<compile_context>
chip_gen: v7x
topology: tpu7x:2x2x1
jax: 0.10.0
libtpu: 0.0.40
codegen_flags: <defaults>
</compile_context>

<pallas_src>
import functools
import math

import jax
import jax.numpy as jnp
from jax.experimental import pallas as pl
from jax.experimental.pallas import tpu as pltpu

_SQRT2 = math.sqrt(2.0)
_INV_SQRT2 = 1.0 / _SQRT2
_VMEM_LIMIT = 32 * 1024 * 1024  # fits scoped-VMEM budgets on v5e / v6e / v7x


def _round_up(x, m):
    return (x + m - 1) // m * m


def _pick_tile_rows(ho, halo, max_rows=64):
    """Largest divisor of `ho` that is a multiple of `halo` and <= max_rows."""
    best = None
    for d in range(1, ho + 1):
        if ho % d == 0 and d % halo == 0 and d <= max_rows:
            best = d
    if best is None:
        assert ho % halo == 0, "conv output rows must be divisible by kh-1"
        best = ho
    return best


# --------------------------------------------------------------------------
# Tiled matmul + fused epilogue (bias / FusedLeakyReLU / residual / scale)
# --------------------------------------------------------------------------
def _matmul_kernel(*refs, act, slope, out_scale, has_res):
    if has_res:
        a_ref, w_ref, b_ref, r_ref, o_ref = refs
    else:
        a_ref, w_ref, b_ref, o_ref = refs
        r_ref = None
    k = pl.program_id(2)

    @pl.when(k == 0)
    def _():
        o_ref[...] = jnp.zeros_like(o_ref)

    # bf16 operands -> MXU, f32 accumulation directly into the resident output block.
    o_ref[...] += jnp.dot(a_ref[...], w_ref[...],
                          preferred_element_type=jnp.float32)

    @pl.when(k == pl.num_programs(2) - 1)
    def _():
        y = o_ref[...] + b_ref[...]
        if act == "flrelu":          # FusedLeakyReLU: lrelu(0.2) * sqrt(2)
            y = jnp.where(y > 0, y, slope * y) * _SQRT2
        elif act == "lrelu":
            y = jnp.where(y > 0, y, slope * y)
        if has_res:
            y = y + r_ref[...]
        o_ref[...] = y * out_scale


def matmul_bias_act(a, w, bias=None, residual=None, act="none", slope=0.2,
                    out_scale=1.0, tm=256, tn=256, tk=512):
    """out = epilogue(a @ w + bias [+ residual]) * out_scale.

    a: (M, K), w: (K, N).  Grid = (M/tm, N/tn, K/tk) with
    ("parallel", "parallel", "arbitrary") semantics.  Operands are padded only
    when the shape actually needs it.  (On v5e, smaller tm/tn/tk may be passed.)
    """
    M, K = a.shape
    K2, N = w.shape
    assert K == K2
    a = a.astype(jnp.bfloat16)
    w = w.astype(jnp.bfloat16)

    if M <= tm:
        tm_ = _round_up(M, 8)
        Mp = tm_
    else:
        tm_ = tm
        Mp = _round_up(M, tm_)
    if N <= tn:
        tn_, Np = N, N
    else:
        tn_ = tn                       # multiple of 128
        Np = _round_up(N, tn_)
    if K <= tk:
        tk_, Kp = K, K
    else:
        tk_ = tk                       # multiple of 128
        Kp = _round_up(K, tk_)

    def pad2(x, rp, cp):
        r, c = x.shape
        if r == rp and c == cp:
            return x
        return jnp.pad(x, ((0, rp - r), (0, cp - c)))

    a_p = pad2(a, Mp, Kp)
    w_p = pad2(w, Kp, Np)
    if bias is None:
        b_p = jnp.zeros((1, Np), jnp.float32)
    else:
        b_p = pad2(bias.reshape(1, N).astype(jnp.float32), 1, Np)
    has_res = residual is not None

    in_specs = [
        pl.BlockSpec((tm_, tk_), lambda i, j, k: (i, k)),
        pl.BlockSpec((tk_, tn_), lambda i, j, k: (k, j)),
        pl.BlockSpec((1, tn_), lambda i, j, k: (0, j)),
    ]
    args = [a_p, w_p, b_p]
    if has_res:
        in_specs.append(pl.BlockSpec((tm_, tn_), lambda i, j, k: (i, j)))
        args.append(pad2(residual.astype(jnp.float32), Mp, Np))

    out = pl.pallas_call(
        functools.partial(_matmul_kernel, act=act, slope=slope,
                          out_scale=out_scale, has_res=has_res),
        out_shape=jax.ShapeDtypeStruct((Mp, Np), jnp.float32),
        grid_spec=pltpu.PrefetchScalarGridSpec(
            num_scalar_prefetch=0,
            grid=(Mp // tm_, Np // tn_, Kp // tk_),
            in_specs=in_specs,
            out_specs=pl.BlockSpec((tm_, tn_), lambda i, j, k: (i, j)),
        ),
        compiler_params=pltpu.CompilerParams(
            dimension_semantics=("parallel", "parallel", "arbitrary"),
            vmem_limit_bytes=_VMEM_LIMIT),
    )(*args)
    if Mp == M and Np == N:
        return out
    return out[:M, :N]


# --------------------------------------------------------------------------
# Direct conv kernel: stride-1 kh x kw conv, taps unrolled in-kernel (no im2col)
# --------------------------------------------------------------------------
def _conv_kernel(xm_ref, xh_ref, w_ref, b_ref, o_ref, xwin_ref, *,
                 kh, kw, wo, act, slope):
    th = o_ref.shape[1]
    cout = o_ref.shape[3]
    halo = kh - 1

    # Assemble the (th + kh - 1) padded-input rows for this output-row tile:
    # `th` rows from the main block + `kh-1` halo rows from the next block.
    xwin_ref[0:th, :, :] = xm_ref[0]
    xwin_ref[th:th + halo, :, :] = xh_ref[0]

    acc = jnp.zeros((th * wo, cout), jnp.float32)
    for i in range(kh):
        for j in range(kw):
            patch = xwin_ref[i:i + th, j:j + wo, :]          # (th, wo, Cin)
            a = patch.reshape(th * wo, patch.shape[-1]).astype(jnp.bfloat16)
            acc = acc + jnp.dot(a, w_ref[i * kw + j],
                                preferred_element_type=jnp.float32)

    y = acc + b_ref[...]
    if act == "flrelu":                                      # FusedLeakyReLU
        y = jnp.where(y > 0, y, slope * y) * _SQRT2
    o_ref[...] = y.reshape(1, th, wo, cout)


def conv2d_direct(x, wk, bias, kh, kw, act="none", slope=0.2, max_rows=64):
    """Stride-1 'valid' conv on an already spatially padded NHWC input.

    x: (B, Hp, Wp, Cin); wk: (kh*kw, Cin, Cout) bf16 (scale already folded);
    bias: (Cout,) f32.  Output: (B, Hp-kh+1, Wp-kw+1, Cout) f32.
    Grid = (batch, row-tile), both "parallel" (shards across v7x TensorCores).
    """
    x = x.astype(jnp.bfloat16)
    B, Hp, Wp, Cin = x.shape
    T, Cin2, Cout = wk.shape
    assert T == kh * kw and Cin2 == Cin
    Ho, Wo = Hp - kh + 1, Wp - kw + 1
    halo = kh - 1
    th = _pick_tile_rows(Ho, halo, max_rows)
    n_r = Ho // th
    hb = th // halo     # halo block index stride (halo block height = kh-1 rows)

    in_specs = [
        pl.BlockSpec((1, th, Wp, Cin), lambda b, r: (b, r, 0, 0)),
        pl.BlockSpec((1, halo, Wp, Cin), lambda b, r: (b, (r + 1) * hb, 0, 0)),
        pl.BlockSpec((T, Cin, Cout), lambda b, r: (0, 0, 0)),
        pl.BlockSpec((1, Cout), lambda b, r: (0, 0)),
    ]
    out_specs = pl.BlockSpec((1, th, Wo, Cout), lambda b, r: (b, r, 0, 0))

    return pl.pallas_call(
        functools.partial(_conv_kernel, kh=kh, kw=kw, wo=Wo, act=act,
                          slope=slope),
        out_shape=jax.ShapeDtypeStruct((B, Ho, Wo, Cout), jnp.float32),
        grid_spec=pltpu.PrefetchScalarGridSpec(
            num_scalar_prefetch=0,
            grid=(B, n_r),
            in_specs=in_specs,
            out_specs=out_specs,
            scratch_shapes=[pltpu.VMEM((th + halo, Wp, Cin), x.dtype)],
        ),
        compiler_params=pltpu.CompilerParams(
            dimension_semantics=("parallel", "parallel"),
            vmem_limit_bytes=_VMEM_LIMIT),
    )(x, x, wk, bias.reshape(1, Cout).astype(jnp.float32))


# --------------------------------------------------------------------------
# Blur: depthwise separable 4x4 FIR ([1,3,3,1] x [1,3,3,1] / 64) on the VPU
# --------------------------------------------------------------------------
def _blur_kernel(x_ref, o_ref):
    x = x_ref[0].astype(jnp.float32)            # (Hp, Wp, C)
    ho, wo = o_ref.shape[1], o_ref.shape[2]
    k = (0.125, 0.375, 0.375, 0.125)            # [1,3,3,1] / 8 per axis
    tmp = k[0] * x[:, 0:wo, :]
    for v in range(1, 4):
        tmp = tmp + k[v] * x[:, v:v + wo, :]
    out = k[0] * tmp[0:ho, :, :]
    for u in range(1, 4):
        out = out + k[u] * tmp[u:u + ho, :, :]
    o_ref[...] = out.reshape(1, ho, wo, out.shape[-1])


def blur4x4(x, pad):
    """upfirdn2d(x, make_kernel([1,3,3,1]), pad=(pad, pad)) for NHWC input."""
    B, H, W, C = x.shape
    xp = jnp.pad(x, ((0, 0), (pad, pad), (pad, pad), (0, 0)))
    Hp, Wp = H + 2 * pad, W + 2 * pad
    Ho, Wo = Hp - 3, Wp - 3
    # TODO(synk): row-tile the blur (halo-block pattern like conv2d_direct) for
    # very large spatial resolutions; per-image blocks are fine at these sizes.
    return pl.pallas_call(
        _blur_kernel,
        out_shape=jax.ShapeDtypeStruct((B, Ho, Wo, C), jnp.float32),
        grid_spec=pltpu.PrefetchScalarGridSpec(
            num_scalar_prefetch=0,
            grid=(B,),
            in_specs=[pl.BlockSpec((1, Hp, Wp, C), lambda b: (b, 0, 0, 0))],
            out_specs=pl.BlockSpec((1, Ho, Wo, C), lambda b: (b, 0, 0, 0)),
        ),
        compiler_params=pltpu.CompilerParams(
            dimension_semantics=("parallel",),
            vmem_limit_bytes=_VMEM_LIMIT),
    )(xp)


# --------------------------------------------------------------------------
# Parameters (EqualConv2d: randn weights, scale folded once at prep time)
# --------------------------------------------------------------------------
def init_params(key, in_ch, out_ch):
    k1, k2, k3 = jax.random.split(key, 3)
    return dict(
        w1=jax.random.normal(k1, (3, 3, in_ch, in_ch), jnp.float32),
        b1=jnp.zeros((in_ch,), jnp.float32),    # FusedLeakyReLU bias (torch init: 0)
        w2=jax.random.normal(k2, (3, 3, in_ch, out_ch), jnp.float32),
        b2=jnp.zeros((out_ch,), jnp.float32),
        ws=jax.random.normal(k3, (1, 1, in_ch, out_ch), jnp.float32),
    )


def prepare_params(p):
    """Fold equal-lr scales, rearrange and cast weights to bf16 (done once)."""
    in_ch = p["w1"].shape[2]
    out_ch = p["w2"].shape[3]
    s1 = 1.0 / math.sqrt(in_ch * 9)
    s2 = 1.0 / math.sqrt(in_ch * 9)
    ss = 1.0 / math.sqrt(in_ch * 1)

    w1e = (p["w1"] * s1).astype(jnp.bfloat16)                 # (3,3,Cin,Cin)
    w2e = (p["w2"] * s2).astype(jnp.bfloat16)                 # (3,3,Cin,Cout)
    wse = (p["ws"][0, 0] * ss).astype(jnp.bfloat16)           # (Cin,Cout)

    # conv1 taps: (9, Cin, Cin)
    w1k = w1e.reshape(9, in_ch, in_ch)
    # conv2 (3x3 stride 2) rewritten as a stride-1 2x2 conv over the
    # space-to-depth input: weight (4, 4*Cin, Cout), row order (p,q,c).
    w2p = jnp.pad(w2e, ((0, 1), (0, 1), (0, 0), (0, 0)))      # (4,4,Cin,Cout)
    w2k = (w2p.reshape(2, 2, 2, 2, in_ch, out_ch)             # (a,p,b,q,ci,co)
              .transpose(0, 2, 1, 3, 4, 5)                    # (a,b,p,q,ci,co)
              .reshape(4, 4 * in_ch, out_ch))

    return dict(
        w1k=w1k, w2k=w2k, wsk=wse, b1=p["b1"], b2=p["b2"],
        # f32 copies of the same (bf16-rounded) effective weights, for the reference
        w1e=w1e.astype(jnp.float32), w2e=w2e.astype(jnp.float32),
        wse=wse.astype(jnp.float32),
    )


# --------------------------------------------------------------------------
# ResBlock forward (NCHW in / NCHW out, NHWC internally)
# --------------------------------------------------------------------------
def resblock_forward(x_nchw, prep):
    x = jnp.transpose(x_nchw, (0, 2, 3, 1)).astype(jnp.float32)   # NHWC
    B, H, W, Cin = x.shape
    assert H % 2 == 0 and W % 2 == 0

    # conv1: EqualConv2d 3x3 s1 p1 + FusedLeakyReLU
    xp = jnp.pad(x, ((0, 0), (1, 1), (1, 1), (0, 0)))
    y1 = conv2d_direct(xp, prep["w1k"], prep["b1"], 3, 3, act="flrelu")

    # conv2: Blur(pad 2,2) -> 3x3 s2 conv (as s2d + 2x2 s1 conv) -> FusedLeakyReLU
    y1b = blur4x4(y1, pad=2)                                      # (B, H+1, W+1, Cin)
    y1bp = jnp.pad(y1b, ((0, 0), (0, 1), (0, 1), (0, 0)))         # even spatial dims
    Bq, H2, W2, Cq = y1bp.shape
    y1s = (y1bp.reshape(Bq, H2 // 2, 2, W2 // 2, 2, Cq)
               .transpose(0, 1, 3, 2, 4, 5)
               .reshape(Bq, H2 // 2, W2 // 2, 4 * Cq))            # space-to-depth
    y2 = conv2d_direct(y1s, prep["w2k"], prep["b2"], 2, 2, act="flrelu")

    # skip: Blur(pad 1,1) -> 1x1 s2 conv, fused with residual add and 1/sqrt(2)
    xb = blur4x4(x, pad=1)                                        # (B, H-1, W-1, Cin)
    xbs = xb[:, ::2, ::2, :]                                      # (B, H/2, W/2, Cin)
    Ho, Wo, Cout = y2.shape[1], y2.shape[2], y2.shape[3]
    out = matmul_bias_act(
        xbs.reshape(B * Ho * Wo, Cin),
        prep["wsk"],
        bias=None,
        residual=y2.reshape(B * Ho * Wo, Cout),
        act="none",
        out_scale=_INV_SQRT2,
    ).reshape(B, Ho, Wo, Cout)

    return jnp.transpose(out, (0, 3, 1, 2))                       # NCHW


# --------------------------------------------------------------------------
# Pure-JAX reference (f32) for correctness self-check
# --------------------------------------------------------------------------
def resblock_reference(x_nchw, prep, slope=0.2):
    hp = jax.lax.Precision.HIGHEST
    x = jnp.transpose(x_nchw, (0, 2, 3, 1)).astype(jnp.float32)

    def flrelu(v, b):
        v = v + b
        return jnp.where(v > 0, v, slope * v) * _SQRT2

    def blur_ref(v, pad):
        vp = jnp.pad(v, ((0, 0), (pad, pad), (pad, pad), (0, 0)))
        k = jnp.array([1., 3., 3., 1.], jnp.float32) / 8.0
        ho = v.shape[1] + 2 * pad - 3
        wo = v.shape[2] + 2 * pad - 3
        t = sum(k[i] * vp[:, :, i:i + wo, :] for i in range(4))
        return sum(k[i] * t[:, i:i + ho, :, :] for i in range(4))

    dn = ("NHWC", "HWIO", "NHWC")
    y1 = jax.lax.conv_general_dilated(x, prep["w1e"], (1, 1),
                                      [(1, 1), (1, 1)], dimension_numbers=dn,
                                      precision=hp)
    y1 = flrelu(y1, prep["b1"])
    y2 = jax.lax.conv_general_dilated(blur_ref(y1, 2), prep["w2e"], (2, 2),
                                      [(0, 0), (0, 0)], dimension_numbers=dn,
                                      precision=hp)
    y2 = flrelu(y2, prep["b2"])
    sk = blur_ref(x, 1)[:, ::2, ::2, :]
    sk = jnp.einsum("bhwc,co->bhwo", sk, prep["wse"], precision=hp)
    out = (y2 + sk) * _INV_SQRT2
    return jnp.transpose(out, (0, 3, 1, 2))


# --------------------------------------------------------------------------
if __name__ == "__main__":
    key = jax.random.PRNGKey(0)
    kp, kb1, kb2, kx = jax.random.split(key, 4)

    B, in_ch, out_ch, H, W = 2, 32, 64, 16, 16
    params = init_params(kp, in_ch, out_ch)
    # PyTorch inits the FusedLeakyReLU biases to zero; use small non-zero values
    # here to exercise the fused bias path (forward semantics are unchanged).
    params["b1"] = 0.1 * jax.random.normal(kb1, (in_ch,), jnp.float32)
    params["b2"] = 0.1 * jax.random.normal(kb2, (out_ch,), jnp.float32)
    prep = prepare_params(params)

    x = jax.random.normal(kx, (B, in_ch, H, W), jnp.float32)

    fwd = jax.jit(resblock_forward)
    out = jax.block_until_ready(fwd(x, prep))
    ref = jax.block_until_ready(resblock_reference(x, prep))

    assert out.shape == (B, out_ch, H // 2, W // 2), out.shape
    assert bool(jnp.all(jnp.isfinite(out)))
    err = float(jnp.max(jnp.abs(out - ref)))
    assert err < 0.08, f"max abs err vs reference = {err}"
    print("KERNEL_OK")
</pallas_src>

<mosaic_0001>
module attributes {stable_mosaic.version = 11 : i64} {
  func.func @_conv_kernel(%arg0: i32, %arg1: i32, %arg2: memref<1x16x18x32xbf16, #tpu.memory_space<vmem>>, %arg3: memref<1x2x18x32xbf16, #tpu.memory_space<vmem>>, %arg4: memref<9x32x32xbf16, #tpu.memory_space<vmem>>, %arg5: memref<1x32xf32, #tpu.memory_space<vmem>>, %arg6: memref<1x16x16x32xf32, #tpu.memory_space<vmem>>, %arg7: memref<18x18x32xbf16, #tpu.memory_space<vmem>>) attributes {dimension_semantics = [#tpu.dimension_semantics<parallel>, #tpu.dimension_semantics<parallel>], iteration_bounds = array<i64: 2, 1>, scalar_prefetch = 0 : i64, scratch_operands = 1 : i64, tpu.core_type = #tpu.core_type<tc>, window_params = [{transform_indices = @transform_0, window_bounds = array<i64: 1, 16, 18, 32>}, {transform_indices = @transform_1, window_bounds = array<i64: 1, 2, 18, 32>}, {pipeline_mode = #tpu.pipeline_mode<synchronous>, transform_indices = @transform_2, window_bounds = array<i64: 9, 32, 32>}, {pipeline_mode = #tpu.pipeline_mode<synchronous>, transform_indices = @transform_3, window_bounds = array<i64: 1, 32>}, {transform_indices = @transform_4, window_bounds = array<i64: 1, 16, 16, 32>}]} {
    %c0 = arith.constant 0 : index
    %c0_0 = arith.constant 0 : index
    %c0_1 = arith.constant 0 : index
    %c0_2 = arith.constant 0 : index
    %0 = vector.load %arg2[%c0, %c0_0, %c0_1, %c0_2] : memref<1x16x18x32xbf16, #tpu.memory_space<vmem>>, vector<1x16x18x32xbf16>
    %1 = vector.shape_cast %0 : vector<1x16x18x32xbf16> to vector<16x18x32xbf16>
    %c0_3 = arith.constant 0 : index
    %c0_4 = arith.constant 0 : index
    %c0_5 = arith.constant 0 : index
    %2 = vector.load %arg7[%c0_3, %c0_4, %c0_5] : memref<18x18x32xbf16, #tpu.memory_space<vmem>>, vector<16x18x32xbf16>
    tpu.vector_store %arg7[%c0_3, %c0_4, %c0_5], %1 {strides = array<i32>} : memref<18x18x32xbf16, #tpu.memory_space<vmem>>, vector<16x18x32xbf16>,
    %c0_6 = arith.constant 0 : index
    %c0_7 = arith.constant 0 : index
    %c0_8 = arith.constant 0 : index
    %c0_9 = arith.constant 0 : index
    %3 = vector.load %arg3[%c0_6, %c0_7, %c0_8, %c0_9] : memref<1x2x18x32xbf16, #tpu.memory_space<vmem>>, vector<1x2x18x32xbf16>
    %4 = vector.shape_cast %3 : vector<1x2x18x32xbf16> to vector<2x18x32xbf16>
    %c16 = arith.constant 16 : index
    %c0_10 = arith.constant 0 : index
    %c0_11 = arith.constant 0 : index
    %5 = vector.load %arg7[%c16, %c0_10, %c0_11] : memref<18x18x32xbf16, #tpu.memory_space<vmem>>, vector<2x18x32xbf16>
    tpu.vector_store %arg7[%c16, %c0_10, %c0_11], %4 {strides = array<i32>} : memref<18x18x32xbf16, #tpu.memory_space<vmem>>, vector<2x18x32xbf16>,
    %cst = arith.constant 0.000000e+00 : f32
    %6 = vector.broadcast %cst : f32 to vector<256x32xf32>
    %c0_12 = arith.constant 0 : index
    %c0_13 = arith.constant 0 : index
    %c0_14 = arith.constant 0 : index
    %7 = vector.load %arg7[%c0_12, %c0_13, %c0_14] : memref<18x18x32xbf16, #tpu.memory_space<vmem>>, vector<16x16x32xbf16>
    %8 = vector.shape_cast %7 : vector<16x16x32xbf16> to vector<256x32xbf16>
    %c0_15 = arith.constant 0 : index
    %c0_16 = arith.constant 0 : index
    %c0_17 = arith.constant 0 : index
    %9 = vector.load %arg4[%c0_15, %c0_16, %c0_17] : memref<9x32x32xbf16, #tpu.memory_space<vmem>>, vector<1x32x32xbf16>
    %10 = vector.shape_cast %9 : vector<1x32x32xbf16> to vector<32x32xbf16>
    %cst_18 = arith.constant dense<0.000000e+00> : vector<256x32xf32>
    %11 = tpu.matmul %8, %10, %cst_18 {dimension_numbers = #tpu.dot_dimension_numbers<[1], [0], [0], [1], [0, 0, 1, 1], [], []>} : vector<256x32xbf16>, vector<32x32xbf16>, vector<256x32xf32> -> vector<256x32xf32>
    %12 = arith.addf %6, %11 : vector<256x32xf32>
    %c0_19 = arith.constant 0 : index
    %c1 = arith.constant 1 : index
    %c0_20 = arith.constant 0 : index
    %13 = vector.load %arg7[%c0_19, %c1, %c0_20] : memref<18x18x32xbf16, #tpu.memory_space<vmem>>, vector<16x16x32xbf16>
    %14 = vector.shape_cast %13 : vector<16x16x32xbf16> to vector<256x32xbf16>
    %c1_21 = arith.constant 1 : index
    %c0_22 = arith.constant 0 : index
    %c0_23 = arith.constant 0 : index
    %15 = vector.load %arg4[%c1_21, %c0_22, %c0_23] : memref<9x32x32xbf16, #tpu.memory_space<vmem>>, vector<1x32x32xbf16>
    %16 = vector.shape_cast %15 : vector<1x32x32xbf16> to vector<32x32xbf16>
    %cst_24 = arith.constant dense<0.000000e+00> : vector<256x32xf32>
    %17 = tpu.matmul %14, %16, %cst_24 {dimension_numbers = #tpu.dot_dimension_numbers<[1], [0], [0], [1], [0, 0, 1, 1], [], []>} : vector<256x32xbf16>, vector<32x32xbf16>, vector<256x32xf32> -> vector<256x32xf32>
    %18 = arith.addf %12, %17 : vector<256x32xf32>
    %c0_25 = arith.constant 0 : index
    %c2 = arith.constant 2 : index
    %c0_26 = arith.constant 0 : index
    %19 = vector.load %arg7[%c0_25, %c2, %c0_26] : memref<18x18x32xbf16, #tpu.memory_space<vmem>>, vector<16x16x32xbf16>
    %20 = vector.shape_cast %19 : vector<16x16x32xbf16> to vector<256x32xbf16>
    %c2_27 = arith.constant 2 : index
    %c0_28 = arith.constant 0 : index
    %c0_29 = arith.constant 0 : index
    %21 = vector.load %arg4[%c2_27, %c0_28, %c0_29] : memref<9x32x32xbf16, #tpu.memory_space<vmem>>, vector<1x32x32xbf16>
    %22 = vector.shape_cast %21 : vector<1x32x32xbf16> to vector<32x32xbf16>
    %cst_30 = arith.constant dense<0.000000e+00> : vector<256x32xf32>
    %23 = tpu.matmul %20, %22, %cst_30 {dimension_numbers = #tpu.dot_dimension_numbers<[1], [0], [0], [1], [0, 0, 1, 1], [], []>} : vector<256x32xbf16>, vector<32x32xbf16>, vector<256x32xf32> -> vector<256x32xf32>
    %24 = arith.addf %18, %23 : vector<256x32xf32>
    %c1_31 = arith.constant 1 : index
    %c0_32 = arith.constant 0 : index
    %c0_33 = arith.constant 0 : index
    %25 = vector.load %arg7[%c1_31, %c0_32, %c0_33] : memref<18x18x32xbf16, #tpu.memory_space<vmem>>, vector<16x16x32xbf16>
    %26 = vector.shape_cast %25 : vector<16x16x32xbf16> to vector<256x32xbf16>
    %c3 = arith.constant 3 : index
    %c0_34 = arith.constant 0 : index
    %c0_35 = arith.constant 0 : index
    %27 = vector.load %arg4[%c3, %c0_34, %c0_35] : memref<9x32x32xbf16, #tpu.memory_space<vmem>>, vector<1x32x32xbf16>
    %28 = vector.shape_cast %27 : vector<1x32x32xbf16> to vector<32x32xbf16>
    %cst_36 = arith.constant dense<0.000000e+00> : vector<256x32xf32>
    %29 = tpu.matmul %26, %28, %cst_36 {dimension_numbers = #tpu.dot_dimension_numbers<[1], [0], [0], [1], [0, 0, 1, 1], [], []>} : vector<256x32xbf16>, vector<32x32xbf16>, vector<256x32xf32> -> vector<256x32xf32>
    %30 = arith.addf %24, %29 : vector<256x32xf32>
    %c1_37 = arith.constant 1 : index
    %c1_38 = arith.constant 1 : index
    %c0_39 = arith.constant 0 : index
    %31 = vector.load %arg7[%c1_37, %c1_38, %c0_39] : memref<18x18x32xbf16, #tpu.memory_space<vmem>>, vector<16x16x32xbf16>
    %32 = vector.shape_cast %31 : vector<16x16x32xbf16> to vector<256x32xbf16>
    %c4 = arith.constant 4 : index
    %c0_40 = arith.constant 0 : index
    %c0_41 = arith.constant 0 : index
    %33 = vector.load %arg4[%c4, %c0_40, %c0_41] : memref<9x32x32xbf16, #tpu.memory_space<vmem>>, vector<1x32x32xbf16>
    %34 = vector.shape_cast %33 : vector<1x32x32xbf16> to vector<32x32xbf16>
    %cst_42 = arith.constant dense<0.000000e+00> : vector<256x32xf32>
    %35 = tpu.matmul %32, %34, %cst_42 {dimension_numbers = #tpu.dot_dimension_numbers<[1], [0], [0], [1], [0, 0, 1, 1], [], []>} : vector<256x32xbf16>, vector<32x32xbf16>, vector<256x32xf32> -> vector<256x32xf32>
    %36 = arith.addf %30, %35 : vector<256x32xf32>
    %c1_43 = arith.constant 1 : index
    %c2_44 = arith.constant 2 : index
    %c0_45 = arith.constant 0 : index
    %37 = vector.load %arg7[%c1_43, %c2_44, %c0_45] : memref<18x18x32xbf16, #tpu.memory_space<vmem>>, vector<16x16x32xbf16>
    %38 = vector.shape_cast %37 : vector<16x16x32xbf16> to vector<256x32xbf16>
    %c5 = arith.constant 5 : index
    %c0_46 = arith.constant 0 : index
    %c0_47 = arith.constant 0 : index
    %39 = vector.load %arg4[%c5, %c0_46, %c0_47] : memref<9x32x32xbf16, #tpu.memory_space<vmem>>, vector<1x32x32xbf16>
    %40 = vector.shape_cast %39 : vector<1x32x32xbf16> to vector<32x32xbf16>
    %cst_48 = arith.constant dense<0.000000e+00> : vector<256x32xf32>
    %41 = tpu.matmul %38, %40, %cst_48 {dimension_numbers = #tpu.dot_dimension_numbers<[1], [0], [0], [1], [0, 0, 1, 1], [], []>} : vector<256x32xbf16>, vector<32x32xbf16>, vector<256x32xf32> -> vector<256x32xf32>
    %42 = arith.addf %36, %41 : vector<256x32xf32>
    %c2_49 = arith.constant 2 : index
    %c0_50 = arith.constant 0 : index
    %c0_51 = arith.constant 0 : index
    %43 = vector.load %arg7[%c2_49, %c0_50, %c0_51] : memref<18x18x32xbf16, #tpu.memory_space<vmem>>, vector<16x16x32xbf16>
    %44 = vector.shape_cast %43 : vector<16x16x32xbf16> to vector<256x32xbf16>
    %c6 = arith.constant 6 : index
    %c0_52 = arith.constant 0 : index
    %c0_53 = arith.constant 0 : index
    %45 = vector.load %arg4[%c6, %c0_52, %c0_53] : memref<9x32x32xbf16, #tpu.memory_space<vmem>>, vector<1x32x32xbf16>
    %46 = vector.shape_cast %45 : vector<1x32x32xbf16> to vector<32x32xbf16>
    %cst_54 = arith.constant dense<0.000000e+00> : vector<256x32xf32>
    %47 = tpu.matmul %44, %46, %cst_54 {dimension_numbers = #tpu.dot_dimension_numbers<[1], [0], [0], [1], [0, 0, 1, 1], [], []>} : vector<256x32xbf16>, vector<32x32xbf16>, vector<256x32xf32> -> vector<256x32xf32>
    %48 = arith.addf %42, %47 : vector<256x32xf32>
    %c2_55 = arith.constant 2 : index
    %c1_56 = arith.constant 1 : index
    %c0_57 = arith.constant 0 : index
    %49 = vector.load %arg7[%c2_55, %c1_56, %c0_57] : memref<18x18x32xbf16, #tpu.memory_space<vmem>>, vector<16x16x32xbf16>
    %50 = vector.shape_cast %49 : vector<16x16x32xbf16> to vector<256x32xbf16>
    %c7 = arith.constant 7 : index
    %c0_58 = arith.constant 0 : index
    %c0_59 = arith.constant 0 : index
    %51 = vector.load %arg4[%c7, %c0_58, %c0_59] : memref<9x32x32xbf16, #tpu.memory_space<vmem>>, vector<1x32x32xbf16>
    %52 = vector.shape_cast %51 : vector<1x32x32xbf16> to vector<32x32xbf16>
    %cst_60 = arith.constant dense<0.000000e+00> : vector<256x32xf32>
    %53 = tpu.matmul %50, %52, %cst_60 {dimension_numbers = #tpu.dot_dimension_numbers<[1], [0], [0], [1], [0, 0, 1, 1], [], []>} : vector<256x32xbf16>, vector<32x32xbf16>, vector<256x32xf32> -> vector<256x32xf32>
    %54 = arith.addf %48, %53 : vector<256x32xf32>
    %c2_61 = arith.constant 2 : index
    %c2_62 = arith.constant 2 : index
    %c0_63 = arith.constant 0 : index
    %55 = vector.load %arg7[%c2_61, %c2_62, %c0_63] : memref<18x18x32xbf16, #tpu.memory_space<vmem>>, vector<16x16x32xbf16>
    %56 = vector.shape_cast %55 : vector<16x16x32xbf16> to vector<256x32xbf16>
    %c8 = arith.constant 8 : index
    %c0_64 = arith.constant 0 : index
    %c0_65 = arith.constant 0 : index
    %57 = vector.load %arg4[%c8, %c0_64, %c0_65] : memref<9x32x32xbf16, #tpu.memory_space<vmem>>, vector<1x32x32xbf16>
    %58 = vector.shape_cast %57 : vector<1x32x32xbf16> to vector<32x32xbf16>
    %cst_66 = arith.constant dense<0.000000e+00> : vector<256x32xf32>
    %59 = tpu.matmul %56, %58, %cst_66 {dimension_numbers = #tpu.dot_dimension_numbers<[1], [0], [0], [1], [0, 0, 1, 1], [], []>} : vector<256x32xbf16>, vector<32x32xbf16>, vector<256x32xf32> -> vector<256x32xf32>
    %60 = arith.addf %54, %59 : vector<256x32xf32>
    %c0_67 = arith.constant 0 : index
    %c0_68 = arith.constant 0 : index
    %61 = vector.load %arg5[%c0_67, %c0_68] : memref<1x32xf32, #tpu.memory_space<vmem>>, vector<1x32xf32>
    %62 = vector.broadcast %61 : vector<1x32xf32> to vector<256x32xf32>
    %63 = arith.addf %60, %62 : vector<256x32xf32>
    %cst_69 = arith.constant 0.000000e+00 : f32
    %64 = vector.broadcast %cst_69 : f32 to vector<256x32xf32>
    %65 = arith.cmpf ogt, %63, %64 : vector<256x32xf32>
    %cst_70 = arith.constant 2.000000e-01 : f32
    %66 = vector.broadcast %cst_70 : f32 to vector<256x32xf32>
    %67 = arith.mulf %66, %63 : vector<256x32xf32>
    %68 = arith.select %65, %63, %67 : vector<256x32xi1>, vector<256x32xf32>
    %cst_71 = arith.constant 1.41421354 : f32
    %69 = vector.broadcast %cst_71 : f32 to vector<256x32xf32>
    %70 = arith.mulf %68, %69 : vector<256x32xf32>
    %71 = vector.shape_cast %70 : vector<256x32xf32> to vector<1x16x16x32xf32>
    %c0_72 = arith.constant 0 : index
    %c0_73 = arith.constant 0 : index
    %c0_74 = arith.constant 0 : index
    %c0_75 = arith.constant 0 : index
    %72 = vector.load %arg6[%c0_72, %c0_73, %c0_74, %c0_75] : memref<1x16x16x32xf32, #tpu.memory_space<vmem>>, vector<1x16x16x32xf32>
    tpu.vector_store %arg6[%c0_72, %c0_73, %c0_74, %c0_75], %71 {strides = array<i32>} : memref<1x16x16x32xf32, #tpu.memory_space<vmem>>, vector<1x16x16x32xf32>,
    return
  }
  func.func @transform_0(%arg0: i32, %arg1: i32) -> (i32, i32, i32, i32) {
    %c0_i32 = arith.constant 0 : i32
    %c0_i32_0 = arith.constant 0 : i32
    %c0_i32_1 = arith.constant 0 : i32
    return %arg0, %arg1, %c0_i32, %c0_i32_0 : i32, i32, i32, i32
  }
  func.func @transform_1(%arg0: i32, %arg1: i32) -> (i32, i32, i32, i32) {
    %c1_i32 = arith.constant 1 : i32
    %0 = arith.addi %arg1, %c1_i32 : i32
    %c8_i32 = arith.constant 8 : i32
    %1 = arith.muli %0, %c8_i32 : i32
    %c0_i32 = arith.constant 0 : i32
    %c0_i32_0 = arith.constant 0 : i32
    %c0_i32_1 = arith.constant 0 : i32
    return %arg0, %1, %c0_i32, %c0_i32_0 : i32, i32, i32, i32
  }
  func.func @transform_2(%arg0: i32, %arg1: i32) -> (i32, i32, i32) {
    %c0_i32 = arith.constant 0 : i32
    %c0_i32_0 = arith.constant 0 : i32
    %c0_i32_1 = arith.constant 0 : i32
    %c0_i32_2 = arith.constant 0 : i32
    return %c0_i32, %c0_i32_0, %c0_i32_1 : i32, i32, i32
  }
  func.func @transform_3(%arg0: i32, %arg1: i32) -> (i32, i32) {
    %c0_i32 = arith.constant 0 : i32
    %c0_i32_0 = arith.constant 0 : i32
    %c0_i32_1 = arith.constant 0 : i32
    return %c0_i32, %c0_i32_0 : i32, i32
  }
  func.func @transform_4(%arg0: i32, %arg1: i32) -> (i32, i32, i32, i32) {
    %c0_i32 = arith.constant 0 : i32
    %c0_i32_0 = arith.constant 0 : i32
    %c0_i32_1 = arith.constant 0 : i32
    return %arg0, %arg1, %c0_i32, %c0_i32_0 : i32, i32, i32, i32
  }
}

module attributes {stable_mosaic.version = 11 : i64} {
  func.func @_blur_kernel(%arg0: i32, %arg1: memref<1x20x20x32xf32, #tpu.memory_space<vmem>>, %arg2: memref<1x17x17x32xf32, #tpu.memory_space<vmem>>) attributes {dimension_semantics = [#tpu.dimension_semantics<parallel>], iteration_bounds = array<i64: 2>, scalar_prefetch = 0 : i64, scratch_operands = 0 : i64, tpu.core_type = #tpu.core_type<tc>, window_params = [{transform_indices = @transform_0, window_bounds = array<i64: 1, 20, 20, 32>}, {transform_indices = @transform_1, window_bounds = array<i64: 1, 17, 17, 32>}]} {
    %c0 = arith.constant 0 : index
    %c0_0 = arith.constant 0 : index
    %c0_1 = arith.constant 0 : index
    %c0_2 = arith.constant 0 : index
    %0 = vector.load %arg1[%c0, %c0_0, %c0_1, %c0_2] : memref<1x20x20x32xf32, #tpu.memory_space<vmem>>, vector<1x20x20x32xf32>
    %1 = vector.shape_cast %0 : vector<1x20x20x32xf32> to vector<20x20x32xf32>
    %2 = vector.extract_strided_slice %1 {offsets = [0, 0, 0], sizes = [20, 17, 32], strides = [1, 1, 1]} : vector<20x20x32xf32> to vector<20x17x32xf32>
    %cst = arith.constant 1.250000e-01 : f32
    %3 = vector.broadcast %cst : f32 to vector<20x17x32xf32>
    %4 = arith.mulf %3, %2 : vector<20x17x32xf32>
    %5 = vector.extract_strided_slice %1 {offsets = [0, 1, 0], sizes = [20, 17, 32], strides = [1, 1, 1]} : vector<20x20x32xf32> to vector<20x17x32xf32>
    %cst_3 = arith.constant 3.750000e-01 : f32
    %6 = vector.broadcast %cst_3 : f32 to vector<20x17x32xf32>
    %7 = arith.mulf %6, %5 : vector<20x17x32xf32>
    %8 = arith.addf %4, %7 : vector<20x17x32xf32>
    %9 = vector.extract_strided_slice %1 {offsets = [0, 2, 0], sizes = [20, 17, 32], strides = [1, 1, 1]} : vector<20x20x32xf32> to vector<20x17x32xf32>
    %cst_4 = arith.constant 3.750000e-01 : f32
    %10 = vector.broadcast %cst_4 : f32 to vector<20x17x32xf32>
    %11 = arith.mulf %10, %9 : vector<20x17x32xf32>
    %12 = arith.addf %8, %11 : vector<20x17x32xf32>
    %13 = vector.extract_strided_slice %1 {offsets = [0, 3, 0], sizes = [20, 17, 32], strides = [1, 1, 1]} : vector<20x20x32xf32> to vector<20x17x32xf32>
    %cst_5 = arith.constant 1.250000e-01 : f32
    %14 = vector.broadcast %cst_5 : f32 to vector<20x17x32xf32>
    %15 = arith.mulf %14, %13 : vector<20x17x32xf32>
    %16 = arith.addf %12, %15 : vector<20x17x32xf32>
    %17 = vector.extract_strided_slice %16 {offsets = [0, 0, 0], sizes = [17, 17, 32], strides = [1, 1, 1]} : vector<20x17x32xf32> to vector<17x17x32xf32>
    %cst_6 = arith.constant 1.250000e-01 : f32
    %18 = vector.broadcast %cst_6 : f32 to vector<17x17x32xf32>
    %19 = arith.mulf %18, %17 : vector<17x17x32xf32>
    %20 = vector.extract_strided_slice %16 {offsets = [1, 0, 0], sizes = [17, 17, 32], strides = [1, 1, 1]} : vector<20x17x32xf32> to vector<17x17x32xf32>
    %cst_7 = arith.constant 3.750000e-01 : f32
    %21 = vector.broadcast %cst_7 : f32 to vector<17x17x32xf32>
    %22 = arith.mulf %21, %20 : vector<17x17x32xf32>
    %23 = arith.addf %19, %22 : vector<17x17x32xf32>
    %24 = vector.extract_strided_slice %16 {offsets = [2, 0, 0], sizes = [17, 17, 32], strides = [1, 1, 1]} : vector<20x17x32xf32> to vector<17x17x32xf32>
    %cst_8 = arith.constant 3.750000e-01 : f32
    %25 = vector.broadcast %cst_8 : f32 to vector<17x17x32xf32>
    %26 = arith.mulf %25, %24 : vector<17x17x32xf32>
    %27 = arith.addf %23, %26 : vector<17x17x32xf32>
    %28 = vector.extract_strided_slice %16 {offsets = [3, 0, 0], sizes = [17, 17, 32], strides = [1, 1, 1]} : vector<20x17x32xf32> to vector<17x17x32xf32>
    %cst_9 = arith.constant 1.250000e-01 : f32
    %29 = vector.broadcast %cst_9 : f32 to vector<17x17x32xf32>
    %30 = arith.mulf %29, %28 : vector<17x17x32xf32>
    %31 = arith.addf %27, %30 : vector<17x17x32xf32>
    %32 = vector.shape_cast %31 : vector<17x17x32xf32> to vector<1x17x17x32xf32>
    %c0_10 = arith.constant 0 : index
    %c0_11 = arith.constant 0 : index
    %c0_12 = arith.constant 0 : index
    %c0_13 = arith.constant 0 : index
    %33 = vector.load %arg2[%c0_10, %c0_11, %c0_12, %c0_13] : memref<1x17x17x32xf32, #tpu.memory_space<vmem>>, vector<1x17x17x32xf32>
    tpu.vector_store %arg2[%c0_10, %c0_11, %c0_12, %c0_13], %32 {strides = array<i32>} : memref<1x17x17x32xf32, #tpu.memory_space<vmem>>, vector<1x17x17x32xf32>,
    return
  }
  func.func @transform_0(%arg0: i32) -> (i32, i32, i32, i32) {
    %c0_i32 = arith.constant 0 : i32
    %c0_i32_0 = arith.constant 0 : i32
    %c0_i32_1 = arith.constant 0 : i32
    %c0_i32_2 = arith.constant 0 : i32
    return %arg0, %c0_i32, %c0_i32_0, %c0_i32_1 : i32, i32, i32, i32
  }
  func.func @transform_1(%arg0: i32) -> (i32, i32, i32, i32) {
    %c0_i32 = arith.constant 0 : i32
    %c0_i32_0 = arith.constant 0 : i32
    %c0_i32_1 = arith.constant 0 : i32
    %c0_i32_2 = arith.constant 0 : i32
    return %arg0, %c0_i32, %c0_i32_0, %c0_i32_1 : i32, i32, i32, i32
  }
}

module attributes {stable_mosaic.version = 11 : i64} {
  func.func @_conv_kernel(%arg0: i32, %arg1: i32, %arg2: memref<1x8x9x128xbf16, #tpu.memory_space<vmem>>, %arg3: memref<1x1x9x128xbf16, #tpu.memory_space<vmem>>, %arg4: memref<4x128x64xbf16, #tpu.memory_space<vmem>>, %arg5: memref<1x64xf32, #tpu.memory_space<vmem>>, %arg6: memref<1x8x8x64xf32, #tpu.memory_space<vmem>>, %arg7: memref<9x9x128xbf16, #tpu.memory_space<vmem>>) attributes {dimension_semantics = [#tpu.dimension_semantics<parallel>, #tpu.dimension_semantics<parallel>], iteration_bounds = array<i64: 2, 1>, scalar_prefetch = 0 : i64, scratch_operands = 1 : i64, tpu.core_type = #tpu.core_type<tc>, window_params = [{transform_indices = @transform_0, window_bounds = array<i64: 1, 8, 9, 128>}, {transform_indices = @transform_1, window_bounds = array<i64: 1, 1, 9, 128>}, {pipeline_mode = #tpu.pipeline_mode<synchronous>, transform_indices = @transform_2, window_bounds = array<i64: 4, 128, 64>}, {pipeline_mode = #tpu.pipeline_mode<synchronous>, transform_indices = @transform_3, window_bounds = array<i64: 1, 64>}, {transform_indices = @transform_4, window_bounds = array<i64: 1, 8, 8, 64>}]} {
    %c0 = arith.constant 0 : index
    %c0_0 = arith.constant 0 : index
    %c0_1 = arith.constant 0 : index
    %c0_2 = arith.constant 0 : index
    %0 = vector.load %arg2[%c0, %c0_0, %c0_1, %c0_2] : memref<1x8x9x128xbf16, #tpu.memory_space<vmem>>, vector<1x8x9x128xbf16>
    %1 = vector.shape_cast %0 : vector<1x8x9x128xbf16> to vector<8x9x128xbf16>
    %c0_3 = arith.constant 0 : index
    %c0_4 = arith.constant 0 : index
    %c0_5 = arith.constant 0 : index
    %2 = vector.load %arg7[%c0_3, %c0_4, %c0_5] : memref<9x9x128xbf16, #tpu.memory_space<vmem>>, vector<8x9x128xbf16>
    tpu.vector_store %arg7[%c0_3, %c0_4, %c0_5], %1 {strides = array<i32>} : memref<9x9x128xbf16, #tpu.memory_space<vmem>>, vector<8x9x128xbf16>,
    %c0_6 = arith.constant 0 : index
    %c0_7 = arith.constant 0 : index
    %c0_8 = arith.constant 0 : index
    %c0_9 = arith.constant 0 : index
    %3 = vector.load %arg3[%c0_6, %c0_7, %c0_8, %c0_9] : memref<1x1x9x128xbf16, #tpu.memory_space<vmem>>, vector<1x1x9x128xbf16>
    %4 = vector.shape_cast %3 : vector<1x1x9x128xbf16> to vector<1x9x128xbf16>
    %c8 = arith.constant 8 : index
    %c0_10 = arith.constant 0 : index
    %c0_11 = arith.constant 0 : index
    %5 = vector.load %arg7[%c8, %c0_10, %c0_11] : memref<9x9x128xbf16, #tpu.memory_space<vmem>>, vector<1x9x128xbf16>
    tpu.vector_store %arg7[%c8, %c0_10, %c0_11], %4 {strides = array<i32>} : memref<9x9x128xbf16, #tpu.memory_space<vmem>>, vector<1x9x128xbf16>,
    %cst = arith.constant 0.000000e+00 : f32
    %6 = vector.broadcast %cst : f32 to vector<64x64xf32>
    %c0_12 = arith.constant 0 : index
    %c0_13 = arith.constant 0 : index
    %c0_14 = arith.constant 0 : index
    %7 = vector.load %arg7[%c0_12, %c0_13, %c0_14] : memref<9x9x128xbf16, #tpu.memory_space<vmem>>, vector<8x8x128xbf16>
    %8 = vector.shape_cast %7 : vector<8x8x128xbf16> to vector<64x128xbf16>
    %c0_15 = arith.constant 0 : index
    %c0_16 = arith.constant 0 : index
    %c0_17 = arith.constant 0 : index
    %9 = vector.load %arg4[%c0_15, %c0_16, %c0_17] : memref<4x128x64xbf16, #tpu.memory_space<vmem>>, vector<1x128x64xbf16>
    %10 = vector.shape_cast %9 : vector<1x128x64xbf16> to vector<128x64xbf16>
    %cst_18 = arith.constant dense<0.000000e+00> : vector<64x64xf32>
    %11 = tpu.matmul %8, %10, %cst_18 {dimension_numbers = #tpu.dot_dimension_numbers<[1], [0], [0], [1], [0, 0, 1, 1], [], []>} : vector<64x128xbf16>, vector<128x64xbf16>, vector<64x64xf32> -> vector<64x64xf32>
    %12 = arith.addf %6, %11 : vector<64x64xf32>
    %c0_19 = arith.constant 0 : index
    %c1 = arith.constant 1 : index
    %c0_20 = arith.constant 0 : index
    %13 = vector.load %arg7[%c0_19, %c1, %c0_20] : memref<9x9x128xbf16, #tpu.memory_space<vmem>>, vector<8x8x128xbf16>
    %14 = vector.shape_cast %13 : vector<8x8x128xbf16> to vector<64x128xbf16>
    %c1_21 = arith.constant 1 : index
    %c0_22 = arith.constant 0 : index
    %c0_23 = arith.constant 0 : index
    %15 = vector.load %arg4[%c1_21, %c0_22, %c0_23] : memref<4x128x64xbf16, #tpu.memory_space<vmem>>, vector<1x128x64xbf16>
    %16 = vector.shape_cast %15 : vector<1x128x64xbf16> to vector<128x64xbf16>
    %cst_24 = arith.constant dense<0.000000e+00> : vector<64x64xf32>
    %17 = tpu.matmul %14, %16, %cst_24 {dimension_numbers = #tpu.dot_dimension_numbers<[1], [0], [0], [1], [0, 0, 1, 1], [], []>} : vector<64x128xbf16>, vector<128x64xbf16>, vector<64x64xf32> -> vector<64x64xf32>
    %18 = arith.addf %12, %17 : vector<64x64xf32>
    %c1_25 = arith.constant 1 : index
    %c0_26 = arith.constant 0 : index
    %c0_27 = arith.constant 0 : index
    %19 = vector.load %arg7[%c1_25, %c0_26, %c0_27] : memref<9x9x128xbf16, #tpu.memory_space<vmem>>, vector<8x8x128xbf16>
    %20 = vector.shape_cast %19 : vector<8x8x128xbf16> to vector<64x128xbf16>
    %c2 = arith.constant 2 : index
    %c0_28 = arith.constant 0 : index
    %c0_29 = arith.constant 0 : index
    %21 = vector.load %arg4[%c2, %c0_28, %c0_29] : memref<4x128x64xbf16, #tpu.memory_space<vmem>>, vector<1x128x64xbf16>
    %22 = vector.shape_cast %21 : vector<1x128x64xbf16> to vector<128x64xbf16>
    %cst_30 = arith.constant dense<0.000000e+00> : vector<64x64xf32>
    %23 = tpu.matmul %20, %22, %cst_30 {dimension_numbers = #tpu.dot_dimension_numbers<[1], [0], [0], [1], [0, 0, 1, 1], [], []>} : vector<64x128xbf16>, vector<128x64xbf16>, vector<64x64xf32> -> vector<64x64xf32>
    %24 = arith.addf %18, %23 : vector<64x64xf32>
    %c1_31 = arith.constant 1 : index
    %c1_32 = arith.constant 1 : index
    %c0_33 = arith.constant 0 : index
    %25 = vector.load %arg7[%c1_31, %c1_32, %c0_33] : memref<9x9x128xbf16, #tpu.memory_space<vmem>>, vector<8x8x128xbf16>
    %26 = vector.shape_cast %25 : vector<8x8x128xbf16> to vector<64x128xbf16>
    %c3 = arith.constant 3 : index
    %c0_34 = arith.constant 0 : index
    %c0_35 = arith.constant 0 : index
    %27 = vector.load %arg4[%c3, %c0_34, %c0_35] : memref<4x128x64xbf16, #tpu.memory_space<vmem>>, vector<1x128x64xbf16>
    %28 = vector.shape_cast %27 : vector<1x128x64xbf16> to vector<128x64xbf16>
    %cst_36 = arith.constant dense<0.000000e+00> : vector<64x64xf32>
    %29 = tpu.matmul %26, %28, %cst_36 {dimension_numbers = #tpu.dot_dimension_numbers<[1], [0], [0], [1], [0, 0, 1, 1], [], []>} : vector<64x128xbf16>, vector<128x64xbf16>, vector<64x64xf32> -> vector<64x64xf32>
    %30 = arith.addf %24, %29 : vector<64x64xf32>
    %c0_37 = arith.constant 0 : index
    %c0_38 = arith.constant 0 : index
    %31 = vector.load %arg5[%c0_37, %c0_38] : memref<1x64xf32, #tpu.memory_space<vmem>>, vector<1x64xf32>
    %32 = vector.broadcast %31 : vector<1x64xf32> to vector<64x64xf32>
    %33 = arith.addf %30, %32 : vector<64x64xf32>
    %cst_39 = arith.constant 0.000000e+00 : f32
    %34 = vector.broadcast %cst_39 : f32 to vector<64x64xf32>
    %35 = arith.cmpf ogt, %33, %34 : vector<64x64xf32>
    %cst_40 = arith.constant 2.000000e-01 : f32
    %36 = vector.broadcast %cst_40 : f32 to vector<64x64xf32>
    %37 = arith.mulf %36, %33 : vector<64x64xf32>
    %38 = arith.select %35, %33, %37 : vector<64x64xi1>, vector<64x64xf32>
    %cst_41 = arith.constant 1.41421354 : f32
    %39 = vector.broadcast %cst_41 : f32 to vector<64x64xf32>
    %40 = arith.mulf %38, %39 : vector<64x64xf32>
    %41 = vector.shape_cast %40 : vector<64x64xf32> to vector<1x8x8x64xf32>
    %c0_42 = arith.constant 0 : index
    %c0_43 = arith.constant 0 : index
    %c0_44 = arith.constant 0 : index
    %c0_45 = arith.constant 0 : index
    %42 = vector.load %arg6[%c0_42, %c0_43, %c0_44, %c0_45] : memref<1x8x8x64xf32, #tpu.memory_space<vmem>>, vector<1x8x8x64xf32>
    tpu.vector_store %arg6[%c0_42, %c0_43, %c0_44, %c0_45], %41 {strides = array<i32>} : memref<1x8x8x64xf32, #tpu.memory_space<vmem>>, vector<1x8x8x64xf32>,
    return
  }
  func.func @transform_0(%arg0: i32, %arg1: i32) -> (i32, i32, i32, i32) {
    %c0_i32 = arith.constant 0 : i32
    %c0_i32_0 = arith.constant 0 : i32
    %c0_i32_1 = arith.constant 0 : i32
    return %arg0, %arg1, %c0_i32, %c0_i32_0 : i32, i32, i32, i32
  }
  func.func @transform_1(%arg0: i32, %arg1: i32) -> (i32, i32, i32, i32) {
    %c1_i32 = arith.constant 1 : i32
    %0 = arith.addi %arg1, %c1_i32 : i32
    %c8_i32 = arith.constant 8 : i32
    %1 = arith.muli %0, %c8_i32 : i32
    %c0_i32 = arith.constant 0 : i32
    %c0_i32_0 = arith.constant 0 : i32
    %c0_i32_1 = arith.constant 0 : i32
    return %arg0, %1, %c0_i32, %c0_i32_0 : i32, i32, i32, i32
  }
  func.func @transform_2(%arg0: i32, %arg1: i32) -> (i32, i32, i32) {
    %c0_i32 = arith.constant 0 : i32
    %c0_i32_0 = arith.constant 0 : i32
    %c0_i32_1 = arith.constant 0 : i32
    %c0_i32_2 = arith.constant 0 : i32
    return %c0_i32, %c0_i32_0, %c0_i32_1 : i32, i32, i32
  }
  func.func @transform_3(%arg0: i32, %arg1: i32) -> (i32, i32) {
    %c0_i32 = arith.constant 0 : i32
    %c0_i32_0 = arith.constant 0 : i32
    %c0_i32_1 = arith.constant 0 : i32
    return %c0_i32, %c0_i32_0 : i32, i32
  }
  func.func @transform_4(%arg0: i32, %arg1: i32) -> (i32, i32, i32, i32) {
    %c0_i32 = arith.constant 0 : i32
    %c0_i32_0 = arith.constant 0 : i32
    %c0_i32_1 = arith.constant 0 : i32
    return %arg0, %arg1, %c0_i32, %c0_i32_0 : i32, i32, i32, i32
  }
}

module attributes {stable_mosaic.version = 11 : i64} {
  func.func @_blur_kernel(%arg0: i32, %arg1: memref<1x18x18x32xf32, #tpu.memory_space<vmem>>, %arg2: memref<1x15x15x32xf32, #tpu.memory_space<vmem>>) attributes {dimension_semantics = [#tpu.dimension_semantics<parallel>], iteration_bounds = array<i64: 2>, scalar_prefetch = 0 : i64, scratch_operands = 0 : i64, tpu.core_type = #tpu.core_type<tc>, window_params = [{transform_indices = @transform_0, window_bounds = array<i64: 1, 18, 18, 32>}, {transform_indices = @transform_1, window_bounds = array<i64: 1, 15, 15, 32>}]} {
    %c0 = arith.constant 0 : index
    %c0_0 = arith.constant 0 : index
    %c0_1 = arith.constant 0 : index
    %c0_2 = arith.constant 0 : index
    %0 = vector.load %arg1[%c0, %c0_0, %c0_1, %c0_2] : memref<1x18x18x32xf32, #tpu.memory_space<vmem>>, vector<1x18x18x32xf32>
    %1 = vector.shape_cast %0 : vector<1x18x18x32xf32> to vector<18x18x32xf32>
    %2 = vector.extract_strided_slice %1 {offsets = [0, 0, 0], sizes = [18, 15, 32], strides = [1, 1, 1]} : vector<18x18x32xf32> to vector<18x15x32xf32>
    %cst = arith.constant 1.250000e-01 : f32
    %3 = vector.broadcast %cst : f32 to vector<18x15x32xf32>
    %4 = arith.mulf %3, %2 : vector<18x15x32xf32>
    %5 = vector.extract_strided_slice %1 {offsets = [0, 1, 0], sizes = [18, 15, 32], strides = [1, 1, 1]} : vector<18x18x32xf32> to vector<18x15x32xf32>
    %cst_3 = arith.constant 3.750000e-01 : f32
    %6 = vector.broadcast %cst_3 : f32 to vector<18x15x32xf32>
    %7 = arith.mulf %6, %5 : vector<18x15x32xf32>
    %8 = arith.addf %4, %7 : vector<18x15x32xf32>
    %9 = vector.extract_strided_slice %1 {offsets = [0, 2, 0], sizes = [18, 15, 32], strides = [1, 1, 1]} : vector<18x18x32xf32> to vector<18x15x32xf32>
    %cst_4 = arith.constant 3.750000e-01 : f32
    %10 = vector.broadcast %cst_4 : f32 to vector<18x15x32xf32>
    %11 = arith.mulf %10, %9 : vector<18x15x32xf32>
    %12 = arith.addf %8, %11 : vector<18x15x32xf32>
    %13 = vector.extract_strided_slice %1 {offsets = [0, 3, 0], sizes = [18, 15, 32], strides = [1, 1, 1]} : vector<18x18x32xf32> to vector<18x15x32xf32>
    %cst_5 = arith.constant 1.250000e-01 : f32
    %14 = vector.broadcast %cst_5 : f32 to vector<18x15x32xf32>
    %15 = arith.mulf %14, %13 : vector<18x15x32xf32>
    %16 = arith.addf %12, %15 : vector<18x15x32xf32>
    %17 = vector.extract_strided_slice %16 {offsets = [0, 0, 0], sizes = [15, 15, 32], strides = [1, 1, 1]} : vector<18x15x32xf32> to vector<15x15x32xf32>
    %cst_6 = arith.constant 1.250000e-01 : f32
    %18 = vector.broadcast %cst_6 : f32 to vector<15x15x32xf32>
    %19 = arith.mulf %18, %17 : vector<15x15x32xf32>
    %20 = vector.extract_strided_slice %16 {offsets = [1, 0, 0], sizes = [15, 15, 32], strides = [1, 1, 1]} : vector<18x15x32xf32> to vector<15x15x32xf32>
    %cst_7 = arith.constant 3.750000e-01 : f32
    %21 = vector.broadcast %cst_7 : f32 to vector<15x15x32xf32>
    %22 = arith.mulf %21, %20 : vector<15x15x32xf32>
    %23 = arith.addf %19, %22 : vector<15x15x32xf32>
    %24 = vector.extract_strided_slice %16 {offsets = [2, 0, 0], sizes = [15, 15, 32], strides = [1, 1, 1]} : vector<18x15x32xf32> to vector<15x15x32xf32>
    %cst_8 = arith.constant 3.750000e-01 : f32
    %25 = vector.broadcast %cst_8 : f32 to vector<15x15x32xf32>
    %26 = arith.mulf %25, %24 : vector<15x15x32xf32>
    %27 = arith.addf %23, %26 : vector<15x15x32xf32>
    %28 = vector.extract_strided_slice %16 {offsets = [3, 0, 0], sizes = [15, 15, 32], strides = [1, 1, 1]} : vector<18x15x32xf32> to vector<15x15x32xf32>
    %cst_9 = arith.constant 1.250000e-01 : f32
    %29 = vector.broadcast %cst_9 : f32 to vector<15x15x32xf32>
    %30 = arith.mulf %29, %28 : vector<15x15x32xf32>
    %31 = arith.addf %27, %30 : vector<15x15x32xf32>
    %32 = vector.shape_cast %31 : vector<15x15x32xf32> to vector<1x15x15x32xf32>
    %c0_10 = arith.constant 0 : index
    %c0_11 = arith.constant 0 : index
    %c0_12 = arith.constant 0 : index
    %c0_13 = arith.constant 0 : index
    %33 = vector.load %arg2[%c0_10, %c0_11, %c0_12, %c0_13] : memref<1x15x15x32xf32, #tpu.memory_space<vmem>>, vector<1x15x15x32xf32>
    tpu.vector_store %arg2[%c0_10, %c0_11, %c0_12, %c0_13], %32 {strides = array<i32>} : memref<1x15x15x32xf32, #tpu.memory_space<vmem>>, vector<1x15x15x32xf32>,
    return
  }
  func.func @transform_0(%arg0: i32) -> (i32, i32, i32, i32) {
    %c0_i32 = arith.constant 0 : i32
    %c0_i32_0 = arith.constant 0 : i32
    %c0_i32_1 = arith.constant 0 : i32
    %c0_i32_2 = arith.constant 0 : i32
    return %arg0, %c0_i32, %c0_i32_0, %c0_i32_1 : i32, i32, i32, i32
  }
  func.func @transform_1(%arg0: i32) -> (i32, i32, i32, i32) {
    %c0_i32 = arith.constant 0 : i32
    %c0_i32_0 = arith.constant 0 : i32
    %c0_i32_1 = arith.constant 0 : i32
    %c0_i32_2 = arith.constant 0 : i32
    return %arg0, %c0_i32, %c0_i32_0, %c0_i32_1 : i32, i32, i32, i32
  }
}

module attributes {stable_mosaic.version = 11 : i64} {
  func.func @_matmul_kernel(%arg0: i32, %arg1: i32, %arg2: i32, %arg3: memref<128x32xbf16, #tpu.memory_space<vmem>>, %arg4: memref<32x64xbf16, #tpu.memory_space<vmem>>, %arg5: memref<1x64xf32, #tpu.memory_space<vmem>>, %arg6: memref<128x64xf32, #tpu.memory_space<vmem>>, %arg7: memref<128x64xf32, #tpu.memory_space<vmem>>) attributes {dimension_semantics = [#tpu.dimension_semantics<parallel>, #tpu.dimension_semantics<parallel>, #tpu.dimension_semantics<arbitrary>], iteration_bounds = array<i64: 1, 1, 1>, scalar_prefetch = 0 : i64, scratch_operands = 0 : i64, tpu.core_type = #tpu.core_type<tc>, window_params = [{transform_indices = @transform_0, window_bounds = array<i64: 128, 32>}, {transform_indices = @transform_1, window_bounds = array<i64: 32, 64>}, {transform_indices = @transform_2, window_bounds = array<i64: 1, 64>}, {transform_indices = @transform_3, window_bounds = array<i64: 128, 64>}, {transform_indices = @transform_4, window_bounds = array<i64: 128, 64>}]} {
    %c0_i32 = arith.constant 0 : i32
    %0 = arith.cmpi eq, %arg2, %c0_i32 : i32
    %1 = arith.extui %0 : i1 to i32
    %c0_i32_0 = arith.constant 0 : i32
    %2 = arith.cmpi ne, %1, %c0_i32_0 : i32
    scf.if %2 {
      %cst_10 = arith.constant 0.000000e+00 : f32
      %12 = vector.broadcast %cst_10 : f32 to vector<128x64xf32>
      %c0_11 = arith.constant 0 : index
      %c0_12 = arith.constant 0 : index
      %13 = vector.load %arg7[%c0_11, %c0_12] : memref<128x64xf32, #tpu.memory_space<vmem>>, vector<128x64xf32>
      tpu.vector_store %arg7[%c0_11, %c0_12], %12 {strides = array<i32>} : memref<128x64xf32, #tpu.memory_space<vmem>>, vector<128x64xf32>,
    } else {
    }
    %c0 = arith.constant 0 : index
    %c0_1 = arith.constant 0 : index
    %3 = vector.load %arg7[%c0, %c0_1] : memref<128x64xf32, #tpu.memory_space<vmem>>, vector<128x64xf32>
    %c0_2 = arith.constant 0 : index
    %c0_3 = arith.constant 0 : index
    %4 = vector.load %arg3[%c0_2, %c0_3] : memref<128x32xbf16, #tpu.memory_space<vmem>>, vector<128x32xbf16>
    %c0_4 = arith.constant 0 : index
    %c0_5 = arith.constant 0 : index
    %5 = vector.load %arg4[%c0_4, %c0_5] : memref<32x64xbf16, #tpu.memory_space<vmem>>, vector<32x64xbf16>
    %cst = arith.constant dense<0.000000e+00> : vector<128x64xf32>
    %6 = tpu.matmul %4, %5, %cst {dimension_numbers = #tpu.dot_dimension_numbers<[1], [0], [0], [1], [0, 0, 1, 1], [], []>} : vector<128x32xbf16>, vector<32x64xbf16>, vector<128x64xf32> -> vector<128x64xf32>
    %7 = arith.addf %3, %6 : vector<128x64xf32>
    %c0_6 = arith.constant 0 : index
    %c0_7 = arith.constant 0 : index
    %8 = vector.load %arg7[%c0_6, %c0_7] : memref<128x64xf32, #tpu.memory_space<vmem>>, vector<128x64xf32>
    tpu.vector_store %arg7[%c0_6, %c0_7], %7 {strides = array<i32>} : memref<128x64xf32, #tpu.memory_space<vmem>>, vector<128x64xf32>,
    %c0_i32_8 = arith.constant 0 : i32
    %9 = arith.cmpi eq, %arg2, %c0_i32_8 : i32
    %10 = arith.extui %9 : i1 to i32
    %c0_i32_9 = arith.constant 0 : i32
    %11 = arith.cmpi ne, %10, %c0_i32_9 : i32
    scf.if %11 {
      %c0_10 = arith.constant 0 : index
      %c0_11 = arith.constant 0 : index
      %12 = vector.load %arg7[%c0_10, %c0_11] : memref<128x64xf32, #tpu.memory_space<vmem>>, vector<128x64xf32>
      %c0_12 = arith.constant 0 : index
      %c0_13 = arith.constant 0 : index
      %13 = vector.load %arg5[%c0_12, %c0_13] : memref<1x64xf32, #tpu.memory_space<vmem>>, vector<1x64xf32>
      %14 = vector.broadcast %13 : vector<1x64xf32> to vector<128x64xf32>
      %15 = arith.addf %12, %14 : vector<128x64xf32>
      %c0_14 = arith.constant 0 : index
      %c0_15 = arith.constant 0 : index
      %16 = vector.load %arg6[%c0_14, %c0_15] : memref<128x64xf32, #tpu.memory_space<vmem>>, vector<128x64xf32>
      %17 = arith.addf %15, %16 : vector<128x64xf32>
      %cst_16 = arith.constant 0.707106769 : f32
      %18 = vector.broadcast %cst_16 : f32 to vector<128x64xf32>
      %19 = arith.mulf %17, %18 : vector<128x64xf32>
      %c0_17 = arith.constant 0 : index
      %c0_18 = arith.constant 0 : index
      %20 = vector.load %arg7[%c0_17, %c0_18] : memref<128x64xf32, #tpu.memory_space<vmem>>, vector<128x64xf32>
      tpu.vector_store %arg7[%c0_17, %c0_18], %19 {strides = array<i32>} : memref<128x64xf32, #tpu.memory_space<vmem>>, vector<128x64xf32>,
    } else {
    }
    return
  }
  func.func @transform_0(%arg0: i32, %arg1: i32, %arg2: i32) -> (i32, i32) {
    %c0_i32 = arith.constant 0 : i32
    return %arg0, %arg2 : i32, i32
  }
  func.func @transform_1(%arg0: i32, %arg1: i32, %arg2: i32) -> (i32, i32) {
    %c0_i32 = arith.constant 0 : i32
    return %arg2, %arg1 : i32, i32
  }
  func.func @transform_2(%arg0: i32, %arg1: i32, %arg2: i32) -> (i32, i32) {
    %c0_i32 = arith.constant 0 : i32
    %c0_i32_0 = arith.constant 0 : i32
    return %c0_i32, %arg1 : i32, i32
  }
  func.func @transform_3(%arg0: i32, %arg1: i32, %arg2: i32) -> (i32, i32) {
    %c0_i32 = arith.constant 0 : i32
    return %arg0, %arg1 : i32, i32
  }
  func.func @transform_4(%arg0: i32, %arg1: i32, %arg2: i32) -> (i32, i32) {
    %c0_i32 = arith.constant 0 : i32
    return %arg0, %arg1 : i32, i32
  }
}

</mosaic_0001>

<llo_original>
// kernel: resblock_forward.6
$region0: #{resblock_forward.6}
  #allocation0 [shape = 'u32[]', space=smem, size = 0x4, offset = 0x4, fixed_abs, tag = 'smem constant byte address 0x4 - core index']
  #allocation1 [shape = 'u32[144,128]{1,0:T(1,128)}', space=vmem, size = 0x12000, scoped, tag = 'internal scratch']
  %s0 = inlined_call_operand.vmem [shape: f32[2,20,20,32], index: 0, kind: input, shape index: {}]
  %s1 = inlined_call_operand.vmem [shape: f32[2,17,17,32], index: 1, kind: output, shape index: {}]
  %s2 = sld [smem:[#allocation0]]
  $region37: #{resblock_forward.6} parent=0
    _
  %s4 = ssub.s32 1, %s2
  %s5 = scalar_select 0, %s4, %s2
  loop: start=0, step=1, limit=4
  $region2: #{resblock_forward.6} parent=0 // loop_pre_header
    _
  $region3: #{resblock_forward.6} parent=0 // loop_header
    %s7 = sphi 0, %s11
    %p8 = scmp.ge.s32.totalorder %s7, 4
    %s17 = sphi 0, %s19
    %s20 = sphi 0, %s17
    %s21 = sphi 0, %s20
    %s37 = sphi 0, %s21
    %s43 = sphi 0, %s45
    %s46 = sphi 0, %s43
    %s47 = sphi 0, %s46
    %s63 = sphi 0, %s47
  $region4: #{resblock_forward.6} parent=0 // loop_header_branch
    %10 = sbr.rel (%p8) target = $region8
  $region5: #{resblock_forward.6} parent=0 // loop_body
    %s12 = ssub.s32 %s7, 1
    %s13 = ssub.s32 %s7, 2
    %s14 = sadd.s32 %s7, 1
    %s15 = ssub.s32 %s7, %s14
    %p16 = scmp.eq.s32.totalorder %s15, 0
    %s18 = sadd.s32 %s17, 1
    %s19 = scalar_select %p16, %s17, %s18
    %p22 = pneg %p16
    %p23 = scmp.eq.s32.totalorder %s7, 1
    %p24 = por %p22, %p23
    %p25 = scmp.ne.s32.totalorder %s17, %s20
    %p26 = scmp.eq.s32.totalorder %s7, 0
    %p27 = por %p25, %p26
    %p28 = scmp.ne.s32.totalorder %s17, %s20
    %p29 = scmp.eq.s32.totalorder %s12, 1
    %p30 = por %p28, %p29
    %p31 = scmp.ne.s32.totalorder %s20, %s21
    %p32 = scmp.eq.s32.totalorder %s12, 0
    %p33 = por %p31, %p32
    %p34 = scmp.ne.s32.totalorder %s20, %s21
    %p35 = scmp.eq.s32.totalorder %s13, 1
    %p36 = por %p34, %p35
    %p38 = scmp.ne.s32.totalorder %s21, %s37
    %p39 = scmp.eq.s32.totalorder %s13, 0
    %p40 = por %p38, %p39
    %s41 = ssub.s32 %s7, %s14
    %p42 = scmp.eq.s32.totalorder %s41, 0
    %s44 = sadd.s32 %s43, 1
    %s45 = scalar_select %p42, %s43, %s44
    %p48 = pneg %p42
    %p49 = scmp.eq.s32.totalorder %s7, 1
    %p50 = por %p48, %p49
    %p51 = scmp.ne.s32.totalorder %s43, %s46
    %p52 = scmp.eq.s32.totalorder %s7, 0
    %p53 = por %p51, %p52
    %p54 = scmp.ne.s32.totalorder %s43, %s46
    %p55 = scmp.eq.s32.totalorder %s12, 1
    %p56 = por %p54, %p55
    %p57 = scmp.ne.s32.totalorder %s46, %s47
    %p58 = scmp.eq.s32.totalorder %s12, 0
    %p59 = por %p57, %p58
    %p60 = scmp.ne.s32.totalorder %s46, %s47
    %p61 = scmp.eq.s32.totalorder %s13, 1
    %p62 = por %p60, %p61
    %p64 = scmp.ne.s32.totalorder %s47, %s63
    %p65 = scmp.eq.s32.totalorder %s13, 0
    %p66 = por %p64, %p65
    %p67 = scmp.le.s32.totalorder 1, %s7
    %p68 = scmp.lt.s32.totalorder %s7, 3
    %p69 = pnand %p67, %p68
    %p70 = pneg %p69
    // Predicated region
    $region9: #{resblock_forward.6} parent=5 // pred_check
      _
    $region10: #{resblock_forward.6} parent=5 // pred_check_branch
      %72 = sbr.rel (%p69) target = $region12
    $region11: #{resblock_forward.6} parent=5 // pred_region
      %s73 = ssub.s32 %s7, 1
    $region12: #{resblock_forward.6} parent=5 // pred_fallthru
      _
    %p74 = scmp.lt.s32.totalorder %s7, 2
    // Predicated region
    $region13: #{resblock_forward.6} parent=5 // pred_check
      %p75 = pneg %p74
    $region14: #{resblock_forward.6} parent=5 // pred_check_branch
      %77 = sbr.rel (%p75) target = $region16
    $region15: #{resblock_forward.6} parent=5 // pred_region
      // Predicated region
      $region17: #{resblock_forward.6} parent=15 // pred_check
        %p78 = pneg %p27
      $region18: #{resblock_forward.6} parent=15 // pred_check_branch
        %80 = sbr.rel (%p78) target = $region20
      $region19: #{resblock_forward.6} parent=15 // pred_region
        %p81 = scmp.lt.s32.totalorder %s7, 1
        %s82 = scalar_select %p81, %s7, 1
        %s83 = smul.addr %s82, 60
        %s84 = smul.addr %s83, 8
        %s85 = scalar_lea.vmem %s0, %s84
      $region20: #{resblock_forward.6} parent=15 // pred_fallthru
        _
    $region16: #{resblock_forward.6} parent=5 // pred_fallthru
      _
    %p86 = scmp.le.s32.totalorder 1, %s7
    %p87 = scmp.lt.s32.totalorder %s7, 3
    %p88 = pnand %p86, %p87
    %p89 = pneg %p88
    // Predicated region
    $region21: #{resblock_forward.6} parent=5 // pred_check
      _
    $region22: #{resblock_forward.6} parent=5 // pred_check_branch
      %91 = sbr.rel (%p88) target = $region24
    $region23: #{resblock_forward.6} parent=5 // pred_region
      %s92 = ssub.s32 %s7, 1
      %p93 = scmp.lt.s32.totalorder %s12, 1
      %s94 = scalar_select %p93, %s12, 1
      %s95 = smul.addr %s94, 60
      %s96 = smul.addr %s95, 8
      %s97 = scalar_lea.vmem %s0, %s96
      %p98 = pneg %p33
      %p99 = pneg %p30
      %p100 = pneg %p59
      %p101 = pneg %p56
      %p102 = scmp.lt.s32.totalorder %s12, 1
      %s103 = scalar_select %p102, %s12, 1
      %s104 = smul.addr %s103, 51
      %s105 = smul.addr %s104, 8
      %s106 = scalar_lea.vmem %s1, %s105
      %p107 = scmp.lt.s32.totalorder %s12, 1
      %s108 = scalar_select %p107, %s12, 1
      %s109 = smul.addr %s108, 60
      %s110 = smul.addr %s109, 8
      %s111 = scalar_lea.vmem %s0, %s110
      %p112 = scmp.lt.s32.totalorder %s12, 1
      %s113 = scalar_select %p112, %s12, 1
      %s114 = smul.addr %s113, 51
      %s115 = smul.addr %s114, 8
      %s116 = scalar_lea.vmem %s1, %s115
      %v117 = vld [vmem:[%s111] sm:$0xff]
      %v118 = vld [vmem:[%s111 + $0x8] sm:$0xff]
      %v119 = vld [vmem:[%s111 + $0x10] sm:$0xf]
      %v120 = vld [vmem:[%s111 + $0x18] sm:$0xff]
      %v121 = vld [vmem:[%s111 + $0x20] sm:$0xff]
      %v122 = vld [vmem:[%s111 + $0x28] sm:$0xf]
      %v123 = vld [vmem:[%s111 + $0x30] sm:$0xff]
      %v124 = vld [vmem:[%s111 + $0x38] sm:$0xff]
      %v125 = vld [vmem:[%s111 + $0x40] sm:$0xf]
      %v126 = vld [vmem:[%s111 + $0x48] sm:$0xff]
      %v127 = vld [vmem:[%s111 + $0x50] sm:$0xff]
      %v128 = vld [vmem:[%s111 + $0x58] sm:$0xf]
      %v129 = vld [vmem:[%s111 + $0x60] sm:$0xff]
      %v130 = vld [vmem:[%s111 + $0x68] sm:$0xff]
      %v131 = vld [vmem:[%s111 + $0x70] sm:$0xf]
      %v132 = vld [vmem:[%s111 + $0x78] sm:$0xff]
      %v133 = vld [vmem:[%s111 + $0x80] sm:$0xff]
      %v134 = vld [vmem:[%s111 + $0x88] sm:$0xf]
      %v135 = vld [vmem:[%s111 + $0x90] sm:$0xff]
      %v136 = vld [vmem:[%s111 + $0x98] sm:$0xff]
      %v137 = vld [vmem:[%s111 + $0xa0] sm:$0xf]
      %v138 = vld [vmem:[%s111 + $0xa8] sm:$0xff]
      %v139 = vld [vmem:[%s111 + $0xb0] sm:$0xff]
      %v140 = vld [vmem:[%s111 + $0xb8] sm:$0xf]
      %v141 = vld [vmem:[%s111 + $0xc0] sm:$0xff]
      %v142 = vld [vmem:[%s111 + $0xc8] sm:$0xff]
      %v143 = vld [vmem:[%s111 + $0xd0] sm:$0xf]
      %v144 = vld [vmem:[%s111 + $0xd8] sm:$0xff]
      %v145 = vld [vmem:[%s111 + $0xe0] sm:$0xff]
      %v146 = vld [vmem:[%s111 + $0xe8] sm:$0xf]
      %v147 = vld [vmem:[%s111 + $0xf0] sm:$0xff]
      %v148 = vld [vmem:[%s111 + $0xf8] sm:$0xff]
      %v149 = vld [vmem:[%s111 + $0x100] sm:$0xf]
      %v150 = vld [vmem:[%s111 + $0x108] sm:$0xff]
      %v151 = vld [vmem:[%s111 + $0x110] sm:$0xff]
      %v152 = vld [vmem:[%s111 + $0x118] sm:$0xf]
      %v153 = vld [vmem:[%s111 + $0x120] sm:$0xff]
      %v154 = vld [vmem:[%s111 + $0x128] sm:$0xff]
      %v155 = vld [vmem:[%s111 + $0x130] sm:$0xf]
      %v156 = vld [vmem:[%s111 + $0x138] sm:$0xff]
      %v157 = vld [vmem:[%s111 + $0x140] sm:$0xff]
      %v158 = vld [vmem:[%s111 + $0x148] sm:$0xf]
      %v159 = vld [vmem:[%s111 + $0x150] sm:$0xff]
      %v160 = vld [vmem:[%s111 + $0x158] sm:$0xff]
      %v161 = vld [vmem:[%s111 + $0x160] sm:$0xf]
      %v162 = vld [vmem:[%s111 + $0x168] sm:$0xff]
      %v163 = vld [vmem:[%s111 + $0x170] sm:$0xff]
      %v164 = vld [vmem:[%s111 + $0x178] sm:$0xf]
      %v165 = vld [vmem:[%s111 + $0x180] sm:$0xff]
      %v166 = vld [vmem:[%s111 + $0x188] sm:$0xff]
      %v167 = vld [vmem:[%s111 + $0x190] sm:$0xf]
      %v168 = vld [vmem:[%s111 + $0x198] sm:$0xff]
      %v169 = vld [vmem:[%s111 + $0x1a0] sm:$0xff]
      %v170 = vld [vmem:[%s111 + $0x1a8] sm:$0xf]
      %v171 = vld [vmem:[%s111 + $0x1b0] sm:$0xff]
      %v172 = vld [vmem:[%s111 + $0x1b8] sm:$0xff]
      %v173 = vld [vmem:[%s111 + $0x1c0] sm:$0xf]
      %v174 = vld [vmem:[%s111 + $0x1c8] sm:$0xff]
      %v175 = vld [vmem:[%s111 + $0x1d0] sm:$0xff]
      %v176 = vld [vmem:[%s111 + $0x1d8] sm:$0xf]
      %v177 = vmul.f32 %v117, 0.125
      %v178 = vmul.f32 %v118, 0.125
      %v179 = vmul.f32 %v119, 0.125
      %v180 = vmul.f32 %v120, 0.125
      %v181 = vmul.f32 %v121, 0.125
      %v182 = vmul.f32 %v122, 0.125
      %v183 = vmul.f32 %v123, 0.125
      %v184 = vmul.f32 %v124, 0.125
      %v185 = vmul.f32 %v125, 0.125
      %v186 = vmul.f32 %v126, 0.125
      %v187 = vmul.f32 %v127, 0.125
      %v188 = vmul.f32 %v128, 0.125
      %v189 = vmul.f32 %v129, 0.125
      %v190 = vmul.f32 %v130, 0.125
      %v191 = vmul.f32 %v131, 0.125
      %v192 = vmul.f32 %v132, 0.125
      %v193 = vmul.f32 %v133, 0.125
      %v194 = vmul.f32 %v134, 0.125
      %v195 = vmul.f32 %v135, 0.125
      %v196 = vmul.f32 %v136, 0.125
      %v197 = vmul.f32 %v137, 0.125
      %v198 = vmul.f32 %v138, 0.125
      %v199 = vmul.f32 %v139, 0.125
      %v200 = vmul.f32 %v140, 0.125
      %v201 = vmul.f32 %v141, 0.125
      %v202 = vmul.f32 %v142, 0.125
      %v203 = vmul.f32 %v143, 0.125
      %v204 = vmul.f32 %v144, 0.125
      %v205 = vmul.f32 %v145, 0.125
      %v206 = vmul.f32 %v146, 0.125
      %v207 = vmul.f32 %v147, 0.125
      %v208 = vmul.f32 %v148, 0.125
      %v209 = vmul.f32 %v149, 0.125
      %v210 = vmul.f32 %v150, 0.125
      %v211 = vmul.f32 %v151, 0.125
      %v212 = vmul.f32 %v152, 0.125
      %v213 = vmul.f32 %v153, 0.125
      %v214 = vmul.f32 %v154, 0.125
      %v215 = vmul.f32 %v155, 0.125
      %v216 = vmul.f32 %v156, 0.125
      %v217 = vmul.f32 %v157, 0.125
      %v218 = vmul.f32 %v158, 0.125
      %v219 = vmul.f32 %v159, 0.125
      %v220 = vmul.f32 %v160, 0.125
      %v221 = vmul.f32 %v161, 0.125
      %v222 = vmul.f32 %v162, 0.125
      %v223 = vmul.f32 %v163, 0.125
      %v224 = vmul.f32 %v164, 0.125
      %v225 = vmul.f32 %v165, 0.125
      %v226 = vmul.f32 %v166, 0.125
      %v227 = vmul.f32 %v167, 0.125
      %v228 = vmul.f32 %v168, 0.125
      %v229 = vmul.f32 %v169, 0.125
      %v230 = vmul.f32 %v170, 0.125
      %v231 = vmul.f32 %v171, 0.125
      %v232 = vmul.f32 %v172, 0.125
      %v233 = vmul.f32 %v173, 0.125
      %v234 = vmul.f32 %v174, 0.125
      %v235 = vmul.f32 %v175, 0.125
      %v236 = vmul.f32 %v176, 0.125
      %v237 = vmul.f32 %v117, 0.375
      %v238 = vmul.f32 %v118, 0.375
      %v239 = vmul.f32 %v119, 0.375
      %v240 = vmul.f32 %v120, 0.375
      %v241 = vmul.f32 %v121, 0.375
      %v242 = vmul.f32 %v122, 0.375
      %v243 = vmul.f32 %v123, 0.375
      %v244 = vmul.f32 %v124, 0.375
      %v245 = vmul.f32 %v125, 0.375
      %v246 = vmul.f32 %v126, 0.375
      %v247 = vmul.f32 %v127, 0.375
      %v248 = vmul.f32 %v128, 0.375
      %v249 = vmul.f32 %v129, 0.375
      %v250 = vmul.f32 %v130, 0.375
      %v251 = vmul.f32 %v131, 0.375
      %v252 = vmul.f32 %v132, 0.375
      %v253 = vmul.f32 %v133, 0.375
      %v254 = vmul.f32 %v134, 0.375
      %v255 = vmul.f32 %v135, 0.375
      %v256 = vmul.f32 %v136, 0.375
      %v257 = vmul.f32 %v137, 0.375
      %v258 = vmul.f32 %v138, 0.375
      %v259 = vmul.f32 %v139, 0.375
      %v260 = vmul.f32 %v140, 0.375
      %v261 = vmul.f32 %v141, 0.375
      %v262 = vmul.f32 %v142, 0.375
      %v263 = vmul.f32 %v143, 0.375
      %v264 = vmul.f32 %v144, 0.375
      %v265 = vmul.f32 %v145, 0.375
      %v266 = vmul.f32 %v146, 0.375
      %v267 = vmul.f32 %v147, 0.375
      %v268 = vmul.f32 %v148, 0.375
      %v269 = vmul.f32 %v149, 0.375
      %v270 = vmul.f32 %v150, 0.375
      %v271 = vmul.f32 %v151, 0.375
      %v272 = vmul.f32 %v152, 0.375
      %v273 = vmul.f32 %v153, 0.375
      %v274 = vmul.f32 %v154, 0.375
      %v275 = vmul.f32 %v155, 0.375
      %v276 = vmul.f32 %v156, 0.375
      %v277 = vmul.f32 %v157, 0.375
      %v278 = vmul.f32 %v158, 0.375
      %v279 = vmul.f32 %v159, 0.375
      %v280 = vmul.f32 %v160, 0.375
      %v281 = vmul.f32 %v161, 0.375
      %v282 = vmul.f32 %v162, 0.375
      %v283 = vmul.f32 %v163, 0.375
      %v284 = vmul.f32 %v164, 0.375
      %v285 = vmul.f32 %v165, 0.375
      %v286 = vmul.f32 %v166, 0.375
      %v287 = vmul.f32 %v167, 0.375
      %v288 = vmul.f32 %v168, 0.375
      %v289 = vmul.f32 %v169, 0.375
      %v290 = vmul.f32 %v170, 0.375
      %v291 = vmul.f32 %v171, 0.375
      %v292 = vmul.f32 %v172, 0.375
      %v293 = vmul.f32 %v173, 0.375
      %v294 = vmul.f32 %v174, 0.375
      %v295 = vmul.f32 %v175, 0.375
      %v296 = vmul.f32 %v176, 0.375
      %vm357 = vcmask 1046528
      %v358 = vrot.slane %v237, 1
      %v359 = vrot.slane %v238, 1
      %v360 = vsel %vm357, %v358, %v359
      %v361 = vrot.slane %v239, 1
      %v362 = vsel %vm357, %v359, %v361
      %v363 = vrot.slane %v240, 1
      %v364 = vrot.slane %v241, 1
      %v365 = vsel %vm357, %v363, %v364
      %v366 = vrot.slane %v242, 1
      %v367 = vsel %vm357, %v364, %v366
      %v368 = vrot.slane %v243, 1
      %v369 = vrot.slane %v244, 1
      %v370 = vsel %vm357, %v368, %v369
      %v371 = vrot.slane %v245, 1
      %v372 = vsel %vm357, %v369, %v371
      %v373 = vrot.slane %v246, 1
      %v374 = vrot.slane %v247, 1
      %v375 = vsel %vm357, %v373, %v374
      %v376 = vrot.slane %v248, 1
      %v377 = vsel %vm357, %v374, %v376
      %v378 = vrot.slane %v249, 1
      %v379 = vrot.slane %v250, 1
      %v380 = vsel %vm357, %v378, %v379
      %v381 = vrot.slane %v251, 1
      %v382 = vsel %vm357, %v379, %v381
      %v383 = vrot.slane %v252, 1
      %v384 = vrot.slane %v253, 1
      %v385 = vsel %vm357, %v383, %v384
      %v386 = vrot.slane %v254, 1
      %v387 = vsel %vm357, %v384, %v386
      %v388 = vrot.slane %v255, 1
      %v389 = vrot.slane %v256, 1
      %v390 = vsel %vm357, %v388, %v389
      %v391 = vrot.slane %v257, 1
      %v392 = vsel %vm357, %v389, %v391
      %v393 = vrot.slane %v258, 1
      %v394 = vrot.slane %v259, 1
      %v395 = vsel %vm357, %v393, %v394
      %v396 = vrot.slane %v260, 1
      %v397 = vsel %vm357, %v394, %v396
      %v398 = vrot.slane %v261, 1
      %v399 = vrot.slane %v262, 1
      %v400 = vsel %vm357, %v398, %v399
      %v401 = vrot.slane %v263, 1
      %v402 = vsel %vm357, %v399, %v401
      %v403 = vrot.slane %v264, 1
      %v404 = vrot.slane %v265, 1
      %v405 = vsel %vm357, %v403, %v404
      %v406 = vrot.slane %v266, 1
      %v407 = vsel %vm357, %v404, %v406
      %v408 = vrot.slane %v267, 1
      %v409 = vrot.slane %v268, 1
      %v410 = vsel %vm357, %v408, %v409
      %v411 = vrot.slane %v269, 1
      %v412 = vsel %vm357, %v409, %v411
      %v413 = vrot.slane %v270, 1
      %v414 = vrot.slane %v271, 1
      %v415 = vsel %vm357, %v413, %v414
      %v416 = vrot.slane %v272, 1
      %v417 = vsel %vm357, %v414, %v416
      %v418 = vrot.slane %v273, 1
      %v419 = vrot.slane %v274, 1
      %v420 = vsel %vm357, %v418, %v419
      %v421 = vrot.slane %v275, 1
      %v422 = vsel %vm357, %v419, %v421
      %v423 = vrot.slane %v276, 1
      %v424 = vrot.slane %v277, 1
      %v425 = vsel %vm357, %v423, %v424
      %v426 = vrot.slane %v278, 1
      %v427 = vsel %vm357, %v424, %v426
      %v428 = vrot.slane %v279, 1
      %v429 = vrot.slane %v280, 1
      %v430 = vsel %vm357, %v428, %v429
      %v431 = vrot.slane %v281, 1
      %v432 = vsel %vm357, %v429, %v431
      %v433 = vrot.slane %v282, 1
      %v434 = vrot.slane %v283, 1
      %v435 = vsel %vm357, %v433, %v434
      %v436 = vrot.slane %v284, 1
      %v437 = vsel %vm357, %v434, %v436
      %v438 = vrot.slane %v285, 1
      %v439 = vrot.slane %v286, 1
      %v440 = vsel %vm357, %v438, %v439
      %v441 = vrot.slane %v287, 1
      %v442 = vsel %vm357, %v439, %v441
      %v443 = vrot.slane %v288, 1
      %v444 = vrot.slane %v289, 1
      %v445 = vsel %vm357, %v443, %v444
      %v446 = vrot.slane %v290, 1
      %v447 = vsel %vm357, %v444, %v446
      %v448 = vrot.slane %v291, 1
      %v449 = vrot.slane %v292, 1
      %v450 = vsel %vm357, %v448, %v449
      %v451 = vrot.slane %v293, 1
      %v452 = vsel %vm357, %v449, %v451
      %v453 = vrot.slane %v294, 1
      %v454 = vrot.slane %v295, 1
      %v455 = vsel %vm357, %v453, %v454
      %v456 = vrot.slane %v296, 1
      %v457 = vsel %vm357, %v454, %v456
      %v518 = vadd.f32 %v177, %v360
      %v519 = vadd.f32 %v178, %v362
      %v520 = vadd.f32 %v179, %v361
      %v521 = vadd.f32 %v180, %v365
      %v522 = vadd.f32 %v181, %v367
      %v523 = vadd.f32 %v182, %v366
      %v524 = vadd.f32 %v183, %v370
      %v525 = vadd.f32 %v184, %v372
      %v526 = vadd.f32 %v185, %v371
      %v527 = vadd.f32 %v186, %v375
      %v528 = vadd.f32 %v187, %v377
      %v529 = vadd.f32 %v188, %v376
      %v530 = vadd.f32 %v189, %v380
      %v531 = vadd.f32 %v190, %v382
      %v532 = vadd.f32 %v191, %v381
      %v533 = vadd.f32 %v192, %v385
      %v534 = vadd.f32 %v193, %v387
      %v535 = vadd.f32 %v194, %v386
      %v536 = vadd.f32 %v195, %v390
      %v537 = vadd.f32 %v196, %v392
      %v538 = vadd.f32 %v197, %v391
      %v539 = vadd.f32 %v198, %v395
      %v540 = vadd.f32 %v199, %v397
      %v541 = vadd.f32 %v200, %v396
      %v542 = vadd.f32 %v201, %v400
      %v543 = vadd.f32 %v202, %v402
      %v544 = vadd.f32 %v203, %v401
      %v545 = vadd.f32 %v204, %v405
      %v546 = vadd.f32 %v205, %v407
      %v547 = vadd.f32 %v206, %v406
      %v548 = vadd.f32 %v207, %v410
      %v549 = vadd.f32 %v208, %v412
      %v550 = vadd.f32 %v209, %v411
      %v551 = vadd.f32 %v210, %v415
      %v552 = vadd.f32 %v211, %v417
      %v553 = vadd.f32 %v212, %v416
      %v554 = vadd.f32 %v213, %v420
      %v555 = vadd.f32 %v214, %v422
      %v556 = vadd.f32 %v215, %v421
      %v557 = vadd.f32 %v216, %v425
      %v558 = vadd.f32 %v217, %v427
      %v559 = vadd.f32 %v218, %v426
      %v560 = vadd.f32 %v219, %v430
      %v561 = vadd.f32 %v220, %v432
      %v562 = vadd.f32 %v221, %v431
      %v563 = vadd.f32 %v222, %v435
      %v564 = vadd.f32 %v223, %v437
      %v565 = vadd.f32 %v224, %v436
      %v566 = vadd.f32 %v225, %v440
      %v567 = vadd.f32 %v226, %v442
      %v568 = vadd.f32 %v227, %v441
      %v569 = vadd.f32 %v228, %v445
      %v570 = vadd.f32 %v229, %v447
      %v571 = vadd.f32 %v230, %v446
      %v572 = vadd.f32 %v231, %v450
      %v573 = vadd.f32 %v232, %v452
      %v574 = vadd.f32 %v233, %v451
      %v575 = vadd.f32 %v234, %v455
      %v576 = vadd.f32 %v235, %v457
      %v577 = vadd.f32 %v236, %v456
      %vm578 = vcmask 1045504
      %v579 = vrot.slane %v237, 2
      %v580 = vrot.slane %v238, 2
      %v581 = vsel %vm578, %v579, %v580
      %v582 = vrot.slane %v239, 2
      %v583 = vsel %vm578, %v580, %v582
      %v584 = vrot.slane %v240, 2
      %v585 = vrot.slane %v241, 2
      %v586 = vsel %vm578, %v584, %v585
      %v587 = vrot.slane %v242, 2
      %v588 = vsel %vm578, %v585, %v587
      %v589 = vrot.slane %v243, 2
      %v590 = vrot.slane %v244, 2
      %v591 = vsel %vm578, %v589, %v590
      %v592 = vrot.slane %v245, 2
      %v593 = vsel %vm578, %v590, %v592
      %v594 = vrot.slane %v246, 2
      %v595 = vrot.slane %v247, 2
      %v596 = vsel %vm578, %v594, %v595
      %v597 = vrot.slane %v248, 2
      %v598 = vsel %vm578, %v595, %v597
      %v599 = vrot.slane %v249, 2
      %v600 = vrot.slane %v250, 2
      %v601 = vsel %vm578, %v599, %v600
      %v602 = vrot.slane %v251, 2
      %v603 = vsel %vm578, %v600, %v602
      %v604 = vrot.slane %v252, 2
      %v605 = vrot.slane %v253, 2
      %v606 = vsel %vm578, %v604, %v605
      %v607 = vrot.slane %v254, 2
      %v608 = vsel %vm578, %v605, %v607
      %v609 = vrot.slane %v255, 2
      %v610 = vrot.slane %v256, 2
      %v611 = vsel %vm578, %v609, %v610
      %v612 = vrot.slane %v257, 2
      %v613 = vsel %vm578, %v610, %v612
      %v614 = vrot.slane %v258, 2
      %v615 = vrot.slane %v259, 2
      %v616 = vsel %vm578, %v614, %v615
      %v617 = vrot.slane %v260, 2
      %v618 = vsel %vm578, %v615, %v617
      %v619 = vrot.slane %v261, 2
      %v620 = vrot.slane %v262, 2
      %v621 = vsel %vm578, %v619, %v620
      %v622 = vrot.slane %v263, 2
      %v623 = vsel %vm578, %v620, %v622
      %v624 = vrot.slane %v264, 2
      %v625 = vrot.slane %v265, 2
      %v626 = vsel %vm578, %v624, %v625
      %v627 = vrot.slane %v266, 2
      %v628 = vsel %vm578, %v625, %v627
      %v629 = vrot.slane %v267, 2
      %v630 = vrot.slane %v268, 2
      %v631 = vsel %vm578, %v629, %v630
      %v632 = vrot.slane %v269, 2
      %v633 = vsel %vm578, %v630, %v632
      %v634 = vrot.slane %v270, 2
      %v635 = vrot.slane %v271, 2
      %v636 = vsel %vm578, %v634, %v635
      %v637 = vrot.slane %v272, 2
      %v638 = vsel %vm578, %v635, %v637
      %v639 = vrot.slane %v273, 2
      %v640 = vrot.slane %v274, 2
      %v641 = vsel %vm578, %v639, %v640
      %v642 = vrot.slane %v275, 2
      %v643 = vsel %vm578, %v640, %v642
      %v644 = vrot.slane %v276, 2
      %v645 = vrot.slane %v277, 2
      %v646 = vsel %vm578, %v644, %v645
      %v647 = vrot.slane %v278, 2
      %v648 = vsel %vm578, %v645, %v647
      %v649 = vrot.slane %v279, 2
      %v650 = vrot.slane %v280, 2
      %v651 = vsel %vm578, %v649, %v650
      %v652 = vrot.slane %v281, 2
      %v653 = vsel %vm578, %v650, %v652
      %v654 = vrot.slane %v282, 2
      %v655 = vrot.slane %v283, 2
      %v656 = vsel %vm578, %v654, %v655
      %v657 = vrot.slane %v284, 2
      %v658 = vsel %vm578, %v655, %v657
      %v659 = vrot.slane %v285, 2
      %v660 = vrot.slane %v286, 2
      %v661 = vsel %vm578, %v659, %v660
      %v662 = vrot.slane %v287, 2
      %v663 = vsel %vm578, %v660, %v662
      %v664 = vrot.slane %v288, 2
      %v665 = vrot.slane %v289, 2
      %v666 = vsel %vm578, %v664, %v665
      %v667 = vrot.slane %v290, 2
      %v668 = vsel %vm578, %v665, %v667
      %v669 = vrot.slane %v291, 2
      %v670 = vrot.slane %v292, 2
      %v671 = vsel %vm578, %v669, %v670
      %v672 = vrot.slane %v293, 2
      %v673 = vsel %vm578, %v670, %v672
      %v674 = vrot.slane %v294, 2
      %v675 = vrot.slane %v295, 2
      %v676 = vsel %vm578, %v674, %v675
      %v677 = vrot.slane %v296, 2
      %v678 = vsel %vm578, %v675, %v677
      %v739 = vadd.f32 %v518, %v581
      %v740 = vadd.f32 %v519, %v583
      %v741 = vadd.f32 %v520, %v582
      %v742 = vadd.f32 %v521, %v586
      %v743 = vadd.f32 %v522, %v588
      %v744 = vadd.f32 %v523, %v587
      %v745 = vadd.f32 %v524, %v591
      %v746 = vadd.f32 %v525, %v593
      %v747 = vadd.f32 %v526, %v592
      %v748 = vadd.f32 %v527, %v596
      %v749 = vadd.f32 %v528, %v598
      %v750 = vadd.f32 %v529, %v597
      %v751 = vadd.f32 %v530, %v601
      %v752 = vadd.f32 %v531, %v603
      %v753 = vadd.f32 %v532, %v602
      %v754 = vadd.f32 %v533, %v606
      %v755 = vadd.f32 %v534, %v608
      %v756 = vadd.f32 %v535, %v607
      %v757 = vadd.f32 %v536, %v611
      %v758 = vadd.f32 %v537, %v613
      %v759 = vadd.f32 %v538, %v612
      %v760 = vadd.f32 %v539, %v616
      %v761 = vadd.f32 %v540, %v618
      %v762 = vadd.f32 %v541, %v617
      %v763 = vadd.f32 %v542, %v621
      %v764 = vadd.f32 %v543, %v623
      %v765 = vadd.f32 %v544, %v622
      %v766 = vadd.f32 %v545, %v626
      %v767 = vadd.f32 %v546, %v628
      %v768 = vadd.f32 %v547, %v627
      %v769 = vadd.f32 %v548, %v631
      %v770 = vadd.f32 %v549, %v633
      %v771 = vadd.f32 %v550, %v632
      %v772 = vadd.f32 %v551, %v636
      %v773 = vadd.f32 %v552, %v638
      %v774 = vadd.f32 %v553, %v637
      %v775 = vadd.f32 %v554, %v641
      %v776 = vadd.f32 %v555, %v643
      %v777 = vadd.f32 %v556, %v642
      %v778 = vadd.f32 %v557, %v646
      %v779 = vadd.f32 %v558, %v648
      %v780 = vadd.f32 %v559, %v647
      %v781 = vadd.f32 %v560, %v651
      %v782 = vadd.f32 %v561, %v653
      %v783 = vadd.f32 %v562, %v652
      %v784 = vadd.f32 %v563, %v656
      %v785 = vadd.f32 %v564, %v658
      %v786 = vadd.f32 %v565, %v657
      %v787 = vadd.f32 %v566, %v661
      %v788 = vadd.f32 %v567, %v663
      %v789 = vadd.f32 %v568, %v662
      %v790 = vadd.f32 %v569, %v666
      %v791 = vadd.f32 %v570, %v668
      %v792 = vadd.f32 %v571, %v667
      %v793 = vadd.f32 %v572, %v671
      %v794 = vadd.f32 %v573, %v673
      %v795 = vadd.f32 %v574, %v672
      %v796 = vadd.f32 %v575, %v676
      %v797 = vadd.f32 %v576, %v678
      %v798 = vadd.f32 %v577, %v677
      %vm859 = vcmask 1044480
      %v860 = vrot.slane %v177, 3
      %v861 = vrot.slane %v178, 3
      %v862 = vsel %vm859, %v860, %v861
      %v863 = vrot.slane %v179, 3
      %v864 = vsel %vm859, %v861, %v863
      %v865 = vrot.slane %v180, 3
      %v866 = vrot.slane %v181, 3
      %v867 = vsel %vm859, %v865, %v866
      %v868 = vrot.slane %v182, 3
      %v869 = vsel %vm859, %v866, %v868
      %v870 = vrot.slane %v183, 3
      %v871 = vrot.slane %v184, 3
      %v872 = vsel %vm859, %v870, %v871
      %v873 = vrot.slane %v185, 3
      %v874 = vsel %vm859, %v871, %v873
      %v875 = vrot.slane %v186, 3
      %v876 = vrot.slane %v187, 3
      %v877 = vsel %vm859, %v875, %v876
      %v878 = vrot.slane %v188, 3
      %v879 = vsel %vm859, %v876, %v878
      %v880 = vrot.slane %v189, 3
      %v881 = vrot.slane %v190, 3
      %v882 = vsel %vm859, %v880, %v881
      %v883 = vrot.slane %v191, 3
      %v884 = vsel %vm859, %v881, %v883
      %v885 = vrot.slane %v192, 3
      %v886 = vrot.slane %v193, 3
      %v887 = vsel %vm859, %v885, %v886
      %v888 = vrot.slane %v194, 3
      %v889 = vsel %vm859, %v886, %v888
      %v890 = vrot.slane %v195, 3
      %v891 = vrot.slane %v196, 3
      %v892 = vsel %vm859, %v890, %v891
      %v893 = vrot.slane %v197, 3
      %v894 = vsel %vm859, %v891, %v893
      %v895 = vrot.slane %v198, 3
      %v896 = vrot.slane %v199, 3
      %v897 = vsel %vm859, %v895, %v896
      %v898 = vrot.slane %v200, 3
      %v899 = vsel %vm859, %v896, %v898
      %v900 = vrot.slane %v201, 3
      %v901 = vrot.slane %v202, 3
      %v902 = vsel %vm859, %v900, %v901
      %v903 = vrot.slane %v203, 3
      %v904 = vsel %vm859, %v901, %v903
      %v905 = vrot.slane %v204, 3
      %v906 = vrot.slane %v205, 3
      %v907 = vsel %vm859, %v905, %v906
      %v908 = vrot.slane %v206, 3
      %v909 = vsel %vm859, %v906, %v908
      %v910 = vrot.slane %v207, 3
      %v911 = vrot.slane %v208, 3
      %v912 = vsel %vm859, %v910, %v911
      %v913 = vrot.slane %v209, 3
      %v914 = vsel %vm859, %v911, %v913
      %v915 = vrot.slane %v210, 3
      %v916 = vrot.slane %v211, 3
      %v917 = vsel %vm859, %v915, %v916
      %v918 = vrot.slane %v212, 3
      %v919 = vsel %vm859, %v916, %v918
      %v920 = vrot.slane %v213, 3
      %v921 = vrot.slane %v214, 3
      %v922 = vsel %vm859, %v920, %v921
      %v923 = vrot.slane %v215, 3
      %v924 = vsel %vm859, %v921, %v923
      %v925 = vrot.slane %v216, 3
      %v926 = vrot.slane %v217, 3
      %v927 = vsel %vm859, %v925, %v926
      %v928 = vrot.slane %v218, 3
      %v929 = vsel %vm859, %v926, %v928
      %v930 = vrot.slane %v219, 3
      %v931 = vrot.slane %v220, 3
      %v932 = vsel %vm859, %v930, %v931
      %v933 = vrot.slane %v221, 3
      %v934 = vsel %vm859, %v931, %v933
      %v935 = vrot.slane %v222, 3
      %v936 = vrot.slane %v223, 3
      %v937 = vsel %vm859, %v935, %v936
      %v938 = vrot.slane %v224, 3
      %v939 = vsel %vm859, %v936, %v938
      %v940 = vrot.slane %v225, 3
      %v941 = vrot.slane %v226, 3
      %v942 = vsel %vm859, %v940, %v941
      %v943 = vrot.slane %v227, 3
      %v944 = vsel %vm859, %v941, %v943
      %v945 = vrot.slane %v228, 3
      %v946 = vrot.slane %v229, 3
      %v947 = vsel %vm859, %v945, %v946
      %v948 = vrot.slane %v230, 3
      %v949 = vsel %vm859, %v946, %v948
      %v950 = vrot.slane %v231, 3
      %v951 = vrot.slane %v232, 3
      %v952 = vsel %vm859, %v950, %v951
      %v953 = vrot.slane %v233, 3
      %v954 = vsel %vm859, %v951, %v953
      %v955 = vrot.slane %v234, 3
      %v956 = vrot.slane %v235, 3
      %v957 = vsel %vm859, %v955, %v956
      %v958 = vrot.slane %v236, 3
      %v959 = vsel %vm859, %v956, %v958
      %v1020 = vadd.f32 %v739, %v862
      %v1021 = vadd.f32 %v740, %v864
      %v1022 = vadd.f32 %v741, %v863
      %v1023 = vadd.f32 %v742, %v867
      %v1024 = vadd.f32 %v743, %v869
      %v1025 = vadd.f32 %v744, %v868
      %v1026 = vadd.f32 %v745, %v872
      %v1027 = vadd.f32 %v746, %v874
      %v1028 = vadd.f32 %v747, %v873
      %v1029 = vadd.f32 %v748, %v877
      %v1030 = vadd.f32 %v749, %v879
      %v1031 = vadd.f32 %v750, %v878
      %v1032 = vadd.f32 %v751, %v882
      %v1033 = vadd.f32 %v752, %v884
      %v1034 = vadd.f32 %v753, %v883
      %v1035 = vadd.f32 %v754, %v887
      %v1036 = vadd.f32 %v755, %v889
      %v1037 = vadd.f32 %v756, %v888
      %v1038 = vadd.f32 %v757, %v892
      %v1039 = vadd.f32 %v758, %v894
      %v1040 = vadd.f32 %v759, %v893
      %v1041 = vadd.f32 %v760, %v897
      %v1042 = vadd.f32 %v761, %v899
      %v1043 = vadd.f32 %v762, %v898
      %v1044 = vadd.f32 %v763, %v902
      %v1045 = vadd.f32 %v764, %v904
      %v1046 = vadd.f32 %v765, %v903
      %v1047 = vadd.f32 %v766, %v907
      %v1048 = vadd.f32 %v767, %v909
      %v1049 = vadd.f32 %v768, %v908
      %v1050 = vadd.f32 %v769, %v912
      %v1051 = vadd.f32 %v770, %v914
      %v1052 = vadd.f32 %v771, %v913
      %v1053 = vadd.f32 %v772, %v917
      %v1054 = vadd.f32 %v773, %v919
      %v1055 = vadd.f32 %v774, %v918
      %v1056 = vadd.f32 %v775, %v922
      %v1057 = vadd.f32 %v776, %v924
      %v1058 = vadd.f32 %v777, %v923
      %v1059 = vadd.f32 %v778, %v927
      %v1060 = vadd.f32 %v779, %v929
      %v1061 = vadd.f32 %v780, %v928
      %v1062 = vadd.f32 %v781, %v932
      %v1063 = vadd.f32 %v782, %v934
      %v1064 = vadd.f32 %v783, %v933
      %v1065 = vadd.f32 %v784, %v937
      %v1066 = vadd.f32 %v785, %v939
      %v1067 = vadd.f32 %v786, %v938
      %v1068 = vadd.f32 %v787, %v942
      %v1069 = vadd.f32 %v788, %v944
      %v1070 = vadd.f32 %v789, %v943
      %v1071 = vadd.f32 %v790, %v947
      %v1072 = vadd.f32 %v791, %v949
      %v1073 = vadd.f32 %v792, %v948
      %v1074 = vadd.f32 %v793, %v952
      %v1075 = vadd.f32 %v794, %v954
      %v1076 = vadd.f32 %v795, %v953
      %v1077 = vadd.f32 %v796, %v957
      %v1078 = vadd.f32 %v797, %v959
      %v1079 = vadd.f32 %v798, %v958
      %v1080 = vmul.f32 %v1020, 0.125
      %v1081 = vmul.f32 %v1021, 0.125
      %v1082 = vmul.f32 %v1022, 0.125
      %v1083 = vmul.f32 %v1023, 0.125
      %v1084 = vmul.f32 %v1024, 0.125
      %v1085 = vmul.f32 %v1025, 0.125
      %v1086 = vmul.f32 %v1026, 0.125
      %v1087 = vmul.f32 %v1027, 0.125
      %v1088 = vmul.f32 %v1028, 0.125
      %v1089 = vmul.f32 %v1029, 0.125
      %v1090 = vmul.f32 %v1030, 0.125
      %v1091 = vmul.f32 %v1031, 0.125
      %v1092 = vmul.f32 %v1032, 0.125
      %v1093 = vmul.f32 %v1033, 0.125
      %v1094 = vmul.f32 %v1034, 0.125
      %v1095 = vmul.f32 %v1035, 0.125
      %v1096 = vmul.f32 %v1036, 0.125
      %v1097 = vmul.f32 %v1037, 0.125
      %v1098 = vmul.f32 %v1038, 0.125
      %v1099 = vmul.f32 %v1039, 0.125
      %v1100 = vmul.f32 %v1040, 0.125
      %v1101 = vmul.f32 %v1041, 0.125
      %v1102 = vmul.f32 %v1042, 0.125
      %v1103 = vmul.f32 %v1043, 0.125
      %v1104 = vmul.f32 %v1044, 0.125
      %v1105 = vmul.f32 %v1045, 0.125
      %v1106 = vmul.f32 %v1046, 0.125
      %v1107 = vmul.f32 %v1047, 0.125
      %v1108 = vmul.f32 %v1048, 0.125
      %v1109 = vmul.f32 %v1049, 0.125
      %v1110 = vmul.f32 %v1050, 0.125
      %v1111 = vmul.f32 %v1051, 0.125
      %v1112 = vmul.f32 %v1052, 0.125
      %v1113 = vmul.f32 %v1053, 0.125
      %v1114 = vmul.f32 %v1054, 0.125
      %v1115 = vmul.f32 %v1055, 0.125
      %v1116 = vmul.f32 %v1056, 0.125
      %v1117 = vmul.f32 %v1057, 0.125
      %v1118 = vmul.f32 %v1058, 0.125
      %v1119 = vmul.f32 %v1059, 0.125
      %v1120 = vmul.f32 %v1060, 0.125
      %v1121 = vmul.f32 %v1061, 0.125
      %v1122 = vmul.f32 %v1062, 0.125
      %v1123 = vmul.f32 %v1063, 0.125
      %v1124 = vmul.f32 %v1064, 0.125
      %v1125 = vmul.f32 %v1065, 0.125
      %v1126 = vmul.f32 %v1066, 0.125
      %v1127 = vmul.f32 %v1067, 0.125
      %v1128 = vmul.f32 %v1068, 0.125
      %v1129 = vmul.f32 %v1069, 0.125
      %v1130 = vmul.f32 %v1070, 0.125
      %v1131 = vmul.f32 %v1023, 0.375
      %v1132 = vmul.f32 %v1024, 0.375
      %v1133 = vmul.f32 %v1025, 0.375
      %v1134 = vmul.f32 %v1026, 0.375
      %v1135 = vmul.f32 %v1027, 0.375
      %v1136 = vmul.f32 %v1028, 0.375
      %v1137 = vmul.f32 %v1029, 0.375
      %v1138 = vmul.f32 %v1030, 0.375
      %v1139 = vmul.f32 %v1031, 0.375
      %v1140 = vmul.f32 %v1032, 0.375
      %v1141 = vmul.f32 %v1033, 0.375
      %v1142 = vmul.f32 %v1034, 0.375
      %v1143 = vmul.f32 %v1035, 0.375
      %v1144 = vmul.f32 %v1036, 0.375
      %v1145 = vmul.f32 %v1037, 0.375
      %v1146 = vmul.f32 %v1038, 0.375
      %v1147 = vmul.f32 %v1039, 0.375
      %v1148 = vmul.f32 %v1040, 0.375
      %v1149 = vmul.f32 %v1041, 0.375
      %v1150 = vmul.f32 %v1042, 0.375
      %v1151 = vmul.f32 %v1043, 0.375
      %v1152 = vmul.f32 %v1044, 0.375
      %v1153 = vmul.f32 %v1045, 0.375
      %v1154 = vmul.f32 %v1046, 0.375
      %v1155 = vmul.f32 %v1047, 0.375
      %v1156 = vmul.f32 %v1048, 0.375
      %v1157 = vmul.f32 %v1049, 0.375
      %v1158 = vmul.f32 %v1050, 0.375
      %v1159 = vmul.f32 %v1051, 0.375
      %v1160 = vmul.f32 %v1052, 0.375
      %v1161 = vmul.f32 %v1053, 0.375
      %v1162 = vmul.f32 %v1054, 0.375
      %v1163 = vmul.f32 %v1055, 0.375
      %v1164 = vmul.f32 %v1056, 0.375
      %v1165 = vmul.f32 %v1057, 0.375
      %v1166 = vmul.f32 %v1058, 0.375
      %v1167 = vmul.f32 %v1059, 0.375
      %v1168 = vmul.f32 %v1060, 0.375
      %v1169 = vmul.f32 %v1061, 0.375
      %v1170 = vmul.f32 %v1062, 0.375
      %v1171 = vmul.f32 %v1063, 0.375
      %v1172 = vmul.f32 %v1064, 0.375
      %v1173 = vmul.f32 %v1065, 0.375
      %v1174 = vmul.f32 %v1066, 0.375
      %v1175 = vmul.f32 %v1067, 0.375
      %v1176 = vmul.f32 %v1068, 0.375
      %v1177 = vmul.f32 %v1069, 0.375
      %v1178 = vmul.f32 %v1070, 0.375
      %v1179 = vmul.f32 %v1071, 0.375
      %v1180 = vmul.f32 %v1072, 0.375
      %v1181 = vmul.f32 %v1073, 0.375
      %v1182 = vadd.f32 %v1080, %v1131
      %v1183 = vadd.f32 %v1081, %v1132
      %v1184 = vadd.f32 %v1082, %v1133
      %v1185 = vadd.f32 %v1083, %v1134
      %v1186 = vadd.f32 %v1084, %v1135
      %v1187 = vadd.f32 %v1085, %v1136
      %v1188 = vadd.f32 %v1086, %v1137
      %v1189 = vadd.f32 %v1087, %v1138
      %v1190 = vadd.f32 %v1088, %v1139
      %v1191 = vadd.f32 %v1089, %v1140
      %v1192 = vadd.f32 %v1090, %v1141
      %v1193 = vadd.f32 %v1091, %v1142
      %v1194 = vadd.f32 %v1092, %v1143
      %v1195 = vadd.f32 %v1093, %v1144
      %v1196 = vadd.f32 %v1094, %v1145
      %v1197 = vadd.f32 %v1095, %v1146
      %v1198 = vadd.f32 %v1096, %v1147
      %v1199 = vadd.f32 %v1097, %v1148
      %v1200 = vadd.f32 %v1098, %v1149
      %v1201 = vadd.f32 %v1099, %v1150
      %v1202 = vadd.f32 %v1100, %v1151
      %v1203 = vadd.f32 %v1101, %v1152
      %v1204 = vadd.f32 %v1102, %v1153
      %v1205 = vadd.f32 %v1103, %v1154
      %v1206 = vadd.f32 %v1104, %v1155
      %v1207 = vadd.f32 %v1105, %v1156
      %v1208 = vadd.f32 %v1106, %v1157
      %v1209 = vadd.f32 %v1107, %v1158
      %v1210 = vadd.f32 %v1108, %v1159
      %v1211 = vadd.f32 %v1109, %v1160
      %v1212 = vadd.f32 %v1110, %v1161
      %v1213 = vadd.f32 %v1111, %v1162
      %v1214 = vadd.f32 %v1112, %v1163
      %v1215 = vadd.f32 %v1113, %v1164
      %v1216 = vadd.f32 %v1114, %v1165
      %v1217 = vadd.f32 %v1115, %v1166
      %v1218 = vadd.f32 %v1116, %v1167
      %v1219 = vadd.f32 %v1117, %v1168
      %v1220 = vadd.f32 %v1118, %v1169
      %v1221 = vadd.f32 %v1119, %v1170
      %v1222 = vadd.f32 %v1120, %v1171
      %v1223 = vadd.f32 %v1121, %v1172
      %v1224 = vadd.f32 %v1122, %v1173
      %v1225 = vadd.f32 %v1123, %v1174
      %v1226 = vadd.f32 %v1124, %v1175
      %v1227 = vadd.f32 %v1125, %v1176
      %v1228 = vadd.f32 %v1126, %v1177
      %v1229 = vadd.f32 %v1127, %v1178
      %v1230 = vadd.f32 %v1128, %v1179
      %v1231 = vadd.f32 %v1129, %v1180
      %v1232 = vadd.f32 %v1130, %v1181
      %v1233 = vmul.f32 %v1074, 0.375
      %v1234 = vmul.f32 %v1075, 0.375
      %v1235 = vmul.f32 %v1076, 0.375
      %v1236 = vadd.f32 %v1182, %v1134
      %v1237 = vadd.f32 %v1183, %v1135
      %v1238 = vadd.f32 %v1184, %v1136
      %v1239 = vadd.f32 %v1185, %v1137
      %v1240 = vadd.f32 %v1186, %v1138
      %v1241 = vadd.f32 %v1187, %v1139
      %v1242 = vadd.f32 %v1188, %v1140
      %v1243 = vadd.f32 %v1189, %v1141
      %v1244 = vadd.f32 %v1190, %v1142
      %v1245 = vadd.f32 %v1191, %v1143
      %v1246 = vadd.f32 %v1192, %v1144
      %v1247 = vadd.f32 %v1193, %v1145
      %v1248 = vadd.f32 %v1194, %v1146
      %v1249 = vadd.f32 %v1195, %v1147
      %v1250 = vadd.f32 %v1196, %v1148
      %v1251 = vadd.f32 %v1197, %v1149
      %v1252 = vadd.f32 %v1198, %v1150
      %v1253 = vadd.f32 %v1199, %v1151
      %v1254 = vadd.f32 %v1200, %v1152
      %v1255 = vadd.f32 %v1201, %v1153
      %v1256 = vadd.f32 %v1202, %v1154
      %v1257 = vadd.f32 %v1203, %v1155
      %v1258 = vadd.f32 %v1204, %v1156
      %v1259 = vadd.f32 %v1205, %v1157
      %v1260 = vadd.f32 %v1206, %v1158
      %v1261 = vadd.f32 %v1207, %v1159
      %v1262 = vadd.f32 %v1208, %v1160
      %v1263 = vadd.f32 %v1209, %v1161
      %v1264 = vadd.f32 %v1210, %v1162
      %v1265 = vadd.f32 %v1211, %v1163
      %v1266 = vadd.f32 %v1212, %v1164
      %v1267 = vadd.f32 %v1213, %v1165
      %v1268 = vadd.f32 %v1214, %v1166
      %v1269 = vadd.f32 %v1215, %v1167
      %v1270 = vadd.f32 %v1216, %v1168
      %v1271 = vadd.f32 %v1217, %v1169
      %v1272 = vadd.f32 %v1218, %v1170
      %v1273 = vadd.f32 %v1219, %v1171
      %v1274 = vadd.f32 %v1220, %v1172
      %v1275 = vadd.f32 %v1221, %v1173
      %v1276 = vadd.f32 %v1222, %v1174
      %v1277 = vadd.f32 %v1223, %v1175
      %v1278 = vadd.f32 %v1224, %v1176
      %v1279 = vadd.f32 %v1225, %v1177
      %v1280 = vadd.f32 %v1226, %v1178
      %v1281 = vadd.f32 %v1227, %v1179
      %v1282 = vadd.f32 %v1228, %v1180
      %v1283 = vadd.f32 %v1229, %v1181
      %v1284 = vadd.f32 %v1230, %v1233
      %v1285 = vadd.f32 %v1231, %v1234
      %v1286 = vadd.f32 %v1232, %v1235
      %v1287 = vmul.f32 %v1071, 0.125
      %v1288 = vmul.f32 %v1072, 0.125
      %v1289 = vmul.f32 %v1073, 0.125
      %v1290 = vmul.f32 %v1074, 0.125
      %v1291 = vmul.f32 %v1075, 0.125
      %v1292 = vmul.f32 %v1076, 0.125
      %v1293 = vmul.f32 %v1077, 0.125
      %v1294 = vmul.f32 %v1078, 0.125
      %v1295 = vmul.f32 %v1079, 0.125
      %v1296 = vadd.f32 %v1236, %v1089
      %v1297 = vadd.f32 %v1237, %v1090
      %v1298 = vadd.f32 %v1238, %v1091
      %v1299 = vadd.f32 %v1239, %v1092
      %v1300 = vadd.f32 %v1240, %v1093
      %v1301 = vadd.f32 %v1241, %v1094
      %v1302 = vadd.f32 %v1242, %v1095
      %v1303 = vadd.f32 %v1243, %v1096
      %v1304 = vadd.f32 %v1244, %v1097
      %v1305 = vadd.f32 %v1245, %v1098
      %v1306 = vadd.f32 %v1246, %v1099
      %v1307 = vadd.f32 %v1247, %v1100
      %v1308 = vadd.f32 %v1248, %v1101
      %v1309 = vadd.f32 %v1249, %v1102
      %v1310 = vadd.f32 %v1250, %v1103
      %v1311 = vadd.f32 %v1251, %v1104
      %v1312 = vadd.f32 %v1252, %v1105
      %v1313 = vadd.f32 %v1253, %v1106
      %v1314 = vadd.f32 %v1254, %v1107
      %v1315 = vadd.f32 %v1255, %v1108
      %v1316 = vadd.f32 %v1256, %v1109
      %v1317 = vadd.f32 %v1257, %v1110
      %v1318 = vadd.f32 %v1258, %v1111
      %v1319 = vadd.f32 %v1259, %v1112
      %v1320 = vadd.f32 %v1260, %v1113
      %v1321 = vadd.f32 %v1261, %v1114
      %v1322 = vadd.f32 %v1262, %v1115
      %v1323 = vadd.f32 %v1263, %v1116
      %v1324 = vadd.f32 %v1264, %v1117
      %v1325 = vadd.f32 %v1265, %v1118
      %v1326 = vadd.f32 %v1266, %v1119
      %v1327 = vadd.f32 %v1267, %v1120
      %v1328 = vadd.f32 %v1268, %v1121
      %v1329 = vadd.f32 %v1269, %v1122
      %v1330 = vadd.f32 %v1270, %v1123
      %v1331 = vadd.f32 %v1271, %v1124
      %v1332 = vadd.f32 %v1272, %v1125
      %v1333 = vadd.f32 %v1273, %v1126
      %v1334 = vadd.f32 %v1274, %v1127
      %v1335 = vadd.f32 %v1275, %v1128
      %v1336 = vadd.f32 %v1276, %v1129
      %v1337 = vadd.f32 %v1277, %v1130
      %v1338 = vadd.f32 %v1278, %v1287
      %v1339 = vadd.f32 %v1279, %v1288
      %v1340 = vadd.f32 %v1280, %v1289
      %v1341 = vadd.f32 %v1281, %v1290
      %v1342 = vadd.f32 %v1282, %v1291
      %v1343 = vadd.f32 %v1283, %v1292
      %v1344 = vadd.f32 %v1284, %v1293
      %v1345 = vadd.f32 %v1285, %v1294
      %v1346 = vadd.f32 %v1286, %v1295
      %vm1347 = vcmask 261120
      %1348 = vst.msk [vmem:[%s116] sm:$0xff] %vm1347, %v1296
      %1349 = vst.msk [vmem:[%s116 + $0x8] sm:$0xff] %vm1347, %v1297
      %vm1350 = vcmask 253952
      %1351 = vst.msk [vmem:[%s116 + $0x10] sm:$0x1] %vm1350, %v1298
      %1352 = vst.msk [vmem:[%s116 + $0x18] sm:$0xff] %vm1347, %v1299
      %1353 = vst.msk [vmem:[%s116 + $0x20] sm:$0xff] %vm1347, %v1300
      %1354 = vst.msk [vmem:[%s116 + $0x28] sm:$0x1] %vm1350, %v1301
      %1355 = vst.msk [vmem:[%s116 + $0x30] sm:$0xff] %vm1347, %v1302
      %1356 = vst.msk [vmem:[%s116 + $0x38] sm:$0xff] %vm1347, %v1303
      %1357 = vst.msk [vmem:[%s116 + $0x40] sm:$0x1] %vm1350, %v1304
      %1358 = vst.msk [vmem:[%s116 + $0x48] sm:$0xff] %vm1347, %v1305
      %1359 = vst.msk [vmem:[%s116 + $0x50] sm:$0xff] %vm1347, %v1306
      %1360 = vst.msk [vmem:[%s116 + $0x58] sm:$0x1] %vm1350, %v1307
      %1361 = vst.msk [vmem:[%s116 + $0x60] sm:$0xff] %vm1347, %v1308
      %1362 = vst.msk [vmem:[%s116 + $0x68] sm:$0xff] %vm1347, %v1309
      %1363 = vst.msk [vmem:[%s116 + $0x70] sm:$0x1] %vm1350, %v1310
      %1364 = vst.msk [vmem:[%s116 + $0x78] sm:$0xff] %vm1347, %v1311
      %1365 = vst.msk [vmem:[%s116 + $0x80] sm:$0xff] %vm1347, %v1312
      %1366 = vst.msk [vmem:[%s116 + $0x88] sm:$0x1] %vm1350, %v1313
      %1367 = vst.msk [vmem:[%s116 + $0x90] sm:$0xff] %vm1347, %v1314
      %1368 = vst.msk [vmem:[%s116 + $0x98] sm:$0xff] %vm1347, %v1315
      %1369 = vst.msk [vmem:[%s116 + $0xa0] sm:$0x1] %vm1350, %v1316
      %1370 = vst.msk [vmem:[%s116 + $0xa8] sm:$0xff] %vm1347, %v1317
      %1371 = vst.msk [vmem:[%s116 + $0xb0] sm:$0xff] %vm1347, %v1318
      %1372 = vst.msk [vmem:[%s116 + $0xb8] sm:$0x1] %vm1350, %v1319
      %1373 = vst.msk [vmem:[%s116 + $0xc0] sm:$0xff] %vm1347, %v1320
      %1374 = vst.msk [vmem:[%s116 + $0xc8] sm:$0xff] %vm1347, %v1321
      %1375 = vst.msk [vmem:[%s116 + $0xd0] sm:$0x1] %vm1350, %v1322
      %1376 = vst.msk [vmem:[%s116 + $0xd8] sm:$0xff] %vm1347, %v1323
      %1377 = vst.msk [vmem:[%s116 + $0xe0] sm:$0xff] %vm1347, %v1324
      %1378 = vst.msk [vmem:[%s116 + $0xe8] sm:$0x1] %vm1350, %v1325
      %1379 = vst.msk [vmem:[%s116 + $0xf0] sm:$0xff] %vm1347, %v1326
      %1380 = vst.msk [vmem:[%s116 + $0xf8] sm:$0xff] %vm1347, %v1327
      %1381 = vst.msk [vmem:[%s116 + $0x100] sm:$0x1] %vm1350, %v1328
      %1382 = vst.msk [vmem:[%s116 + $0x108] sm:$0xff] %vm1347, %v1329
      %1383 = vst.msk [vmem:[%s116 + $0x110] sm:$0xff] %vm1347, %v1330
      %1384 = vst.msk [vmem:[%s116 + $0x118] sm:$0x1] %vm1350, %v1331
      %1385 = vst.msk [vmem:[%s116 + $0x120] sm:$0xff] %vm1347, %v1332
      %1386 = vst.msk [vmem:[%s116 + $0x128] sm:$0xff] %vm1347, %v1333
      %1387 = vst.msk [vmem:[%s116 + $0x130] sm:$0x1] %vm1350, %v1334
      %1388 = vst.msk [vmem:[%s116 + $0x138] sm:$0xff] %vm1347, %v1335
      %1389 = vst.msk [vmem:[%s116 + $0x140] sm:$0xff] %vm1347, %v1336
      %1390 = vst.msk [vmem:[%s116 + $0x148] sm:$0x1] %vm1350, %v1337
      %1391 = vst.msk [vmem:[%s116 + $0x150] sm:$0xff] %vm1347, %v1338
      %1392 = vst.msk [vmem:[%s116 + $0x158] sm:$0xff] %vm1347, %v1339
      %1393 = vst.msk [vmem:[%s116 + $0x160] sm:$0x1] %vm1350, %v1340
      %1394 = vst.msk [vmem:[%s116 + $0x168] sm:$0xff] %vm1347, %v1341
      %1395 = vst.msk [vmem:[%s116 + $0x170] sm:$0xff] %vm1347, %v1342
      %1396 = vst.msk [vmem:[%s116 + $0x178] sm:$0x1] %vm1350, %v1343
      %1397 = vst.msk [vmem:[%s116 + $0x180] sm:$0xff] %vm1347, %v1344
      %1398 = vst.msk [vmem:[%s116 + $0x188] sm:$0xff] %vm1347, %v1345
      %1399 = vst.msk [vmem:[%s116 + $0x190] sm:$0x1] %vm1350, %v1346
      %p1400 = scmp.lt.s32.totalorder %s12, 1
      %s1401 = scalar_select %p1400, %s12, 1
      %s1402 = smul.addr %s1401, 51
      %s1403 = smul.addr %s1402, 8
      %s1404 = scalar_lea.vmem %s1, %s1403
      // Predicated region
      $region25: #{resblock_forward.6} parent=23 // pred_check
        %p1405 = pneg %p56
      $region26: #{resblock_forward.6} parent=23 // pred_check_branch
        %1407 = sbr.rel (%p1405) target = $region28
      $region27: #{resblock_forward.6} parent=23 // pred_region
        _
      $region28: #{resblock_forward.6} parent=23 // pred_fallthru
        _
    $region24: #{resblock_forward.6} parent=5 // pred_fallthru
      _
    %p1408 = scmp.le.s32.totalorder 2, %s7
    // Predicated region
    $region29: #{resblock_forward.6} parent=5 // pred_check
      %p1409 = pneg %p1408
    $region30: #{resblock_forward.6} parent=5 // pred_check_branch
      %1411 = sbr.rel (%p1409) target = $region32
    $region31: #{resblock_forward.6} parent=5 // pred_region
      %s1412 = ssub.s32 %s7, 2
      // Predicated region
      $region33: #{resblock_forward.6} parent=31 // pred_check
        %p1413 = pneg %p62
      $region34: #{resblock_forward.6} parent=31 // pred_check_branch
        %1415 = sbr.rel (%p1413) target = $region36
      $region35: #{resblock_forward.6} parent=31 // pred_region
        %p1416 = scmp.lt.s32.totalorder %s13, 1
        %s1417 = scalar_select %p1416, %s13, 1
        %s1418 = smul.addr %s1417, 51
        %s1419 = smul.addr %s1418, 8
        %s1420 = scalar_lea.vmem %s1, %s1419
      $region36: #{resblock_forward.6} parent=31 // pred_fallthru
        _
    $region32: #{resblock_forward.6} parent=5 // pred_fallthru
      _
  $region6: #{resblock_forward.6} parent=0 // loop_footer
    %s11 = sadd.s32 1, %s7
  $region7: #{resblock_forward.6} parent=0 // loop_footer_branch
    %6 = sbr.rel target = $region3
  $region8: #{resblock_forward.6} parent=0 // loop_exit
    _

// kernel: resblock_forward.5
$region0: #{resblock_forward.5}
  #allocation0 [shape = 'u32[]', space=smem, size = 0x4, offset = 0x4, fixed_abs, tag = 'smem constant byte address 0x4 - core index']
  #allocation1 [shape = 'u32[144,128]{1,0:T(1,128)}', space=vmem, size = 0x12000, scoped, tag = 'internal scratch']
  #allocation2 [shape = 'bf16[18,18,32]{2,1,0:T(8,128)(2,1)}', space=vmem, size = 0x1b000, scoped, tag = 'scratch operand']
  %s0 = inlined_call_operand.vmem [shape: bf16[2,18,18,32], index: 0, kind: input, shape index: {}, may-alias: {0,1}]
  %s1 = inlined_call_operand.vmem [shape: bf16[2,18,18,32], index: 1, kind: input, shape index: {}, may-alias: {0,1}]
  %s2 = inlined_call_operand.vmem [shape: bf16[9,32,32], index: 2, kind: input, shape index: {}]
  %s3 = inlined_call_operand.vmem [shape: f32[1,32], index: 3, kind: input, shape index: {}]
  %s4 = inlined_call_operand.vmem [shape: f32[2,16,16,32], index: 4, kind: output, shape index: {}]
  %s5 = sld [smem:[#allocation0]]
  $region49: #{resblock_forward.5} parent=0
    _
  %s7 = ssub.s32 1, %s5
  %s8 = scalar_select 0, %s7, %s5
  loop: start=0, step=1, limit=4
  $region2: #{resblock_forward.5} parent=0 // loop_pre_header
    _
  $region3: #{resblock_forward.5} parent=0 // loop_header
    %s10 = sphi 0, %s14
    %p11 = scmp.ge.s32.totalorder %s10, 4
    %s17 = sphi 0, %s29
    %s18 = sphi 0, %s25
    %s19 = sphi 0, %s17
    %s20 = sphi 0, %s18
    %s21 = sphi 0, %s19
    %s22 = sphi 0, %s20
    %s34 = sphi 0, %s36
    %s37 = sphi 0, %s34
    %s38 = sphi 0, %s37
    %s54 = sphi 0, %s38
    %s66 = sphi 0, %s68
    %s69 = sphi 0, %s66
    %s70 = sphi 0, %s69
    %s86 = sphi 0, %s70
    %s90 = sphi 0, %s90
    %s92 = sphi 0, %s90
    %s93 = sphi 0, %s92
    %s107 = sphi 0, %s93
    %s111 = sphi 0, %s111
    %s113 = sphi 0, %s111
    %s114 = sphi 0, %s113
    %s128 = sphi 0, %s114
    %s136 = sphi 0, %s138
    %s139 = sphi 0, %s136
    %s140 = sphi 0, %s139
    %s156 = sphi 0, %s140
  $region4: #{resblock_forward.5} parent=0 // loop_header_branch
    %13 = sbr.rel (%p11) target = $region8
  $region5: #{resblock_forward.5} parent=0 // loop_body
    %s15 = ssub.s32 %s10, 1
    %s16 = ssub.s32 %s10, 2
    %s23 = sadd.s32 1, %s18
    %p24 = scmp.ge.s32.totalorder %s23, 1
    %s25 = scalar_select %p24, 0, %s23
    %s26 = sadd.s32 1, %s17
    %s27 = scalar_select %p24, %s26, %s17
    %p28 = scmp.ge.s32.totalorder %s27, 2
    %s29 = scalar_select %p28, 0, %s27
    %s30 = ssub.s32 %s17, %s29
    %s31 = ssub.s32 %s18, %s25
    %s32 = sor.u32 %s30, %s31
    %p33 = scmp.eq.s32.totalorder %s32, 0
    %s35 = sadd.s32 %s34, 1
    %s36 = scalar_select %p33, %s34, %s35
    %p39 = pneg %p33
    %p40 = scmp.eq.s32.totalorder %s10, 1
    %p41 = por %p39, %p40
    %p42 = scmp.ne.s32.totalorder %s34, %s37
    %p43 = scmp.eq.s32.totalorder %s10, 0
    %p44 = por %p42, %p43
    %p45 = scmp.ne.s32.totalorder %s34, %s37
    %p46 = scmp.eq.s32.totalorder %s15, 1
    %p47 = por %p45, %p46
    %p48 = scmp.ne.s32.totalorder %s37, %s38
    %p49 = scmp.eq.s32.totalorder %s15, 0
    %p50 = por %p48, %p49
    %p51 = scmp.ne.s32.totalorder %s37, %s38
    %p52 = scmp.eq.s32.totalorder %s16, 1
    %p53 = por %p51, %p52
    %p55 = scmp.ne.s32.totalorder %s38, %s54
    %p56 = scmp.eq.s32.totalorder %s16, 0
    %p57 = por %p55, %p56
    %s58 = sadd.s32 %s18, 1
    %s59 = smul.u32 %s58, 8
    %s60 = sadd.s32 %s25, 1
    %s61 = smul.u32 %s60, 8
    %s62 = ssub.s32 %s17, %s29
    %s63 = ssub.s32 %s59, %s61
    %s64 = sor.u32 %s62, %s63
    %p65 = scmp.eq.s32.totalorder %s64, 0
    %s67 = sadd.s32 %s66, 1
    %s68 = scalar_select %p65, %s66, %s67
    %p71 = pneg %p65
    %p72 = scmp.eq.s32.totalorder %s10, 1
    %p73 = por %p71, %p72
    %p74 = scmp.ne.s32.totalorder %s66, %s69
    %p75 = scmp.eq.s32.totalorder %s10, 0
    %p76 = por %p74, %p75
    %p77 = scmp.ne.s32.totalorder %s66, %s69
    %p78 = scmp.eq.s32.totalorder %s15, 1
    %p79 = por %p77, %p78
    %p80 = scmp.ne.s32.totalorder %s69, %s70
    %p81 = scmp.eq.s32.totalorder %s15, 0
    %p82 = por %p80, %p81
    %p83 = scmp.ne.s32.totalorder %s69, %s70
    %p84 = scmp.eq.s32.totalorder %s16, 1
    %p85 = por %p83, %p84
    %p87 = scmp.ne.s32.totalorder %s70, %s86
    %p88 = scmp.eq.s32.totalorder %s16, 0
    %p89 = por %p87, %p88
    %s91 = sadd.s32 %s90, 1
    %p94 = scmp.eq.s32.totalorder %s10, 1
    %p95 = scmp.ne.s32.totalorder %s90, %s92
    %p96 = scmp.eq.s32.totalorder %s10, 0
    %p97 = por %p95, %p96
    %p98 = scmp.ne.s32.totalorder %s90, %s92
    %p99 = scmp.eq.s32.totalorder %s15, 1
    %p100 = por %p98, %p99
    %p101 = scmp.ne.s32.totalorder %s92, %s93
    %p102 = scmp.eq.s32.totalorder %s15, 0
    %p103 = por %p101, %p102
    %p104 = scmp.ne.s32.totalorder %s92, %s93
    %p105 = scmp.eq.s32.totalorder %s16, 1
    %p106 = por %p104, %p105
    %p108 = scmp.ne.s32.totalorder %s93, %s107
    %p109 = scmp.eq.s32.totalorder %s16, 0
    %p110 = por %p108, %p109
    %s112 = sadd.s32 %s111, 1
    %p115 = scmp.eq.s32.totalorder %s10, 1
    %p116 = scmp.ne.s32.totalorder %s111, %s113
    %p117 = scmp.eq.s32.totalorder %s10, 0
    %p118 = por %p116, %p117
    %p119 = scmp.ne.s32.totalorder %s111, %s113
    %p120 = scmp.eq.s32.totalorder %s15, 1
    %p121 = por %p119, %p120
    %p122 = scmp.ne.s32.totalorder %s113, %s114
    %p123 = scmp.eq.s32.totalorder %s15, 0
    %p124 = por %p122, %p123
    %p125 = scmp.ne.s32.totalorder %s113, %s114
    %p126 = scmp.eq.s32.totalorder %s16, 1
    %p127 = por %p125, %p126
    %p129 = scmp.ne.s32.totalorder %s114, %s128
    %p130 = scmp.eq.s32.totalorder %s16, 0
    %p131 = por %p129, %p130
    %s132 = ssub.s32 %s17, %s29
    %s133 = ssub.s32 %s18, %s25
    %s134 = sor.u32 %s132, %s133
    %p135 = scmp.eq.s32.totalorder %s134, 0
    %s137 = sadd.s32 %s136, 1
    %s138 = scalar_select %p135, %s136, %s137
    %p141 = pneg %p135
    %p142 = scmp.eq.s32.totalorder %s10, 1
    %p143 = por %p141, %p142
    %p144 = scmp.ne.s32.totalorder %s136, %s139
    %p145 = scmp.eq.s32.totalorder %s10, 0
    %p146 = por %p144, %p145
    %p147 = scmp.ne.s32.totalorder %s136, %s139
    %p148 = scmp.eq.s32.totalorder %s15, 1
    %p149 = por %p147, %p148
    %p150 = scmp.ne.s32.totalorder %s139, %s140
    %p151 = scmp.eq.s32.totalorder %s15, 0
    %p152 = por %p150, %p151
    %p153 = scmp.ne.s32.totalorder %s139, %s140
    %p154 = scmp.eq.s32.totalorder %s16, 1
    %p155 = por %p153, %p154
    %p157 = scmp.ne.s32.totalorder %s140, %s156
    %p158 = scmp.eq.s32.totalorder %s16, 0
    %p159 = por %p157, %p158
    %p160 = scmp.le.s32.totalorder 1, %s10
    %p161 = scmp.lt.s32.totalorder %s10, 3
    %p162 = pnand %p160, %p161
    %p163 = pneg %p162
    // Predicated region
    $region9: #{resblock_forward.5} parent=5 // pred_check
      _
    $region10: #{resblock_forward.5} parent=5 // pred_check_branch
      %165 = sbr.rel (%p162) target = $region12
    $region11: #{resblock_forward.5} parent=5 // pred_region
      %s166 = ssub.s32 %s10, 1
      // Predicated region
      $region13: #{resblock_forward.5} parent=11 // pred_check
        %p167 = pneg %p103
      $region14: #{resblock_forward.5} parent=11 // pred_check_branch
        %169 = sbr.rel (%p167) target = $region16
      $region15: #{resblock_forward.5} parent=11 // pred_region
        _
      $region16: #{resblock_forward.5} parent=11 // pred_fallthru
        _
      // Predicated region
      $region17: #{resblock_forward.5} parent=11 // pred_check
        %p170 = pneg %p124
      $region18: #{resblock_forward.5} parent=11 // pred_check_branch
        %172 = sbr.rel (%p170) target = $region20
      $region19: #{resblock_forward.5} parent=11 // pred_region
        _
      $region20: #{resblock_forward.5} parent=11 // pred_fallthru
        _
    $region12: #{resblock_forward.5} parent=5 // pred_fallthru
      _
    %p173 = scmp.lt.s32.totalorder %s10, 2
    // Predicated region
    $region21: #{resblock_forward.5} parent=5 // pred_check
      %p174 = pneg %p173
    $region22: #{resblock_forward.5} parent=5 // pred_check_branch
      %176 = sbr.rel (%p174) target = $region24
    $region23: #{resblock_forward.5} parent=5 // pred_region
      // Predicated region
      $region25: #{resblock_forward.5} parent=23 // pred_check
        %p177 = pneg %p44
      $region26: #{resblock_forward.5} parent=23 // pred_check_branch
        %179 = sbr.rel (%p177) target = $region28
      $region27: #{resblock_forward.5} parent=23 // pred_region
        %s180 = smul.u32 16, %s18
        %s181 = ssub.s32 18, %s180
        %p182 = scmp.lt.s32.totalorder %s181, 16
        %s183 = scalar_select %p182, %s181, 16
        %s184 = smul.u32 64, %s183
        %s185 = smul.u32 %s184, 3
        %p186 = scmp.lt.s32.totalorder %s17, 1
        %s187 = scalar_select %p186, %s17, 1
        %p188 = scmp.lt.s32.totalorder %s180, 17
        %s189 = scalar_select %p188, %s180, 17
        %s190 = smul.addr %s189, 3
        %s191 = smul.addr %s187, 54
        %s192 = sadd.s32 %s190, %s191
        %s193 = smul.addr %s192, 4
        %s194 = scalar_lea.vmem %s0, %s193
        %s195 = smul.u32 16, %s18
        %s196 = ssub.s32 18, %s195
        %p197 = scmp.lt.s32.totalorder %s196, 16
        %s198 = scalar_select %p197, %s196, 16
        %s199 = smul.u32 64, %s198
        %s200 = smul.u32 %s199, 3
      $region28: #{resblock_forward.5} parent=23 // pred_fallthru
        _
      // Predicated region
      $region29: #{resblock_forward.5} parent=23 // pred_check
        %p201 = pneg %p76
      $region30: #{resblock_forward.5} parent=23 // pred_check_branch
        %203 = sbr.rel (%p201) target = $region32
      $region31: #{resblock_forward.5} parent=23 // pred_region
        %s204 = sadd.s32 %s18, 1
        %s205 = smul.u32 %s204, 8
        %s206 = smul.u32 2, %s205
        %p207 = scmp.lt.s32.totalorder %s17, 1
        %s208 = scalar_select %p207, %s17, 1
        %p209 = scmp.lt.s32.totalorder %s206, 17
        %s210 = scalar_select %p209, %s206, 17
        %s211 = smul.addr %s210, 3
        %s212 = smul.addr %s208, 54
        %s213 = sadd.s32 %s211, %s212
        %s214 = smul.addr %s213, 4
        %s215 = scalar_lea.vmem %s1, %s214
        %s216 = sadd.s32 %s18, 1
        %s217 = smul.u32 %s216, 8
        %s218 = smul.u32 2, %s217
      $region32: #{resblock_forward.5} parent=23 // pred_fallthru
        _
    $region24: #{resblock_forward.5} parent=5 // pred_fallthru
      _
    %p219 = scmp.le.s32.totalorder 1, %s10
    %p220 = scmp.lt.s32.totalorder %s10, 3
    %p221 = pnand %p219, %p220
    %p222 = pneg %p221
    // Predicated region
    $region33: #{resblock_forward.5} parent=5 // pred_check
      _
    $region34: #{resblock_forward.5} parent=5 // pred_check_branch
      %224 = sbr.rel (%p221) target = $region36
    $region35: #{resblock_forward.5} parent=5 // pred_region
      %s225 = ssub.s32 %s10, 1
      %s226 = smul.u32 16, %s20
      %s227 = ssub.s32 18, %s226
      %p228 = scmp.lt.s32.totalorder %s227, 16
      %s229 = scalar_select %p228, %s227, 16
      %s230 = smul.u32 64, %s229
      %s231 = smul.u32 %s230, 3
      %p232 = scmp.lt.s32.totalorder %s19, 1
      %s233 = scalar_select %p232, %s19, 1
      %p234 = scmp.lt.s32.totalorder %s226, 17
      %s235 = scalar_select %p234, %s226, 17
      %s236 = smul.addr %s235, 3
      %s237 = smul.addr %s233, 54
      %s238 = sadd.s32 %s236, %s237
      %s239 = smul.addr %s238, 4
      %s240 = scalar_lea.vmem %s0, %s239
      %p241 = pneg %p50
      %p242 = pneg %p47
      %s243 = sadd.s32 %s20, 1
      %s244 = smul.u32 %s243, 8
      %s245 = smul.u32 2, %s244
      %p246 = scmp.lt.s32.totalorder %s19, 1
      %s247 = scalar_select %p246, %s19, 1
      %p248 = scmp.lt.s32.totalorder %s245, 17
      %s249 = scalar_select %p248, %s245, 17
      %s250 = smul.addr %s249, 3
      %s251 = smul.addr %s247, 54
      %s252 = sadd.s32 %s250, %s251
      %s253 = smul.addr %s252, 4
      %s254 = scalar_lea.vmem %s1, %s253
      %p255 = pneg %p82
      %p256 = pneg %p79
      %p257 = pneg %p103
      %p258 = pneg %p100
      %p259 = pneg %p124
      %p260 = pneg %p121
      %p261 = pneg %p152
      %p262 = pneg %p149
      %s263 = smul.u32 16, %s20
      %p264 = scmp.lt.s32.totalorder %s19, 1
      %s265 = scalar_select %p264, %s19, 1
      %p266 = scmp.lt.s32.totalorder %s263, 15
      %s267 = scalar_select %p266, %s263, 15
      %s268 = smul.addr %s267, 2
      %s269 = smul.addr %s265, 32
      %s270 = sadd.s32 %s268, %s269
      %s271 = smul.addr %s270, 8
      %s272 = scalar_lea.vmem %s4, %s271
      %s273 = smul.u32 16, %s20
      %s274 = ssub.s32 18, %s273
      %p275 = scmp.lt.s32.totalorder %s274, 16
      %s276 = scalar_select %p275, %s274, 16
      %s277 = smul.u32 64, %s276
      %s278 = smul.u32 %s277, 3
      %p279 = scmp.lt.s32.totalorder %s19, 1
      %s280 = scalar_select %p279, %s19, 1
      %p281 = scmp.lt.s32.totalorder %s273, 17
      %s282 = scalar_select %p281, %s273, 17
      %s283 = smul.addr %s282, 3
      %s284 = smul.addr %s280, 54
      %s285 = sadd.s32 %s283, %s284
      %s286 = smul.addr %s285, 4
      %s287 = scalar_lea.vmem %s0, %s286
      %s288 = smul.u32 16, %s20
      %s289 = ssub.s32 18, %s288
      %p290 = scmp.lt.s32.totalorder %s289, 16
      %s291 = scalar_select %p290, %s289, 16
      %s292 = smul.u32 64, %s291
      %s293 = smul.u32 %s292, 3
      %s294 = sadd.s32 %s20, 1
      %s295 = smul.u32 %s294, 8
      %s296 = smul.u32 2, %s295
      %p297 = scmp.lt.s32.totalorder %s19, 1
      %s298 = scalar_select %p297, %s19, 1
      %p299 = scmp.lt.s32.totalorder %s296, 17
      %s300 = scalar_select %p299, %s296, 17
      %s301 = smul.addr %s300, 3
      %s302 = smul.addr %s298, 54
      %s303 = sadd.s32 %s301, %s302
      %s304 = smul.addr %s303, 4
      %s305 = scalar_lea.vmem %s1, %s304
      %s306 = sadd.s32 %s20, 1
      %s307 = smul.u32 %s306, 8
      %s308 = smul.u32 2, %s307
      %s309 = smul.u32 16, %s20
      %p310 = scmp.lt.s32.totalorder %s19, 1
      %s311 = scalar_select %p310, %s19, 1
      %p312 = scmp.lt.s32.totalorder %s309, 15
      %s313 = scalar_select %p312, %s309, 15
      %s314 = smul.addr %s313, 2
      %s315 = smul.addr %s311, 32
      %s316 = sadd.s32 %s314, %s315
      %s317 = smul.addr %s316, 8
      %s318 = scalar_lea.vmem %s4, %s317
      %s319 = smul.u32 16, %s20
      %v321 = vld [vmem:[%s287] sm:$0xf]
      %v322 = vld [vmem:[%s287 + $0x4] sm:$0xf]
      %v323 = vld [vmem:[%s287 + $0x8] sm:$0x1]
      %v324 = vld [vmem:[%s287 + $0xc] sm:$0xf]
      %v325 = vld [vmem:[%s287 + $0x10] sm:$0xf]
      %v326 = vld [vmem:[%s287 + $0x14] sm:$0x1]
      %v327 = vld [vmem:[%s287 + $0x18] sm:$0xf]
      %v328 = vld [vmem:[%s287 + $0x1c] sm:$0xf]
      %v329 = vld [vmem:[%s287 + $0x20] sm:$0x1]
      %v330 = vld [vmem:[%s287 + $0x24] sm:$0xf]
      %v331 = vld [vmem:[%s287 + $0x28] sm:$0xf]
      %v332 = vld [vmem:[%s287 + $0x2c] sm:$0x1]
      %v333 = vld [vmem:[%s287 + $0x30] sm:$0xf]
      %v334 = vld [vmem:[%s287 + $0x34] sm:$0xf]
      %v335 = vld [vmem:[%s287 + $0x38] sm:$0x1]
      %v336 = vld [vmem:[%s287 + $0x3c] sm:$0xf]
      %v337 = vld [vmem:[%s287 + $0x40] sm:$0xf]
      %v338 = vld [vmem:[%s287 + $0x44] sm:$0x1]
      %v339 = vld [vmem:[%s287 + $0x48] sm:$0xf]
      %v340 = vld [vmem:[%s287 + $0x4c] sm:$0xf]
      %v341 = vld [vmem:[%s287 + $0x50] sm:$0x1]
      %v342 = vld [vmem:[%s287 + $0x54] sm:$0xf]
      %v343 = vld [vmem:[%s287 + $0x58] sm:$0xf]
      %v344 = vld [vmem:[%s287 + $0x5c] sm:$0x1]
      %v345 = vld [vmem:[%s287 + $0x60] sm:$0xf]
      %v346 = vld [vmem:[%s287 + $0x64] sm:$0xf]
      %v347 = vld [vmem:[%s287 + $0x68] sm:$0x1]
      %v348 = vld [vmem:[%s287 + $0x6c] sm:$0xf]
      %v349 = vld [vmem:[%s287 + $0x70] sm:$0xf]
      %v350 = vld [vmem:[%s287 + $0x74] sm:$0x1]
      %v351 = vld [vmem:[%s287 + $0x78] sm:$0xf]
      %v352 = vld [vmem:[%s287 + $0x7c] sm:$0xf]
      %v353 = vld [vmem:[%s287 + $0x80] sm:$0x1]
      %v354 = vld [vmem:[%s287 + $0x84] sm:$0xf]
      %v355 = vld [vmem:[%s287 + $0x88] sm:$0xf]
      %v356 = vld [vmem:[%s287 + $0x8c] sm:$0x1]
      %v357 = vld [vmem:[%s287 + $0x90] sm:$0xf]
      %v358 = vld [vmem:[%s287 + $0x94] sm:$0xf]
      %v359 = vld [vmem:[%s287 + $0x98] sm:$0x1]
      %v360 = vld [vmem:[%s287 + $0x9c] sm:$0xf]
      %v361 = vld [vmem:[%s287 + $0xa0] sm:$0xf]
      %v362 = vld [vmem:[%s287 + $0xa4] sm:$0x1]
      %v363 = vld [vmem:[%s287 + $0xa8] sm:$0xf]
      %v364 = vld [vmem:[%s287 + $0xac] sm:$0xf]
      %v365 = vld [vmem:[%s287 + $0xb0] sm:$0x1]
      %v366 = vld [vmem:[%s287 + $0xb4] sm:$0xf]
      %v367 = vld [vmem:[%s287 + $0xb8] sm:$0xf]
      %v368 = vld [vmem:[%s287 + $0xbc] sm:$0x1]
      %vm369 = vcmask 257024
      %370 = vst.msk [vmem:[#allocation2] sm:$0xf] %vm369, %v321
      %371 = vst.msk [vmem:[#allocation2 + $0x4] sm:$0xf] %vm369, %v322
      %vm372 = vcmask 253952
      %373 = vst.msk [vmem:[#allocation2 + $0x8] sm:$0x1] %vm372, %v323
      %374 = vst.msk [vmem:[#allocation2 + $0xc] sm:$0xf] %vm369, %v324
      %375 = vst.msk [vmem:[#allocation2 + $0x10] sm:$0xf] %vm369, %v325
      %376 = vst.msk [vmem:[#allocation2 + $0x14] sm:$0x1] %vm372, %v326
      %377 = vst.msk [vmem:[#allocation2 + $0x18] sm:$0xf] %vm369, %v327
      %378 = vst.msk [vmem:[#allocation2 + $0x1c] sm:$0xf] %vm369, %v328
      %379 = vst.msk [vmem:[#allocation2 + $0x20] sm:$0x1] %vm372, %v329
      %380 = vst.msk [vmem:[#allocation2 + $0x24] sm:$0xf] %vm369, %v330
      %381 = vst.msk [vmem:[#allocation2 + $0x28] sm:$0xf] %vm369, %v331
      %382 = vst.msk [vmem:[#allocation2 + $0x2c] sm:$0x1] %vm372, %v332
      %383 = vst.msk [vmem:[#allocation2 + $0x30] sm:$0xf] %vm369, %v333
      %384 = vst.msk [vmem:[#allocation2 + $0x34] sm:$0xf] %vm369, %v334
      %385 = vst.msk [vmem:[#allocation2 + $0x38] sm:$0x1] %vm372, %v335
      %386 = vst.msk [vmem:[#allocation2 + $0x3c] sm:$0xf] %vm369, %v336
      %387 = vst.msk [vmem:[#allocation2 + $0x40] sm:$0xf] %vm369, %v337
      %388 = vst.msk [vmem:[#allocation2 + $0x44] sm:$0x1] %vm372, %v338
      %389 = vst.msk [vmem:[#allocation2 + $0x48] sm:$0xf] %vm369, %v339
      %390 = vst.msk [vmem:[#allocation2 + $0x4c] sm:$0xf] %vm369, %v340
      %391 = vst.msk [vmem:[#allocation2 + $0x50] sm:$0x1] %vm372, %v341
      %392 = vst.msk [vmem:[#allocation2 + $0x54] sm:$0xf] %vm369, %v342
      %393 = vst.msk [vmem:[#allocation2 + $0x58] sm:$0xf] %vm369, %v343
      %394 = vst.msk [vmem:[#allocation2 + $0x5c] sm:$0x1] %vm372, %v344
      %395 = vst.msk [vmem:[#allocation2 + $0x60] sm:$0xf] %vm369, %v345
      %396 = vst.msk [vmem:[#allocation2 + $0x64] sm:$0xf] %vm369, %v346
      %397 = vst.msk [vmem:[#allocation2 + $0x68] sm:$0x1] %vm372, %v347
      %398 = vst.msk [vmem:[#allocation2 + $0x6c] sm:$0xf] %vm369, %v348
      %399 = vst.msk [vmem:[#allocation2 + $0x70] sm:$0xf] %vm369, %v349
      %400 = vst.msk [vmem:[#allocation2 + $0x74] sm:$0x1] %vm372, %v350
      %401 = vst.msk [vmem:[#allocation2 + $0x78] sm:$0xf] %vm369, %v351
      %402 = vst.msk [vmem:[#allocation2 + $0x7c] sm:$0xf] %vm369, %v352
      %403 = vst.msk [vmem:[#allocation2 + $0x80] sm:$0x1] %vm372, %v353
      %404 = vst.msk [vmem:[#allocation2 + $0x84] sm:$0xf] %vm369, %v354
      %405 = vst.msk [vmem:[#allocation2 + $0x88] sm:$0xf] %vm369, %v355
      %406 = vst.msk [vmem:[#allocation2 + $0x8c] sm:$0x1] %vm372, %v356
      %407 = vst.msk [vmem:[#allocation2 + $0x90] sm:$0xf] %vm369, %v357
      %408 = vst.msk [vmem:[#allocation2 + $0x94] sm:$0xf] %vm369, %v358
      %409 = vst.msk [vmem:[#allocation2 + $0x98] sm:$0x1] %vm372, %v359
      %410 = vst.msk [vmem:[#allocation2 + $0x9c] sm:$0xf] %vm369, %v360
      %411 = vst.msk [vmem:[#allocation2 + $0xa0] sm:$0xf] %vm369, %v361
      %412 = vst.msk [vmem:[#allocation2 + $0xa4] sm:$0x1] %vm372, %v362
      %413 = vst.msk [vmem:[#allocation2 + $0xa8] sm:$0xf] %vm369, %v363
      %414 = vst.msk [vmem:[#allocation2 + $0xac] sm:$0xf] %vm369, %v364
      %415 = vst.msk [vmem:[#allocation2 + $0xb0] sm:$0x1] %vm372, %v365
      %416 = vst.msk [vmem:[#allocation2 + $0xb4] sm:$0xf] %vm369, %v366
      %417 = vst.msk [vmem:[#allocation2 + $0xb8] sm:$0xf] %vm369, %v367
      %418 = vst.msk [vmem:[#allocation2 + $0xbc] sm:$0x1] %vm372, %v368
      %v419 = vld [vmem:[%s305] sm:$0xf]
      %v420 = vld [vmem:[%s305 + $0x4] sm:$0xf]
      %v421 = vld [vmem:[%s305 + $0x8] sm:$0x1]
      %v422 = vld [vmem:[%s305 + $0xc] sm:$0xf]
      %v423 = vld [vmem:[%s305 + $0x10] sm:$0xf]
      %v424 = vld [vmem:[%s305 + $0x14] sm:$0x1]
      %s425 = scalar_lea.vmem [#allocation2], 192
      %426 = vst.msk [vmem:[%s425] sm:$0xf] %vm369, %v419
      %427 = vst.msk [vmem:[%s425 + $0x4] sm:$0xf] %vm369, %v420
      %428 = vst.msk [vmem:[%s425 + $0x8] sm:$0x1] %vm372, %v421
      %429 = vst.msk [vmem:[%s425 + $0xc] sm:$0xf] %vm369, %v422
      %430 = vst.msk [vmem:[%s425 + $0x10] sm:$0xf] %vm369, %v423
      %431 = vst.msk [vmem:[%s425 + $0x14] sm:$0x1] %vm372, %v424
      %v432 = vld [vmem:[#allocation2] sm:$0xf]
      %v433 = vld [vmem:[#allocation2 + $0x4] sm:$0xf]
      %v434 = vld [vmem:[#allocation2 + $0xc] sm:$0xf]
      %v435 = vld [vmem:[#allocation2 + $0x10] sm:$0xf]
      %v436 = vld [vmem:[#allocation2 + $0x18] sm:$0xf]
      %v437 = vld [vmem:[#allocation2 + $0x1c] sm:$0xf]
      %v438 = vld [vmem:[#allocation2 + $0x24] sm:$0xf]
      %v439 = vld [vmem:[#allocation2 + $0x28] sm:$0xf]
      %v440 = vld [vmem:[#allocation2 + $0x30] sm:$0xf]
      %v441 = vld [vmem:[#allocation2 + $0x34] sm:$0xf]
      %v442 = vld [vmem:[#allocation2 + $0x3c] sm:$0xf]
      %v443 = vld [vmem:[#allocation2 + $0x40] sm:$0xf]
      %v444 = vld [vmem:[#allocation2 + $0x48] sm:$0xf]
      %v445 = vld [vmem:[#allocation2 + $0x4c] sm:$0xf]
      %v446 = vld [vmem:[#allocation2 + $0x54] sm:$0xf]
      %v447 = vld [vmem:[#allocation2 + $0x58] sm:$0xf]
      %v448 = vld [vmem:[#allocation2 + $0x60] sm:$0xf]
      %v449 = vld [vmem:[#allocation2 + $0x64] sm:$0xf]
      %v450 = vld [vmem:[#allocation2 + $0x6c] sm:$0xf]
      %v451 = vld [vmem:[#allocation2 + $0x70] sm:$0xf]
      %v452 = vld [vmem:[#allocation2 + $0x78] sm:$0xf]
      %v453 = vld [vmem:[#allocation2 + $0x7c] sm:$0xf]
      %v454 = vld [vmem:[#allocation2 + $0x84] sm:$0xf]
      %v455 = vld [vmem:[#allocation2 + $0x88] sm:$0xf]
      %v456 = vld [vmem:[#allocation2 + $0x90] sm:$0xf]
      %v457 = vld [vmem:[#allocation2 + $0x94] sm:$0xf]
      %v458 = vld [vmem:[#allocation2 + $0x9c] sm:$0xf]
      %v459 = vld [vmem:[#allocation2 + $0xa0] sm:$0xf]
      %v460 = vld [vmem:[#allocation2 + $0xa8] sm:$0xf]
      %v461 = vld [vmem:[#allocation2 + $0xac] sm:$0xf]
      %v462 = vld [vmem:[#allocation2 + $0xb4] sm:$0xf]
      %v463 = vld [vmem:[#allocation2 + $0xb8] sm:$0xf]
      %v464 = vld [vmem:[%s2] sm:$0xf]
      %v465 = vld [vmem:[%s2 + $0x4] sm:$0xf]
      %v466 = vld [vmem:[%s2 + $0x8] sm:$0xf]
      %v467 = vld [vmem:[%s2 + $0xc] sm:$0xf]
      %v468 = vld [vmem:[#allocation2 + $0x8] sm:$0x1]
      %v469 = vld [vmem:[#allocation2 + $0x14] sm:$0x1]
      %v470 = vld [vmem:[#allocation2 + $0x20] sm:$0x1]
      %v471 = vld [vmem:[#allocation2 + $0x2c] sm:$0x1]
      %v472 = vld [vmem:[#allocation2 + $0x38] sm:$0x1]
      %v473 = vld [vmem:[#allocation2 + $0x44] sm:$0x1]
      %v474 = vld [vmem:[#allocation2 + $0x50] sm:$0x1]
      %v475 = vld [vmem:[#allocation2 + $0x5c] sm:$0x1]
      %v476 = vld [vmem:[#allocation2 + $0x68] sm:$0x1]
      %v477 = vld [vmem:[#allocation2 + $0x74] sm:$0x1]
      %v478 = vld [vmem:[#allocation2 + $0x80] sm:$0x1]
      %v479 = vld [vmem:[#allocation2 + $0x8c] sm:$0x1]
      %v480 = vld [vmem:[#allocation2 + $0x98] sm:$0x1]
      %v481 = vld [vmem:[#allocation2 + $0xa4] sm:$0x1]
      %v482 = vld [vmem:[#allocation2 + $0xb0] sm:$0x1]
      %v483 = vld [vmem:[#allocation2 + $0xbc] sm:$0x1]
      %vm484 = vsmask.f32 3328
      %vm485 = vsmask.f32 7440
      %vm486 = vmor %vm484, %vm485
      %v488 = vshrl.u32 %v432, 16
      %v490 = vrot.slane %v488, 4
      %v491 = vshll.u32 %v432, 16
      %v493 = vrot.slane %v491, 5
      %v494 = vor.u32 %v490, %v493
      %v495 = vrot.slane %v494, 4
      %v497 = vshll.u32 %v433, 16
      %v499 = vrot.slane %v497, 5
      %v500 = vsel %vm486, %v495, %v499
      %v501 = vshrl.u32 %v433, 16
      %v503 = vrot.slane %v501, 4
      %v504 = vor.u32 %v503, %v499
      %v505 = vrot.slane %v504, 4
      %v507 = vshll.u32 %v468, 16
      %v509 = vrot.slane %v507, 5
      %v510 = vsel %vm486, %v505, %v509
      %v512 = vshrl.u32 %v434, 16
      %v514 = vrot.slane %v512, 4
      %v515 = vshll.u32 %v434, 16
      %v517 = vrot.slane %v515, 5
      %v518 = vor.u32 %v514, %v517
      %v519 = vrot.slane %v518, 4
      %v521 = vshll.u32 %v435, 16
      %v523 = vrot.slane %v521, 5
      %v524 = vsel %vm486, %v519, %v523
      %v525 = vshrl.u32 %v435, 16
      %v527 = vrot.slane %v525, 4
      %v528 = vor.u32 %v527, %v523
      %v529 = vrot.slane %v528, 4
      %v531 = vshll.u32 %v469, 16
      %v533 = vrot.slane %v531, 5
      %v534 = vsel %vm486, %v529, %v533
      %v536 = vshrl.u32 %v436, 16
      %v538 = vrot.slane %v536, 4
      %v539 = vshll.u32 %v436, 16
      %v541 = vrot.slane %v539, 5
      %v542 = vor.u32 %v538, %v541
      %v543 = vrot.slane %v542, 4
      %v545 = vshll.u32 %v437, 16
      %v547 = vrot.slane %v545, 5
      %v548 = vsel %vm486, %v543, %v547
      %v549 = vshrl.u32 %v437, 16
      %v551 = vrot.slane %v549, 4
      %v552 = vor.u32 %v551, %v547
      %v553 = vrot.slane %v552, 4
      %v555 = vshll.u32 %v470, 16
      %v557 = vrot.slane %v555, 5
      %v558 = vsel %vm486, %v553, %v557
      %v560 = vshrl.u32 %v438, 16
      %v562 = vrot.slane %v560, 4
      %v563 = vshll.u32 %v438, 16
      %v565 = vrot.slane %v563, 5
      %v566 = vor.u32 %v562, %v565
      %v567 = vrot.slane %v566, 4
      %v569 = vshll.u32 %v439, 16
      %v571 = vrot.slane %v569, 5
      %v572 = vsel %vm486, %v567, %v571
      %v573 = vshrl.u32 %v439, 16
      %v575 = vrot.slane %v573, 4
      %v576 = vor.u32 %v575, %v571
      %v577 = vrot.slane %v576, 4
      %v579 = vshll.u32 %v471, 16
      %v581 = vrot.slane %v579, 5
      %v582 = vsel %vm486, %v577, %v581
      %v584 = vshrl.u32 %v440, 16
      %v586 = vrot.slane %v584, 4
      %v587 = vshll.u32 %v440, 16
      %v589 = vrot.slane %v587, 5
      %v590 = vor.u32 %v586, %v589
      %v591 = vrot.slane %v590, 4
      %v593 = vshll.u32 %v441, 16
      %v595 = vrot.slane %v593, 5
      %v596 = vsel %vm486, %v591, %v595
      %v597 = vshrl.u32 %v441, 16
      %v599 = vrot.slane %v597, 4
      %v600 = vor.u32 %v599, %v595
      %v601 = vrot.slane %v600, 4
      %v603 = vshll.u32 %v472, 16
      %v605 = vrot.slane %v603, 5
      %v606 = vsel %vm486, %v601, %v605
      %v608 = vshrl.u32 %v442, 16
      %v610 = vrot.slane %v608, 4
      %v611 = vshll.u32 %v442, 16
      %v613 = vrot.slane %v611, 5
      %v614 = vor.u32 %v610, %v613
      %v615 = vrot.slane %v614, 4
      %v617 = vshll.u32 %v443, 16
      %v619 = vrot.slane %v617, 5
      %v620 = vsel %vm486, %v615, %v619
      %v621 = vshrl.u32 %v443, 16
      %v623 = vrot.slane %v621, 4
      %v624 = vor.u32 %v623, %v619
      %v625 = vrot.slane %v624, 4
      %v627 = vshll.u32 %v473, 16
      %v629 = vrot.slane %v627, 5
      %v630 = vsel %vm486, %v625, %v629
      %v632 = vshrl.u32 %v444, 16
      %v634 = vrot.slane %v632, 4
      %v635 = vshll.u32 %v444, 16
      %v637 = vrot.slane %v635, 5
      %v638 = vor.u32 %v634, %v637
      %v639 = vrot.slane %v638, 4
      %v641 = vshll.u32 %v445, 16
      %v643 = vrot.slane %v641, 5
      %v644 = vsel %vm486, %v639, %v643
      %v645 = vshrl.u32 %v445, 16
      %v647 = vrot.slane %v645, 4
      %v648 = vor.u32 %v647, %v643
      %v649 = vrot.slane %v648, 4
      %v651 = vshll.u32 %v474, 16
      %v653 = vrot.slane %v651, 5
      %v654 = vsel %vm486, %v649, %v653
      %v656 = vshrl.u32 %v446, 16
      %v658 = vrot.slane %v656, 4
      %v659 = vshll.u32 %v446, 16
      %v661 = vrot.slane %v659, 5
      %v662 = vor.u32 %v658, %v661
      %v663 = vrot.slane %v662, 4
      %v665 = vshll.u32 %v447, 16
      %v667 = vrot.slane %v665, 5
      %v668 = vsel %vm486, %v663, %v667
      %v669 = vshrl.u32 %v447, 16
      %v671 = vrot.slane %v669, 4
      %v672 = vor.u32 %v671, %v667
      %v673 = vrot.slane %v672, 4
      %v675 = vshll.u32 %v475, 16
      %v677 = vrot.slane %v675, 5
      %v678 = vsel %vm486, %v673, %v677
      %v680 = vshrl.u32 %v448, 16
      %v682 = vrot.slane %v680, 4
      %v683 = vshll.u32 %v448, 16
      %v685 = vrot.slane %v683, 5
      %v686 = vor.u32 %v682, %v685
      %v687 = vrot.slane %v686, 4
      %v689 = vshll.u32 %v449, 16
      %v691 = vrot.slane %v689, 5
      %v692 = vsel %vm486, %v687, %v691
      %v693 = vshrl.u32 %v449, 16
      %v695 = vrot.slane %v693, 4
      %v696 = vor.u32 %v695, %v691
      %v697 = vrot.slane %v696, 4
      %v699 = vshll.u32 %v476, 16
      %v701 = vrot.slane %v699, 5
      %v702 = vsel %vm486, %v697, %v701
      %v704 = vshrl.u32 %v450, 16
      %v706 = vrot.slane %v704, 4
      %v707 = vshll.u32 %v450, 16
      %v709 = vrot.slane %v707, 5
      %v710 = vor.u32 %v706, %v709
      %v711 = vrot.slane %v710, 4
      %v713 = vshll.u32 %v451, 16
      %v715 = vrot.slane %v713, 5
      %v716 = vsel %vm486, %v711, %v715
      %v717 = vshrl.u32 %v451, 16
      %v719 = vrot.slane %v717, 4
      %v720 = vor.u32 %v719, %v715
      %v721 = vrot.slane %v720, 4
      %v723 = vshll.u32 %v477, 16
      %v725 = vrot.slane %v723, 5
      %v726 = vsel %vm486, %v721, %v725
      %v728 = vshrl.u32 %v452, 16
      %v730 = vrot.slane %v728, 4
      %v731 = vshll.u32 %v452, 16
      %v733 = vrot.slane %v731, 5
      %v734 = vor.u32 %v730, %v733
      %v735 = vrot.slane %v734, 4
      %v737 = vshll.u32 %v453, 16
      %v739 = vrot.slane %v737, 5
      %v740 = vsel %vm486, %v735, %v739
      %v741 = vshrl.u32 %v453, 16
      %v743 = vrot.slane %v741, 4
      %v744 = vor.u32 %v743, %v739
      %v745 = vrot.slane %v744, 4
      %v747 = vshll.u32 %v478, 16
      %v749 = vrot.slane %v747, 5
      %v750 = vsel %vm486, %v745, %v749
      %v752 = vshrl.u32 %v454, 16
      %v754 = vrot.slane %v752, 4
      %v755 = vshll.u32 %v454, 16
      %v757 = vrot.slane %v755, 5
      %v758 = vor.u32 %v754, %v757
      %v759 = vrot.slane %v758, 4
      %v761 = vshll.u32 %v455, 16
      %v763 = vrot.slane %v761, 5
      %v764 = vsel %vm486, %v759, %v763
      %v765 = vshrl.u32 %v455, 16
      %v767 = vrot.slane %v765, 4
      %v768 = vor.u32 %v767, %v763
      %v769 = vrot.slane %v768, 4
      %v771 = vshll.u32 %v479, 16
      %v773 = vrot.slane %v771, 5
      %v774 = vsel %vm486, %v769, %v773
      %v776 = vshrl.u32 %v456, 16
      %v778 = vrot.slane %v776, 4
      %v779 = vshll.u32 %v456, 16
      %v781 = vrot.slane %v779, 5
      %v782 = vor.u32 %v778, %v781
      %v783 = vrot.slane %v782, 4
      %v785 = vshll.u32 %v457, 16
      %v787 = vrot.slane %v785, 5
      %v788 = vsel %vm486, %v783, %v787
      %v789 = vshrl.u32 %v457, 16
      %v791 = vrot.slane %v789, 4
      %v792 = vor.u32 %v791, %v787
      %v793 = vrot.slane %v792, 4
      %v795 = vshll.u32 %v480, 16
      %v797 = vrot.slane %v795, 5
      %v798 = vsel %vm486, %v793, %v797
      %v800 = vshrl.u32 %v458, 16
      %v802 = vrot.slane %v800, 4
      %v803 = vshll.u32 %v458, 16
      %v805 = vrot.slane %v803, 5
      %v806 = vor.u32 %v802, %v805
      %v807 = vrot.slane %v806, 4
      %v809 = vshll.u32 %v459, 16
      %v811 = vrot.slane %v809, 5
      %v812 = vsel %vm486, %v807, %v811
      %v813 = vshrl.u32 %v459, 16
      %v815 = vrot.slane %v813, 4
      %v816 = vor.u32 %v815, %v811
      %v817 = vrot.slane %v816, 4
      %v819 = vshll.u32 %v481, 16
      %v821 = vrot.slane %v819, 5
      %v822 = vsel %vm486, %v817, %v821
      %v824 = vshrl.u32 %v460, 16
      %v826 = vrot.slane %v824, 4
      %v827 = vshll.u32 %v460, 16
      %v829 = vrot.slane %v827, 5
      %v830 = vor.u32 %v826, %v829
      %v831 = vrot.slane %v830, 4
      %v833 = vshll.u32 %v461, 16
      %v835 = vrot.slane %v833, 5
      %v836 = vsel %vm486, %v831, %v835
      %v837 = vshrl.u32 %v461, 16
      %v839 = vrot.slane %v837, 4
      %v840 = vor.u32 %v839, %v835
      %v841 = vrot.slane %v840, 4
      %v843 = vshll.u32 %v482, 16
      %v845 = vrot.slane %v843, 5
      %v846 = vsel %vm486, %v841, %v845
      %v848 = vshrl.u32 %v462, 16
      %v850 = vrot.slane %v848, 4
      %v851 = vshll.u32 %v462, 16
      %v853 = vrot.slane %v851, 5
      %v854 = vor.u32 %v850, %v853
      %v855 = vrot.slane %v854, 4
      %v857 = vshll.u32 %v463, 16
      %v859 = vrot.slane %v857, 5
      %v860 = vsel %vm486, %v855, %v859
      %v861 = vshrl.u32 %v463, 16
      %v863 = vrot.slane %v861, 4
      %v864 = vor.u32 %v863, %v859
      %v865 = vrot.slane %v864, 4
      %v867 = vshll.u32 %v483, 16
      %v869 = vrot.slane %v867, 5
      %v870 = vsel %vm486, %v865, %v869
      %s871 = scalar_lea.vmem %s2, 16
      %v872 = vld [vmem:[%s871] sm:$0xf]
      %v873 = vld [vmem:[%s871 + $0x4] sm:$0xf]
      %v874 = vld [vmem:[%s871 + $0x8] sm:$0xf]
      %v875 = vld [vmem:[%s871 + $0xc] sm:$0xf]
      %v876 = vunpack.c.l.b16 %v500
      %v877 = vunpack.c.l.b16 %v510
      %v878 = vunpack.c.l.b16 %v524
      %v879 = vunpack.c.l.b16 %v534
      %v880 = vunpack.c.l.b16 %v548
      %v881 = vunpack.c.l.b16 %v558
      %v882 = vunpack.c.l.b16 %v572
      %v883 = vunpack.c.l.b16 %v582
      %v884 = vunpack.c.l.b16 %v596
      %v885 = vunpack.c.l.b16 %v606
      %v886 = vunpack.c.l.b16 %v620
      %v887 = vunpack.c.l.b16 %v630
      %v888 = vunpack.c.l.b16 %v644
      %v889 = vunpack.c.l.b16 %v654
      %v890 = vunpack.c.l.b16 %v668
      %v891 = vunpack.c.l.b16 %v678
      %v892 = vunpack.c.l.b16 %v692
      %v893 = vunpack.c.l.b16 %v702
      %v894 = vunpack.c.l.b16 %v716
      %v895 = vunpack.c.l.b16 %v726
      %v896 = vunpack.c.l.b16 %v740
      %v897 = vunpack.c.l.b16 %v750
      %v898 = vunpack.c.l.b16 %v764
      %v899 = vunpack.c.l.b16 %v774
      %v900 = vunpack.c.l.b16 %v788
      %v901 = vunpack.c.l.b16 %v798
      %v902 = vunpack.c.l.b16 %v812
      %v903 = vunpack.c.l.b16 %v822
      %v904 = vunpack.c.l.b16 %v836
      %v905 = vunpack.c.l.b16 %v846
      %v906 = vunpack.c.l.b16 %v860
      %v907 = vunpack.c.l.b16 %v870
      %v908 = vpack.c.b16 %v877, %v876
      %v909 = vpack.c.b16 %v879, %v878
      %v910 = vpack.c.b16 %v881, %v880
      %v911 = vpack.c.b16 %v883, %v882
      %v912 = vpack.c.b16 %v885, %v884
      %v913 = vpack.c.b16 %v887, %v886
      %v914 = vpack.c.b16 %v889, %v888
      %v915 = vpack.c.b16 %v891, %v890
      %v916 = vpack.c.b16 %v893, %v892
      %v917 = vpack.c.b16 %v895, %v894
      %v918 = vpack.c.b16 %v897, %v896
      %v919 = vpack.c.b16 %v899, %v898
      %v920 = vpack.c.b16 %v901, %v900
      %v921 = vpack.c.b16 %v903, %v902
      %v922 = vpack.c.b16 %v905, %v904
      %v923 = vpack.c.b16 %v907, %v906
      %v928 = vunpack.c.l.b16 %v872
      %v929 = vunpack.c.l.b16 %v873
      %v930 = vunpack.c.l.b16 %v874
      %v931 = vunpack.c.l.b16 %v875
      %v932 = vpack.c.b16 %v929, %v928
      %v933 = vpack.c.b16 %v931, %v930
      %vm936 = vcmask 261120
      %v938 = vsel %vm936, %v908, 0
      %v941 = vsel %vm936, %v909, 0
      %v944 = vsel %vm936, %v910, 0
      %v947 = vsel %vm936, %v911, 0
      %v950 = vsel %vm936, %v912, 0
      %v953 = vsel %vm936, %v913, 0
      %v956 = vsel %vm936, %v914, 0
      %v959 = vsel %vm936, %v915, 0
      %v962 = vsel %vm936, %v916, 0
      %v965 = vsel %vm936, %v917, 0
      %v968 = vsel %vm936, %v918, 0
      %v971 = vsel %vm936, %v919, 0
      %v974 = vsel %vm936, %v920, 0
      %v977 = vsel %vm936, %v921, 0
      %v980 = vsel %vm936, %v922, 0
      %v983 = vsel %vm936, %v923, 0
      %985 = vmatprep.subr.bf16.mxu0 0
      %986 = vmatpush1.bf16.msra.mxu0 %v932
      %987 = vmatprep.subr.bf16.mxu0 0
      %988 = vmatpush1.bf16.msra.mxu0 %v933
      %989 = vmatprep.subr.bf16.mxu0 0
      %990 = vmatpush1.bf16.msra.mxu0 0
      %991 = vmatprep.subr.bf16.mxu0 0
      %992 = vmatpush1.bf16.msra.mxu0 0
      %993 = vmatprep.subr.bf16.mxu0 0
      %994 = vmatpush1.bf16.msra.mxu0 0
      %995 = vmatprep.subr.bf16.mxu0 0
      %996 = vmatpush1.bf16.msra.mxu0 0
      %997 = vmatprep.subr.bf16.mxu0 0
      %998 = vmatpush1.bf16.msra.mxu0 0
      %999 = vmatprep.subr.bf16.mxu0 0
      %1000 = vmatpush1.bf16.msra.mxu0 0
      %1001 = vmatprep.subr.bf16.mxu0 0
      %1002 = vmatpush1.bf16.msra.mxu0 0
      %1003 = vmatprep.subr.bf16.mxu0 0
      %1004 = vmatpush1.bf16.msra.mxu0 0
      %1005 = vmatprep.subr.bf16.mxu0 0
      %1006 = vmatpush1.bf16.msra.mxu0 0
      %1007 = vmatprep.subr.bf16.mxu0 0
      %1008 = vmatpush1.bf16.msra.mxu0 0
      %1009 = vmatprep.subr.bf16.mxu0 0
      %1010 = vmatpush1.bf16.msra.mxu0 0
      %1011 = vmatprep.subr.bf16.mxu0 0
      %1012 = vmatpush1.bf16.msra.mxu0 0
      %1013 = vmatprep.subr.bf16.mxu0 0
      %1014 = vmatpush1.bf16.msra.mxu0 0
      %1015 = vmatprep.subr.bf16.mxu0 0
      %1016 = vmatpush1.bf16.msra.mxu0 0
      %1017 = vmatprep.mubr.bf16.mxu0 0
      %1018 = vmatmul.mubr.bf16.gmra.mrb[0].mxu0 %v938
      %v1019 = vpop.f32.mrb[0].mxu0
      %v1020 = vadd.f32 0.0, %v1019
      %v1021 = vpop.f32.mrb[0].mxu0
      %v1022 = vpop.f32.mrb[0].mxu0
      %v1023 = vadd.f32 0.0, %v1022
      %v1024 = vpop.f32.mrb[0].mxu0
      %1025 = vmatprep.mubr.bf16.mxu0 0
      %1026 = vmatmul.mubr.bf16.gmra.mrb[0].mxu0 %v941
      %v1027 = vpop.f32.mrb[0].mxu0
      %v1028 = vadd.f32 0.0, %v1027
      %v1029 = vpop.f32.mrb[0].mxu0
      %v1030 = vpop.f32.mrb[0].mxu0
      %v1031 = vadd.f32 0.0, %v1030
      %v1032 = vpop.f32.mrb[0].mxu0
      %1033 = vmatprep.mubr.bf16.mxu0 0
      %1034 = vmatmul.mubr.bf16.gmra.mrb[0].mxu0 %v944
      %v1035 = vpop.f32.mrb[0].mxu0
      %v1036 = vadd.f32 0.0, %v1035
      %v1037 = vpop.f32.mrb[0].mxu0
      %v1038 = vpop.f32.mrb[0].mxu0
      %v1039 = vadd.f32 0.0, %v1038
      %v1040 = vpop.f32.mrb[0].mxu0
      %1041 = vmatprep.mubr.bf16.mxu0 0
      %1042 = vmatmul.mubr.bf16.gmra.mrb[0].mxu0 %v947
      %v1043 = vpop.f32.mrb[0].mxu0
      %v1044 = vadd.f32 0.0, %v1043
      %v1045 = vpop.f32.mrb[0].mxu0
      %v1046 = vpop.f32.mrb[0].mxu0
      %v1047 = vadd.f32 0.0, %v1046
      %v1048 = vpop.f32.mrb[0].mxu0
      %1049 = vmatprep.mubr.bf16.mxu0 0
      %1050 = vmatmul.mubr.bf16.gmra.mrb[0].mxu0 %v950
      %v1051 = vpop.f32.mrb[0].mxu0
      %v1052 = vadd.f32 0.0, %v1051
      %v1053 = vpop.f32.mrb[0].mxu0
      %v1054 = vpop.f32.mrb[0].mxu0
      %v1055 = vadd.f32 0.0, %v1054
      %v1056 = vpop.f32.mrb[0].mxu0
      %1057 = vmatprep.mubr.bf16.mxu0 0
      %1058 = vmatmul.mubr.bf16.gmra.mrb[0].mxu0 %v953
      %v1059 = vpop.f32.mrb[0].mxu0
      %v1060 = vadd.f32 0.0, %v1059
      %v1061 = vpop.f32.mrb[0].mxu0
      %v1062 = vpop.f32.mrb[0].mxu0
      %v1063 = vadd.f32 0.0, %v1062
      %v1064 = vpop.f32.mrb[0].mxu0
      %1065 = vmatprep.mubr.bf16.mxu0 0
      %1066 = vmatmul.mubr.bf16.gmra.mrb[0].mxu0 %v956
      %v1067 = vpop.f32.mrb[0].mxu0
      %v1068 = vadd.f32 0.0, %v1067
      %v1069 = vpop.f32.mrb[0].mxu0
      %v1070 = vpop.f32.mrb[0].mxu0
      %v1071 = vadd.f32 0.0, %v1070
      %v1072 = vpop.f32.mrb[0].mxu0
      %1073 = vmatprep.mubr.bf16.mxu0 0
      %1074 = vmatmul.mubr.bf16.gmra.mrb[0].mxu0 %v959
      %v1075 = vpop.f32.mrb[0].mxu0
      %v1076 = vadd.f32 0.0, %v1075
      %v1077 = vpop.f32.mrb[0].mxu0
      %v1078 = vpop.f32.mrb[0].mxu0
      %v1079 = vadd.f32 0.0, %v1078
      %v1080 = vpop.f32.mrb[0].mxu0
      %1081 = vmatprep.mubr.bf16.mxu0 0
      %1082 = vmatmul.mubr.bf16.gmra.mrb[0].mxu0 %v962
      %v1083 = vpop.f32.mrb[0].mxu0
      %v1084 = vadd.f32 0.0, %v1083
      %v1085 = vpop.f32.mrb[0].mxu0
      %v1086 = vpop.f32.mrb[0].mxu0
      %v1087 = vadd.f32 0.0, %v1086
      %v1088 = vpop.f32.mrb[0].mxu0
      %1089 = vmatprep.mubr.bf16.mxu0 0
      %1090 = vmatmul.mubr.bf16.gmra.mrb[0].mxu0 %v965
      %v1091 = vpop.f32.mrb[0].mxu0
      %v1092 = vadd.f32 0.0, %v1091
      %v1093 = vpop.f32.mrb[0].mxu0
      %v1094 = vpop.f32.mrb[0].mxu0
      %v1095 = vadd.f32 0.0, %v1094
      %v1096 = vpop.f32.mrb[0].mxu0
      %1097 = vmatprep.mubr.bf16.mxu0 0
      %1098 = vmatmul.mubr.bf16.gmra.mrb[0].mxu0 %v968
      %v1099 = vpop.f32.mrb[0].mxu0
      %v1100 = vadd.f32 0.0, %v1099
      %v1101 = vpop.f32.mrb[0].mxu0
      %v1102 = vpop.f32.mrb[0].mxu0
      %v1103 = vadd.f32 0.0, %v1102
      %v1104 = vpop.f32.mrb[0].mxu0
      %1105 = vmatprep.mubr.bf16.mxu0 0
      %1106 = vmatmul.mubr.bf16.gmra.mrb[0].mxu0 %v971
      %v1107 = vpop.f32.mrb[0].mxu0
      %v1108 = vadd.f32 0.0, %v1107
      %v1109 = vpop.f32.mrb[0].mxu0
      %v1110 = vpop.f32.mrb[0].mxu0
      %v1111 = vadd.f32 0.0, %v1110
      %v1112 = vpop.f32.mrb[0].mxu0
      %1113 = vmatprep.mubr.bf16.mxu0 0
      %1114 = vmatmul.mubr.bf16.gmra.mrb[0].mxu0 %v974
      %v1115 = vpop.f32.mrb[0].mxu0
      %v1116 = vadd.f32 0.0, %v1115
      %v1117 = vpop.f32.mrb[0].mxu0
      %v1118 = vpop.f32.mrb[0].mxu0
      %v1119 = vadd.f32 0.0, %v1118
      %v1120 = vpop.f32.mrb[0].mxu0
      %1121 = vmatprep.mubr.bf16.mxu0 0
      %1122 = vmatmul.mubr.bf16.gmra.mrb[0].mxu0 %v977
      %v1123 = vpop.f32.mrb[0].mxu0
      %v1124 = vadd.f32 0.0, %v1123
      %v1125 = vpop.f32.mrb[0].mxu0
      %v1126 = vpop.f32.mrb[0].mxu0
      %v1127 = vadd.f32 0.0, %v1126
      %v1128 = vpop.f32.mrb[0].mxu0
      %1129 = vmatprep.mubr.bf16.mxu0 0
      %1130 = vmatmul.mubr.bf16.gmra.mrb[0].mxu0 %v980
      %v1131 = vpop.f32.mrb[0].mxu0
      %v1132 = vadd.f32 0.0, %v1131
      %v1133 = vpop.f32.mrb[0].mxu0
      %v1134 = vpop.f32.mrb[0].mxu0
      %v1135 = vadd.f32 0.0, %v1134
      %v1136 = vpop.f32.mrb[0].mxu0
      %1137 = vmatprep.mubr.bf16.mxu0 0
      %1138 = vmatmul.mubr.bf16.gmra.mrb[0].mxu0 %v983
      %v1139 = vpop.f32.mrb[0].mxu0
      %v1140 = vadd.f32 0.0, %v1139
      %v1141 = vpop.f32.mrb[0].mxu0
      %v1142 = vpop.f32.mrb[0].mxu0
      %v1143 = vadd.f32 0.0, %v1142
      %v1144 = vpop.f32.mrb[0].mxu0
      %1145 = vdwg.mxu0
      %v1178 = vunpack.c.l.b16 %v432
      %v1179 = vunpack.c.l.b16 %v433
      %v1180 = vunpack.c.l.b16 %v434
      %v1181 = vunpack.c.l.b16 %v435
      %v1182 = vunpack.c.l.b16 %v436
      %v1183 = vunpack.c.l.b16 %v437
      %v1184 = vunpack.c.l.b16 %v438
      %v1185 = vunpack.c.l.b16 %v439
      %v1186 = vunpack.c.l.b16 %v440
      %v1187 = vunpack.c.l.b16 %v441
      %v1188 = vunpack.c.l.b16 %v442
      %v1189 = vunpack.c.l.b16 %v443
      %v1190 = vunpack.c.l.b16 %v444
      %v1191 = vunpack.c.l.b16 %v445
      %v1192 = vunpack.c.l.b16 %v446
      %v1193 = vunpack.c.l.b16 %v447
      %v1194 = vunpack.c.l.b16 %v448
      %v1195 = vunpack.c.l.b16 %v449
      %v1196 = vunpack.c.l.b16 %v450
      %v1197 = vunpack.c.l.b16 %v451
      %v1198 = vunpack.c.l.b16 %v452
      %v1199 = vunpack.c.l.b16 %v453
      %v1200 = vunpack.c.l.b16 %v454
      %v1201 = vunpack.c.l.b16 %v455
      %v1202 = vunpack.c.l.b16 %v456
      %v1203 = vunpack.c.l.b16 %v457
      %v1204 = vunpack.c.l.b16 %v458
      %v1205 = vunpack.c.l.b16 %v459
      %v1206 = vunpack.c.l.b16 %v460
      %v1207 = vunpack.c.l.b16 %v461
      %v1208 = vunpack.c.l.b16 %v462
      %v1209 = vunpack.c.l.b16 %v463
      %v1210 = vpack.c.b16 %v1179, %v1178
      %v1211 = vpack.c.b16 %v1181, %v1180
      %v1212 = vpack.c.b16 %v1183, %v1182
      %v1213 = vpack.c.b16 %v1185, %v1184
      %v1214 = vpack.c.b16 %v1187, %v1186
      %v1215 = vpack.c.b16 %v1189, %v1188
      %v1216 = vpack.c.b16 %v1191, %v1190
      %v1217 = vpack.c.b16 %v1193, %v1192
      %v1218 = vpack.c.b16 %v1195, %v1194
      %v1219 = vpack.c.b16 %v1197, %v1196
      %v1220 = vpack.c.b16 %v1199, %v1198
      %v1221 = vpack.c.b16 %v1201, %v1200
      %v1222 = vpack.c.b16 %v1203, %v1202
      %v1223 = vpack.c.b16 %v1205, %v1204
      %v1224 = vpack.c.b16 %v1207, %v1206
      %v1225 = vpack.c.b16 %v1209, %v1208
      %v1230 = vunpack.c.l.b16 %v464
      %v1231 = vunpack.c.l.b16 %v465
      %v1232 = vunpack.c.l.b16 %v466
      %v1233 = vunpack.c.l.b16 %v467
      %v1234 = vpack.c.b16 %v1231, %v1230
      %v1235 = vpack.c.b16 %v1233, %v1232
      %v1239 = vsel %vm936, %v1210, 0
      %v1242 = vsel %vm936, %v1211, 0
      %v1245 = vsel %vm936, %v1212, 0
      %v1248 = vsel %vm936, %v1213, 0
      %v1251 = vsel %vm936, %v1214, 0
      %v1254 = vsel %vm936, %v1215, 0
      %v1257 = vsel %vm936, %v1216, 0
      %v1260 = vsel %vm936, %v1217, 0
      %v1263 = vsel %vm936, %v1218, 0
      %v1266 = vsel %vm936, %v1219, 0
      %v1269 = vsel %vm936, %v1220, 0
      %v1272 = vsel %vm936, %v1221, 0
      %v1275 = vsel %vm936, %v1222, 0
      %v1278 = vsel %vm936, %v1223, 0
      %v1281 = vsel %vm936, %v1224, 0
      %v1284 = vsel %vm936, %v1225, 0
      %1286 = vmatprep.subr.bf16.mxu0 0
      %1287 = vmatpush1.bf16.msra.mxu0 %v1234
      %1288 = vmatprep.subr.bf16.mxu0 0
      %1289 = vmatpush1.bf16.msra.mxu0 %v1235
      %1290 = vmatprep.subr.bf16.mxu0 0
      %1291 = vmatpush1.bf16.msra.mxu0 0
      %1292 = vmatprep.subr.bf16.mxu0 0
      %1293 = vmatpush1.bf16.msra.mxu0 0
      %1294 = vmatprep.subr.bf16.mxu0 0
      %1295 = vmatpush1.bf16.msra.mxu0 0
      %1296 = vmatprep.subr.bf16.mxu0 0
      %1297 = vmatpush1.bf16.msra.mxu0 0
      %1298 = vmatprep.subr.bf16.mxu0 0
      %1299 = vmatpush1.bf16.msra.mxu0 0
      %1300 = vmatprep.subr.bf16.mxu0 0
      %1301 = vmatpush1.bf16.msra.mxu0 0
      %1302 = vmatprep.subr.bf16.mxu0 0
      %1303 = vmatpush1.bf16.msra.mxu0 0
      %1304 = vmatprep.subr.bf16.mxu0 0
      %1305 = vmatpush1.bf16.msra.mxu0 0
      %1306 = vmatprep.subr.bf16.mxu0 0
      %1307 = vmatpush1.bf16.msra.mxu0 0
      %1308 = vmatprep.subr.bf16.mxu0 0
      %1309 = vmatpush1.bf16.msra.mxu0 0
      %1310 = vmatprep.subr.bf16.mxu0 0
      %1311 = vmatpush1.bf16.msra.mxu0 0
      %1312 = vmatprep.subr.bf16.mxu0 0
      %1313 = vmatpush1.bf16.msra.mxu0 0
      %1314 = vmatprep.subr.bf16.mxu0 0
      %1315 = vmatpush1.bf16.msra.mxu0 0
      %1316 = vmatprep.subr.bf16.mxu0 0
      %1317 = vmatpush1.bf16.msra.mxu0 0
      %1318 = vmatprep.mubr.bf16.mxu0 0
      %1319 = vmatmul.mubr.bf16.gmra.mrb[0].mxu0 %v1239
      %v1320 = vpop.f32.mrb[0].mxu0
      %v1321 = vadd.f32 %v1020, %v1320
      %v1322 = vpop.f32.mrb[0].mxu0
      %v1323 = vpop.f32.mrb[0].mxu0
      %v1324 = vadd.f32 %v1023, %v1323
      %v1325 = vpop.f32.mrb[0].mxu0
      %1326 = vmatprep.mubr.bf16.mxu0 0
      %1327 = vmatmul.mubr.bf16.gmra.mrb[0].mxu0 %v1242
      %v1328 = vpop.f32.mrb[0].mxu0
      %v1329 = vadd.f32 %v1028, %v1328
      %v1330 = vpop.f32.mrb[0].mxu0
      %v1331 = vpop.f32.mrb[0].mxu0
      %v1332 = vadd.f32 %v1031, %v1331
      %v1333 = vpop.f32.mrb[0].mxu0
      %1334 = vmatprep.mubr.bf16.mxu0 0
      %1335 = vmatmul.mubr.bf16.gmra.mrb[0].mxu0 %v1245
      %v1336 = vpop.f32.mrb[0].mxu0
      %v1337 = vadd.f32 %v1036, %v1336
      %v1338 = vpop.f32.mrb[0].mxu0
      %v1339 = vpop.f32.mrb[0].mxu0
      %v1340 = vadd.f32 %v1039, %v1339
      %v1341 = vpop.f32.mrb[0].mxu0
      %1342 = vmatprep.mubr.bf16.mxu0 0
      %1343 = vmatmul.mubr.bf16.gmra.mrb[0].mxu0 %v1248
      %v1344 = vpop.f32.mrb[0].mxu0
      %v1345 = vadd.f32 %v1044, %v1344
      %v1346 = vpop.f32.mrb[0].mxu0
      %v1347 = vpop.f32.mrb[0].mxu0
      %v1348 = vadd.f32 %v1047, %v1347
      %v1349 = vpop.f32.mrb[0].mxu0
      %1350 = vmatprep.mubr.bf16.mxu0 0
      %1351 = vmatmul.mubr.bf16.gmra.mrb[0].mxu0 %v1251
      %v1352 = vpop.f32.mrb[0].mxu0
      %v1353 = vadd.f32 %v1052, %v1352
      %v1354 = vpop.f32.mrb[0].mxu0
      %v1355 = vpop.f32.mrb[0].mxu0
      %v1356 = vadd.f32 %v1055, %v1355
      %v1357 = vpop.f32.mrb[0].mxu0
      %1358 = vmatprep.mubr.bf16.mxu0 0
      %1359 = vmatmul.mubr.bf16.gmra.mrb[0].mxu0 %v1254
      %v1360 = vpop.f32.mrb[0].mxu0
      %v1361 = vadd.f32 %v1060, %v1360
      %v1362 = vpop.f32.mrb[0].mxu0
      %v1363 = vpop.f32.mrb[0].mxu0
      %v1364 = vadd.f32 %v1063, %v1363
      %v1365 = vpop.f32.mrb[0].mxu0
      %1366 = vmatprep.mubr.bf16.mxu0 0
      %1367 = vmatmul.mubr.bf16.gmra.mrb[0].mxu0 %v1257
      %v1368 = vpop.f32.mrb[0].mxu0
      %v1369 = vadd.f32 %v1068, %v1368
      %v1370 = vpop.f32.mrb[0].mxu0
      %v1371 = vpop.f32.mrb[0].mxu0
      %v1372 = vadd.f32 %v1071, %v1371
      %v1373 = vpop.f32.mrb[0].mxu0
      %1374 = vmatprep.mubr.bf16.mxu0 0
      %1375 = vmatmul.mubr.bf16.gmra.mrb[0].mxu0 %v1260
      %v1376 = vpop.f32.mrb[0].mxu0
      %v1377 = vadd.f32 %v1076, %v1376
      %v1378 = vpop.f32.mrb[0].mxu0
      %v1379 = vpop.f32.mrb[0].mxu0
      %v1380 = vadd.f32 %v1079, %v1379
      %v1381 = vpop.f32.mrb[0].mxu0
      %1382 = vmatprep.mubr.bf16.mxu0 0
      %1383 = vmatmul.mubr.bf16.gmra.mrb[0].mxu0 %v1263
      %v1384 = vpop.f32.mrb[0].mxu0
      %v1385 = vadd.f32 %v1084, %v1384
      %v1386 = vpop.f32.mrb[0].mxu0
      %v1387 = vpop.f32.mrb[0].mxu0
      %v1388 = vadd.f32 %v1087, %v1387
      %v1389 = vpop.f32.mrb[0].mxu0
      %1390 = vmatprep.mubr.bf16.mxu0 0
      %1391 = vmatmul.mubr.bf16.gmra.mrb[0].mxu0 %v1266
      %v1392 = vpop.f32.mrb[0].mxu0
      %v1393 = vadd.f32 %v1092, %v1392
      %v1394 = vpop.f32.mrb[0].mxu0
      %v1395 = vpop.f32.mrb[0].mxu0
      %v1396 = vadd.f32 %v1095, %v1395
      %v1397 = vpop.f32.mrb[0].mxu0
      %1398 = vmatprep.mubr.bf16.mxu0 0
      %1399 = vmatmul.mubr.bf16.gmra.mrb[0].mxu0 %v1269
      %v1400 = vpop.f32.mrb[0].mxu0
      %v1401 = vadd.f32 %v1100, %v1400
      %v1402 = vpop.f32.mrb[0].mxu0
      %v1403 = vpop.f32.mrb[0].mxu0
      %v1404 = vadd.f32 %v1103, %v1403
      %v1405 = vpop.f32.mrb[0].mxu0
      %1406 = vmatprep.mubr.bf16.mxu0 0
      %1407 = vmatmul.mubr.bf16.gmra.mrb[0].mxu0 %v1272
      %v1408 = vpop.f32.mrb[0].mxu0
      %v1409 = vadd.f32 %v1108, %v1408
      %v1410 = vpop.f32.mrb[0].mxu0
      %v1411 = vpop.f32.mrb[0].mxu0
      %v1412 = vadd.f32 %v1111, %v1411
      %v1413 = vpop.f32.mrb[0].mxu0
      %1414 = vmatprep.mubr.bf16.mxu0 0
      %1415 = vmatmul.mubr.bf16.gmra.mrb[0].mxu0 %v1275
      %v1416 = vpop.f32.mrb[0].mxu0
      %v1417 = vadd.f32 %v1116, %v1416
      %v1418 = vpop.f32.mrb[0].mxu0
      %v1419 = vpop.f32.mrb[0].mxu0
      %v1420 = vadd.f32 %v1119, %v1419
      %v1421 = vpop.f32.mrb[0].mxu0
      %1422 = vmatprep.mubr.bf16.mxu0 0
      %1423 = vmatmul.mubr.bf16.gmra.mrb[0].mxu0 %v1278
      %v1424 = vpop.f32.mrb[0].mxu0
      %v1425 = vadd.f32 %v1124, %v1424
      %v1426 = vpop.f32.mrb[0].mxu0
      %v1427 = vpop.f32.mrb[0].mxu0
      %v1428 = vadd.f32 %v1127, %v1427
      %v1429 = vpop.f32.mrb[0].mxu0
      %1430 = vmatprep.mubr.bf16.mxu0 0
      %1431 = vmatmul.mubr.bf16.gmra.mrb[0].mxu0 %v1281
      %v1432 = vpop.f32.mrb[0].mxu0
      %v1433 = vadd.f32 %v1132, %v1432
      %v1434 = vpop.f32.mrb[0].mxu0
      %v1435 = vpop.f32.mrb[0].mxu0
      %v1436 = vadd.f32 %v1135, %v1435
      %v1437 = vpop.f32.mrb[0].mxu0
      %1438 = vmatprep.mubr.bf16.mxu0 0
      %1439 = vmatmul.mubr.bf16.gmra.mrb[0].mxu0 %v1284
      %v1440 = vpop.f32.mrb[0].mxu0
      %v1441 = vadd.f32 %v1140, %v1440
      %v1442 = vpop.f32.mrb[0].mxu0
      %v1443 = vpop.f32.mrb[0].mxu0
      %v1444 = vadd.f32 %v1143, %v1443
      %v1445 = vpop.f32.mrb[0].mxu0
      %1446 = vdwg.mxu0
      %v1447 = vld [vmem:[#allocation2] sm:$0xe]
      %v1448 = vld [vmem:[#allocation2 + $0xc] sm:$0xe]
      %v1449 = vld [vmem:[#allocation2 + $0x18] sm:$0xe]
      %v1450 = vld [vmem:[#allocation2 + $0x24] sm:$0xe]
      %v1451 = vld [vmem:[#allocation2 + $0x30] sm:$0xe]
      %v1452 = vld [vmem:[#allocation2 + $0x3c] sm:$0xe]
      %v1453 = vld [vmem:[#allocation2 + $0x48] sm:$0xe]
      %v1454 = vld [vmem:[#allocation2 + $0x54] sm:$0xe]
      %v1455 = vld [vmem:[#allocation2 + $0x60] sm:$0xe]
      %v1456 = vld [vmem:[#allocation2 + $0x6c] sm:$0xe]
      %v1457 = vld [vmem:[#allocation2 + $0x78] sm:$0xe]
      %v1458 = vld [vmem:[#allocation2 + $0x84] sm:$0xe]
      %v1459 = vld [vmem:[#allocation2 + $0x90] sm:$0xe]
      %v1460 = vld [vmem:[#allocation2 + $0x9c] sm:$0xe]
      %v1461 = vld [vmem:[#allocation2 + $0xa8] sm:$0xe]
      %v1462 = vld [vmem:[#allocation2 + $0xb4] sm:$0xe]
      %vm1495 = vcmask 1042432
      %vm1496 = vcmask 1046532
      %vm1497 = vmor %vm1495, %vm1496
      %v1498 = vrot.slane %v1447, 5
      %v1499 = vrot.slane %v1498, 4
      %v1500 = vrot.slane %v433, 5
      %v1501 = vsel %vm1497, %v1499, %v1500
      %v1502 = vrot.slane %v1500, 4
      %v1503 = vrot.slane %v468, 5
      %v1504 = vsel %vm1497, %v1502, %v1503
      %v1505 = vrot.slane %v1448, 5
      %v1506 = vrot.slane %v1505, 4
      %v1507 = vrot.slane %v435, 5
      %v1508 = vsel %vm1497, %v1506, %v1507
      %v1509 = vrot.slane %v1507, 4
      %v1510 = vrot.slane %v469, 5
      %v1511 = vsel %vm1497, %v1509, %v1510
      %v1512 = vrot.slane %v1449, 5
      %v1513 = vrot.slane %v1512, 4
      %v1514 = vrot.slane %v437, 5
      %v1515 = vsel %vm1497, %v1513, %v1514
      %v1516 = vrot.slane %v1514, 4
      %v1517 = vrot.slane %v470, 5
      %v1518 = vsel %vm1497, %v1516, %v1517
      %v1519 = vrot.slane %v1450, 5
      %v1520 = vrot.slane %v1519, 4
      %v1521 = vrot.slane %v439, 5
      %v1522 = vsel %vm1497, %v1520, %v1521
      %v1523 = vrot.slane %v1521, 4
      %v1524 = vrot.slane %v471, 5
      %v1525 = vsel %vm1497, %v1523, %v1524
      %v1526 = vrot.slane %v1451, 5
      %v1527 = vrot.slane %v1526, 4
      %v1528 = vrot.slane %v441, 5
      %v1529 = vsel %vm1497, %v1527, %v1528
      %v1530 = vrot.slane %v1528, 4
      %v1531 = vrot.slane %v472, 5
      %v1532 = vsel %vm1497, %v1530, %v1531
      %v1533 = vrot.slane %v1452, 5
      %v1534 = vrot.slane %v1533, 4
      %v1535 = vrot.slane %v443, 5
      %v1536 = vsel %vm1497, %v1534, %v1535
      %v1537 = vrot.slane %v1535, 4
      %v1538 = vrot.slane %v473, 5
      %v1539 = vsel %vm1497, %v1537, %v1538
      %v1540 = vrot.slane %v1453, 5
      %v1541 = vrot.slane %v1540, 4
      %v1542 = vrot.slane %v445, 5
      %v1543 = vsel %vm1497, %v1541, %v1542
      %v1544 = vrot.slane %v1542, 4
      %v1545 = vrot.slane %v474, 5
      %v1546 = vsel %vm1497, %v1544, %v1545
      %v1547 = vrot.slane %v1454, 5
      %v1548 = vrot.slane %v1547, 4
      %v1549 = vrot.slane %v447, 5
      %v1550 = vsel %vm1497, %v1548, %v1549
      %v1551 = vrot.slane %v1549, 4
      %v1552 = vrot.slane %v475, 5
      %v1553 = vsel %vm1497, %v1551, %v1552
      %v1554 = vrot.slane %v1455, 5
      %v1555 = vrot.slane %v1554, 4
      %v1556 = vrot.slane %v449, 5
      %v1557 = vsel %vm1497, %v1555, %v1556
      %v1558 = vrot.slane %v1556, 4
      %v1559 = vrot.slane %v476, 5
      %v1560 = vsel %vm1497, %v1558, %v1559
      %v1561 = vrot.slane %v1456, 5
      %v1562 = vrot.slane %v1561, 4
      %v1563 = vrot.slane %v451, 5
      %v1564 = vsel %vm1497, %v1562, %v1563
      %v1565 = vrot.slane %v1563, 4
      %v1566 = vrot.slane %v477, 5
      %v1567 = vsel %vm1497, %v1565, %v1566
      %v1568 = vrot.slane %v1457, 5
      %v1569 = vrot.slane %v1568, 4
      %v1570 = vrot.slane %v453, 5
      %v1571 = vsel %vm1497, %v1569, %v1570
      %v1572 = vrot.slane %v1570, 4
      %v1573 = vrot.slane %v478, 5
      %v1574 = vsel %vm1497, %v1572, %v1573
      %v1575 = vrot.slane %v1458, 5
      %v1576 = vrot.slane %v1575, 4
      %v1577 = vrot.slane %v455, 5
      %v1578 = vsel %vm1497, %v1576, %v1577
      %v1579 = vrot.slane %v1577, 4
      %v1580 = vrot.slane %v479, 5
      %v1581 = vsel %vm1497, %v1579, %v1580
      %v1582 = vrot.slane %v1459, 5
      %v1583 = vrot.slane %v1582, 4
      %v1584 = vrot.slane %v457, 5
      %v1585 = vsel %vm1497, %v1583, %v1584
      %v1586 = vrot.slane %v1584, 4
      %v1587 = vrot.slane %v480, 5
      %v1588 = vsel %vm1497, %v1586, %v1587
      %v1589 = vrot.slane %v1460, 5
      %v1590 = vrot.slane %v1589, 4
      %v1591 = vrot.slane %v459, 5
      %v1592 = vsel %vm1497, %v1590, %v1591
      %v1593 = vrot.slane %v1591, 4
      %v1594 = vrot.slane %v481, 5
      %v1595 = vsel %vm1497, %v1593, %v1594
      %v1596 = vrot.slane %v1461, 5
      %v1597 = vrot.slane %v1596, 4
      %v1598 = vrot.slane %v461, 5
      %v1599 = vsel %vm1497, %v1597, %v1598
      %v1600 = vrot.slane %v1598, 4
      %v1601 = vrot.slane %v482, 5
      %v1602 = vsel %vm1497, %v1600, %v1601
      %v1603 = vrot.slane %v1462, 5
      %v1604 = vrot.slane %v1603, 4
      %v1605 = vrot.slane %v463, 5
      %v1606 = vsel %vm1497, %v1604, %v1605
      %v1607 = vrot.slane %v1605, 4
      %v1608 = vrot.slane %v483, 5
      %v1609 = vsel %vm1497, %v1607, %v1608
      %s1610 = scalar_lea.vmem %s2, 32
      %v1611 = vld [vmem:[%s1610] sm:$0xf]
      %v1612 = vld [vmem:[%s1610 + $0x4] sm:$0xf]
      %v1613 = vld [vmem:[%s1610 + $0x8] sm:$0xf]
      %v1614 = vld [vmem:[%s1610 + $0xc] sm:$0xf]
      %v1615 = vunpack.c.l.b16 %v1501
      %v1616 = vunpack.c.l.b16 %v1504
      %v1617 = vunpack.c.l.b16 %v1508
      %v1618 = vunpack.c.l.b16 %v1511
      %v1619 = vunpack.c.l.b16 %v1515
      %v1620 = vunpack.c.l.b16 %v1518
      %v1621 = vunpack.c.l.b16 %v1522
      %v1622 = vunpack.c.l.b16 %v1525
      %v1623 = vunpack.c.l.b16 %v1529
      %v1624 = vunpack.c.l.b16 %v1532
      %v1625 = vunpack.c.l.b16 %v1536
      %v1626 = vunpack.c.l.b16 %v1539
      %v1627 = vunpack.c.l.b16 %v1543
      %v1628 = vunpack.c.l.b16 %v1546
      %v1629 = vunpack.c.l.b16 %v1550
      %v1630 = vunpack.c.l.b16 %v1553
      %v1631 = vunpack.c.l.b16 %v1557
      %v1632 = vunpack.c.l.b16 %v1560
      %v1633 = vunpack.c.l.b16 %v1564
      %v1634 = vunpack.c.l.b16 %v1567
      %v1635 = vunpack.c.l.b16 %v1571
      %v1636 = vunpack.c.l.b16 %v1574
      %v1637 = vunpack.c.l.b16 %v1578
      %v1638 = vunpack.c.l.b16 %v1581
      %v1639 = vunpack.c.l.b16 %v1585
      %v1640 = vunpack.c.l.b16 %v1588
      %v1641 = vunpack.c.l.b16 %v1592
      %v1642 = vunpack.c.l.b16 %v1595
      %v1643 = vunpack.c.l.b16 %v1599
      %v1644 = vunpack.c.l.b16 %v1602
      %v1645 = vunpack.c.l.b16 %v1606
      %v1646 = vunpack.c.l.b16 %v1609
      %v1647 = vpack.c.b16 %v1616, %v1615
      %v1648 = vpack.c.b16 %v1618, %v1617
      %v1649 = vpack.c.b16 %v1620, %v1619
      %v1650 = vpack.c.b16 %v1622, %v1621
      %v1651 = vpack.c.b16 %v1624, %v1623
      %v1652 = vpack.c.b16 %v1626, %v1625
      %v1653 = vpack.c.b16 %v1628, %v1627
      %v1654 = vpack.c.b16 %v1630, %v1629
      %v1655 = vpack.c.b16 %v1632, %v1631
      %v1656 = vpack.c.b16 %v1634, %v1633
      %v1657 = vpack.c.b16 %v1636, %v1635
      %v1658 = vpack.c.b16 %v1638, %v1637
      %v1659 = vpack.c.b16 %v1640, %v1639
      %v1660 = vpack.c.b16 %v1642, %v1641
      %v1661 = vpack.c.b16 %v1644, %v1643
      %v1662 = vpack.c.b16 %v1646, %v1645
      %v1667 = vunpack.c.l.b16 %v1611
      %v1668 = vunpack.c.l.b16 %v1612
      %v1669 = vunpack.c.l.b16 %v1613
      %v1670 = vunpack.c.l.b16 %v1614
      %v1671 = vpack.c.b16 %v1668, %v1667
      %v1672 = vpack.c.b16 %v1670, %v1669
      %v1676 = vsel %vm936, %v1647, 0
      %v1679 = vsel %vm936, %v1648, 0
      %v1682 = vsel %vm936, %v1649, 0
      %v1685 = vsel %vm936, %v1650, 0
      %v1688 = vsel %vm936, %v1651, 0
      %v1691 = vsel %vm936, %v1652, 0
      %v1694 = vsel %vm936, %v1653, 0
      %v1697 = vsel %vm936, %v1654, 0
      %v1700 = vsel %vm936, %v1655, 0
      %v1703 = vsel %vm936, %v1656, 0
      %v1706 = vsel %vm936, %v1657, 0
      %v1709 = vsel %vm936, %v1658, 0
      %v1712 = vsel %vm936, %v1659, 0
      %v1715 = vsel %vm936, %v1660, 0
      %v1718 = vsel %vm936, %v1661, 0
      %v1721 = vsel %vm936, %v1662, 0
      %1723 = vmatprep.subr.bf16.mxu0 0
      %1724 = vmatpush1.bf16.msra.mxu0 %v1671
      %1725 = vmatprep.subr.bf16.mxu0 0
      %1726 = vmatpush1.bf16.msra.mxu0 %v1672
      %1727 = vmatprep.subr.bf16.mxu0 0
      %1728 = vmatpush1.bf16.msra.mxu0 0
      %1729 = vmatprep.subr.bf16.mxu0 0
      %1730 = vmatpush1.bf16.msra.mxu0 0
      %1731 = vmatprep.subr.bf16.mxu0 0
      %1732 = vmatpush1.bf16.msra.mxu0 0
      %1733 = vmatprep.subr.bf16.mxu0 0
      %1734 = vmatpush1.bf16.msra.mxu0 0
      %1735 = vmatprep.subr.bf16.mxu0 0
      %1736 = vmatpush1.bf16.msra.mxu0 0
      %1737 = vmatprep.subr.bf16.mxu0 0
      %1738 = vmatpush1.bf16.msra.mxu0 0
      %1739 = vmatprep.subr.bf16.mxu0 0
      %1740 = vmatpush1.bf16.msra.mxu0 0
      %1741 = vmatprep.subr.bf16.mxu0 0
      %1742 = vmatpush1.bf16.msra.mxu0 0
      %1743 = vmatprep.subr.bf16.mxu0 0
      %1744 = vmatpush1.bf16.msra.mxu0 0
      %1745 = vmatprep.subr.bf16.mxu0 0
      %1746 = vmatpush1.bf16.msra.mxu0 0
      %1747 = vmatprep.subr.bf16.mxu0 0
      %1748 = vmatpush1.bf16.msra.mxu0 0
      %1749 = vmatprep.subr.bf16.mxu0 0
      %1750 = vmatpush1.bf16.msra.mxu0 0
      %1751 = vmatprep.subr.bf16.mxu0 0
      %1752 = vmatpush1.bf16.msra.mxu0 0
      %1753 = vmatprep.subr.bf16.mxu0 0
      %1754 = vmatpush1.bf16.msra.mxu0 0
      %1755 = vmatprep.mubr.bf16.mxu0 0
      %1756 = vmatmul.mubr.bf16.gmra.mrb[0].mxu0 %v1676
      %v1757 = vpop.f32.mrb[0].mxu0
      %v1758 = vadd.f32 0.0, %v1757
      %v1759 = vpop.f32.mrb[0].mxu0
      %v1760 = vpop.f32.mrb[0].mxu0
      %v1761 = vadd.f32 0.0, %v1760
      %v1762 = vpop.f32.mrb[0].mxu0
      %1763 = vmatprep.mubr.bf16.mxu0 0
      %1764 = vmatmul.mubr.bf16.gmra.mrb[0].mxu0 %v1679
      %v1765 = vpop.f32.mrb[0].mxu0
      %v1766 = vadd.f32 0.0, %v1765
      %v1767 = vpop.f32.mrb[0].mxu0
      %v1768 = vpop.f32.mrb[0].mxu0
      %v1769 = vadd.f32 0.0, %v1768
      %v1770 = vpop.f32.mrb[0].mxu0
      %1771 = vmatprep.mubr.bf16.mxu0 0
      %1772 = vmatmul.mubr.bf16.gmra.mrb[0].mxu0 %v1682
      %v1773 = vpop.f32.mrb[0].mxu0
      %v1774 = vadd.f32 0.0, %v1773
      %v1775 = vpop.f32.mrb[0].mxu0
      %v1776 = vpop.f32.mrb[0].mxu0
      %v1777 = vadd.f32 0.0, %v1776
      %v1778 = vpop.f32.mrb[0].mxu0
      %1779 = vmatprep.mubr.bf16.mxu0 0
      %1780 = vmatmul.mubr.bf16.gmra.mrb[0].mxu0 %v1685
      %v1781 = vpop.f32.mrb[0].mxu0
      %v1782 = vadd.f32 0.0, %v1781
      %v1783 = vpop.f32.mrb[0].mxu0
      %v1784 = vpop.f32.mrb[0].mxu0
      %v1785 = vadd.f32 0.0, %v1784
      %v1786 = vpop.f32.mrb[0].mxu0
      %1787 = vmatprep.mubr.bf16.mxu0 0
      %1788 = vmatmul.mubr.bf16.gmra.mrb[0].mxu0 %v1688
      %v1789 = vpop.f32.mrb[0].mxu0
      %v1790 = vadd.f32 0.0, %v1789
      %v1791 = vpop.f32.mrb[0].mxu0
      %v1792 = vpop.f32.mrb[0].mxu0
      %v1793 = vadd.f32 0.0, %v1792
      %v1794 = vpop.f32.mrb[0].mxu0
      %1795 = vmatprep.mubr.bf16.mxu0 0
      %1796 = vmatmul.mubr.bf16.gmra.mrb[0].mxu0 %v1691
      %v1797 = vpop.f32.mrb[0].mxu0
      %v1798 = vadd.f32 0.0, %v1797
      %v1799 = vpop.f32.mrb[0].mxu0
      %v1800 = vpop.f32.mrb[0].mxu0
      %v1801 = vadd.f32 0.0, %v1800
      %v1802 = vpop.f32.mrb[0].mxu0
      %1803 = vmatprep.mubr.bf16.mxu0 0
      %1804 = vmatmul.mubr.bf16.gmra.mrb[0].mxu0 %v1694
      %v1805 = vpop.f32.mrb[0].mxu0
      %v1806 = vadd.f32 0.0, %v1805
      %v1807 = vpop.f32.mrb[0].mxu0
      %v1808 = vpop.f32.mrb[0].mxu0
      %v1809 = vadd.f32 0.0, %v1808
      %v1810 = vpop.f32.mrb[0].mxu0
      %1811 = vmatprep.mubr.bf16.mxu0 0
      %1812 = vmatmul.mubr.bf16.gmra.mrb[0].mxu0 %v1697
      %v1813 = vpop.f32.mrb[0].mxu0
      %v1814 = vadd.f32 0.0, %v1813
      %v1815 = vpop.f32.mrb[0].mxu0
      %v1816 = vpop.f32.mrb[0].mxu0
      %v1817 = vadd.f32 0.0, %v1816
      %v1818 = vpop.f32.mrb[0].mxu0
      %1819 = vmatprep.mubr.bf16.mxu0 0
      %1820 = vmatmul.mubr.bf16.gmra.mrb[0].mxu0 %v1700
      %v1821 = vpop.f32.mrb[0].mxu0
      %v1822 = vadd.f32 0.0, %v1821
      %v1823 = vpop.f32.mrb[0].mxu0
      %v1824 = vpop.f32.mrb[0].mxu0
      %v1825 = vadd.f32 0.0, %v1824
      %v1826 = vpop.f32.mrb[0].mxu0
      %1827 = vmatprep.mubr.bf16.mxu0 0
      %1828 = vmatmul.mubr.bf16.gmra.mrb[0].mxu0 %v1703
      %v1829 = vpop.f32.mrb[0].mxu0
      %v1830 = vadd.f32 0.0, %v1829
      %v1831 = vpop.f32.mrb[0].mxu0
      %v1832 = vpop.f32.mrb[0].mxu0
      %v1833 = vadd.f32 0.0, %v1832
      %v1834 = vpop.f32.mrb[0].mxu0
      %1835 = vmatprep.mubr.bf16.mxu0 0
      %1836 = vmatmul.mubr.bf16.gmra.mrb[0].mxu0 %v1706
      %v1837 = vpop.f32.mrb[0].mxu0
      %v1838 = vadd.f32 0.0, %v1837
      %v1839 = vpop.f32.mrb[0].mxu0
      %v1840 = vpop.f32.mrb[0].mxu0
      %v1841 = vadd.f32 0.0, %v1840
      %v1842 = vpop.f32.mrb[0].mxu0
      %1843 = vmatprep.mubr.bf16.mxu0 0
      %1844 = vmatmul.mubr.bf16.gmra.mrb[0].mxu0 %v1709
      %v1845 = vpop.f32.mrb[0].mxu0
      %v1846 = vadd.f32 0.0, %v1845
      %v1847 = vpop.f32.mrb[0].mxu0
      %v1848 = vpop.f32.mrb[0].mxu0
      %v1849 = vadd.f32 0.0, %v1848
      %v1850 = vpop.f32.mrb[0].mxu0
      %1851 = vmatprep.mubr.bf16.mxu0 0
      %1852 = vmatmul.mubr.bf16.gmra.mrb[0].mxu0 %v1712
      %v1853 = vpop.f32.mrb[0].mxu0
      %v1854 = vadd.f32 0.0, %v1853
      %v1855 = vpop.f32.mrb[0].mxu0
      %v1856 = vpop.f32.mrb[0].mxu0
      %v1857 = vadd.f32 0.0, %v1856
      %v1858 = vpop.f32.mrb[0].mxu0
      %1859 = vmatprep.mubr.bf16.mxu0 0
      %1860 = vmatmul.mubr.bf16.gmra.mrb[0].mxu0 %v1715
      %v1861 = vpop.f32.mrb[0].mxu0
      %v1862 = vadd.f32 0.0, %v1861
      %v1863 = vpop.f32.mrb[0].mxu0
      %v1864 = vpop.f32.mrb[0].mxu0
      %v1865 = vadd.f32 0.0, %v1864
      %v1866 = vpop.f32.mrb[0].mxu0
      %1867 = vmatprep.mubr.bf16.mxu0 0
      %1868 = vmatmul.mubr.bf16.gmra.mrb[0].mxu0 %v1718
      %v1869 = vpop.f32.mrb[0].mxu0
      %v1870 = vadd.f32 0.0, %v1869
      %v1871 = vpop.f32.mrb[0].mxu0
      %v1872 = vpop.f32.mrb[0].mxu0
      %v1873 = vadd.f32 0.0, %v1872
      %v1874 = vpop.f32.mrb[0].mxu0
      %1875 = vmatprep.mubr.bf16.mxu0 0
      %1876 = vmatmul.mubr.bf16.gmra.mrb[0].mxu0 %v1721
      %v1877 = vpop.f32.mrb[0].mxu0
      %v1878 = vadd.f32 0.0, %v1877
      %v1879 = vpop.f32.mrb[0].mxu0
      %v1880 = vpop.f32.mrb[0].mxu0
      %v1881 = vadd.f32 0.0, %v1880
      %v1882 = vpop.f32.mrb[0].mxu0
      %1883 = vdwg.mxu0
      %v1884 = vadd.f32 %v1321, %v1758
      %v1885 = vadd.f32 %v1324, %v1761
      %v1886 = vadd.f32 %v1329, %v1766
      %v1887 = vadd.f32 %v1332, %v1769
      %v1888 = vadd.f32 %v1337, %v1774
      %v1889 = vadd.f32 %v1340, %v1777
      %v1890 = vadd.f32 %v1345, %v1782
      %v1891 = vadd.f32 %v1348, %v1785
      %v1892 = vadd.f32 %v1353, %v1790
      %v1893 = vadd.f32 %v1356, %v1793
      %v1894 = vadd.f32 %v1361, %v1798
      %v1895 = vadd.f32 %v1364, %v1801
      %v1896 = vadd.f32 %v1369, %v1806
      %v1897 = vadd.f32 %v1372, %v1809
      %v1898 = vadd.f32 %v1377, %v1814
      %v1899 = vadd.f32 %v1380, %v1817
      %v1900 = vadd.f32 %v1385, %v1822
      %v1901 = vadd.f32 %v1388, %v1825
      %v1902 = vadd.f32 %v1393, %v1830
      %v1903 = vadd.f32 %v1396, %v1833
      %v1904 = vadd.f32 %v1401, %v1838
      %v1905 = vadd.f32 %v1404, %v1841
      %v1906 = vadd.f32 %v1409, %v1846
      %v1907 = vadd.f32 %v1412, %v1849
      %v1908 = vadd.f32 %v1417, %v1854
      %v1909 = vadd.f32 %v1420, %v1857
      %v1910 = vadd.f32 %v1425, %v1862
      %v1911 = vadd.f32 %v1428, %v1865
      %v1912 = vadd.f32 %v1433, %v1870
      %v1913 = vadd.f32 %v1436, %v1873
      %v1914 = vadd.f32 %v1441, %v1878
      %v1915 = vadd.f32 %v1444, %v1881
      %s1916 = scalar_lea.vmem [#allocation2], 12
      %v1917 = vld [vmem:[%s1916] sm:$0xf]
      %v1918 = vld [vmem:[%s1916 + $0x4] sm:$0xf]
      %v1919 = vld [vmem:[%s1916 + $0xc] sm:$0xf]
      %v1920 = vld [vmem:[%s1916 + $0x10] sm:$0xf]
      %v1921 = vld [vmem:[%s1916 + $0x18] sm:$0xf]
      %v1922 = vld [vmem:[%s1916 + $0x1c] sm:$0xf]
      %v1923 = vld [vmem:[%s1916 + $0x24] sm:$0xf]
      %v1924 = vld [vmem:[%s1916 + $0x28] sm:$0xf]
      %v1925 = vld [vmem:[%s1916 + $0x30] sm:$0xf]
      %v1926 = vld [vmem:[%s1916 + $0x34] sm:$0xf]
      %v1927 = vld [vmem:[%s1916 + $0x3c] sm:$0xf]
      %v1928 = vld [vmem:[%s1916 + $0x40] sm:$0xf]
      %v1929 = vld [vmem:[%s1916 + $0x48] sm:$0xf]
      %v1930 = vld [vmem:[%s1916 + $0x4c] sm:$0xf]
      %v1931 = vld [vmem:[%s1916 + $0x54] sm:$0xf]
      %v1932 = vld [vmem:[%s1916 + $0x58] sm:$0xf]
      %v1933 = vld [vmem:[%s1916 + $0x60] sm:$0xf]
      %v1934 = vld [vmem:[%s1916 + $0x64] sm:$0xf]
      %v1935 = vld [vmem:[%s1916 + $0x6c] sm:$0xf]
      %v1936 = vld [vmem:[%s1916 + $0x70] sm:$0xf]
      %v1937 = vld [vmem:[%s1916 + $0x78] sm:$0xf]
      %v1938 = vld [vmem:[%s1916 + $0x7c] sm:$0xf]
      %v1939 = vld [vmem:[%s1916 + $0x84] sm:$0xf]
      %v1940 = vld [vmem:[%s1916 + $0x88] sm:$0xf]
      %v1941 = vld [vmem:[%s1916 + $0x90] sm:$0xf]
      %v1942 = vld [vmem:[%s1916 + $0x94] sm:$0xf]
      %v1943 = vld [vmem:[%s1916 + $0x9c] sm:$0xf]
      %v1944 = vld [vmem:[%s1916 + $0xa0] sm:$0xf]
      %v1945 = vld [vmem:[%s1916 + $0xa8] sm:$0xf]
      %v1946 = vld [vmem:[%s1916 + $0xac] sm:$0xf]
      %v1947 = vld [vmem:[%s1916 + $0xb4] sm:$0xf]
      %v1948 = vld [vmem:[%s1916 + $0xb8] sm:$0xf]
      %s1949 = scalar_lea.vmem %s2, 48
      %v1950 = vld [vmem:[%s1949] sm:$0xf]
      %v1951 = vld [vmem:[%s1949 + $0x4] sm:$0xf]
      %v1952 = vld [vmem:[%s1949 + $0x8] sm:$0xf]
      %v1953 = vld [vmem:[%s1949 + $0xc] sm:$0xf]
      %v1986 = vunpack.c.l.b16 %v1917
      %v1987 = vunpack.c.l.b16 %v1918
      %v1988 = vunpack.c.l.b16 %v1919
      %v1989 = vunpack.c.l.b16 %v1920
      %v1990 = vunpack.c.l.b16 %v1921
      %v1991 = vunpack.c.l.b16 %v1922
      %v1992 = vunpack.c.l.b16 %v1923
      %v1993 = vunpack.c.l.b16 %v1924
      %v1994 = vunpack.c.l.b16 %v1925
      %v1995 = vunpack.c.l.b16 %v1926
      %v1996 = vunpack.c.l.b16 %v1927
      %v1997 = vunpack.c.l.b16 %v1928
      %v1998 = vunpack.c.l.b16 %v1929
      %v1999 = vunpack.c.l.b16 %v1930
      %v2000 = vunpack.c.l.b16 %v1931
      %v2001 = vunpack.c.l.b16 %v1932
      %v2002 = vunpack.c.l.b16 %v1933
      %v2003 = vunpack.c.l.b16 %v1934
      %v2004 = vunpack.c.l.b16 %v1935
      %v2005 = vunpack.c.l.b16 %v1936
      %v2006 = vunpack.c.l.b16 %v1937
      %v2007 = vunpack.c.l.b16 %v1938
      %v2008 = vunpack.c.l.b16 %v1939
      %v2009 = vunpack.c.l.b16 %v1940
      %v2010 = vunpack.c.l.b16 %v1941
      %v2011 = vunpack.c.l.b16 %v1942
      %v2012 = vunpack.c.l.b16 %v1943
      %v2013 = vunpack.c.l.b16 %v1944
      %v2014 = vunpack.c.l.b16 %v1945
      %v2015 = vunpack.c.l.b16 %v1946
      %v2016 = vunpack.c.l.b16 %v1947
      %v2017 = vunpack.c.l.b16 %v1948
      %v2018 = vpack.c.b16 %v1987, %v1986
      %v2019 = vpack.c.b16 %v1989, %v1988
      %v2020 = vpack.c.b16 %v1991, %v1990
      %v2021 = vpack.c.b16 %v1993, %v1992
      %v2022 = vpack.c.b16 %v1995, %v1994
      %v2023 = vpack.c.b16 %v1997, %v1996
      %v2024 = vpack.c.b16 %v1999, %v1998
      %v2025 = vpack.c.b16 %v2001, %v2000
      %v2026 = vpack.c.b16 %v2003, %v2002
      %v2027 = vpack.c.b16 %v2005, %v2004
      %v2028 = vpack.c.b16 %v2007, %v2006
      %v2029 = vpack.c.b16 %v2009, %v2008
      %v2030 = vpack.c.b16 %v2011, %v2010
      %v2031 = vpack.c.b16 %v2013, %v2012
      %v2032 = vpack.c.b16 %v2015, %v2014
      %v2033 = vpack.c.b16 %v2017, %v2016
      %v2038 = vunpack.c.l.b16 %v1950
      %v2039 = vunpack.c.l.b16 %v1951
      %v2040 = vunpack.c.l.b16 %v1952
      %v2041 = vunpack.c.l.b16 %v1953
      %v2042 = vpack.c.b16 %v2039, %v2038
      %v2043 = vpack.c.b16 %v2041, %v2040
      %v2047 = vsel %vm936, %v2018, 0
      %v2050 = vsel %vm936, %v2019, 0
      %v2053 = vsel %vm936, %v2020, 0
      %v2056 = vsel %vm936, %v2021, 0
      %v2059 = vsel %vm936, %v2022, 0
      %v2062 = vsel %vm936, %v2023, 0
      %v2065 = vsel %vm936, %v2024, 0
      %v2068 = vsel %vm936, %v2025, 0
      %v2071 = vsel %vm936, %v2026, 0
      %v2074 = vsel %vm936, %v2027, 0
      %v2077 = vsel %vm936, %v2028, 0
      %v2080 = vsel %vm936, %v2029, 0
      %v2083 = vsel %vm936, %v2030, 0
      %v2086 = vsel %vm936, %v2031, 0
      %v2089 = vsel %vm936, %v2032, 0
      %v2092 = vsel %vm936, %v2033, 0
      %2094 = vmatprep.subr.bf16.mxu0 0
      %2095 = vmatpush1.bf16.msra.mxu0 %v2042
      %2096 = vmatprep.subr.bf16.mxu0 0
      %2097 = vmatpush1.bf16.msra.mxu0 %v2043
      %2098 = vmatprep.subr.bf16.mxu0 0
      %2099 = vmatpush1.bf16.msra.mxu0 0
      %2100 = vmatprep.subr.bf16.mxu0 0
      %2101 = vmatpush1.bf16.msra.mxu0 0
      %2102 = vmatprep.subr.bf16.mxu0 0
      %2103 = vmatpush1.bf16.msra.mxu0 0
      %2104 = vmatprep.subr.bf16.mxu0 0
      %2105 = vmatpush1.bf16.msra.mxu0 0
      %2106 = vmatprep.subr.bf16.mxu0 0
      %2107 = vmatpush1.bf16.msra.mxu0 0
      %2108 = vmatprep.subr.bf16.mxu0 0
      %2109 = vmatpush1.bf16.msra.mxu0 0
      %2110 = vmatprep.subr.bf16.mxu0 0
      %2111 = vmatpush1.bf16.msra.mxu0 0
      %2112 = vmatprep.subr.bf16.mxu0 0
      %2113 = vmatpush1.bf16.msra.mxu0 0
      %2114 = vmatprep.subr.bf16.mxu0 0
      %2115 = vmatpush1.bf16.msra.mxu0 0
      %2116 = vmatprep.subr.bf16.mxu0 0
      %2117 = vmatpush1.bf16.msra.mxu0 0
      %2118 = vmatprep.subr.bf16.mxu0 0
      %2119 = vmatpush1.bf16.msra.mxu0 0
      %2120 = vmatprep.subr.bf16.mxu0 0
      %2121 = vmatpush1.bf16.msra.mxu0 0
      %2122 = vmatprep.subr.bf16.mxu0 0
      %2123 = vmatpush1.bf16.msra.mxu0 0
      %2124 = vmatprep.subr.bf16.mxu0 0
      %2125 = vmatpush1.bf16.msra.mxu0 0
      %2126 = vmatprep.mubr.bf16.mxu0 0
      %2127 = vmatmul.mubr.bf16.gmra.mrb[0].mxu0 %v2047
      %v2128 = vpop.f32.mrb[0].mxu0
      %v2129 = vadd.f32 0.0, %v2128
      %v2130 = vpop.f32.mrb[0].mxu0
      %v2131 = vpop.f32.mrb[0].mxu0
      %v2132 = vadd.f32 0.0, %v2131
      %v2133 = vpop.f32.mrb[0].mxu0
      %2134 = vmatprep.mubr.bf16.mxu0 0
      %2135 = vmatmul.mubr.bf16.gmra.mrb[0].mxu0 %v2050
      %v2136 = vpop.f32.mrb[0].mxu0
      %v2137 = vadd.f32 0.0, %v2136
      %v2138 = vpop.f32.mrb[0].mxu0
      %v2139 = vpop.f32.mrb[0].mxu0
      %v2140 = vadd.f32 0.0, %v2139
      %v2141 = vpop.f32.mrb[0].mxu0
      %2142 = vmatprep.mubr.bf16.mxu0 0
      %2143 = vmatmul.mubr.bf16.gmra.mrb[0].mxu0 %v2053
      %v2144 = vpop.f32.mrb[0].mxu0
      %v2145 = vadd.f32 0.0, %v2144
      %v2146 = vpop.f32.mrb[0].mxu0
      %v2147 = vpop.f32.mrb[0].mxu0
      %v2148 = vadd.f32 0.0, %v2147
      %v2149 = vpop.f32.mrb[0].mxu0
      %2150 = vmatprep.mubr.bf16.mxu0 0
      %2151 = vmatmul.mubr.bf16.gmra.mrb[0].mxu0 %v2056
      %v2152 = vpop.f32.mrb[0].mxu0
      %v2153 = vadd.f32 0.0, %v2152
      %v2154 = vpop.f32.mrb[0].mxu0
      %v2155 = vpop.f32.mrb[0].mxu0
      %v2156 = vadd.f32 0.0, %v2155
      %v2157 = vpop.f32.mrb[0].mxu0
      %2158 = vmatprep.mubr.bf16.mxu0 0
      %2159 = vmatmul.mubr.bf16.gmra.mrb[0].mxu0 %v2059
      %v2160 = vpop.f32.mrb[0].mxu0
      %v2161 = vadd.f32 0.0, %v2160
      %v2162 = vpop.f32.mrb[0].mxu0
      %v2163 = vpop.f32.mrb[0].mxu0
      %v2164 = vadd.f32 0.0, %v2163
      %v2165 = vpop.f32.mrb[0].mxu0
      %2166 = vmatprep.mubr.bf16.mxu0 0
      %2167 = vmatmul.mubr.bf16.gmra.mrb[0].mxu0 %v2062
      %v2168 = vpop.f32.mrb[0].mxu0
      %v2169 = vadd.f32 0.0, %v2168
      %v2170 = vpop.f32.mrb[0].mxu0
      %v2171 = vpop.f32.mrb[0].mxu0
      %v2172 = vadd.f32 0.0, %v2171
      %v2173 = vpop.f32.mrb[0].mxu0
      %2174 = vmatprep.mubr.bf16.mxu0 0
      %2175 = vmatmul.mubr.bf16.gmra.mrb[0].mxu0 %v2065
      %v2176 = vpop.f32.mrb[0].mxu0
      %v2177 = vadd.f32 0.0, %v2176
      %v2178 = vpop.f32.mrb[0].mxu0
      %v2179 = vpop.f32.mrb[0].mxu0
      %v2180 = vadd.f32 0.0, %v2179
      %v2181 = vpop.f32.mrb[0].mxu0
      %2182 = vmatprep.mubr.bf16.mxu0 0
      %2183 = vmatmul.mubr.bf16.gmra.mrb[0].mxu0 %v2068
      %v2184 = vpop.f32.mrb[0].mxu0
      %v2185 = vadd.f32 0.0, %v2184
      %v2186 = vpop.f32.mrb[0].mxu0
      %v2187 = vpop.f32.mrb[0].mxu0
      %v2188 = vadd.f32 0.0, %v2187
      %v2189 = vpop.f32.mrb[0].mxu0
      %2190 = vmatprep.mubr.bf16.mxu0 0
      %2191 = vmatmul.mubr.bf16.gmra.mrb[0].mxu0 %v2071
      %v2192 = vpop.f32.mrb[0].mxu0
      %v2193 = vadd.f32 0.0, %v2192
      %v2194 = vpop.f32.mrb[0].mxu0
      %v2195 = vpop.f32.mrb[0].mxu0
      %v2196 = vadd.f32 0.0, %v2195
      %v2197 = vpop.f32.mrb[0].mxu0
      %2198 = vmatprep.mubr.bf16.mxu0 0
      %2199 = vmatmul.mubr.bf16.gmra.mrb[0].mxu0 %v2074
      %v2200 = vpop.f32.mrb[0].mxu0
      %v2201 = vadd.f32 0.0, %v2200
      %v2202 = vpop.f32.mrb[0].mxu0
      %v2203 = vpop.f32.mrb[0].mxu0
      %v2204 = vadd.f32 0.0, %v2203
      %v2205 = vpop.f32.mrb[0].mxu0
      %2206 = vmatprep.mubr.bf16.mxu0 0
      %2207 = vmatmul.mubr.bf16.gmra.mrb[0].mxu0 %v2077
      %v2208 = vpop.f32.mrb[0].mxu0
      %v2209 = vadd.f32 0.0, %v2208
      %v2210 = vpop.f32.mrb[0].mxu0
      %v2211 = vpop.f32.mrb[0].mxu0
      %v2212 = vadd.f32 0.0, %v2211
      %v2213 = vpop.f32.mrb[0].mxu0
      %2214 = vmatprep.mubr.bf16.mxu0 0
      %2215 = vmatmul.mubr.bf16.gmra.mrb[0].mxu0 %v2080
      %v2216 = vpop.f32.mrb[0].mxu0
      %v2217 = vadd.f32 0.0, %v2216
      %v2218 = vpop.f32.mrb[0].mxu0
      %v2219 = vpop.f32.mrb[0].mxu0
      %v2220 = vadd.f32 0.0, %v2219
      %v2221 = vpop.f32.mrb[0].mxu0
      %2222 = vmatprep.mubr.bf16.mxu0 0
      %2223 = vmatmul.mubr.bf16.gmra.mrb[0].mxu0 %v2083
      %v2224 = vpop.f32.mrb[0].mxu0
      %v2225 = vadd.f32 0.0, %v2224
      %v2226 = vpop.f32.mrb[0].mxu0
      %v2227 = vpop.f32.mrb[0].mxu0
      %v2228 = vadd.f32 0.0, %v2227
      %v2229 = vpop.f32.mrb[0].mxu0
      %2230 = vmatprep.mubr.bf16.mxu0 0
      %2231 = vmatmul.mubr.bf16.gmra.mrb[0].mxu0 %v2086
      %v2232 = vpop.f32.mrb[0].mxu0
      %v2233 = vadd.f32 0.0, %v2232
      %v2234 = vpop.f32.mrb[0].mxu0
      %v2235 = vpop.f32.mrb[0].mxu0
      %v2236 = vadd.f32 0.0, %v2235
      %v2237 = vpop.f32.mrb[0].mxu0
      %2238 = vmatprep.mubr.bf16.mxu0 0
      %2239 = vmatmul.mubr.bf16.gmra.mrb[0].mxu0 %v2089
      %v2240 = vpop.f32.mrb[0].mxu0
      %v2241 = vadd.f32 0.0, %v2240
      %v2242 = vpop.f32.mrb[0].mxu0
      %v2243 = vpop.f32.mrb[0].mxu0
      %v2244 = vadd.f32 0.0, %v2243
      %v2245 = vpop.f32.mrb[0].mxu0
      %2246 = vmatprep.mubr.bf16.mxu0 0
      %2247 = vmatmul.mubr.bf16.gmra.mrb[0].mxu0 %v2092
      %v2248 = vpop.f32.mrb[0].mxu0
      %v2249 = vadd.f32 0.0, %v2248
      %v2250 = vpop.f32.mrb[0].mxu0
      %v2251 = vpop.f32.mrb[0].mxu0
      %v2252 = vadd.f32 0.0, %v2251
      %v2253 = vpop.f32.mrb[0].mxu0
      %2254 = vdwg.mxu0
      %v2255 = vadd.f32 %v1884, %v2129
      %v2256 = vadd.f32 %v1885, %v2132
      %v2257 = vadd.f32 %v1886, %v2137
      %v2258 = vadd.f32 %v1887, %v2140
      %v2259 = vadd.f32 %v1888, %v2145
      %v2260 = vadd.f32 %v1889, %v2148
      %v2261 = vadd.f32 %v1890, %v2153
      %v2262 = vadd.f32 %v1891, %v2156
      %v2263 = vadd.f32 %v1892, %v2161
      %v2264 = vadd.f32 %v1893, %v2164
      %v2265 = vadd.f32 %v1894, %v2169
      %v2266 = vadd.f32 %v1895, %v2172
      %v2267 = vadd.f32 %v1896, %v2177
      %v2268 = vadd.f32 %v1897, %v2180
      %v2269 = vadd.f32 %v1898, %v2185
      %v2270 = vadd.f32 %v1899, %v2188
      %v2271 = vadd.f32 %v1900, %v2193
      %v2272 = vadd.f32 %v1901, %v2196
      %v2273 = vadd.f32 %v1902, %v2201
      %v2274 = vadd.f32 %v1903, %v2204
      %v2275 = vadd.f32 %v1904, %v2209
      %v2276 = vadd.f32 %v1905, %v2212
      %v2277 = vadd.f32 %v1906, %v2217
      %v2278 = vadd.f32 %v1907, %v2220
      %v2279 = vadd.f32 %v1908, %v2225
      %v2280 = vadd.f32 %v1909, %v2228
      %v2281 = vadd.f32 %v1910, %v2233
      %v2282 = vadd.f32 %v1911, %v2236
      %v2283 = vadd.f32 %v1912, %v2241
      %v2284 = vadd.f32 %v1913, %v2244
      %v2285 = vadd.f32 %v1914, %v2249
      %v2286 = vadd.f32 %v1915, %v2252
      %v2287 = vld [vmem:[%s1916] sm:$0xf]
      %v2288 = vld [vmem:[%s1916 + $0x4] sm:$0xf]
      %v2289 = vld [vmem:[%s1916 + $0x8] sm:$0x1]
      %v2290 = vld [vmem:[%s1916 + $0xc] sm:$0xf]
      %v2291 = vld [vmem:[%s1916 + $0x10] sm:$0xf]
      %v2292 = vld [vmem:[%s1916 + $0x14] sm:$0x1]
      %v2293 = vld [vmem:[%s1916 + $0x18] sm:$0xf]
      %v2294 = vld [vmem:[%s1916 + $0x1c] sm:$0xf]
      %v2295 = vld [vmem:[%s1916 + $0x20] sm:$0x1]
      %v2296 = vld [vmem:[%s1916 + $0x24] sm:$0xf]
      %v2297 = vld [vmem:[%s1916 + $0x28] sm:$0xf]
      %v2298 = vld [vmem:[%s1916 + $0x2c] sm:$0x1]
      %v2299 = vld [vmem:[%s1916 + $0x30] sm:$0xf]
      %v2300 = vld [vmem:[%s1916 + $0x34] sm:$0xf]
      %v2301 = vld [vmem:[%s1916 + $0x38] sm:$0x1]
      %v2302 = vld [vmem:[%s1916 + $0x3c] sm:$0xf]
      %v2303 = vld [vmem:[%s1916 + $0x40] sm:$0xf]
      %v2304 = vld [vmem:[%s1916 + $0x44] sm:$0x1]
      %v2305 = vld [vmem:[%s1916 + $0x48] sm:$0xf]
      %v2306 = vld [vmem:[%s1916 + $0x4c] sm:$0xf]
      %v2307 = vld [vmem:[%s1916 + $0x50] sm:$0x1]
      %v2308 = vld [vmem:[%s1916 + $0x54] sm:$0xf]
      %v2309 = vld [vmem:[%s1916 + $0x58] sm:$0xf]
      %v2310 = vld [vmem:[%s1916 + $0x5c] sm:$0x1]
      %v2311 = vld [vmem:[%s1916 + $0x60] sm:$0xf]
      %v2312 = vld [vmem:[%s1916 + $0x64] sm:$0xf]
      %v2313 = vld [vmem:[%s1916 + $0x68] sm:$0x1]
      %v2314 = vld [vmem:[%s1916 + $0x6c] sm:$0xf]
      %v2315 = vld [vmem:[%s1916 + $0x70] sm:$0xf]
      %v2316 = vld [vmem:[%s1916 + $0x74] sm:$0x1]
      %v2317 = vld [vmem:[%s1916 + $0x78] sm:$0xf]
      %v2318 = vld [vmem:[%s1916 + $0x7c] sm:$0xf]
      %v2319 = vld [vmem:[%s1916 + $0x80] sm:$0x1]
      %v2320 = vld [vmem:[%s1916 + $0x84] sm:$0xf]
      %v2321 = vld [vmem:[%s1916 + $0x88] sm:$0xf]
      %v2322 = vld [vmem:[%s1916 + $0x8c] sm:$0x1]
      %v2323 = vld [vmem:[%s1916 + $0x90] sm:$0xf]
      %v2324 = vld [vmem:[%s1916 + $0x94] sm:$0xf]
      %v2325 = vld [vmem:[%s1916 + $0x98] sm:$0x1]
      %v2326 = vld [vmem:[%s1916 + $0x9c] sm:$0xf]
      %v2327 = vld [vmem:[%s1916 + $0xa0] sm:$0xf]
      %v2328 = vld [vmem:[%s1916 + $0xa4] sm:$0x1]
      %v2329 = vld [vmem:[%s1916 + $0xa8] sm:$0xf]
      %v2330 = vld [vmem:[%s1916 + $0xac] sm:$0xf]
      %v2331 = vld [vmem:[%s1916 + $0xb0] sm:$0x1]
      %v2332 = vld [vmem:[%s1916 + $0xb4] sm:$0xf]
      %v2333 = vld [vmem:[%s1916 + $0xb8] sm:$0xf]
      %v2334 = vld [vmem:[%s1916 + $0xbc] sm:$0x1]
      %v2336 = vshrl.u32 %v2287, 16
      %v2338 = vrot.slane %v2336, 4
      %v2339 = vshll.u32 %v2287, 16
      %v2341 = vrot.slane %v2339, 5
      %v2342 = vor.u32 %v2338, %v2341
      %v2343 = vrot.slane %v2342, 4
      %v2345 = vshll.u32 %v2288, 16
      %v2347 = vrot.slane %v2345, 5
      %v2348 = vsel %vm486, %v2343, %v2347
      %v2349 = vshrl.u32 %v2288, 16
      %v2351 = vrot.slane %v2349, 4
      %v2352 = vor.u32 %v2351, %v2347
      %v2353 = vrot.slane %v2352, 4
      %v2355 = vshll.u32 %v2289, 16
      %v2357 = vrot.slane %v2355, 5
      %v2358 = vsel %vm486, %v2353, %v2357
      %v2360 = vshrl.u32 %v2290, 16
      %v2362 = vrot.slane %v2360, 4
      %v2363 = vshll.u32 %v2290, 16
      %v2365 = vrot.slane %v2363, 5
      %v2366 = vor.u32 %v2362, %v2365
      %v2367 = vrot.slane %v2366, 4
      %v2369 = vshll.u32 %v2291, 16
      %v2371 = vrot.slane %v2369, 5
      %v2372 = vsel %vm486, %v2367, %v2371
      %v2373 = vshrl.u32 %v2291, 16
      %v2375 = vrot.slane %v2373, 4
      %v2376 = vor.u32 %v2375, %v2371
      %v2377 = vrot.slane %v2376, 4
      %v2379 = vshll.u32 %v2292, 16
      %v2381 = vrot.slane %v2379, 5
      %v2382 = vsel %vm486, %v2377, %v2381
      %v2384 = vshrl.u32 %v2293, 16
      %v2386 = vrot.slane %v2384, 4
      %v2387 = vshll.u32 %v2293, 16
      %v2389 = vrot.slane %v2387, 5
      %v2390 = vor.u32 %v2386, %v2389
      %v2391 = vrot.slane %v2390, 4
      %v2393 = vshll.u32 %v2294, 16
      %v2395 = vrot.slane %v2393, 5
      %v2396 = vsel %vm486, %v2391, %v2395
      %v2397 = vshrl.u32 %v2294, 16
      %v2399 = vrot.slane %v2397, 4
      %v2400 = vor.u32 %v2399, %v2395
      %v2401 = vrot.slane %v2400, 4
      %v2403 = vshll.u32 %v2295, 16
      %v2405 = vrot.slane %v2403, 5
      %v2406 = vsel %vm486, %v2401, %v2405
      %v2408 = vshrl.u32 %v2296, 16
      %v2410 = vrot.slane %v2408, 4
      %v2411 = vshll.u32 %v2296, 16
      %v2413 = vrot.slane %v2411, 5
      %v2414 = vor.u32 %v2410, %v2413
      %v2415 = vrot.slane %v2414, 4
      %v2417 = vshll.u32 %v2297, 16
      %v2419 = vrot.slane %v2417, 5
      %v2420 = vsel %vm486, %v2415, %v2419
      %v2421 = vshrl.u32 %v2297, 16
      %v2423 = vrot.slane %v2421, 4
      %v2424 = vor.u32 %v2423, %v2419
      %v2425 = vrot.slane %v2424, 4
      %v2427 = vshll.u32 %v2298, 16
      %v2429 = vrot.slane %v2427, 5
      %v2430 = vsel %vm486, %v2425, %v2429
      %v2432 = vshrl.u32 %v2299, 16
      %v2434 = vrot.slane %v2432, 4
      %v2435 = vshll.u32 %v2299, 16
      %v2437 = vrot.slane %v2435, 5
      %v2438 = vor.u32 %v2434, %v2437
      %v2439 = vrot.slane %v2438, 4
      %v2441 = vshll.u32 %v2300, 16
      %v2443 = vrot.slane %v2441, 5
      %v2444 = vsel %vm486, %v2439, %v2443
      %v2445 = vshrl.u32 %v2300, 16
      %v2447 = vrot.slane %v2445, 4
      %v2448 = vor.u32 %v2447, %v2443
      %v2449 = vrot.slane %v2448, 4
      %v2451 = vshll.u32 %v2301, 16
      %v2453 = vrot.slane %v2451, 5
      %v2454 = vsel %vm486, %v2449, %v2453
      %v2456 = vshrl.u32 %v2302, 16
      %v2458 = vrot.slane %v2456, 4
      %v2459 = vshll.u32 %v2302, 16
      %v2461 = vrot.slane %v2459, 5
      %v2462 = vor.u32 %v2458, %v2461
      %v2463 = vrot.slane %v2462, 4
      %v2465 = vshll.u32 %v2303, 16
      %v2467 = vrot.slane %v2465, 5
      %v2468 = vsel %vm486, %v2463, %v2467
      %v2469 = vshrl.u32 %v2303, 16
      %v2471 = vrot.slane %v2469, 4
      %v2472 = vor.u32 %v2471, %v2467
      %v2473 = vrot.slane %v2472, 4
      %v2475 = vshll.u32 %v2304, 16
      %v2477 = vrot.slane %v2475, 5
      %v2478 = vsel %vm486, %v2473, %v2477
      %v2480 = vshrl.u32 %v2305, 16
      %v2482 = vrot.slane %v2480, 4
      %v2483 = vshll.u32 %v2305, 16
      %v2485 = vrot.slane %v2483, 5
      %v2486 = vor.u32 %v2482, %v2485
      %v2487 = vrot.slane %v2486, 4
      %v2489 = vshll.u32 %v2306, 16
      %v2491 = vrot.slane %v2489, 5
      %v2492 = vsel %vm486, %v2487, %v2491
      %v2493 = vshrl.u32 %v2306, 16
      %v2495 = vrot.slane %v2493, 4
      %v2496 = vor.u32 %v2495, %v2491
      %v2497 = vrot.slane %v2496, 4
      %v2499 = vshll.u32 %v2307, 16
      %v2501 = vrot.slane %v2499, 5
      %v2502 = vsel %vm486, %v2497, %v2501
      %v2504 = vshrl.u32 %v2308, 16
      %v2506 = vrot.slane %v2504, 4
      %v2507 = vshll.u32 %v2308, 16
      %v2509 = vrot.slane %v2507, 5
      %v2510 = vor.u32 %v2506, %v2509
      %v2511 = vrot.slane %v2510, 4
      %v2513 = vshll.u32 %v2309, 16
      %v2515 = vrot.slane %v2513, 5
      %v2516 = vsel %vm486, %v2511, %v2515
      %v2517 = vshrl.u32 %v2309, 16
      %v2519 = vrot.slane %v2517, 4
      %v2520 = vor.u32 %v2519, %v2515
      %v2521 = vrot.slane %v2520, 4
      %v2523 = vshll.u32 %v2310, 16
      %v2525 = vrot.slane %v2523, 5
      %v2526 = vsel %vm486, %v2521, %v2525
      %v2528 = vshrl.u32 %v2311, 16
      %v2530 = vrot.slane %v2528, 4
      %v2531 = vshll.u32 %v2311, 16
      %v2533 = vrot.slane %v2531, 5
      %v2534 = vor.u32 %v2530, %v2533
      %v2535 = vrot.slane %v2534, 4
      %v2537 = vshll.u32 %v2312, 16
      %v2539 = vrot.slane %v2537, 5
      %v2540 = vsel %vm486, %v2535, %v2539
      %v2541 = vshrl.u32 %v2312, 16
      %v2543 = vrot.slane %v2541, 4
      %v2544 = vor.u32 %v2543, %v2539
      %v2545 = vrot.slane %v2544, 4
      %v2547 = vshll.u32 %v2313, 16
      %v2549 = vrot.slane %v2547, 5
      %v2550 = vsel %vm486, %v2545, %v2549
      %v2552 = vshrl.u32 %v2314, 16
      %v2554 = vrot.slane %v2552, 4
      %v2555 = vshll.u32 %v2314, 16
      %v2557 = vrot.slane %v2555, 5
      %v2558 = vor.u32 %v2554, %v2557
      %v2559 = vrot.slane %v2558, 4
      %v2561 = vshll.u32 %v2315, 16
      %v2563 = vrot.slane %v2561, 5
      %v2564 = vsel %vm486, %v2559, %v2563
      %v2565 = vshrl.u32 %v2315, 16
      %v2567 = vrot.slane %v2565, 4
      %v2568 = vor.u32 %v2567, %v2563
      %v2569 = vrot.slane %v2568, 4
      %v2571 = vshll.u32 %v2316, 16
      %v2573 = vrot.slane %v2571, 5
      %v2574 = vsel %vm486, %v2569, %v2573
      %v2576 = vshrl.u32 %v2317, 16
      %v2578 = vrot.slane %v2576, 4
      %v2579 = vshll.u32 %v2317, 16
      %v2581 = vrot.slane %v2579, 5
      %v2582 = vor.u32 %v2578, %v2581
      %v2583 = vrot.slane %v2582, 4
      %v2585 = vshll.u32 %v2318, 16
      %v2587 = vrot.slane %v2585, 5
      %v2588 = vsel %vm486, %v2583, %v2587
      %v2589 = vshrl.u32 %v2318, 16
      %v2591 = vrot.slane %v2589, 4
      %v2592 = vor.u32 %v2591, %v2587
      %v2593 = vrot.slane %v2592, 4
      %v2595 = vshll.u32 %v2319, 16
      %v2597 = vrot.slane %v2595, 5
      %v2598 = vsel %vm486, %v2593, %v2597
      %v2600 = vshrl.u32 %v2320, 16
      %v2602 = vrot.slane %v2600, 4
      %v2603 = vshll.u32 %v2320, 16
      %v2605 = vrot.slane %v2603, 5
      %v2606 = vor.u32 %v2602, %v2605
      %v2607 = vrot.slane %v2606, 4
      %v2609 = vshll.u32 %v2321, 16
      %v2611 = vrot.slane %v2609, 5
      %v2612 = vsel %vm486, %v2607, %v2611
      %v2613 = vshrl.u32 %v2321, 16
      %v2615 = vrot.slane %v2613, 4
      %v2616 = vor.u32 %v2615, %v2611
      %v2617 = vrot.slane %v2616, 4
      %v2619 = vshll.u32 %v2322, 16
      %v2621 = vrot.slane %v2619, 5
      %v2622 = vsel %vm486, %v2617, %v2621
      %v2624 = vshrl.u32 %v2323, 16
      %v2626 = vrot.slane %v2624, 4
      %v2627 = vshll.u32 %v2323, 16
      %v2629 = vrot.slane %v2627, 5
      %v2630 = vor.u32 %v2626, %v2629
      %v2631 = vrot.slane %v2630, 4
      %v2633 = vshll.u32 %v2324, 16
      %v2635 = vrot.slane %v2633, 5
      %v2636 = vsel %vm486, %v2631, %v2635
      %v2637 = vshrl.u32 %v2324, 16
      %v2639 = vrot.slane %v2637, 4
      %v2640 = vor.u32 %v2639, %v2635
      %v2641 = vrot.slane %v2640, 4
      %v2643 = vshll.u32 %v2325, 16
      %v2645 = vrot.slane %v2643, 5
      %v2646 = vsel %vm486, %v2641, %v2645
      %v2648 = vshrl.u32 %v2326, 16
      %v2650 = vrot.slane %v2648, 4
      %v2651 = vshll.u32 %v2326, 16
      %v2653 = vrot.slane %v2651, 5
      %v2654 = vor.u32 %v2650, %v2653
      %v2655 = vrot.slane %v2654, 4
      %v2657 = vshll.u32 %v2327, 16
      %v2659 = vrot.slane %v2657, 5
      %v2660 = vsel %vm486, %v2655, %v2659
      %v2661 = vshrl.u32 %v2327, 16
      %v2663 = vrot.slane %v2661, 4
      %v2664 = vor.u32 %v2663, %v2659
      %v2665 = vrot.slane %v2664, 4
      %v2667 = vshll.u32 %v2328, 16
      %v2669 = vrot.slane %v2667, 5
      %v2670 = vsel %vm486, %v2665, %v2669
      %v2672 = vshrl.u32 %v2329, 16
      %v2674 = vrot.slane %v2672, 4
      %v2675 = vshll.u32 %v2329, 16
      %v2677 = vrot.slane %v2675, 5
      %v2678 = vor.u32 %v2674, %v2677
      %v2679 = vrot.slane %v2678, 4
      %v2681 = vshll.u32 %v2330, 16
      %v2683 = vrot.slane %v2681, 5
      %v2684 = vsel %vm486, %v2679, %v2683
      %v2685 = vshrl.u32 %v2330, 16
      %v2687 = vrot.slane %v2685, 4
      %v2688 = vor.u32 %v2687, %v2683
      %v2689 = vrot.slane %v2688, 4
      %v2691 = vshll.u32 %v2331, 16
      %v2693 = vrot.slane %v2691, 5
      %v2694 = vsel %vm486, %v2689, %v2693
      %v2696 = vshrl.u32 %v2332, 16
      %v2698 = vrot.slane %v2696, 4
      %v2699 = vshll.u32 %v2332, 16
      %v2701 = vrot.slane %v2699, 5
      %v2702 = vor.u32 %v2698, %v2701
      %v2703 = vrot.slane %v2702, 4
      %v2705 = vshll.u32 %v2333, 16
      %v2707 = vrot.slane %v2705, 5
      %v2708 = vsel %vm486, %v2703, %v2707
      %v2709 = vshrl.u32 %v2333, 16
      %v2711 = vrot.slane %v2709, 4
      %v2712 = vor.u32 %v2711, %v2707
      %v2713 = vrot.slane %v2712, 4
      %v2715 = vshll.u32 %v2334, 16
      %v2717 = vrot.slane %v2715, 5
      %v2718 = vsel %vm486, %v2713, %v2717
      %s2719 = scalar_lea.vmem %s2, 64
      %v2720 = vld [vmem:[%s2719] sm:$0xf]
      %v2721 = vld [vmem:[%s2719 + $0x4] sm:$0xf]
      %v2722 = vld [vmem:[%s2719 + $0x8] sm:$0xf]
      %v2723 = vld [vmem:[%s2719 + $0xc] sm:$0xf]
      %v2724 = vunpack.c.l.b16 %v2348
      %v2725 = vunpack.c.l.b16 %v2358
      %v2726 = vunpack.c.l.b16 %v2372
      %v2727 = vunpack.c.l.b16 %v2382
      %v2728 = vunpack.c.l.b16 %v2396
      %v2729 = vunpack.c.l.b16 %v2406
      %v2730 = vunpack.c.l.b16 %v2420
      %v2731 = vunpack.c.l.b16 %v2430
      %v2732 = vunpack.c.l.b16 %v2444
      %v2733 = vunpack.c.l.b16 %v2454
      %v2734 = vunpack.c.l.b16 %v2468
      %v2735 = vunpack.c.l.b16 %v2478
      %v2736 = vunpack.c.l.b16 %v2492
      %v2737 = vunpack.c.l.b16 %v2502
      %v2738 = vunpack.c.l.b16 %v2516
      %v2739 = vunpack.c.l.b16 %v2526
      %v2740 = vunpack.c.l.b16 %v2540
      %v2741 = vunpack.c.l.b16 %v2550
      %v2742 = vunpack.c.l.b16 %v2564
      %v2743 = vunpack.c.l.b16 %v2574
      %v2744 = vunpack.c.l.b16 %v2588
      %v2745 = vunpack.c.l.b16 %v2598
      %v2746 = vunpack.c.l.b16 %v2612
      %v2747 = vunpack.c.l.b16 %v2622
      %v2748 = vunpack.c.l.b16 %v2636
      %v2749 = vunpack.c.l.b16 %v2646
      %v2750 = vunpack.c.l.b16 %v2660
      %v2751 = vunpack.c.l.b16 %v2670
      %v2752 = vunpack.c.l.b16 %v2684
      %v2753 = vunpack.c.l.b16 %v2694
      %v2754 = vunpack.c.l.b16 %v2708
      %v2755 = vunpack.c.l.b16 %v2718
      %v2756 = vpack.c.b16 %v2725, %v2724
      %v2757 = vpack.c.b16 %v2727, %v2726
      %v2758 = vpack.c.b16 %v2729, %v2728
      %v2759 = vpack.c.b16 %v2731, %v2730
      %v2760 = vpack.c.b16 %v2733, %v2732
      %v2761 = vpack.c.b16 %v2735, %v2734
      %v2762 = vpack.c.b16 %v2737, %v2736
      %v2763 = vpack.c.b16 %v2739, %v2738
      %v2764 = vpack.c.b16 %v2741, %v2740
      %v2765 = vpack.c.b16 %v2743, %v2742
      %v2766 = vpack.c.b16 %v2745, %v2744
      %v2767 = vpack.c.b16 %v2747, %v2746
      %v2768 = vpack.c.b16 %v2749, %v2748
      %v2769 = vpack.c.b16 %v2751, %v2750
      %v2770 = vpack.c.b16 %v2753, %v2752
      %v2771 = vpack.c.b16 %v2755, %v2754
      %v2776 = vunpack.c.l.b16 %v2720
      %v2777 = vunpack.c.l.b16 %v2721
      %v2778 = vunpack.c.l.b16 %v2722
      %v2779 = vunpack.c.l.b16 %v2723
      %v2780 = vpack.c.b16 %v2777, %v2776
      %v2781 = vpack.c.b16 %v2779, %v2778
      %v2785 = vsel %vm936, %v2756, 0
      %v2788 = vsel %vm936, %v2757, 0
      %v2791 = vsel %vm936, %v2758, 0
      %v2794 = vsel %vm936, %v2759, 0
      %v2797 = vsel %vm936, %v2760, 0
      %v2800 = vsel %vm936, %v2761, 0
      %v2803 = vsel %vm936, %v2762, 0
      %v2806 = vsel %vm936, %v2763, 0
      %v2809 = vsel %vm936, %v2764, 0
      %v2812 = vsel %vm936, %v2765, 0
      %v2815 = vsel %vm936, %v2766, 0
      %v2818 = vsel %vm936, %v2767, 0
      %v2821 = vsel %vm936, %v2768, 0
      %v2824 = vsel %vm936, %v2769, 0
      %v2827 = vsel %vm936, %v2770, 0
      %v2830 = vsel %vm936, %v2771, 0
      %2832 = vmatprep.subr.bf16.mxu0 0
      %2833 = vmatpush1.bf16.msra.mxu0 %v2780
      %2834 = vmatprep.subr.bf16.mxu0 0
      %2835 = vmatpush1.bf16.msra.mxu0 %v2781
      %2836 = vmatprep.subr.bf16.mxu0 0
      %2837 = vmatpush1.bf16.msra.mxu0 0
      %2838 = vmatprep.subr.bf16.mxu0 0
      %2839 = vmatpush1.bf16.msra.mxu0 0
      %2840 = vmatprep.subr.bf16.mxu0 0
      %2841 = vmatpush1.bf16.msra.mxu0 0
      %2842 = vmatprep.subr.bf16.mxu0 0
      %2843 = vmatpush1.bf16.msra.mxu0 0
      %2844 = vmatprep.subr.bf16.mxu0 0
      %2845 = vmatpush1.bf16.msra.mxu0 0
      %2846 = vmatprep.subr.bf16.mxu0 0
      %2847 = vmatpush1.bf16.msra.mxu0 0
      %2848 = vmatprep.subr.bf16.mxu0 0
      %2849 = vmatpush1.bf16.msra.mxu0 0
      %2850 = vmatprep.subr.bf16.mxu0 0
      %2851 = vmatpush1.bf16.msra.mxu0 0
      %2852 = vmatprep.subr.bf16.mxu0 0
      %2853 = vmatpush1.bf16.msra.mxu0 0
      %2854 = vmatprep.subr.bf16.mxu0 0
      %2855 = vmatpush1.bf16.msra.mxu0 0
      %2856 = vmatprep.subr.bf16.mxu0 0
      %2857 = vmatpush1.bf16.msra.mxu0 0
      %2858 = vmatprep.subr.bf16.mxu0 0
      %2859 = vmatpush1.bf16.msra.mxu0 0
      %2860 = vmatprep.subr.bf16.mxu0 0
      %2861 = vmatpush1.bf16.msra.mxu0 0
      %2862 = vmatprep.subr.bf16.mxu0 0
      %2863 = vmatpush1.bf16.msra.mxu0 0
      %2864 = vmatprep.mubr.bf16.mxu0 0
      %2865 = vmatmul.mubr.bf16.gmra.mrb[0].mxu0 %v2785
      %v2866 = vpop.f32.mrb[0].mxu0
      %v2867 = vadd.f32 0.0, %v2866
      %v2868 = vpop.f32.mrb[0].mxu0
      %v2869 = vpop.f32.mrb[0].mxu0
      %v2870 = vadd.f32 0.0, %v2869
      %v2871 = vpop.f32.mrb[0].mxu0
      %2872 = vmatprep.mubr.bf16.mxu0 0
      %2873 = vmatmul.mubr.bf16.gmra.mrb[0].mxu0 %v2788
      %v2874 = vpop.f32.mrb[0].mxu0
      %v2875 = vadd.f32 0.0, %v2874
      %v2876 = vpop.f32.mrb[0].mxu0
      %v2877 = vpop.f32.mrb[0].mxu0
      %v2878 = vadd.f32 0.0, %v2877
      %v2879 = vpop.f32.mrb[0].mxu0
      %2880 = vmatprep.mubr.bf16.mxu0 0
      %2881 = vmatmul.mubr.bf16.gmra.mrb[0].mxu0 %v2791
      %v2882 = vpop.f32.mrb[0].mxu0
      %v2883 = vadd.f32 0.0, %v2882
      %v2884 = vpop.f32.mrb[0].mxu0
      %v2885 = vpop.f32.mrb[0].mxu0
      %v2886 = vadd.f32 0.0, %v2885
      %v2887 = vpop.f32.mrb[0].mxu0
      %2888 = vmatprep.mubr.bf16.mxu0 0
      %2889 = vmatmul.mubr.bf16.gmra.mrb[0].mxu0 %v2794
      %v2890 = vpop.f32.mrb[0].mxu0
      %v2891 = vadd.f32 0.0, %v2890
      %v2892 = vpop.f32.mrb[0].mxu0
      %v2893 = vpop.f32.mrb[0].mxu0
      %v2894 = vadd.f32 0.0, %v2893
      %v2895 = vpop.f32.mrb[0].mxu0
      %2896 = vmatprep.mubr.bf16.mxu0 0
      %2897 = vmatmul.mubr.bf16.gmra.mrb[0].mxu0 %v2797
      %v2898 = vpop.f32.mrb[0].mxu0
      %v2899 = vadd.f32 0.0, %v2898
      %v2900 = vpop.f32.mrb[0].mxu0
      %v2901 = vpop.f32.mrb[0].mxu0
      %v2902 = vadd.f32 0.0, %v2901
      %v2903 = vpop.f32.mrb[0].mxu0
      %2904 = vmatprep.mubr.bf16.mxu0 0
      %2905 = vmatmul.mubr.bf16.gmra.mrb[0].mxu0 %v2800
      %v2906 = vpop.f32.mrb[0].mxu0
      %v2907 = vadd.f32 0.0, %v2906
      %v2908 = vpop.f32.mrb[0].mxu0
      %v2909 = vpop.f32.mrb[0].mxu0
      %v2910 = vadd.f32 0.0, %v2909
      %v2911 = vpop.f32.mrb[0].mxu0
      %2912 = vmatprep.mubr.bf16.mxu0 0
      %2913 = vmatmul.mubr.bf16.gmra.mrb[0].mxu0 %v2803
      %v2914 = vpop.f32.mrb[0].mxu0
      %v2915 = vadd.f32 0.0, %v2914
      %v2916 = vpop.f32.mrb[0].mxu0
      %v2917 = vpop.f32.mrb[0].mxu0
      %v2918 = vadd.f32 0.0, %v2917
      %v2919 = vpop.f32.mrb[0].mxu0
      %2920 = vmatprep.mubr.bf16.mxu0 0
      %2921 = vmatmul.mubr.bf16.gmra.mrb[0].mxu0 %v2806
      %v2922 = vpop.f32.mrb[0].mxu0
      %v2923 = vadd.f32 0.0, %v2922
      %v2924 = vpop.f32.mrb[0].mxu0
      %v2925 = vpop.f32.mrb[0].mxu0
      %v2926 = vadd.f32 0.0, %v2925
      %v2927 = vpop.f32.mrb[0].mxu0
      %2928 = vmatprep.mubr.bf16.mxu0 0
      %2929 = vmatmul.mubr.bf16.gmra.mrb[0].mxu0 %v2809
      %v2930 = vpop.f32.mrb[0].mxu0
      %v2931 = vadd.f32 0.0, %v2930
      %v2932 = vpop.f32.mrb[0].mxu0
      %v2933 = vpop.f32.mrb[0].mxu0
      %v2934 = vadd.f32 0.0, %v2933
      %v2935 = vpop.f32.mrb[0].mxu0
      %2936 = vmatprep.mubr.bf16.mxu0 0
      %2937 = vmatmul.mubr.bf16.gmra.mrb[0].mxu0 %v2812
      %v2938 = vpop.f32.mrb[0].mxu0
      %v2939 = vadd.f32 0.0, %v2938
      %v2940 = vpop.f32.mrb[0].mxu0
      %v2941 = vpop.f32.mrb[0].mxu0
      %v2942 = vadd.f32 0.0, %v2941
      %v2943 = vpop.f32.mrb[0].mxu0
      %2944 = vmatprep.mubr.bf16.mxu0 0
      %2945 = vmatmul.mubr.bf16.gmra.mrb[0].mxu0 %v2815
      %v2946 = vpop.f32.mrb[0].mxu0
      %v2947 = vadd.f32 0.0, %v2946
      %v2948 = vpop.f32.mrb[0].mxu0
      %v2949 = vpop.f32.mrb[0].mxu0
      %v2950 = vadd.f32 0.0, %v2949
      %v2951 = vpop.f32.mrb[0].mxu0
      %2952 = vmatprep.mubr.bf16.mxu0 0
      %2953 = vmatmul.mubr.bf16.gmra.mrb[0].mxu0 %v2818
      %v2954 = vpop.f32.mrb[0].mxu0
      %v2955 = vadd.f32 0.0, %v2954
      %v2956 = vpop.f32.mrb[0].mxu0
      %v2957 = vpop.f32.mrb[0].mxu0
      %v2958 = vadd.f32 0.0, %v2957
      %v2959 = vpop.f32.mrb[0].mxu0
      %2960 = vmatprep.mubr.bf16.mxu0 0
      %2961 = vmatmul.mubr.bf16.gmra.mrb[0].mxu0 %v2821
      %v2962 = vpop.f32.mrb[0].mxu0
      %v2963 = vadd.f32 0.0, %v2962
      %v2964 = vpop.f32.mrb[0].mxu0
      %v2965 = vpop.f32.mrb[0].mxu0
      %v2966 = vadd.f32 0.0, %v2965
      %v2967 = vpop.f32.mrb[0].mxu0
      %2968 = vmatprep.mubr.bf16.mxu0 0
      %2969 = vmatmul.mubr.bf16.gmra.mrb[0].mxu0 %v2824
      %v2970 = vpop.f32.mrb[0].mxu0
      %v2971 = vadd.f32 0.0, %v2970
      %v2972 = vpop.f32.mrb[0].mxu0
      %v2973 = vpop.f32.mrb[0].mxu0
      %v2974 = vadd.f32 0.0, %v2973
      %v2975 = vpop.f32.mrb[0].mxu0
      %2976 = vmatprep.mubr.bf16.mxu0 0
      %2977 = vmatmul.mubr.bf16.gmra.mrb[0].mxu0 %v2827
      %v2978 = vpop.f32.mrb[0].mxu0
      %v2979 = vadd.f32 0.0, %v2978
      %v2980 = vpop.f32.mrb[0].mxu0
      %v2981 = vpop.f32.mrb[0].mxu0
      %v2982 = vadd.f32 0.0, %v2981
      %v2983 = vpop.f32.mrb[0].mxu0
      %2984 = vmatprep.mubr.bf16.mxu0 0
      %2985 = vmatmul.mubr.bf16.gmra.mrb[0].mxu0 %v2830
      %v2986 = vpop.f32.mrb[0].mxu0
      %v2987 = vadd.f32 0.0, %v2986
      %v2988 = vpop.f32.mrb[0].mxu0
      %v2989 = vpop.f32.mrb[0].mxu0
      %v2990 = vadd.f32 0.0, %v2989
      %v2991 = vpop.f32.mrb[0].mxu0
      %2992 = vdwg.mxu0
      %v2993 = vadd.f32 %v2255, %v2867
      %v2994 = vadd.f32 %v2256, %v2870
      %v2995 = vadd.f32 %v2257, %v2875
      %v2996 = vadd.f32 %v2258, %v2878
      %v2997 = vadd.f32 %v2259, %v2883
      %v2998 = vadd.f32 %v2260, %v2886
      %v2999 = vadd.f32 %v2261, %v2891
      %v3000 = vadd.f32 %v2262, %v2894
      %v3001 = vadd.f32 %v2263, %v2899
      %v3002 = vadd.f32 %v2264, %v2902
      %v3003 = vadd.f32 %v2265, %v2907
      %v3004 = vadd.f32 %v2266, %v2910
      %v3005 = vadd.f32 %v2267, %v2915
      %v3006 = vadd.f32 %v2268, %v2918
      %v3007 = vadd.f32 %v2269, %v2923
      %v3008 = vadd.f32 %v2270, %v2926
      %v3009 = vadd.f32 %v2271, %v2931
      %v3010 = vadd.f32 %v2272, %v2934
      %v3011 = vadd.f32 %v2273, %v2939
      %v3012 = vadd.f32 %v2274, %v2942
      %v3013 = vadd.f32 %v2275, %v2947
      %v3014 = vadd.f32 %v2276, %v2950
      %v3015 = vadd.f32 %v2277, %v2955
      %v3016 = vadd.f32 %v2278, %v2958
      %v3017 = vadd.f32 %v2279, %v2963
      %v3018 = vadd.f32 %v2280, %v2966
      %v3019 = vadd.f32 %v2281, %v2971
      %v3020 = vadd.f32 %v2282, %v2974
      %v3021 = vadd.f32 %v2283, %v2979
      %v3022 = vadd.f32 %v2284, %v2982
      %v3023 = vadd.f32 %v2285, %v2987
      %v3024 = vadd.f32 %v2286, %v2990
      %v3025 = vld [vmem:[%s1916] sm:$0xe]
      %v3026 = vld [vmem:[%s1916 + $0xc] sm:$0xe]
      %v3027 = vld [vmem:[%s1916 + $0x18] sm:$0xe]
      %v3028 = vld [vmem:[%s1916 + $0x24] sm:$0xe]
      %v3029 = vld [vmem:[%s1916 + $0x30] sm:$0xe]
      %v3030 = vld [vmem:[%s1916 + $0x3c] sm:$0xe]
      %v3031 = vld [vmem:[%s1916 + $0x48] sm:$0xe]
      %v3032 = vld [vmem:[%s1916 + $0x54] sm:$0xe]
      %v3033 = vld [vmem:[%s1916 + $0x60] sm:$0xe]
      %v3034 = vld [vmem:[%s1916 + $0x6c] sm:$0xe]
      %v3035 = vld [vmem:[%s1916 + $0x78] sm:$0xe]
      %v3036 = vld [vmem:[%s1916 + $0x84] sm:$0xe]
      %v3037 = vld [vmem:[%s1916 + $0x90] sm:$0xe]
      %v3038 = vld [vmem:[%s1916 + $0x9c] sm:$0xe]
      %v3039 = vld [vmem:[%s1916 + $0xa8] sm:$0xe]
      %v3040 = vld [vmem:[%s1916 + $0xb4] sm:$0xe]
      %v3089 = vrot.slane %v3025, 5
      %v3090 = vrot.slane %v3089, 4
      %v3091 = vrot.slane %v2288, 5
      %v3092 = vsel %vm1497, %v3090, %v3091
      %v3093 = vrot.slane %v3091, 4
      %v3094 = vrot.slane %v2289, 5
      %v3095 = vsel %vm1497, %v3093, %v3094
      %v3096 = vrot.slane %v3026, 5
      %v3097 = vrot.slane %v3096, 4
      %v3098 = vrot.slane %v2291, 5
      %v3099 = vsel %vm1497, %v3097, %v3098
      %v3100 = vrot.slane %v3098, 4
      %v3101 = vrot.slane %v2292, 5
      %v3102 = vsel %vm1497, %v3100, %v3101
      %v3103 = vrot.slane %v3027, 5
      %v3104 = vrot.slane %v3103, 4
      %v3105 = vrot.slane %v2294, 5
      %v3106 = vsel %vm1497, %v3104, %v3105
      %v3107 = vrot.slane %v3105, 4
      %v3108 = vrot.slane %v2295, 5
      %v3109 = vsel %vm1497, %v3107, %v3108
      %v3110 = vrot.slane %v3028, 5
      %v3111 = vrot.slane %v3110, 4
      %v3112 = vrot.slane %v2297, 5
      %v3113 = vsel %vm1497, %v3111, %v3112
      %v3114 = vrot.slane %v3112, 4
      %v3115 = vrot.slane %v2298, 5
      %v3116 = vsel %vm1497, %v3114, %v3115
      %v3117 = vrot.slane %v3029, 5
      %v3118 = vrot.slane %v3117, 4
      %v3119 = vrot.slane %v2300, 5
      %v3120 = vsel %vm1497, %v3118, %v3119
      %v3121 = vrot.slane %v3119, 4
      %v3122 = vrot.slane %v2301, 5
      %v3123 = vsel %vm1497, %v3121, %v3122
      %v3124 = vrot.slane %v3030, 5
      %v3125 = vrot.slane %v3124, 4
      %v3126 = vrot.slane %v2303, 5
      %v3127 = vsel %vm1497, %v3125, %v3126
      %v3128 = vrot.slane %v3126, 4
      %v3129 = vrot.slane %v2304, 5
      %v3130 = vsel %vm1497, %v3128, %v3129
      %v3131 = vrot.slane %v3031, 5
      %v3132 = vrot.slane %v3131, 4
      %v3133 = vrot.slane %v2306, 5
      %v3134 = vsel %vm1497, %v3132, %v3133
      %v3135 = vrot.slane %v3133, 4
      %v3136 = vrot.slane %v2307, 5
      %v3137 = vsel %vm1497, %v3135, %v3136
      %v3138 = vrot.slane %v3032, 5
      %v3139 = vrot.slane %v3138, 4
      %v3140 = vrot.slane %v2309, 5
      %v3141 = vsel %vm1497, %v3139, %v3140
      %v3142 = vrot.slane %v3140, 4
      %v3143 = vrot.slane %v2310, 5
      %v3144 = vsel %vm1497, %v3142, %v3143
      %v3145 = vrot.slane %v3033, 5
      %v3146 = vrot.slane %v3145, 4
      %v3147 = vrot.slane %v2312, 5
      %v3148 = vsel %vm1497, %v3146, %v3147
      %v3149 = vrot.slane %v3147, 4
      %v3150 = vrot.slane %v2313, 5
      %v3151 = vsel %vm1497, %v3149, %v3150
      %v3152 = vrot.slane %v3034, 5
      %v3153 = vrot.slane %v3152, 4
      %v3154 = vrot.slane %v2315, 5
      %v3155 = vsel %vm1497, %v3153, %v3154
      %v3156 = vrot.slane %v3154, 4
      %v3157 = vrot.slane %v2316, 5
      %v3158 = vsel %vm1497, %v3156, %v3157
      %v3159 = vrot.slane %v3035, 5
      %v3160 = vrot.slane %v3159, 4
      %v3161 = vrot.slane %v2318, 5
      %v3162 = vsel %vm1497, %v3160, %v3161
      %v3163 = vrot.slane %v3161, 4
      %v3164 = vrot.slane %v2319, 5
      %v3165 = vsel %vm1497, %v3163, %v3164
      %v3166 = vrot.slane %v3036, 5
      %v3167 = vrot.slane %v3166, 4
      %v3168 = vrot.slane %v2321, 5
      %v3169 = vsel %vm1497, %v3167, %v3168
      %v3170 = vrot.slane %v3168, 4
      %v3171 = vrot.slane %v2322, 5
      %v3172 = vsel %vm1497, %v3170, %v3171
      %v3173 = vrot.slane %v3037, 5
      %v3174 = vrot.slane %v3173, 4
      %v3175 = vrot.slane %v2324, 5
      %v3176 = vsel %vm1497, %v3174, %v3175
      %v3177 = vrot.slane %v3175, 4
      %v3178 = vrot.slane %v2325, 5
      %v3179 = vsel %vm1497, %v3177, %v3178
      %v3180 = vrot.slane %v3038, 5
      %v3181 = vrot.slane %v3180, 4
      %v3182 = vrot.slane %v2327, 5
      %v3183 = vsel %vm1497, %v3181, %v3182
      %v3184 = vrot.slane %v3182, 4
      %v3185 = vrot.slane %v2328, 5
      %v3186 = vsel %vm1497, %v3184, %v3185
      %v3187 = vrot.slane %v3039, 5
      %v3188 = vrot.slane %v3187, 4
      %v3189 = vrot.slane %v2330, 5
      %v3190 = vsel %vm1497, %v3188, %v3189
      %v3191 = vrot.slane %v3189, 4
      %v3192 = vrot.slane %v2331, 5
      %v3193 = vsel %vm1497, %v3191, %v3192
      %v3194 = vrot.slane %v3040, 5
      %v3195 = vrot.slane %v3194, 4
      %v3196 = vrot.slane %v2333, 5
      %v3197 = vsel %vm1497, %v3195, %v3196
      %v3198 = vrot.slane %v3196, 4
      %v3199 = vrot.slane %v2334, 5
      %v3200 = vsel %vm1497, %v3198, %v3199
      %s3201 = scalar_lea.vmem %s2, 80
      %v3202 = vld [vmem:[%s3201] sm:$0xf]
      %v3203 = vld [vmem:[%s3201 + $0x4] sm:$0xf]
      %v3204 = vld [vmem:[%s3201 + $0x8] sm:$0xf]
      %v3205 = vld [vmem:[%s3201 + $0xc] sm:$0xf]
      %v3206 = vunpack.c.l.b16 %v3092
      %v3207 = vunpack.c.l.b16 %v3095
      %v3208 = vunpack.c.l.b16 %v3099
      %v3209 = vunpack.c.l.b16 %v3102
      %v3210 = vunpack.c.l.b16 %v3106
      %v3211 = vunpack.c.l.b16 %v3109
      %v3212 = vunpack.c.l.b16 %v3113
      %v3213 = vunpack.c.l.b16 %v3116
      %v3214 = vunpack.c.l.b16 %v3120
      %v3215 = vunpack.c.l.b16 %v3123
      %v3216 = vunpack.c.l.b16 %v3127
      %v3217 = vunpack.c.l.b16 %v3130
      %v3218 = vunpack.c.l.b16 %v3134
      %v3219 = vunpack.c.l.b16 %v3137
      %v3220 = vunpack.c.l.b16 %v3141
      %v3221 = vunpack.c.l.b16 %v3144
      %v3222 = vunpack.c.l.b16 %v3148
      %v3223 = vunpack.c.l.b16 %v3151
      %v3224 = vunpack.c.l.b16 %v3155
      %v3225 = vunpack.c.l.b16 %v3158
      %v3226 = vunpack.c.l.b16 %v3162
      %v3227 = vunpack.c.l.b16 %v3165
      %v3228 = vunpack.c.l.b16 %v3169
      %v3229 = vunpack.c.l.b16 %v3172
      %v3230 = vunpack.c.l.b16 %v3176
      %v3231 = vunpack.c.l.b16 %v3179
      %v3232 = vunpack.c.l.b16 %v3183
      %v3233 = vunpack.c.l.b16 %v3186
      %v3234 = vunpack.c.l.b16 %v3190
      %v3235 = vunpack.c.l.b16 %v3193
      %v3236 = vunpack.c.l.b16 %v3197
      %v3237 = vunpack.c.l.b16 %v3200
      %v3238 = vpack.c.b16 %v3207, %v3206
      %v3239 = vpack.c.b16 %v3209, %v3208
      %v3240 = vpack.c.b16 %v3211, %v3210
      %v3241 = vpack.c.b16 %v3213, %v3212
      %v3242 = vpack.c.b16 %v3215, %v3214
      %v3243 = vpack.c.b16 %v3217, %v3216
      %v3244 = vpack.c.b16 %v3219, %v3218
      %v3245 = vpack.c.b16 %v3221, %v3220
      %v3246 = vpack.c.b16 %v3223, %v3222
      %v3247 = vpack.c.b16 %v3225, %v3224
      %v3248 = vpack.c.b16 %v3227, %v3226
      %v3249 = vpack.c.b16 %v3229, %v3228
      %v3250 = vpack.c.b16 %v3231, %v3230
      %v3251 = vpack.c.b16 %v3233, %v3232
      %v3252 = vpack.c.b16 %v3235, %v3234
      %v3253 = vpack.c.b16 %v3237, %v3236
      %v3258 = vunpack.c.l.b16 %v3202
      %v3259 = vunpack.c.l.b16 %v3203
      %v3260 = vunpack.c.l.b16 %v3204
      %v3261 = vunpack.c.l.b16 %v3205
      %v3262 = vpack.c.b16 %v3259, %v3258
      %v3263 = vpack.c.b16 %v3261, %v3260
      %v3267 = vsel %vm936, %v3238, 0
      %v3270 = vsel %vm936, %v3239, 0
      %v3273 = vsel %vm936, %v3240, 0
      %v3276 = vsel %vm936, %v3241, 0
      %v3279 = vsel %vm936, %v3242, 0
      %v3282 = vsel %vm936, %v3243, 0
      %v3285 = vsel %vm936, %v3244, 0
      %v3288 = vsel %vm936, %v3245, 0
      %v3291 = vsel %vm936, %v3246, 0
      %v3294 = vsel %vm936, %v3247, 0
      %v3297 = vsel %vm936, %v3248, 0
      %v3300 = vsel %vm936, %v3249, 0
      %v3303 = vsel %vm936, %v3250, 0
      %v3306 = vsel %vm936, %v3251, 0
      %v3309 = vsel %vm936, %v3252, 0
      %v3312 = vsel %vm936, %v3253, 0
      %3314 = vmatprep.subr.bf16.mxu0 0
      %3315 = vmatpush1.bf16.msra.mxu0 %v3262
      %3316 = vmatprep.subr.bf16.mxu0 0
      %3317 = vmatpush1.bf16.msra.mxu0 %v3263
      %3318 = vmatprep.subr.bf16.mxu0 0
      %3319 = vmatpush1.bf16.msra.mxu0 0
      %3320 = vmatprep.subr.bf16.mxu0 0
      %3321 = vmatpush1.bf16.msra.mxu0 0
      %3322 = vmatprep.subr.bf16.mxu0 0
      %3323 = vmatpush1.bf16.msra.mxu0 0
      %3324 = vmatprep.subr.bf16.mxu0 0
      %3325 = vmatpush1.bf16.msra.mxu0 0
      %3326 = vmatprep.subr.bf16.mxu0 0
      %3327 = vmatpush1.bf16.msra.mxu0 0
      %3328 = vmatprep.subr.bf16.mxu0 0
      %3329 = vmatpush1.bf16.msra.mxu0 0
      %3330 = vmatprep.subr.bf16.mxu0 0
      %3331 = vmatpush1.bf16.msra.mxu0 0
      %3332 = vmatprep.subr.bf16.mxu0 0
      %3333 = vmatpush1.bf16.msra.mxu0 0
      %3334 = vmatprep.subr.bf16.mxu0 0
      %3335 = vmatpush1.bf16.msra.mxu0 0
      %3336 = vmatprep.subr.bf16.mxu0 0
      %3337 = vmatpush1.bf16.msra.mxu0 0
      %3338 = vmatprep.subr.bf16.mxu0 0
      %3339 = vmatpush1.bf16.msra.mxu0 0
      %3340 = vmatprep.subr.bf16.mxu0 0
      %3341 = vmatpush1.bf16.msra.mxu0 0
      %3342 = vmatprep.subr.bf16.mxu0 0
      %3343 = vmatpush1.bf16.msra.mxu0 0
      %3344 = vmatprep.subr.bf16.mxu0 0
      %3345 = vmatpush1.bf16.msra.mxu0 0
      %3346 = vmatprep.mubr.bf16.mxu0 0
      %3347 = vmatmul.mubr.bf16.gmra.mrb[0].mxu0 %v3267
      %v3348 = vpop.f32.mrb[0].mxu0
      %v3349 = vadd.f32 0.0, %v3348
      %v3350 = vpop.f32.mrb[0].mxu0
      %v3351 = vpop.f32.mrb[0].mxu0
      %v3352 = vadd.f32 0.0, %v3351
      %v3353 = vpop.f32.mrb[0].mxu0
      %3354 = vmatprep.mubr.bf16.mxu0 0
      %3355 = vmatmul.mubr.bf16.gmra.mrb[0].mxu0 %v3270
      %v3356 = vpop.f32.mrb[0].mxu0
      %v3357 = vadd.f32 0.0, %v3356
      %v3358 = vpop.f32.mrb[0].mxu0
      %v3359 = vpop.f32.mrb[0].mxu0
      %v3360 = vadd.f32 0.0, %v3359
      %v3361 = vpop.f32.mrb[0].mxu0
      %3362 = vmatprep.mubr.bf16.mxu0 0
      %3363 = vmatmul.mubr.bf16.gmra.mrb[0].mxu0 %v3273
      %v3364 = vpop.f32.mrb[0].mxu0
      %v3365 = vadd.f32 0.0, %v3364
      %v3366 = vpop.f32.mrb[0].mxu0
      %v3367 = vpop.f32.mrb[0].mxu0
      %v3368 = vadd.f32 0.0, %v3367
      %v3369 = vpop.f32.mrb[0].mxu0
      %3370 = vmatprep.mubr.bf16.mxu0 0
      %3371 = vmatmul.mubr.bf16.gmra.mrb[0].mxu0 %v3276
      %v3372 = vpop.f32.mrb[0].mxu0
      %v3373 = vadd.f32 0.0, %v3372
      %v3374 = vpop.f32.mrb[0].mxu0
      %v3375 = vpop.f32.mrb[0].mxu0
      %v3376 = vadd.f32 0.0, %v3375
      %v3377 = vpop.f32.mrb[0].mxu0
      %3378 = vmatprep.mubr.bf16.mxu0 0
      %3379 = vmatmul.mubr.bf16.gmra.mrb[0].mxu0 %v3279
      %v3380 = vpop.f32.mrb[0].mxu0
      %v3381 = vadd.f32 0.0, %v3380
      %v3382 = vpop.f32.mrb[0].mxu0
      %v3383 = vpop.f32.mrb[0].mxu0
      %v3384 = vadd.f32 0.0, %v3383
      %v3385 = vpop.f32.mrb[0].mxu0
      %3386 = vmatprep.mubr.bf16.mxu0 0
      %3387 = vmatmul.mubr.bf16.gmra.mrb[0].mxu0 %v3282
      %v3388 = vpop.f32.mrb[0].mxu0
      %v3389 = vadd.f32 0.0, %v3388
      %v3390 = vpop.f32.mrb[0].mxu0
      %v3391 = vpop.f32.mrb[0].mxu0
      %v3392 = vadd.f32 0.0, %v3391
      %v3393 = vpop.f32.mrb[0].mxu0
      %3394 = vmatprep.mubr.bf16.mxu0 0
      %3395 = vmatmul.mubr.bf16.gmra.mrb[0].mxu0 %v3285
      %v3396 = vpop.f32.mrb[0].mxu0
      %v3397 = vadd.f32 0.0, %v3396
      %v3398 = vpop.f32.mrb[0].mxu0
      %v3399 = vpop.f32.mrb[0].mxu0
      %v3400 = vadd.f32 0.0, %v3399
      %v3401 = vpop.f32.mrb[0].mxu0
      %3402 = vmatprep.mubr.bf16.mxu0 0
      %3403 = vmatmul.mubr.bf16.gmra.mrb[0].mxu0 %v3288
      %v3404 = vpop.f32.mrb[0].mxu0
      %v3405 = vadd.f32 0.0, %v3404
      %v3406 = vpop.f32.mrb[0].mxu0
      %v3407 = vpop.f32.mrb[0].mxu0
      %v3408 = vadd.f32 0.0, %v3407
      %v3409 = vpop.f32.mrb[0].mxu0
      %3410 = vmatprep.mubr.bf16.mxu0 0
      %3411 = vmatmul.mubr.bf16.gmra.mrb[0].mxu0 %v3291
      %v3412 = vpop.f32.mrb[0].mxu0
      %v3413 = vadd.f32 0.0, %v3412
      %v3414 = vpop.f32.mrb[0].mxu0
      %v3415 = vpop.f32.mrb[0].mxu0
      %v3416 = vadd.f32 0.0, %v3415
      %v3417 = vpop.f32.mrb[0].mxu0
      %3418 = vmatprep.mubr.bf16.mxu0 0
      %3419 = vmatmul.mubr.bf16.gmra.mrb[0].mxu0 %v3294
      %v3420 = vpop.f32.mrb[0].mxu0
      %v3421 = vadd.f32 0.0, %v3420
      %v3422 = vpop.f32.mrb[0].mxu0
      %v3423 = vpop.f32.mrb[0].mxu0
      %v3424 = vadd.f32 0.0, %v3423
      %v3425 = vpop.f32.mrb[0].mxu0
      %3426 = vmatprep.mubr.bf16.mxu0 0
      %3427 = vmatmul.mubr.bf16.gmra.mrb[0].mxu0 %v3297
      %v3428 = vpop.f32.mrb[0].mxu0
      %v3429 = vadd.f32 0.0, %v3428
      %v3430 = vpop.f32.mrb[0].mxu0
      %v3431 = vpop.f32.mrb[0].mxu0
      %v3432 = vadd.f32 0.0, %v3431
      %v3433 = vpop.f32.mrb[0].mxu0
      %3434 = vmatprep.mubr.bf16.mxu0 0
      %3435 = vmatmul.mubr.bf16.gmra.mrb[0].mxu0 %v3300
      %v3436 = vpop.f32.mrb[0].mxu0
      %v3437 = vadd.f32 0.0, %v3436
      %v3438 = vpop.f32.mrb[0].mxu0
      %v3439 = vpop.f32.mrb[0].mxu0
      %v3440 = vadd.f32 0.0, %v3439
      %v3441 = vpop.f32.mrb[0].mxu0
      %3442 = vmatprep.mubr.bf16.mxu0 0
      %3443 = vmatmul.mubr.bf16.gmra.mrb[0].mxu0 %v3303
      %v3444 = vpop.f32.mrb[0].mxu0
      %v3445 = vadd.f32 0.0, %v3444
      %v3446 = vpop.f32.mrb[0].mxu0
      %v3447 = vpop.f32.mrb[0].mxu0
      %v3448 = vadd.f32 0.0, %v3447
      %v3449 = vpop.f32.mrb[0].mxu0
      %3450 = vmatprep.mubr.bf16.mxu0 0
      %3451 = vmatmul.mubr.bf16.gmra.mrb[0].mxu0 %v3306
      %v3452 = vpop.f32.mrb[0].mxu0
      %v3453 = vadd.f32 0.0, %v3452
      %v3454 = vpop.f32.mrb[0].mxu0
      %v3455 = vpop.f32.mrb[0].mxu0
      %v3456 = vadd.f32 0.0, %v3455
      %v3457 = vpop.f32.mrb[0].mxu0
      %3458 = vmatprep.mubr.bf16.mxu0 0
      %3459 = vmatmul.mubr.bf16.gmra.mrb[0].mxu0 %v3309
      %v3460 = vpop.f32.mrb[0].mxu0
      %v3461 = vadd.f32 0.0, %v3460
      %v3462 = vpop.f32.mrb[0].mxu0
      %v3463 = vpop.f32.mrb[0].mxu0
      %v3464 = vadd.f32 0.0, %v3463
      %v3465 = vpop.f32.mrb[0].mxu0
      %3466 = vmatprep.mubr.bf16.mxu0 0
      %3467 = vmatmul.mubr.bf16.gmra.mrb[0].mxu0 %v3312
      %v3468 = vpop.f32.mrb[0].mxu0
      %v3469 = vadd.f32 0.0, %v3468
      %v3470 = vpop.f32.mrb[0].mxu0
      %v3471 = vpop.f32.mrb[0].mxu0
      %v3472 = vadd.f32 0.0, %v3471
      %v3473 = vpop.f32.mrb[0].mxu0
      %3474 = vdwg.mxu0
      %v3475 = vadd.f32 %v2993, %v3349
      %v3476 = vadd.f32 %v2994, %v3352
      %v3477 = vadd.f32 %v2995, %v3357
      %v3478 = vadd.f32 %v2996, %v3360
      %v3479 = vadd.f32 %v2997, %v3365
      %v3480 = vadd.f32 %v2998, %v3368
      %v3481 = vadd.f32 %v2999, %v3373
      %v3482 = vadd.f32 %v3000, %v3376
      %v3483 = vadd.f32 %v3001, %v3381
      %v3484 = vadd.f32 %v3002, %v3384
      %v3485 = vadd.f32 %v3003, %v3389
      %v3486 = vadd.f32 %v3004, %v3392
      %v3487 = vadd.f32 %v3005, %v3397
      %v3488 = vadd.f32 %v3006, %v3400
      %v3489 = vadd.f32 %v3007, %v3405
      %v3490 = vadd.f32 %v3008, %v3408
      %v3491 = vadd.f32 %v3009, %v3413
      %v3492 = vadd.f32 %v3010, %v3416
      %v3493 = vadd.f32 %v3011, %v3421
      %v3494 = vadd.f32 %v3012, %v3424
      %v3495 = vadd.f32 %v3013, %v3429
      %v3496 = vadd.f32 %v3014, %v3432
      %v3497 = vadd.f32 %v3015, %v3437
      %v3498 = vadd.f32 %v3016, %v3440
      %v3499 = vadd.f32 %v3017, %v3445
      %v3500 = vadd.f32 %v3018, %v3448
      %v3501 = vadd.f32 %v3019, %v3453
      %v3502 = vadd.f32 %v3020, %v3456
      %v3503 = vadd.f32 %v3021, %v3461
      %v3504 = vadd.f32 %v3022, %v3464
      %v3505 = vadd.f32 %v3023, %v3469
      %v3506 = vadd.f32 %v3024, %v3472
      %s3507 = scalar_lea.vmem [#allocation2], 24
      %v3508 = vld [vmem:[%s3507] sm:$0xf]
      %v3509 = vld [vmem:[%s3507 + $0x4] sm:$0xf]
      %v3510 = vld [vmem:[%s3507 + $0xc] sm:$0xf]
      %v3511 = vld [vmem:[%s3507 + $0x10] sm:$0xf]
      %v3512 = vld [vmem:[%s3507 + $0x18] sm:$0xf]
      %v3513 = vld [vmem:[%s3507 + $0x1c] sm:$0xf]
      %v3514 = vld [vmem:[%s3507 + $0x24] sm:$0xf]
      %v3515 = vld [vmem:[%s3507 + $0x28] sm:$0xf]
      %v3516 = vld [vmem:[%s3507 + $0x30] sm:$0xf]
      %v3517 = vld [vmem:[%s3507 + $0x34] sm:$0xf]
      %v3518 = vld [vmem:[%s3507 + $0x3c] sm:$0xf]
      %v3519 = vld [vmem:[%s3507 + $0x40] sm:$0xf]
      %v3520 = vld [vmem:[%s3507 + $0x48] sm:$0xf]
      %v3521 = vld [vmem:[%s3507 + $0x4c] sm:$0xf]
      %v3522 = vld [vmem:[%s3507 + $0x54] sm:$0xf]
      %v3523 = vld [vmem:[%s3507 + $0x58] sm:$0xf]
      %v3524 = vld [vmem:[%s3507 + $0x60] sm:$0xf]
      %v3525 = vld [vmem:[%s3507 + $0x64] sm:$0xf]
      %v3526 = vld [vmem:[%s3507 + $0x6c] sm:$0xf]
      %v3527 = vld [vmem:[%s3507 + $0x70] sm:$0xf]
      %v3528 = vld [vmem:[%s3507 + $0x78] sm:$0xf]
      %v3529 = vld [vmem:[%s3507 + $0x7c] sm:$0xf]
      %v3530 = vld [vmem:[%s3507 + $0x84] sm:$0xf]
      %v3531 = vld [vmem:[%s3507 + $0x88] sm:$0xf]
      %v3532 = vld [vmem:[%s3507 + $0x90] sm:$0xf]
      %v3533 = vld [vmem:[%s3507 + $0x94] sm:$0xf]
      %v3534 = vld [vmem:[%s3507 + $0x9c] sm:$0xf]
      %v3535 = vld [vmem:[%s3507 + $0xa0] sm:$0xf]
      %v3536 = vld [vmem:[%s3507 + $0xa8] sm:$0xf]
      %v3537 = vld [vmem:[%s3507 + $0xac] sm:$0xf]
      %v3538 = vld [vmem:[%s3507 + $0xb4] sm:$0xf]
      %v3539 = vld [vmem:[%s3507 + $0xb8] sm:$0xf]
      %s3540 = scalar_lea.vmem %s2, 96
      %v3541 = vld [vmem:[%s3540] sm:$0xf]
      %v3542 = vld [vmem:[%s3540 + $0x4] sm:$0xf]
      %v3543 = vld [vmem:[%s3540 + $0x8] sm:$0xf]
      %v3544 = vld [vmem:[%s3540 + $0xc] sm:$0xf]
      %v3577 = vunpack.c.l.b16 %v3508
      %v3578 = vunpack.c.l.b16 %v3509
      %v3579 = vunpack.c.l.b16 %v3510
      %v3580 = vunpack.c.l.b16 %v3511
      %v3581 = vunpack.c.l.b16 %v3512
      %v3582 = vunpack.c.l.b16 %v3513
      %v3583 = vunpack.c.l.b16 %v3514
      %v3584 = vunpack.c.l.b16 %v3515
      %v3585 = vunpack.c.l.b16 %v3516
      %v3586 = vunpack.c.l.b16 %v3517
      %v3587 = vunpack.c.l.b16 %v3518
      %v3588 = vunpack.c.l.b16 %v3519
      %v3589 = vunpack.c.l.b16 %v3520
      %v3590 = vunpack.c.l.b16 %v3521
      %v3591 = vunpack.c.l.b16 %v3522
      %v3592 = vunpack.c.l.b16 %v3523
      %v3593 = vunpack.c.l.b16 %v3524
      %v3594 = vunpack.c.l.b16 %v3525
      %v3595 = vunpack.c.l.b16 %v3526
      %v3596 = vunpack.c.l.b16 %v3527
      %v3597 = vunpack.c.l.b16 %v3528
      %v3598 = vunpack.c.l.b16 %v3529
      %v3599 = vunpack.c.l.b16 %v3530
      %v3600 = vunpack.c.l.b16 %v3531
      %v3601 = vunpack.c.l.b16 %v3532
      %v3602 = vunpack.c.l.b16 %v3533
      %v3603 = vunpack.c.l.b16 %v3534
      %v3604 = vunpack.c.l.b16 %v3535
      %v3605 = vunpack.c.l.b16 %v3536
      %v3606 = vunpack.c.l.b16 %v3537
      %v3607 = vunpack.c.l.b16 %v3538
      %v3608 = vunpack.c.l.b16 %v3539
      %v3609 = vpack.c.b16 %v3578, %v3577
      %v3610 = vpack.c.b16 %v3580, %v3579
      %v3611 = vpack.c.b16 %v3582, %v3581
      %v3612 = vpack.c.b16 %v3584, %v3583
      %v3613 = vpack.c.b16 %v3586, %v3585
      %v3614 = vpack.c.b16 %v3588, %v3587
      %v3615 = vpack.c.b16 %v3590, %v3589
      %v3616 = vpack.c.b16 %v3592, %v3591
      %v3617 = vpack.c.b16 %v3594, %v3593
      %v3618 = vpack.c.b16 %v3596, %v3595
      %v3619 = vpack.c.b16 %v3598, %v3597
      %v3620 = vpack.c.b16 %v3600, %v3599
      %v3621 = vpack.c.b16 %v3602, %v3601
      %v3622 = vpack.c.b16 %v3604, %v3603
      %v3623 = vpack.c.b16 %v3606, %v3605
      %v3624 = vpack.c.b16 %v3608, %v3607
      %v3629 = vunpack.c.l.b16 %v3541
      %v3630 = vunpack.c.l.b16 %v3542
      %v3631 = vunpack.c.l.b16 %v3543
      %v3632 = vunpack.c.l.b16 %v3544
      %v3633 = vpack.c.b16 %v3630, %v3629
      %v3634 = vpack.c.b16 %v3632, %v3631
      %v3638 = vsel %vm936, %v3609, 0
      %v3641 = vsel %vm936, %v3610, 0
      %v3644 = vsel %vm936, %v3611, 0
      %v3647 = vsel %vm936, %v3612, 0
      %v3650 = vsel %vm936, %v3613, 0
      %v3653 = vsel %vm936, %v3614, 0
      %v3656 = vsel %vm936, %v3615, 0
      %v3659 = vsel %vm936, %v3616, 0
      %v3662 = vsel %vm936, %v3617, 0
      %v3665 = vsel %vm936, %v3618, 0
      %v3668 = vsel %vm936, %v3619, 0
      %v3671 = vsel %vm936, %v3620, 0
      %v3674 = vsel %vm936, %v3621, 0
      %v3677 = vsel %vm936, %v3622, 0
      %v3680 = vsel %vm936, %v3623, 0
      %v3683 = vsel %vm936, %v3624, 0
      %3685 = vmatprep.subr.bf16.mxu0 0
      %3686 = vmatpush1.bf16.msra.mxu0 %v3633
      %3687 = vmatprep.subr.bf16.mxu0 0
      %3688 = vmatpush1.bf16.msra.mxu0 %v3634
      %3689 = vmatprep.subr.bf16.mxu0 0
      %3690 = vmatpush1.bf16.msra.mxu0 0
      %3691 = vmatprep.subr.bf16.mxu0 0
      %3692 = vmatpush1.bf16.msra.mxu0 0
      %3693 = vmatprep.subr.bf16.mxu0 0
      %3694 = vmatpush1.bf16.msra.mxu0 0
      %3695 = vmatprep.subr.bf16.mxu0 0
      %3696 = vmatpush1.bf16.msra.mxu0 0
      %3697 = vmatprep.subr.bf16.mxu0 0
      %3698 = vmatpush1.bf16.msra.mxu0 0
      %3699 = vmatprep.subr.bf16.mxu0 0
      %3700 = vmatpush1.bf16.msra.mxu0 0
      %3701 = vmatprep.subr.bf16.mxu0 0
      %3702 = vmatpush1.bf16.msra.mxu0 0
      %3703 = vmatprep.subr.bf16.mxu0 0
      %3704 = vmatpush1.bf16.msra.mxu0 0
      %3705 = vmatprep.subr.bf16.mxu0 0
      %3706 = vmatpush1.bf16.msra.mxu0 0
      %3707 = vmatprep.subr.bf16.mxu0 0
      %3708 = vmatpush1.bf16.msra.mxu0 0
      %3709 = vmatprep.subr.bf16.mxu0 0
      %3710 = vmatpush1.bf16.msra.mxu0 0
      %3711 = vmatprep.subr.bf16.mxu0 0
      %3712 = vmatpush1.bf16.msra.mxu0 0
      %3713 = vmatprep.subr.bf16.mxu0 0
      %3714 = vmatpush1.bf16.msra.mxu0 0
      %3715 = vmatprep.subr.bf16.mxu0 0
      %3716 = vmatpush1.bf16.msra.mxu0 0
      %3717 = vmatprep.mubr.bf16.mxu0 0
      %3718 = vmatmul.mubr.bf16.gmra.mrb[0].mxu0 %v3638
      %v3719 = vpop.f32.mrb[0].mxu0
      %v3720 = vadd.f32 0.0, %v3719
      %v3721 = vpop.f32.mrb[0].mxu0
      %v3722 = vpop.f32.mrb[0].mxu0
      %v3723 = vadd.f32 0.0, %v3722
      %v3724 = vpop.f32.mrb[0].mxu0
      %3725 = vmatprep.mubr.bf16.mxu0 0
      %3726 = vmatmul.mubr.bf16.gmra.mrb[0].mxu0 %v3641
      %v3727 = vpop.f32.mrb[0].mxu0
      %v3728 = vadd.f32 0.0, %v3727
      %v3729 = vpop.f32.mrb[0].mxu0
      %v3730 = vpop.f32.mrb[0].mxu0
      %v3731 = vadd.f32 0.0, %v3730
      %v3732 = vpop.f32.mrb[0].mxu0
      %3733 = vmatprep.mubr.bf16.mxu0 0
      %3734 = vmatmul.mubr.bf16.gmra.mrb[0].mxu0 %v3644
      %v3735 = vpop.f32.mrb[0].mxu0
      %v3736 = vadd.f32 0.0, %v3735
      %v3737 = vpop.f32.mrb[0].mxu0
      %v3738 = vpop.f32.mrb[0].mxu0
      %v3739 = vadd.f32 0.0, %v3738
      %v3740 = vpop.f32.mrb[0].mxu0
      %3741 = vmatprep.mubr.bf16.mxu0 0
      %3742 = vmatmul.mubr.bf16.gmra.mrb[0].mxu0 %v3647
      %v3743 = vpop.f32.mrb[0].mxu0
      %v3744 = vadd.f32 0.0, %v3743
      %v3745 = vpop.f32.mrb[0].mxu0
      %v3746 = vpop.f32.mrb[0].mxu0
      %v3747 = vadd.f32 0.0, %v3746
      %v3748 = vpop.f32.mrb[0].mxu0
      %3749 = vmatprep.mubr.bf16.mxu0 0
      %3750 = vmatmul.mubr.bf16.gmra.mrb[0].mxu0 %v3650
      %v3751 = vpop.f32.mrb[0].mxu0
      %v3752 = vadd.f32 0.0, %v3751
      %v3753 = vpop.f32.mrb[0].mxu0
      %v3754 = vpop.f32.mrb[0].mxu0
      %v3755 = vadd.f32 0.0, %v3754
      %v3756 = vpop.f32.mrb[0].mxu0
      %3757 = vmatprep.mubr.bf16.mxu0 0
      %3758 = vmatmul.mubr.bf16.gmra.mrb[0].mxu0 %v3653
      %v3759 = vpop.f32.mrb[0].mxu0
      %v3760 = vadd.f32 0.0, %v3759
      %v3761 = vpop.f32.mrb[0].mxu0
      %v3762 = vpop.f32.mrb[0].mxu0
      %v3763 = vadd.f32 0.0, %v3762
      %v3764 = vpop.f32.mrb[0].mxu0
      %3765 = vmatprep.mubr.bf16.mxu0 0
      %3766 = vmatmul.mubr.bf16.gmra.mrb[0].mxu0 %v3656
      %v3767 = vpop.f32.mrb[0].mxu0
      %v3768 = vadd.f32 0.0, %v3767
      %v3769 = vpop.f32.mrb[0].mxu0
      %v3770 = vpop.f32.mrb[0].mxu0
      %v3771 = vadd.f32 0.0, %v3770
      %v3772 = vpop.f32.mrb[0].mxu0
      %3773 = vmatprep.mubr.bf16.mxu0 0
      %3774 = vmatmul.mubr.bf16.gmra.mrb[0].mxu0 %v3659
      %v3775 = vpop.f32.mrb[0].mxu0
      %v3776 = vadd.f32 0.0, %v3775
      %v3777 = vpop.f32.mrb[0].mxu0
      %v3778 = vpop.f32.mrb[0].mxu0
      %v3779 = vadd.f32 0.0, %v3778
      %v3780 = vpop.f32.mrb[0].mxu0
      %3781 = vmatprep.mubr.bf16.mxu0 0
      %3782 = vmatmul.mubr.bf16.gmra.mrb[0].mxu0 %v3662
      %v3783 = vpop.f32.mrb[0].mxu0
      %v3784 = vadd.f32 0.0, %v3783
      %v3785 = vpop.f32.mrb[0].mxu0
      %v3786 = vpop.f32.mrb[0].mxu0
      %v3787 = vadd.f32 0.0, %v3786
      %v3788 = vpop.f32.mrb[0].mxu0
      %3789 = vmatprep.mubr.bf16.mxu0 0
      %3790 = vmatmul.mubr.bf16.gmra.mrb[0].mxu0 %v3665
      %v3791 = vpop.f32.mrb[0].mxu0
      %v3792 = vadd.f32 0.0, %v3791
      %v3793 = vpop.f32.mrb[0].mxu0
      %v3794 = vpop.f32.mrb[0].mxu0
      %v3795 = vadd.f32 0.0, %v3794
      %v3796 = vpop.f32.mrb[0].mxu0
      %3797 = vmatprep.mubr.bf16.mxu0 0
      %3798 = vmatmul.mubr.bf16.gmra.mrb[0].mxu0 %v3668
      %v3799 = vpop.f32.mrb[0].mxu0
      %v3800 = vadd.f32 0.0, %v3799
      %v3801 = vpop.f32.mrb[0].mxu0
      %v3802 = vpop.f32.mrb[0].mxu0
      %v3803 = vadd.f32 0.0, %v3802
      %v3804 = vpop.f32.mrb[0].mxu0
      %3805 = vmatprep.mubr.bf16.mxu0 0
      %3806 = vmatmul.mubr.bf16.gmra.mrb[0].mxu0 %v3671
      %v3807 = vpop.f32.mrb[0].mxu0
      %v3808 = vadd.f32 0.0, %v3807
      %v3809 = vpop.f32.mrb[0].mxu0
      %v3810 = vpop.f32.mrb[0].mxu0
      %v3811 = vadd.f32 0.0, %v3810
      %v3812 = vpop.f32.mrb[0].mxu0
      %3813 = vmatprep.mubr.bf16.mxu0 0
      %3814 = vmatmul.mubr.bf16.gmra.mrb[0].mxu0 %v3674
      %v3815 = vpop.f32.mrb[0].mxu0
      %v3816 = vadd.f32 0.0, %v3815
      %v3817 = vpop.f32.mrb[0].mxu0
      %v3818 = vpop.f32.mrb[0].mxu0
      %v3819 = vadd.f32 0.0, %v3818
      %v3820 = vpop.f32.mrb[0].mxu0
      %3821 = vmatprep.mubr.bf16.mxu0 0
      %3822 = vmatmul.mubr.bf16.gmra.mrb[0].mxu0 %v3677
      %v3823 = vpop.f32.mrb[0].mxu0
      %v3824 = vadd.f32 0.0, %v3823
      %v3825 = vpop.f32.mrb[0].mxu0
      %v3826 = vpop.f32.mrb[0].mxu0
      %v3827 = vadd.f32 0.0, %v3826
      %v3828 = vpop.f32.mrb[0].mxu0
      %3829 = vmatprep.mubr.bf16.mxu0 0
      %3830 = vmatmul.mubr.bf16.gmra.mrb[0].mxu0 %v3680
      %v3831 = vpop.f32.mrb[0].mxu0
      %v3832 = vadd.f32 0.0, %v3831
      %v3833 = vpop.f32.mrb[0].mxu0
      %v3834 = vpop.f32.mrb[0].mxu0
      %v3835 = vadd.f32 0.0, %v3834
      %v3836 = vpop.f32.mrb[0].mxu0
      %3837 = vmatprep.mubr.bf16.mxu0 0
      %3838 = vmatmul.mubr.bf16.gmra.mrb[0].mxu0 %v3683
      %v3839 = vpop.f32.mrb[0].mxu0
      %v3840 = vadd.f32 0.0, %v3839
      %v3841 = vpop.f32.mrb[0].mxu0
      %v3842 = vpop.f32.mrb[0].mxu0
      %v3843 = vadd.f32 0.0, %v3842
      %v3844 = vpop.f32.mrb[0].mxu0
      %3845 = vdwg.mxu0
      %v3846 = vadd.f32 %v3475, %v3720
      %v3847 = vadd.f32 %v3476, %v3723
      %v3848 = vadd.f32 %v3477, %v3728
      %v3849 = vadd.f32 %v3478, %v3731
      %v3850 = vadd.f32 %v3479, %v3736
      %v3851 = vadd.f32 %v3480, %v3739
      %v3852 = vadd.f32 %v3481, %v3744
      %v3853 = vadd.f32 %v3482, %v3747
      %v3854 = vadd.f32 %v3483, %v3752
      %v3855 = vadd.f32 %v3484, %v3755
      %v3856 = vadd.f32 %v3485, %v3760
      %v3857 = vadd.f32 %v3486, %v3763
      %v3858 = vadd.f32 %v3487, %v3768
      %v3859 = vadd.f32 %v3488, %v3771
      %v3860 = vadd.f32 %v3489, %v3776
      %v3861 = vadd.f32 %v3490, %v3779
      %v3862 = vadd.f32 %v3491, %v3784
      %v3863 = vadd.f32 %v3492, %v3787
      %v3864 = vadd.f32 %v3493, %v3792
      %v3865 = vadd.f32 %v3494, %v3795
      %v3866 = vadd.f32 %v3495, %v3800
      %v3867 = vadd.f32 %v3496, %v3803
      %v3868 = vadd.f32 %v3497, %v3808
      %v3869 = vadd.f32 %v3498, %v3811
      %v3870 = vadd.f32 %v3499, %v3816
      %v3871 = vadd.f32 %v3500, %v3819
      %v3872 = vadd.f32 %v3501, %v3824
      %v3873 = vadd.f32 %v3502, %v3827
      %v3874 = vadd.f32 %v3503, %v3832
      %v3875 = vadd.f32 %v3504, %v3835
      %v3876 = vadd.f32 %v3505, %v3840
      %v3877 = vadd.f32 %v3506, %v3843
      %v3878 = vld [vmem:[%s3507] sm:$0xf]
      %v3879 = vld [vmem:[%s3507 + $0x4] sm:$0xf]
      %v3880 = vld [vmem:[%s3507 + $0x8] sm:$0x1]
      %v3881 = vld [vmem:[%s3507 + $0xc] sm:$0xf]
      %v3882 = vld [vmem:[%s3507 + $0x10] sm:$0xf]
      %v3883 = vld [vmem:[%s3507 + $0x14] sm:$0x1]
      %v3884 = vld [vmem:[%s3507 + $0x18] sm:$0xf]
      %v3885 = vld [vmem:[%s3507 + $0x1c] sm:$0xf]
      %v3886 = vld [vmem:[%s3507 + $0x20] sm:$0x1]
      %v3887 = vld [vmem:[%s3507 + $0x24] sm:$0xf]
      %v3888 = vld [vmem:[%s3507 + $0x28] sm:$0xf]
      %v3889 = vld [vmem:[%s3507 + $0x2c] sm:$0x1]
      %v3890 = vld [vmem:[%s3507 + $0x30] sm:$0xf]
      %v3891 = vld [vmem:[%s3507 + $0x34] sm:$0xf]
      %v3892 = vld [vmem:[%s3507 + $0x38] sm:$0x1]
      %v3893 = vld [vmem:[%s3507 + $0x3c] sm:$0xf]
      %v3894 = vld [vmem:[%s3507 + $0x40] sm:$0xf]
      %v3895 = vld [vmem:[%s3507 + $0x44] sm:$0x1]
      %v3896 = vld [vmem:[%s3507 + $0x48] sm:$0xf]
      %v3897 = vld [vmem:[%s3507 + $0x4c] sm:$0xf]
      %v3898 = vld [vmem:[%s3507 + $0x50] sm:$0x1]
      %v3899 = vld [vmem:[%s3507 + $0x54] sm:$0xf]
      %v3900 = vld [vmem:[%s3507 + $0x58] sm:$0xf]
      %v3901 = vld [vmem:[%s3507 + $0x5c] sm:$0x1]
      %v3902 = vld [vmem:[%s3507 + $0x60] sm:$0xf]
      %v3903 = vld [vmem:[%s3507 + $0x64] sm:$0xf]
      %v3904 = vld [vmem:[%s3507 + $0x68] sm:$0x1]
      %v3905 = vld [vmem:[%s3507 + $0x6c] sm:$0xf]
      %v3906 = vld [vmem:[%s3507 + $0x70] sm:$0xf]
      %v3907 = vld [vmem:[%s3507 + $0x74] sm:$0x1]
      %v3908 = vld [vmem:[%s3507 + $0x78] sm:$0xf]
      %v3909 = vld [vmem:[%s3507 + $0x7c] sm:$0xf]
      %v3910 = vld [vmem:[%s3507 + $0x80] sm:$0x1]
      %v3911 = vld [vmem:[%s3507 + $0x84] sm:$0xf]
      %v3912 = vld [vmem:[%s3507 + $0x88] sm:$0xf]
      %v3913 = vld [vmem:[%s3507 + $0x8c] sm:$0x1]
      %v3914 = vld [vmem:[%s3507 + $0x90] sm:$0xf]
      %v3915 = vld [vmem:[%s3507 + $0x94] sm:$0xf]
      %v3916 = vld [vmem:[%s3507 + $0x98] sm:$0x1]
      %v3917 = vld [vmem:[%s3507 + $0x9c] sm:$0xf]
      %v3918 = vld [vmem:[%s3507 + $0xa0] sm:$0xf]
      %v3919 = vld [vmem:[%s3507 + $0xa4] sm:$0x1]
      %v3920 = vld [vmem:[%s3507 + $0xa8] sm:$0xf]
      %v3921 = vld [vmem:[%s3507 + $0xac] sm:$0xf]
      %v3922 = vld [vmem:[%s3507 + $0xb0] sm:$0x1]
      %v3923 = vld [vmem:[%s3507 + $0xb4] sm:$0xf]
      %v3924 = vld [vmem:[%s3507 + $0xb8] sm:$0xf]
      %v3925 = vld [vmem:[%s3507 + $0xbc] sm:$0x1]
      %v3927 = vshrl.u32 %v3878, 16
      %v3929 = vrot.slane %v3927, 4
      %v3930 = vshll.u32 %v3878, 16
      %v3932 = vrot.slane %v3930, 5
      %v3933 = vor.u32 %v3929, %v3932
      %v3934 = vrot.slane %v3933, 4
      %v3936 = vshll.u32 %v3879, 16
      %v3938 = vrot.slane %v3936, 5
      %v3939 = vsel %vm486, %v3934, %v3938
      %v3940 = vshrl.u32 %v3879, 16
      %v3942 = vrot.slane %v3940, 4
      %v3943 = vor.u32 %v3942, %v3938
      %v3944 = vrot.slane %v3943, 4
      %v3946 = vshll.u32 %v3880, 16
      %v3948 = vrot.slane %v3946, 5
      %v3949 = vsel %vm486, %v3944, %v3948
      %v3951 = vshrl.u32 %v3881, 16
      %v3953 = vrot.slane %v3951, 4
      %v3954 = vshll.u32 %v3881, 16
      %v3956 = vrot.slane %v3954, 5
      %v3957 = vor.u32 %v3953, %v3956
      %v3958 = vrot.slane %v3957, 4
      %v3960 = vshll.u32 %v3882, 16
      %v3962 = vrot.slane %v3960, 5
      %v3963 = vsel %vm486, %v3958, %v3962
      %v3964 = vshrl.u32 %v3882, 16
      %v3966 = vrot.slane %v3964, 4
      %v3967 = vor.u32 %v3966, %v3962
      %v3968 = vrot.slane %v3967, 4
      %v3970 = vshll.u32 %v3883, 16
      %v3972 = vrot.slane %v3970, 5
      %v3973 = vsel %vm486, %v3968, %v3972
      %v3975 = vshrl.u32 %v3884, 16
      %v3977 = vrot.slane %v3975, 4
      %v3978 = vshll.u32 %v3884, 16
      %v3980 = vrot.slane %v3978, 5
      %v3981 = vor.u32 %v3977, %v3980
      %v3982 = vrot.slane %v3981, 4
      %v3984 = vshll.u32 %v3885, 16
      %v3986 = vrot.slane %v3984, 5
      %v3987 = vsel %vm486, %v3982, %v3986
      %v3988 = vshrl.u32 %v3885, 16
      %v3990 = vrot.slane %v3988, 4
      %v3991 = vor.u32 %v3990, %v3986
      %v3992 = vrot.slane %v3991, 4
      %v3994 = vshll.u32 %v3886, 16
      %v3996 = vrot.slane %v3994, 5
      %v3997 = vsel %vm486, %v3992, %v3996
      %v3999 = vshrl.u32 %v3887, 16
      %v4001 = vrot.slane %v3999, 4
      %v4002 = vshll.u32 %v3887, 16
      %v4004 = vrot.slane %v4002, 5
      %v4005 = vor.u32 %v4001, %v4004
      %v4006 = vrot.slane %v4005, 4
      %v4008 = vshll.u32 %v3888, 16
      %v4010 = vrot.slane %v4008, 5
      %v4011 = vsel %vm486, %v4006, %v4010
      %v4012 = vshrl.u32 %v3888, 16
      %v4014 = vrot.slane %v4012, 4
      %v4015 = vor.u32 %v4014, %v4010
      %v4016 = vrot.slane %v4015, 4
      %v4018 = vshll.u32 %v3889, 16
      %v4020 = vrot.slane %v4018, 5
      %v4021 = vsel %vm486, %v4016, %v4020
      %v4023 = vshrl.u32 %v3890, 16
      %v4025 = vrot.slane %v4023, 4
      %v4026 = vshll.u32 %v3890, 16
      %v4028 = vrot.slane %v4026, 5
      %v4029 = vor.u32 %v4025, %v4028
      %v4030 = vrot.slane %v4029, 4
      %v4032 = vshll.u32 %v3891, 16
      %v4034 = vrot.slane %v4032, 5
      %v4035 = vsel %vm486, %v4030, %v4034
      %v4036 = vshrl.u32 %v3891, 16
      %v4038 = vrot.slane %v4036, 4
      %v4039 = vor.u32 %v4038, %v4034
      %v4040 = vrot.slane %v4039, 4
      %v4042 = vshll.u32 %v3892, 16
      %v4044 = vrot.slane %v4042, 5
      %v4045 = vsel %vm486, %v4040, %v4044
      %v4047 = vshrl.u32 %v3893, 16
      %v4049 = vrot.slane %v4047, 4
      %v4050 = vshll.u32 %v3893, 16
      %v4052 = vrot.slane %v4050, 5
      %v4053 = vor.u32 %v4049, %v4052
      %v4054 = vrot.slane %v4053, 4
      %v4056 = vshll.u32 %v3894, 16
      %v4058 = vrot.slane %v4056, 5
      %v4059 = vsel %vm486, %v4054, %v4058
      %v4060 = vshrl.u32 %v3894, 16
      %v4062 = vrot.slane %v4060, 4
      %v4063 = vor.u32 %v4062, %v4058
      %v4064 = vrot.slane %v4063, 4
      %v4066 = vshll.u32 %v3895, 16
      %v4068 = vrot.slane %v4066, 5
      %v4069 = vsel %vm486, %v4064, %v4068
      %v4071 = vshrl.u32 %v3896, 16
      %v4073 = vrot.slane %v4071, 4
      %v4074 = vshll.u32 %v3896, 16
      %v4076 = vrot.slane %v4074, 5
      %v4077 = vor.u32 %v4073, %v4076
      %v4078 = vrot.slane %v4077, 4
      %v4080 = vshll.u32 %v3897, 16
      %v4082 = vrot.slane %v4080, 5
      %v4083 = vsel %vm486, %v4078, %v4082
      %v4084 = vshrl.u32 %v3897, 16
      %v4086 = vrot.slane %v4084, 4
      %v4087 = vor.u32 %v4086, %v4082
      %v4088 = vrot.slane %v4087, 4
      %v4090 = vshll.u32 %v3898, 16
      %v4092 = vrot.slane %v4090, 5
      %v4093 = vsel %vm486, %v4088, %v4092
      %v4095 = vshrl.u32 %v3899, 16
      %v4097 = vrot.slane %v4095, 4
      %v4098 = vshll.u32 %v3899, 16
      %v4100 = vrot.slane %v4098, 5
      %v4101 = vor.u32 %v4097, %v4100
      %v4102 = vrot.slane %v4101, 4
      %v4104 = vshll.u32 %v3900, 16
      %v4106 = vrot.slane %v4104, 5
      %v4107 = vsel %vm486, %v4102, %v4106
      %v4108 = vshrl.u32 %v3900, 16
      %v4110 = vrot.slane %v4108, 4
      %v4111 = vor.u32 %v4110, %v4106
      %v4112 = vrot.slane %v4111, 4
      %v4114 = vshll.u32 %v3901, 16
      %v4116 = vrot.slane %v4114, 5
      %v4117 = vsel %vm486, %v4112, %v4116
      %v4119 = vshrl.u32 %v3902, 16
      %v4121 = vrot.slane %v4119, 4
      %v4122 = vshll.u32 %v3902, 16
      %v4124 = vrot.slane %v4122, 5
      %v4125 = vor.u32 %v4121, %v4124
      %v4126 = vrot.slane %v4125, 4
      %v4128 = vshll.u32 %v3903, 16
      %v4130 = vrot.slane %v4128, 5
      %v4131 = vsel %vm486, %v4126, %v4130
      %v4132 = vshrl.u32 %v3903, 16
      %v4134 = vrot.slane %v4132, 4
      %v4135 = vor.u32 %v4134, %v4130
      %v4136 = vrot.slane %v4135, 4
      %v4138 = vshll.u32 %v3904, 16
      %v4140 = vrot.slane %v4138, 5
      %v4141 = vsel %vm486, %v4136, %v4140
      %v4143 = vshrl.u32 %v3905, 16
      %v4145 = vrot.slane %v4143, 4
      %v4146 = vshll.u32 %v3905, 16
      %v4148 = vrot.slane %v4146, 5
      %v4149 = vor.u32 %v4145, %v4148
      %v4150 = vrot.slane %v4149, 4
      %v4152 = vshll.u32 %v3906, 16
      %v4154 = vrot.slane %v4152, 5
      %v4155 = vsel %vm486, %v4150, %v4154
      %v4156 = vshrl.u32 %v3906, 16
      %v4158 = vrot.slane %v4156, 4
      %v4159 = vor.u32 %v4158, %v4154
      %v4160 = vrot.slane %v4159, 4
      %v4162 = vshll.u32 %v3907, 16
      %v4164 = vrot.slane %v4162, 5
      %v4165 = vsel %vm486, %v4160, %v4164
      %v4167 = vshrl.u32 %v3908, 16
      %v4169 = vrot.slane %v4167, 4
      %v4170 = vshll.u32 %v3908, 16
      %v4172 = vrot.slane %v4170, 5
      %v4173 = vor.u32 %v4169, %v4172
      %v4174 = vrot.slane %v4173, 4
      %v4176 = vshll.u32 %v3909, 16
      %v4178 = vrot.slane %v4176, 5
      %v4179 = vsel %vm486, %v4174, %v4178
      %v4180 = vshrl.u32 %v3909, 16
      %v4182 = vrot.slane %v4180, 4
      %v4183 = vor.u32 %v4182, %v4178
      %v4184 = vrot.slane %v4183, 4
      %v4186 = vshll.u32 %v3910, 16
      %v4188 = vrot.slane %v4186, 5
      %v4189 = vsel %vm486, %v4184, %v4188
      %v4191 = vshrl.u32 %v3911, 16
      %v4193 = vrot.slane %v4191, 4
      %v4194 = vshll.u32 %v3911, 16
      %v4196 = vrot.slane %v4194, 5
      %v4197 = vor.u32 %v4193, %v4196
      %v4198 = vrot.slane %v4197, 4
      %v4200 = vshll.u32 %v3912, 16
      %v4202 = vrot.slane %v4200, 5
      %v4203 = vsel %vm486, %v4198, %v4202
      %v4204 = vshrl.u32 %v3912, 16
      %v4206 = vrot.slane %v4204, 4
      %v4207 = vor.u32 %v4206, %v4202
      %v4208 = vrot.slane %v4207, 4
      %v4210 = vshll.u32 %v3913, 16
      %v4212 = vrot.slane %v4210, 5
      %v4213 = vsel %vm486, %v4208, %v4212
      %v4215 = vshrl.u32 %v3914, 16
      %v4217 = vrot.slane %v4215, 4
      %v4218 = vshll.u32 %v3914, 16
      %v4220 = vrot.slane %v4218, 5
      %v4221 = vor.u32 %v4217, %v4220
      %v4222 = vrot.slane %v4221, 4
      %v4224 = vshll.u32 %v3915, 16
      %v4226 = vrot.slane %v4224, 5
      %v4227 = vsel %vm486, %v4222, %v4226
      %v4228 = vshrl.u32 %v3915, 16
      %v4230 = vrot.slane %v4228, 4
      %v4231 = vor.u32 %v4230, %v4226
      %v4232 = vrot.slane %v4231, 4
      %v4234 = vshll.u32 %v3916, 16
      %v4236 = vrot.slane %v4234, 5
      %v4237 = vsel %vm486, %v4232, %v4236
      %v4239 = vshrl.u32 %v3917, 16
      %v4241 = vrot.slane %v4239, 4
      %v4242 = vshll.u32 %v3917, 16
      %v4244 = vrot.slane %v4242, 5
      %v4245 = vor.u32 %v4241, %v4244
      %v4246 = vrot.slane %v4245, 4
      %v4248 = vshll.u32 %v3918, 16
      %v4250 = vrot.slane %v4248, 5
      %v4251 = vsel %vm486, %v4246, %v4250
      %v4252 = vshrl.u32 %v3918, 16
      %v4254 = vrot.slane %v4252, 4
      %v4255 = vor.u32 %v4254, %v4250
      %v4256 = vrot.slane %v4255, 4
      %v4258 = vshll.u32 %v3919, 16
      %v4260 = vrot.slane %v4258, 5
      %v4261 = vsel %vm486, %v4256, %v4260
      %v4263 = vshrl.u32 %v3920, 16
      %v4265 = vrot.slane %v4263, 4
      %v4266 = vshll.u32 %v3920, 16
      %v4268 = vrot.slane %v4266, 5
      %v4269 = vor.u32 %v4265, %v4268
      %v4270 = vrot.slane %v4269, 4
      %v4272 = vshll.u32 %v3921, 16
      %v4274 = vrot.slane %v4272, 5
      %v4275 = vsel %vm486, %v4270, %v4274
      %v4276 = vshrl.u32 %v3921, 16
      %v4278 = vrot.slane %v4276, 4
      %v4279 = vor.u32 %v4278, %v4274
      %v4280 = vrot.slane %v4279, 4
      %v4282 = vshll.u32 %v3922, 16
      %v4284 = vrot.slane %v4282, 5
      %v4285 = vsel %vm486, %v4280, %v4284
      %v4287 = vshrl.u32 %v3923, 16
      %v4289 = vrot.slane %v4287, 4
      %v4290 = vshll.u32 %v3923, 16
      %v4292 = vrot.slane %v4290, 5
      %v4293 = vor.u32 %v4289, %v4292
      %v4294 = vrot.slane %v4293, 4
      %v4296 = vshll.u32 %v3924, 16
      %v4298 = vrot.slane %v4296, 5
      %v4299 = vsel %vm486, %v4294, %v4298
      %v4300 = vshrl.u32 %v3924, 16
      %v4302 = vrot.slane %v4300, 4
      %v4303 = vor.u32 %v4302, %v4298
      %v4304 = vrot.slane %v4303, 4
      %v4306 = vshll.u32 %v3925, 16
      %v4308 = vrot.slane %v4306, 5
      %v4309 = vsel %vm486, %v4304, %v4308
      %s4310 = scalar_lea.vmem %s2, 112
      %v4311 = vld [vmem:[%s4310] sm:$0xf]
      %v4312 = vld [vmem:[%s4310 + $0x4] sm:$0xf]
      %v4313 = vld [vmem:[%s4310 + $0x8] sm:$0xf]
      %v4314 = vld [vmem:[%s4310 + $0xc] sm:$0xf]
      %v4315 = vunpack.c.l.b16 %v3939
      %v4316 = vunpack.c.l.b16 %v3949
      %v4317 = vunpack.c.l.b16 %v3963
      %v4318 = vunpack.c.l.b16 %v3973
      %v4319 = vunpack.c.l.b16 %v3987
      %v4320 = vunpack.c.l.b16 %v3997
      %v4321 = vunpack.c.l.b16 %v4011
      %v4322 = vunpack.c.l.b16 %v4021
      %v4323 = vunpack.c.l.b16 %v4035
      %v4324 = vunpack.c.l.b16 %v4045
      %v4325 = vunpack.c.l.b16 %v4059
      %v4326 = vunpack.c.l.b16 %v4069
      %v4327 = vunpack.c.l.b16 %v4083
      %v4328 = vunpack.c.l.b16 %v4093
      %v4329 = vunpack.c.l.b16 %v4107
      %v4330 = vunpack.c.l.b16 %v4117
      %v4331 = vunpack.c.l.b16 %v4131
      %v4332 = vunpack.c.l.b16 %v4141
      %v4333 = vunpack.c.l.b16 %v4155
      %v4334 = vunpack.c.l.b16 %v4165
      %v4335 = vunpack.c.l.b16 %v4179
      %v4336 = vunpack.c.l.b16 %v4189
      %v4337 = vunpack.c.l.b16 %v4203
      %v4338 = vunpack.c.l.b16 %v4213
      %v4339 = vunpack.c.l.b16 %v4227
      %v4340 = vunpack.c.l.b16 %v4237
      %v4341 = vunpack.c.l.b16 %v4251
      %v4342 = vunpack.c.l.b16 %v4261
      %v4343 = vunpack.c.l.b16 %v4275
      %v4344 = vunpack.c.l.b16 %v4285
      %v4345 = vunpack.c.l.b16 %v4299
      %v4346 = vunpack.c.l.b16 %v4309
      %v4347 = vpack.c.b16 %v4316, %v4315
      %v4348 = vpack.c.b16 %v4318, %v4317
      %v4349 = vpack.c.b16 %v4320, %v4319
      %v4350 = vpack.c.b16 %v4322, %v4321
      %v4351 = vpack.c.b16 %v4324, %v4323
      %v4352 = vpack.c.b16 %v4326, %v4325
      %v4353 = vpack.c.b16 %v4328, %v4327
      %v4354 = vpack.c.b16 %v4330, %v4329
      %v4355 = vpack.c.b16 %v4332, %v4331
      %v4356 = vpack.c.b16 %v4334, %v4333
      %v4357 = vpack.c.b16 %v4336, %v4335
      %v4358 = vpack.c.b16 %v4338, %v4337
      %v4359 = vpack.c.b16 %v4340, %v4339
      %v4360 = vpack.c.b16 %v4342, %v4341
      %v4361 = vpack.c.b16 %v4344, %v4343
      %v4362 = vpack.c.b16 %v4346, %v4345
      %v4367 = vunpack.c.l.b16 %v4311
      %v4368 = vunpack.c.l.b16 %v4312
      %v4369 = vunpack.c.l.b16 %v4313
      %v4370 = vunpack.c.l.b16 %v4314
      %v4371 = vpack.c.b16 %v4368, %v4367
      %v4372 = vpack.c.b16 %v4370, %v4369
      %v4376 = vsel %vm936, %v4347, 0
      %v4379 = vsel %vm936, %v4348, 0
      %v4382 = vsel %vm936, %v4349, 0
      %v4385 = vsel %vm936, %v4350, 0
      %v4388 = vsel %vm936, %v4351, 0
      %v4391 = vsel %vm936, %v4352, 0
      %v4394 = vsel %vm936, %v4353, 0
      %v4397 = vsel %vm936, %v4354, 0
      %v4400 = vsel %vm936, %v4355, 0
      %v4403 = vsel %vm936, %v4356, 0
      %v4406 = vsel %vm936, %v4357, 0
      %v4409 = vsel %vm936, %v4358, 0
      %v4412 = vsel %vm936, %v4359, 0
      %v4415 = vsel %vm936, %v4360, 0
      %v4418 = vsel %vm936, %v4361, 0
      %v4421 = vsel %vm936, %v4362, 0
      %4423 = vmatprep.subr.bf16.mxu0 0
      %4424 = vmatpush1.bf16.msra.mxu0 %v4371
      %4425 = vmatprep.subr.bf16.mxu0 0
      %4426 = vmatpush1.bf16.msra.mxu0 %v4372
      %4427 = vmatprep.subr.bf16.mxu0 0
      %4428 = vmatpush1.bf16.msra.mxu0 0
      %4429 = vmatprep.subr.bf16.mxu0 0
      %4430 = vmatpush1.bf16.msra.mxu0 0
      %4431 = vmatprep.subr.bf16.mxu0 0
      %4432 = vmatpush1.bf16.msra.mxu0 0
      %4433 = vmatprep.subr.bf16.mxu0 0
      %4434 = vmatpush1.bf16.msra.mxu0 0
      %4435 = vmatprep.subr.bf16.mxu0 0
      %4436 = vmatpush1.bf16.msra.mxu0 0
      %4437 = vmatprep.subr.bf16.mxu0 0
      %4438 = vmatpush1.bf16.msra.mxu0 0
      %4439 = vmatprep.subr.bf16.mxu0 0
      %4440 = vmatpush1.bf16.msra.mxu0 0
      %4441 = vmatprep.subr.bf16.mxu0 0
      %4442 = vmatpush1.bf16.msra.mxu0 0
      %4443 = vmatprep.subr.bf16.mxu0 0
      %4444 = vmatpush1.bf16.msra.mxu0 0
      %4445 = vmatprep.subr.bf16.mxu0 0
      %4446 = vmatpush1.bf16.msra.mxu0 0
      %4447 = vmatprep.subr.bf16.mxu0 0
      %4448 = vmatpush1.bf16.msra.mxu0 0
      %4449 = vmatprep.subr.bf16.mxu0 0
      %4450 = vmatpush1.bf16.msra.mxu0 0
      %4451 = vmatprep.subr.bf16.mxu0 0
      %4452 = vmatpush1.bf16.msra.mxu0 0
      %4453 = vmatprep.subr.bf16.mxu0 0
      %4454 = vmatpush1.bf16.msra.mxu0 0
      %4455 = vmatprep.mubr.bf16.mxu0 0
      %4456 = vmatmul.mubr.bf16.gmra.mrb[0].mxu0 %v4376
      %v4457 = vpop.f32.mrb[0].mxu0
      %v4458 = vadd.f32 0.0, %v4457
      %v4459 = vpop.f32.mrb[0].mxu0
      %v4460 = vpop.f32.mrb[0].mxu0
      %v4461 = vadd.f32 0.0, %v4460
      %v4462 = vpop.f32.mrb[0].mxu0
      %4463 = vmatprep.mubr.bf16.mxu0 0
      %4464 = vmatmul.mubr.bf16.gmra.mrb[0].mxu0 %v4379
      %v4465 = vpop.f32.mrb[0].mxu0
      %v4466 = vadd.f32 0.0, %v4465
      %v4467 = vpop.f32.mrb[0].mxu0
      %v4468 = vpop.f32.mrb[0].mxu0
      %v4469 = vadd.f32 0.0, %v4468
      %v4470 = vpop.f32.mrb[0].mxu0
      %4471 = vmatprep.mubr.bf16.mxu0 0
      %4472 = vmatmul.mubr.bf16.gmra.mrb[0].mxu0 %v4382
      %v4473 = vpop.f32.mrb[0].mxu0
      %v4474 = vadd.f32 0.0, %v4473
      %v4475 = vpop.f32.mrb[0].mxu0
      %v4476 = vpop.f32.mrb[0].mxu0
      %v4477 = vadd.f32 0.0, %v4476
      %v4478 = vpop.f32.mrb[0].mxu0
      %4479 = vmatprep.mubr.bf16.mxu0 0
      %4480 = vmatmul.mubr.bf16.gmra.mrb[0].mxu0 %v4385
      %v4481 = vpop.f32.mrb[0].mxu0
      %v4482 = vadd.f32 0.0, %v4481
      %v4483 = vpop.f32.mrb[0].mxu0
      %v4484 = vpop.f32.mrb[0].mxu0
      %v4485 = vadd.f32 0.0, %v4484
      %v4486 = vpop.f32.mrb[0].mxu0
      %4487 = vmatprep.mubr.bf16.mxu0 0
      %4488 = vmatmul.mubr.bf16.gmra.mrb[0].mxu0 %v4388
      %v4489 = vpop.f32.mrb[0].mxu0
      %v4490 = vadd.f32 0.0, %v4489
      %v4491 = vpop.f32.mrb[0].mxu0
      %v4492 = vpop.f32.mrb[0].mxu0
      %v4493 = vadd.f32 0.0, %v4492
      %v4494 = vpop.f32.mrb[0].mxu0
      %4495 = vmatprep.mubr.bf16.mxu0 0
      %4496 = vmatmul.mubr.bf16.gmra.mrb[0].mxu0 %v4391
      %v4497 = vpop.f32.mrb[0].mxu0
      %v4498 = vadd.f32 0.0, %v4497
      %v4499 = vpop.f32.mrb[0].mxu0
      %v4500 = vpop.f32.mrb[0].mxu0
      %v4501 = vadd.f32 0.0, %v4500
      %v4502 = vpop.f32.mrb[0].mxu0
      %4503 = vmatprep.mubr.bf16.mxu0 0
      %4504 = vmatmul.mubr.bf16.gmra.mrb[0].mxu0 %v4394
      %v4505 = vpop.f32.mrb[0].mxu0
      %v4506 = vadd.f32 0.0, %v4505
      %v4507 = vpop.f32.mrb[0].mxu0
      %v4508 = vpop.f32.mrb[0].mxu0
      %v4509 = vadd.f32 0.0, %v4508
      %v4510 = vpop.f32.mrb[0].mxu0
      %4511 = vmatprep.mubr.bf16.mxu0 0
      %4512 = vmatmul.mubr.bf16.gmra.mrb[0].mxu0 %v4397
      %v4513 = vpop.f32.mrb[0].mxu0
      %v4514 = vadd.f32 0.0, %v4513
      %v4515 = vpop.f32.mrb[0].mxu0
      %v4516 = vpop.f32.mrb[0].mxu0
      %v4517 = vadd.f32 0.0, %v4516
      %v4518 = vpop.f32.mrb[0].mxu0
      %4519 = vmatprep.mubr.bf16.mxu0 0
      %4520 = vmatmul.mubr.bf16.gmra.mrb[0].mxu0 %v4400
      %v4521 = vpop.f32.mrb[0].mxu0
      %v4522 = vadd.f32 0.0, %v4521
      %v4523 = vpop.f32.mrb[0].mxu0
      %v4524 = vpop.f32.mrb[0].mxu0
      %v4525 = vadd.f32 0.0, %v4524
      %v4526 = vpop.f32.mrb[0].mxu0
      %4527 = vmatprep.mubr.bf16.mxu0 0
      %4528 = vmatmul.mubr.bf16.gmra.mrb[0].mxu0 %v4403
      %v4529 = vpop.f32.mrb[0].mxu0
      %v4530 = vadd.f32 0.0, %v4529
      %v4531 = vpop.f32.mrb[0].mxu0
      %v4532 = vpop.f32.mrb[0].mxu0
      %v4533 = vadd.f32 0.0, %v4532
      %v4534 = vpop.f32.mrb[0].mxu0
      %4535 = vmatprep.mubr.bf16.mxu0 0
      %4536 = vmatmul.mubr.bf16.gmra.mrb[0].mxu0 %v4406
      %v4537 = vpop.f32.mrb[0].mxu0
      %v4538 = vadd.f32 0.0, %v4537
      %v4539 = vpop.f32.mrb[0].mxu0
      %v4540 = vpop.f32.mrb[0].mxu0
      %v4541 = vadd.f32 0.0, %v4540
      %v4542 = vpop.f32.mrb[0].mxu0
      %4543 = vmatprep.mubr.bf16.mxu0 0
      %4544 = vmatmul.mubr.bf16.gmra.mrb[0].mxu0 %v4409
      %v4545 = vpop.f32.mrb[0].mxu0
      %v4546 = vadd.f32 0.0, %v4545
      %v4547 = vpop.f32.mrb[0].mxu0
      %v4548 = vpop.f32.mrb[0].mxu0
      %v4549 = vadd.f32 0.0, %v4548
      %v4550 = vpop.f32.mrb[0].mxu0
      %4551 = vmatprep.mubr.bf16.mxu0 0
      %4552 = vmatmul.mubr.bf16.gmra.mrb[0].mxu0 %v4412
      %v4553 = vpop.f32.mrb[0].mxu0
      %v4554 = vadd.f32 0.0, %v4553
      %v4555 = vpop.f32.mrb[0].mxu0
      %v4556 = vpop.f32.mrb[0].mxu0
      %v4557 = vadd.f32 0.0, %v4556
      %v4558 = vpop.f32.mrb[0].mxu0
      %4559 = vmatprep.mubr.bf16.mxu0 0
      %4560 = vmatmul.mubr.bf16.gmra.mrb[0].mxu0 %v4415
      %v4561 = vpop.f32.mrb[0].mxu0
      %v4562 = vadd.f32 0.0, %v4561
      %v4563 = vpop.f32.mrb[0].mxu0
      %v4564 = vpop.f32.mrb[0].mxu0
      %v4565 = vadd.f32 0.0, %v4564
      %v4566 = vpop.f32.mrb[0].mxu0
      %4567 = vmatprep.mubr.bf16.mxu0 0
      %4568 = vmatmul.mubr.bf16.gmra.mrb[0].mxu0 %v4418
      %v4569 = vpop.f32.mrb[0].mxu0
      %v4570 = vadd.f32 0.0, %v4569
      %v4571 = vpop.f32.mrb[0].mxu0
      %v4572 = vpop.f32.mrb[0].mxu0
      %v4573 = vadd.f32 0.0, %v4572
      %v4574 = vpop.f32.mrb[0].mxu0
      %4575 = vmatprep.mubr.bf16.mxu0 0
      %4576 = vmatmul.mubr.bf16.gmra.mrb[0].mxu0 %v4421
      %v4577 = vpop.f32.mrb[0].mxu0
      %v4578 = vadd.f32 0.0, %v4577
      %v4579 = vpop.f32.mrb[0].mxu0
      %v4580 = vpop.f32.mrb[0].mxu0
      %v4581 = vadd.f32 0.0, %v4580
      %v4582 = vpop.f32.mrb[0].mxu0
      %4583 = vdwg.mxu0
      %v4584 = vadd.f32 %v3846, %v4458
      %v4585 = vadd.f32 %v3847, %v4461
      %v4586 = vadd.f32 %v3848, %v4466
      %v4587 = vadd.f32 %v3849, %v4469
      %v4588 = vadd.f32 %v3850, %v4474
      %v4589 = vadd.f32 %v3851, %v4477
      %v4590 = vadd.f32 %v3852, %v4482
      %v4591 = vadd.f32 %v3853, %v4485
      %v4592 = vadd.f32 %v3854, %v4490
      %v4593 = vadd.f32 %v3855, %v4493
      %v4594 = vadd.f32 %v3856, %v4498
      %v4595 = vadd.f32 %v3857, %v4501
      %v4596 = vadd.f32 %v3858, %v4506
      %v4597 = vadd.f32 %v3859, %v4509
      %v4598 = vadd.f32 %v3860, %v4514
      %v4599 = vadd.f32 %v3861, %v4517
      %v4600 = vadd.f32 %v3862, %v4522
      %v4601 = vadd.f32 %v3863, %v4525
      %v4602 = vadd.f32 %v3864, %v4530
      %v4603 = vadd.f32 %v3865, %v4533
      %v4604 = vadd.f32 %v3866, %v4538
      %v4605 = vadd.f32 %v3867, %v4541
      %v4606 = vadd.f32 %v3868, %v4546
      %v4607 = vadd.f32 %v3869, %v4549
      %v4608 = vadd.f32 %v3870, %v4554
      %v4609 = vadd.f32 %v3871, %v4557
      %v4610 = vadd.f32 %v3872, %v4562
      %v4611 = vadd.f32 %v3873, %v4565
      %v4612 = vadd.f32 %v3874, %v4570
      %v4613 = vadd.f32 %v3875, %v4573
      %v4614 = vadd.f32 %v3876, %v4578
      %v4615 = vadd.f32 %v3877, %v4581
      %v4616 = vld [vmem:[%s3507] sm:$0xe]
      %v4617 = vld [vmem:[%s3507 + $0xc] sm:$0xe]
      %v4618 = vld [vmem:[%s3507 + $0x18] sm:$0xe]
      %v4619 = vld [vmem:[%s3507 + $0x24] sm:$0xe]
      %v4620 = vld [vmem:[%s3507 + $0x30] sm:$0xe]
      %v4621 = vld [vmem:[%s3507 + $0x3c] sm:$0xe]
      %v4622 = vld [vmem:[%s3507 + $0x48] sm:$0xe]
      %v4623 = vld [vmem:[%s3507 + $0x54] sm:$0xe]
      %v4624 = vld [vmem:[%s3507 + $0x60] sm:$0xe]
      %v4625 = vld [vmem:[%s3507 + $0x6c] sm:$0xe]
      %v4626 = vld [vmem:[%s3507 + $0x78] sm:$0xe]
      %v4627 = vld [vmem:[%s3507 + $0x84] sm:$0xe]
      %v4628 = vld [vmem:[%s3507 + $0x90] sm:$0xe]
      %v4629 = vld [vmem:[%s3507 + $0x9c] sm:$0xe]
      %v4630 = vld [vmem:[%s3507 + $0xa8] sm:$0xe]
      %v4631 = vld [vmem:[%s3507 + $0xb4] sm:$0xe]
      %v4680 = vrot.slane %v4616, 5
      %v4681 = vrot.slane %v4680, 4
      %v4682 = vrot.slane %v3879, 5
      %v4683 = vsel %vm1497, %v4681, %v4682
      %v4684 = vrot.slane %v4682, 4
      %v4685 = vrot.slane %v3880, 5
      %v4686 = vsel %vm1497, %v4684, %v4685
      %v4687 = vrot.slane %v4617, 5
      %v4688 = vrot.slane %v4687, 4
      %v4689 = vrot.slane %v3882, 5
      %v4690 = vsel %vm1497, %v4688, %v4689
      %v4691 = vrot.slane %v4689, 4
      %v4692 = vrot.slane %v3883, 5
      %v4693 = vsel %vm1497, %v4691, %v4692
      %v4694 = vrot.slane %v4618, 5
      %v4695 = vrot.slane %v4694, 4
      %v4696 = vrot.slane %v3885, 5
      %v4697 = vsel %vm1497, %v4695, %v4696
      %v4698 = vrot.slane %v4696, 4
      %v4699 = vrot.slane %v3886, 5
      %v4700 = vsel %vm1497, %v4698, %v4699
      %v4701 = vrot.slane %v4619, 5
      %v4702 = vrot.slane %v4701, 4
      %v4703 = vrot.slane %v3888, 5
      %v4704 = vsel %vm1497, %v4702, %v4703
      %v4705 = vrot.slane %v4703, 4
      %v4706 = vrot.slane %v3889, 5
      %v4707 = vsel %vm1497, %v4705, %v4706
      %v4708 = vrot.slane %v4620, 5
      %v4709 = vrot.slane %v4708, 4
      %v4710 = vrot.slane %v3891, 5
      %v4711 = vsel %vm1497, %v4709, %v4710
      %v4712 = vrot.slane %v4710, 4
      %v4713 = vrot.slane %v3892, 5
      %v4714 = vsel %vm1497, %v4712, %v4713
      %v4715 = vrot.slane %v4621, 5
      %v4716 = vrot.slane %v4715, 4
      %v4717 = vrot.slane %v3894, 5
      %v4718 = vsel %vm1497, %v4716, %v4717
      %v4719 = vrot.slane %v4717, 4
      %v4720 = vrot.slane %v3895, 5
      %v4721 = vsel %vm1497, %v4719, %v4720
      %v4722 = vrot.slane %v4622, 5
      %v4723 = vrot.slane %v4722, 4
      %v4724 = vrot.slane %v3897, 5
      %v4725 = vsel %vm1497, %v4723, %v4724
      %v4726 = vrot.slane %v4724, 4
      %v4727 = vrot.slane %v3898, 5
      %v4728 = vsel %vm1497, %v4726, %v4727
      %v4729 = vrot.slane %v4623, 5
      %v4730 = vrot.slane %v4729, 4
      %v4731 = vrot.slane %v3900, 5
      %v4732 = vsel %vm1497, %v4730, %v4731
      %v4733 = vrot.slane %v4731, 4
      %v4734 = vrot.slane %v3901, 5
      %v4735 = vsel %vm1497, %v4733, %v4734
      %v4736 = vrot.slane %v4624, 5
      %v4737 = vrot.slane %v4736, 4
      %v4738 = vrot.slane %v3903, 5
      %v4739 = vsel %vm1497, %v4737, %v4738
      %v4740 = vrot.slane %v4738, 4
      %v4741 = vrot.slane %v3904, 5
      %v4742 = vsel %vm1497, %v4740, %v4741
      %v4743 = vrot.slane %v4625, 5
      %v4744 = vrot.slane %v4743, 4
      %v4745 = vrot.slane %v3906, 5
      %v4746 = vsel %vm1497, %v4744, %v4745
      %v4747 = vrot.slane %v4745, 4
      %v4748 = vrot.slane %v3907, 5
      %v4749 = vsel %vm1497, %v4747, %v4748
      %v4750 = vrot.slane %v4626, 5
      %v4751 = vrot.slane %v4750, 4
      %v4752 = vrot.slane %v3909, 5
      %v4753 = vsel %vm1497, %v4751, %v4752
      %v4754 = vrot.slane %v4752, 4
      %v4755 = vrot.slane %v3910, 5
      %v4756 = vsel %vm1497, %v4754, %v4755
      %v4757 = vrot.slane %v4627, 5
      %v4758 = vrot.slane %v4757, 4
      %v4759 = vrot.slane %v3912, 5
      %v4760 = vsel %vm1497, %v4758, %v4759
      %v4761 = vrot.slane %v4759, 4
      %v4762 = vrot.slane %v3913, 5
      %v4763 = vsel %vm1497, %v4761, %v4762
      %v4764 = vrot.slane %v4628, 5
      %v4765 = vrot.slane %v4764, 4
      %v4766 = vrot.slane %v3915, 5
      %v4767 = vsel %vm1497, %v4765, %v4766
      %v4768 = vrot.slane %v4766, 4
      %v4769 = vrot.slane %v3916, 5
      %v4770 = vsel %vm1497, %v4768, %v4769
      %v4771 = vrot.slane %v4629, 5
      %v4772 = vrot.slane %v4771, 4
      %v4773 = vrot.slane %v3918, 5
      %v4774 = vsel %vm1497, %v4772, %v4773
      %v4775 = vrot.slane %v4773, 4
      %v4776 = vrot.slane %v3919, 5
      %v4777 = vsel %vm1497, %v4775, %v4776
      %v4778 = vrot.slane %v4630, 5
      %v4779 = vrot.slane %v4778, 4
      %v4780 = vrot.slane %v3921, 5
      %v4781 = vsel %vm1497, %v4779, %v4780
      %v4782 = vrot.slane %v4780, 4
      %v4783 = vrot.slane %v3922, 5
      %v4784 = vsel %vm1497, %v4782, %v4783
      %v4785 = vrot.slane %v4631, 5
      %v4786 = vrot.slane %v4785, 4
      %v4787 = vrot.slane %v3924, 5
      %v4788 = vsel %vm1497, %v4786, %v4787
      %v4789 = vrot.slane %v4787, 4
      %v4790 = vrot.slane %v3925, 5
      %v4791 = vsel %vm1497, %v4789, %v4790
      %s4792 = scalar_lea.vmem %s2, 128
      %v4793 = vld [vmem:[%s4792] sm:$0xf]
      %v4794 = vld [vmem:[%s4792 + $0x4] sm:$0xf]
      %v4795 = vld [vmem:[%s4792 + $0x8] sm:$0xf]
      %v4796 = vld [vmem:[%s4792 + $0xc] sm:$0xf]
      %v4797 = vunpack.c.l.b16 %v4683
      %v4798 = vunpack.c.l.b16 %v4686
      %v4799 = vunpack.c.l.b16 %v4690
      %v4800 = vunpack.c.l.b16 %v4693
      %v4801 = vunpack.c.l.b16 %v4697
      %v4802 = vunpack.c.l.b16 %v4700
      %v4803 = vunpack.c.l.b16 %v4704
      %v4804 = vunpack.c.l.b16 %v4707
      %v4805 = vunpack.c.l.b16 %v4711
      %v4806 = vunpack.c.l.b16 %v4714
      %v4807 = vunpack.c.l.b16 %v4718
      %v4808 = vunpack.c.l.b16 %v4721
      %v4809 = vunpack.c.l.b16 %v4725
      %v4810 = vunpack.c.l.b16 %v4728
      %v4811 = vunpack.c.l.b16 %v4732
      %v4812 = vunpack.c.l.b16 %v4735
      %v4813 = vunpack.c.l.b16 %v4739
      %v4814 = vunpack.c.l.b16 %v4742
      %v4815 = vunpack.c.l.b16 %v4746
      %v4816 = vunpack.c.l.b16 %v4749
      %v4817 = vunpack.c.l.b16 %v4753
      %v4818 = vunpack.c.l.b16 %v4756
      %v4819 = vunpack.c.l.b16 %v4760
      %v4820 = vunpack.c.l.b16 %v4763
      %v4821 = vunpack.c.l.b16 %v4767
      %v4822 = vunpack.c.l.b16 %v4770
      %v4823 = vunpack.c.l.b16 %v4774
      %v4824 = vunpack.c.l.b16 %v4777
      %v4825 = vunpack.c.l.b16 %v4781
      %v4826 = vunpack.c.l.b16 %v4784
      %v4827 = vunpack.c.l.b16 %v4788
      %v4828 = vunpack.c.l.b16 %v4791
      %v4829 = vpack.c.b16 %v4798, %v4797
      %v4830 = vpack.c.b16 %v4800, %v4799
      %v4831 = vpack.c.b16 %v4802, %v4801
      %v4832 = vpack.c.b16 %v4804, %v4803
      %v4833 = vpack.c.b16 %v4806, %v4805
      %v4834 = vpack.c.b16 %v4808, %v4807
      %v4835 = vpack.c.b16 %v4810, %v4809
      %v4836 = vpack.c.b16 %v4812, %v4811
      %v4837 = vpack.c.b16 %v4814, %v4813
      %v4838 = vpack.c.b16 %v4816, %v4815
      %v4839 = vpack.c.b16 %v4818, %v4817
      %v4840 = vpack.c.b16 %v4820, %v4819
      %v4841 = vpack.c.b16 %v4822, %v4821
      %v4842 = vpack.c.b16 %v4824, %v4823
      %v4843 = vpack.c.b16 %v4826, %v4825
      %v4844 = vpack.c.b16 %v4828, %v4827
      %v4849 = vunpack.c.l.b16 %v4793
      %v4850 = vunpack.c.l.b16 %v4794
      %v4851 = vunpack.c.l.b16 %v4795
      %v4852 = vunpack.c.l.b16 %v4796
      %v4853 = vpack.c.b16 %v4850, %v4849
      %v4854 = vpack.c.b16 %v4852, %v4851
      %v4858 = vsel %vm936, %v4829, 0
      %v4861 = vsel %vm936, %v4830, 0
      %v4864 = vsel %vm936, %v4831, 0
      %v4867 = vsel %vm936, %v4832, 0
      %v4870 = vsel %vm936, %v4833, 0
      %v4873 = vsel %vm936, %v4834, 0
      %v4876 = vsel %vm936, %v4835, 0
      %v4879 = vsel %vm936, %v4836, 0
      %v4882 = vsel %vm936, %v4837, 0
      %v4885 = vsel %vm936, %v4838, 0
      %v4888 = vsel %vm936, %v4839, 0
      %v4891 = vsel %vm936, %v4840, 0
      %v4894 = vsel %vm936, %v4841, 0
      %v4897 = vsel %vm936, %v4842, 0
      %v4900 = vsel %vm936, %v4843, 0
      %v4903 = vsel %vm936, %v4844, 0
      %4905 = vmatprep.subr.bf16.mxu0 0
      %4906 = vmatpush1.bf16.msra.mxu0 %v4853
      %4907 = vmatprep.subr.bf16.mxu0 0
      %4908 = vmatpush1.bf16.msra.mxu0 %v4854
      %4909 = vmatprep.subr.bf16.mxu0 0
      %4910 = vmatpush1.bf16.msra.mxu0 0
      %4911 = vmatprep.subr.bf16.mxu0 0
      %4912 = vmatpush1.bf16.msra.mxu0 0
      %4913 = vmatprep.subr.bf16.mxu0 0
      %4914 = vmatpush1.bf16.msra.mxu0 0
      %4915 = vmatprep.subr.bf16.mxu0 0
      %4916 = vmatpush1.bf16.msra.mxu0 0
      %4917 = vmatprep.subr.bf16.mxu0 0
      %4918 = vmatpush1.bf16.msra.mxu0 0
      %4919 = vmatprep.subr.bf16.mxu0 0
      %4920 = vmatpush1.bf16.msra.mxu0 0
      %4921 = vmatprep.subr.bf16.mxu0 0
      %4922 = vmatpush1.bf16.msra.mxu0 0
      %4923 = vmatprep.subr.bf16.mxu0 0
      %4924 = vmatpush1.bf16.msra.mxu0 0
      %4925 = vmatprep.subr.bf16.mxu0 0
      %4926 = vmatpush1.bf16.msra.mxu0 0
      %4927 = vmatprep.subr.bf16.mxu0 0
      %4928 = vmatpush1.bf16.msra.mxu0 0
      %4929 = vmatprep.subr.bf16.mxu0 0
      %4930 = vmatpush1.bf16.msra.mxu0 0
      %4931 = vmatprep.subr.bf16.mxu0 0
      %4932 = vmatpush1.bf16.msra.mxu0 0
      %4933 = vmatprep.subr.bf16.mxu0 0
      %4934 = vmatpush1.bf16.msra.mxu0 0
      %4935 = vmatprep.subr.bf16.mxu0 0
      %4936 = vmatpush1.bf16.msra.mxu0 0
      %4937 = vmatprep.mubr.bf16.mxu0 0
      %4938 = vmatmul.mubr.bf16.gmra.mrb[0].mxu0 %v4858
      %v4939 = vpop.f32.mrb[0].mxu0
      %v4940 = vadd.f32 0.0, %v4939
      %v4941 = vpop.f32.mrb[0].mxu0
      %v4942 = vpop.f32.mrb[0].mxu0
      %v4943 = vadd.f32 0.0, %v4942
      %v4944 = vpop.f32.mrb[0].mxu0
      %4945 = vmatprep.mubr.bf16.mxu0 0
      %4946 = vmatmul.mubr.bf16.gmra.mrb[0].mxu0 %v4861
      %v4947 = vpop.f32.mrb[0].mxu0
      %v4948 = vadd.f32 0.0, %v4947
      %v4949 = vpop.f32.mrb[0].mxu0
      %v4950 = vpop.f32.mrb[0].mxu0
      %v4951 = vadd.f32 0.0, %v4950
      %v4952 = vpop.f32.mrb[0].mxu0
      %4953 = vmatprep.mubr.bf16.mxu0 0
      %4954 = vmatmul.mubr.bf16.gmra.mrb[0].mxu0 %v4864
      %v4955 = vpop.f32.mrb[0].mxu0
      %v4956 = vadd.f32 0.0, %v4955
      %v4957 = vpop.f32.mrb[0].mxu0
      %v4958 = vpop.f32.mrb[0].mxu0
      %v4959 = vadd.f32 0.0, %v4958
      %v4960 = vpop.f32.mrb[0].mxu0
      %4961 = vmatprep.mubr.bf16.mxu0 0
      %4962 = vmatmul.mubr.bf16.gmra.mrb[0].mxu0 %v4867
      %v4963 = vpop.f32.mrb[0].mxu0
      %v4964 = vadd.f32 0.0, %v4963
      %v4965 = vpop.f32.mrb[0].mxu0
      %v4966 = vpop.f32.mrb[0].mxu0
      %v4967 = vadd.f32 0.0, %v4966
      %v4968 = vpop.f32.mrb[0].mxu0
      %4969 = vmatprep.mubr.bf16.mxu0 0
      %4970 = vmatmul.mubr.bf16.gmra.mrb[0].mxu0 %v4870
      %v4971 = vpop.f32.mrb[0].mxu0
      %v4972 = vadd.f32 0.0, %v4971
      %v4973 = vpop.f32.mrb[0].mxu0
      %v4974 = vpop.f32.mrb[0].mxu0
      %v4975 = vadd.f32 0.0, %v4974
      %v4976 = vpop.f32.mrb[0].mxu0
      %4977 = vmatprep.mubr.bf16.mxu0 0
      %4978 = vmatmul.mubr.bf16.gmra.mrb[0].mxu0 %v4873
      %v4979 = vpop.f32.mrb[0].mxu0
      %v4980 = vadd.f32 0.0, %v4979
      %v4981 = vpop.f32.mrb[0].mxu0
      %v4982 = vpop.f32.mrb[0].mxu0
      %v4983 = vadd.f32 0.0, %v4982
      %v4984 = vpop.f32.mrb[0].mxu0
      %4985 = vmatprep.mubr.bf16.mxu0 0
      %4986 = vmatmul.mubr.bf16.gmra.mrb[0].mxu0 %v4876
      %v4987 = vpop.f32.mrb[0].mxu0
      %v4988 = vadd.f32 0.0, %v4987
      %v4989 = vpop.f32.mrb[0].mxu0
      %v4990 = vpop.f32.mrb[0].mxu0
      %v4991 = vadd.f32 0.0, %v4990
      %v4992 = vpop.f32.mrb[0].mxu0
      %4993 = vmatprep.mubr.bf16.mxu0 0
      %4994 = vmatmul.mubr.bf16.gmra.mrb[0].mxu0 %v4879
      %v4995 = vpop.f32.mrb[0].mxu0
      %v4996 = vadd.f32 0.0, %v4995
      %v4997 = vpop.f32.mrb[0].mxu0
      %v4998 = vpop.f32.mrb[0].mxu0
      %v4999 = vadd.f32 0.0, %v4998
      %v5000 = vpop.f32.mrb[0].mxu0
      %5001 = vmatprep.mubr.bf16.mxu0 0
      %5002 = vmatmul.mubr.bf16.gmra.mrb[0].mxu0 %v4882
      %v5003 = vpop.f32.mrb[0].mxu0
      %v5004 = vadd.f32 0.0, %v5003
      %v5005 = vpop.f32.mrb[0].mxu0
      %v5006 = vpop.f32.mrb[0].mxu0
      %v5007 = vadd.f32 0.0, %v5006
      %v5008 = vpop.f32.mrb[0].mxu0
      %5009 = vmatprep.mubr.bf16.mxu0 0
      %5010 = vmatmul.mubr.bf16.gmra.mrb[0].mxu0 %v4885
      %v5011 = vpop.f32.mrb[0].mxu0
      %v5012 = vadd.f32 0.0, %v5011
      %v5013 = vpop.f32.mrb[0].mxu0
      %v5014 = vpop.f32.mrb[0].mxu0
      %v5015 = vadd.f32 0.0, %v5014
      %v5016 = vpop.f32.mrb[0].mxu0
      %5017 = vmatprep.mubr.bf16.mxu0 0
      %5018 = vmatmul.mubr.bf16.gmra.mrb[0].mxu0 %v4888
      %v5019 = vpop.f32.mrb[0].mxu0
      %v5020 = vadd.f32 0.0, %v5019
      %v5021 = vpop.f32.mrb[0].mxu0
      %v5022 = vpop.f32.mrb[0].mxu0
      %v5023 = vadd.f32 0.0, %v5022
      %v5024 = vpop.f32.mrb[0].mxu0
      %5025 = vmatprep.mubr.bf16.mxu0 0
      %5026 = vmatmul.mubr.bf16.gmra.mrb[0].mxu0 %v4891
      %v5027 = vpop.f32.mrb[0].mxu0
      %v5028 = vadd.f32 0.0, %v5027
      %v5029 = vpop.f32.mrb[0].mxu0
      %v5030 = vpop.f32.mrb[0].mxu0
      %v5031 = vadd.f32 0.0, %v5030
      %v5032 = vpop.f32.mrb[0].mxu0
      %5033 = vmatprep.mubr.bf16.mxu0 0
      %5034 = vmatmul.mubr.bf16.gmra.mrb[0].mxu0 %v4894
      %v5035 = vpop.f32.mrb[0].mxu0
      %v5036 = vadd.f32 0.0, %v5035
      %v5037 = vpop.f32.mrb[0].mxu0
      %v5038 = vpop.f32.mrb[0].mxu0
      %v5039 = vadd.f32 0.0, %v5038
      %v5040 = vpop.f32.mrb[0].mxu0
      %5041 = vmatprep.mubr.bf16.mxu0 0
      %5042 = vmatmul.mubr.bf16.gmra.mrb[0].mxu0 %v4897
      %v5043 = vpop.f32.mrb[0].mxu0
      %v5044 = vadd.f32 0.0, %v5043
      %v5045 = vpop.f32.mrb[0].mxu0
      %v5046 = vpop.f32.mrb[0].mxu0
      %v5047 = vadd.f32 0.0, %v5046
      %v5048 = vpop.f32.mrb[0].mxu0
      %5049 = vmatprep.mubr.bf16.mxu0 0
      %5050 = vmatmul.mubr.bf16.gmra.mrb[0].mxu0 %v4900
      %v5051 = vpop.f32.mrb[0].mxu0
      %v5052 = vadd.f32 0.0, %v5051
      %v5053 = vpop.f32.mrb[0].mxu0
      %v5054 = vpop.f32.mrb[0].mxu0
      %v5055 = vadd.f32 0.0, %v5054
      %v5056 = vpop.f32.mrb[0].mxu0
      %5057 = vmatprep.mubr.bf16.mxu0 0
      %5058 = vmatmul.mubr.bf16.gmra.mrb[0].mxu0 %v4903
      %v5059 = vpop.f32.mrb[0].mxu0
      %v5060 = vadd.f32 0.0, %v5059
      %v5061 = vpop.f32.mrb[0].mxu0
      %v5062 = vpop.f32.mrb[0].mxu0
      %v5063 = vadd.f32 0.0, %v5062
      %v5064 = vpop.f32.mrb[0].mxu0
      %5065 = vdwg.mxu0
      %v5066 = vadd.f32 %v4584, %v4940
      %v5067 = vadd.f32 %v4585, %v4943
      %v5068 = vadd.f32 %v4586, %v4948
      %v5069 = vadd.f32 %v4587, %v4951
      %v5070 = vadd.f32 %v4588, %v4956
      %v5071 = vadd.f32 %v4589, %v4959
      %v5072 = vadd.f32 %v4590, %v4964
      %v5073 = vadd.f32 %v4591, %v4967
      %v5074 = vadd.f32 %v4592, %v4972
      %v5075 = vadd.f32 %v4593, %v4975
      %v5076 = vadd.f32 %v4594, %v4980
      %v5077 = vadd.f32 %v4595, %v4983
      %v5078 = vadd.f32 %v4596, %v4988
      %v5079 = vadd.f32 %v4597, %v4991
      %v5080 = vadd.f32 %v4598, %v4996
      %v5081 = vadd.f32 %v4599, %v4999
      %v5082 = vadd.f32 %v4600, %v5004
      %v5083 = vadd.f32 %v4601, %v5007
      %v5084 = vadd.f32 %v4602, %v5012
      %v5085 = vadd.f32 %v4603, %v5015
      %v5086 = vadd.f32 %v4604, %v5020
      %v5087 = vadd.f32 %v4605, %v5023
      %v5088 = vadd.f32 %v4606, %v5028
      %v5089 = vadd.f32 %v4607, %v5031
      %v5090 = vadd.f32 %v4608, %v5036
      %v5091 = vadd.f32 %v4609, %v5039
      %v5092 = vadd.f32 %v4610, %v5044
      %v5093 = vadd.f32 %v4611, %v5047
      %v5094 = vadd.f32 %v4612, %v5052
      %v5095 = vadd.f32 %v4613, %v5055
      %v5096 = vadd.f32 %v4614, %v5060
      %v5097 = vadd.f32 %v4615, %v5063
      %v5098 = vld [vmem:[%s3] sm:$0x1]
      %v5100 = vlaneseq
      %v5101 = vshrl.u32 %v5100, 7
      %v5102 = vsub.s32 0, %v5101
      %v5103 = vrot.slane %v5098, %v5102
      %v5105 = vadd.f32 %v5066, %v5103
      %v5106 = vadd.f32 %v5067, %v5103
      %v5107 = vadd.f32 %v5068, %v5103
      %v5108 = vadd.f32 %v5069, %v5103
      %v5109 = vadd.f32 %v5070, %v5103
      %v5110 = vadd.f32 %v5071, %v5103
      %v5111 = vadd.f32 %v5072, %v5103
      %v5112 = vadd.f32 %v5073, %v5103
      %v5113 = vadd.f32 %v5074, %v5103
      %v5114 = vadd.f32 %v5075, %v5103
      %v5115 = vadd.f32 %v5076, %v5103
      %v5116 = vadd.f32 %v5077, %v5103
      %v5117 = vadd.f32 %v5078, %v5103
      %v5118 = vadd.f32 %v5079, %v5103
      %v5119 = vadd.f32 %v5080, %v5103
      %v5120 = vadd.f32 %v5081, %v5103
      %v5121 = vadd.f32 %v5082, %v5103
      %v5122 = vadd.f32 %v5083, %v5103
      %v5123 = vadd.f32 %v5084, %v5103
      %v5124 = vadd.f32 %v5085, %v5103
      %v5125 = vadd.f32 %v5086, %v5103
      %v5126 = vadd.f32 %v5087, %v5103
      %v5127 = vadd.f32 %v5088, %v5103
      %v5128 = vadd.f32 %v5089, %v5103
      %v5129 = vadd.f32 %v5090, %v5103
      %v5130 = vadd.f32 %v5091, %v5103
      %v5131 = vadd.f32 %v5092, %v5103
      %v5132 = vadd.f32 %v5093, %v5103
      %v5133 = vadd.f32 %v5094, %v5103
      %v5134 = vadd.f32 %v5095, %v5103
      %v5135 = vadd.f32 %v5096, %v5103
      %v5136 = vadd.f32 %v5097, %v5103
      %vm5137 = vcmp.gt.f32.partialorder %v5105, 0.0
      %vm5138 = vcmp.gt.f32.partialorder %v5106, 0.0
      %vm5139 = vcmp.gt.f32.partialorder %v5107, 0.0
      %vm5140 = vcmp.gt.f32.partialorder %v5108, 0.0
      %vm5141 = vcmp.gt.f32.partialorder %v5109, 0.0
      %vm5142 = vcmp.gt.f32.partialorder %v5110, 0.0
      %vm5143 = vcmp.gt.f32.partialorder %v5111, 0.0
      %vm5144 = vcmp.gt.f32.partialorder %v5112, 0.0
      %vm5145 = vcmp.gt.f32.partialorder %v5113, 0.0
      %vm5146 = vcmp.gt.f32.partialorder %v5114, 0.0
      %vm5147 = vcmp.gt.f32.partialorder %v5115, 0.0
      %vm5148 = vcmp.gt.f32.partialorder %v5116, 0.0
      %vm5149 = vcmp.gt.f32.partialorder %v5117, 0.0
      %vm5150 = vcmp.gt.f32.partialorder %v5118, 0.0
      %vm5151 = vcmp.gt.f32.partialorder %v5119, 0.0
      %vm5152 = vcmp.gt.f32.partialorder %v5120, 0.0
      %vm5153 = vcmp.gt.f32.partialorder %v5121, 0.0
      %vm5154 = vcmp.gt.f32.partialorder %v5122, 0.0
      %vm5155 = vcmp.gt.f32.partialorder %v5123, 0.0
      %vm5156 = vcmp.gt.f32.partialorder %v5124, 0.0
      %vm5157 = vcmp.gt.f32.partialorder %v5125, 0.0
      %vm5158 = vcmp.gt.f32.partialorder %v5126, 0.0
      %vm5159 = vcmp.gt.f32.partialorder %v5127, 0.0
      %vm5160 = vcmp.gt.f32.partialorder %v5128, 0.0
      %vm5161 = vcmp.gt.f32.partialorder %v5129, 0.0
      %vm5162 = vcmp.gt.f32.partialorder %v5130, 0.0
      %vm5163 = vcmp.gt.f32.partialorder %v5131, 0.0
      %vm5164 = vcmp.gt.f32.partialorder %v5132, 0.0
      %vm5165 = vcmp.gt.f32.partialorder %v5133, 0.0
      %vm5166 = vcmp.gt.f32.partialorder %v5134, 0.0
      %vm5167 = vcmp.gt.f32.partialorder %v5135, 0.0
      %vm5168 = vcmp.gt.f32.partialorder %v5136, 0.0
      %v5169 = vmul.f32 %v5105, 0.2
      %v5170 = vmul.f32 %v5106, 0.2
      %v5171 = vmul.f32 %v5107, 0.2
      %v5172 = vmul.f32 %v5108, 0.2
      %v5173 = vmul.f32 %v5109, 0.2
      %v5174 = vmul.f32 %v5110, 0.2
      %v5175 = vmul.f32 %v5111, 0.2
      %v5176 = vmul.f32 %v5112, 0.2
      %v5177 = vmul.f32 %v5113, 0.2
      %v5178 = vmul.f32 %v5114, 0.2
      %v5179 = vmul.f32 %v5115, 0.2
      %v5180 = vmul.f32 %v5116, 0.2
      %v5181 = vmul.f32 %v5117, 0.2
      %v5182 = vmul.f32 %v5118, 0.2
      %v5183 = vmul.f32 %v5119, 0.2
      %v5184 = vmul.f32 %v5120, 0.2
      %v5185 = vmul.f32 %v5121, 0.2
      %v5186 = vmul.f32 %v5122, 0.2
      %v5187 = vmul.f32 %v5123, 0.2
      %v5188 = vmul.f32 %v5124, 0.2
      %v5189 = vmul.f32 %v5125, 0.2
      %v5190 = vmul.f32 %v5126, 0.2
      %v5191 = vmul.f32 %v5127, 0.2
      %v5192 = vmul.f32 %v5128, 0.2
      %v5193 = vmul.f32 %v5129, 0.2
      %v5194 = vmul.f32 %v5130, 0.2
      %v5195 = vmul.f32 %v5131, 0.2
      %v5196 = vmul.f32 %v5132, 0.2
      %v5197 = vmul.f32 %v5133, 0.2
      %v5198 = vmul.f32 %v5134, 0.2
      %v5199 = vmul.f32 %v5135, 0.2
      %v5200 = vmul.f32 %v5136, 0.2
      %v5201 = vsel %vm5137, %v5105, %v5169
      %v5202 = vsel %vm5138, %v5106, %v5170
      %v5203 = vsel %vm5139, %v5107, %v5171
      %v5204 = vsel %vm5140, %v5108, %v5172
      %v5205 = vsel %vm5141, %v5109, %v5173
      %v5206 = vsel %vm5142, %v5110, %v5174
      %v5207 = vsel %vm5143, %v5111, %v5175
      %v5208 = vsel %vm5144, %v5112, %v5176
      %v5209 = vsel %vm5145, %v5113, %v5177
      %v5210 = vsel %vm5146, %v5114, %v5178
      %v5211 = vsel %vm5147, %v5115, %v5179
      %v5212 = vsel %vm5148, %v5116, %v5180
      %v5213 = vsel %vm5149, %v5117, %v5181
      %v5214 = vsel %vm5150, %v5118, %v5182
      %v5215 = vsel %vm5151, %v5119, %v5183
      %v5216 = vsel %vm5152, %v5120, %v5184
      %v5217 = vsel %vm5153, %v5121, %v5185
      %v5218 = vsel %vm5154, %v5122, %v5186
      %v5219 = vsel %vm5155, %v5123, %v5187
      %v5220 = vsel %vm5156, %v5124, %v5188
      %v5221 = vsel %vm5157, %v5125, %v5189
      %v5222 = vsel %vm5158, %v5126, %v5190
      %v5223 = vsel %vm5159, %v5127, %v5191
      %v5224 = vsel %vm5160, %v5128, %v5192
      %v5225 = vsel %vm5161, %v5129, %v5193
      %v5226 = vsel %vm5162, %v5130, %v5194
      %v5227 = vsel %vm5163, %v5131, %v5195
      %v5228 = vsel %vm5164, %v5132, %v5196
      %v5229 = vsel %vm5165, %v5133, %v5197
      %v5230 = vsel %vm5166, %v5134, %v5198
      %v5231 = vsel %vm5167, %v5135, %v5199
      %v5232 = vsel %vm5168, %v5136, %v5200
      %v5233 = vmul.f32 %v5201, 1.4142135
      %v5234 = vmul.f32 %v5202, 1.4142135
      %v5235 = vmul.f32 %v5203, 1.4142135
      %v5236 = vmul.f32 %v5204, 1.4142135
      %v5237 = vmul.f32 %v5205, 1.4142135
      %v5238 = vmul.f32 %v5206, 1.4142135
      %v5239 = vmul.f32 %v5207, 1.4142135
      %v5240 = vmul.f32 %v5208, 1.4142135
      %v5241 = vmul.f32 %v5209, 1.4142135
      %v5242 = vmul.f32 %v5210, 1.4142135
      %v5243 = vmul.f32 %v5211, 1.4142135
      %v5244 = vmul.f32 %v5212, 1.4142135
      %v5245 = vmul.f32 %v5213, 1.4142135
      %v5246 = vmul.f32 %v5214, 1.4142135
      %v5247 = vmul.f32 %v5215, 1.4142135
      %v5248 = vmul.f32 %v5216, 1.4142135
      %v5249 = vmul.f32 %v5217, 1.4142135
      %v5250 = vmul.f32 %v5218, 1.4142135
      %v5251 = vmul.f32 %v5219, 1.4142135
      %v5252 = vmul.f32 %v5220, 1.4142135
      %v5253 = vmul.f32 %v5221, 1.4142135
      %v5254 = vmul.f32 %v5222, 1.4142135
      %v5255 = vmul.f32 %v5223, 1.4142135
      %v5256 = vmul.f32 %v5224, 1.4142135
      %v5257 = vmul.f32 %v5225, 1.4142135
      %v5258 = vmul.f32 %v5226, 1.4142135
      %v5259 = vmul.f32 %v5227, 1.4142135
      %v5260 = vmul.f32 %v5228, 1.4142135
      %v5261 = vmul.f32 %v5229, 1.4142135
      %v5262 = vmul.f32 %v5230, 1.4142135
      %v5263 = vmul.f32 %v5231, 1.4142135
      %v5264 = vmul.f32 %v5232, 1.4142135
      %5265 = vst.msk [vmem:[%s318] sm:$0xff] %vm936, %v5233
      %5266 = vst.msk [vmem:[%s318 + $0x8] sm:$0xff] %vm936, %v5234
      %5267 = vst.msk [vmem:[%s318 + $0x10] sm:$0xff] %vm936, %v5235
      %5268 = vst.msk [vmem:[%s318 + $0x18] sm:$0xff] %vm936, %v5236
      %5269 = vst.msk [vmem:[%s318 + $0x20] sm:$0xff] %vm936, %v5237
      %5270 = vst.msk [vmem:[%s318 + $0x28] sm:$0xff] %vm936, %v5238
      %5271 = vst.msk [vmem:[%s318 + $0x30] sm:$0xff] %vm936, %v5239
      %5272 = vst.msk [vmem:[%s318 + $0x38] sm:$0xff] %vm936, %v5240
      %5273 = vst.msk [vmem:[%s318 + $0x40] sm:$0xff] %vm936, %v5241
      %5274 = vst.msk [vmem:[%s318 + $0x48] sm:$0xff] %vm936, %v5242
      %5275 = vst.msk [vmem:[%s318 + $0x50] sm:$0xff] %vm936, %v5243
      %5276 = vst.msk [vmem:[%s318 + $0x58] sm:$0xff] %vm936, %v5244
      %5277 = vst.msk [vmem:[%s318 + $0x60] sm:$0xff] %vm936, %v5245
      %5278 = vst.msk [vmem:[%s318 + $0x68] sm:$0xff] %vm936, %v5246
      %5279 = vst.msk [vmem:[%s318 + $0x70] sm:$0xff] %vm936, %v5247
      %5280 = vst.msk [vmem:[%s318 + $0x78] sm:$0xff] %vm936, %v5248
      %5281 = vst.msk [vmem:[%s318 + $0x80] sm:$0xff] %vm936, %v5249
      %5282 = vst.msk [vmem:[%s318 + $0x88] sm:$0xff] %vm936, %v5250
      %5283 = vst.msk [vmem:[%s318 + $0x90] sm:$0xff] %vm936, %v5251
      %5284 = vst.msk [vmem:[%s318 + $0x98] sm:$0xff] %vm936, %v5252
      %5285 = vst.msk [vmem:[%s318 + $0xa0] sm:$0xff] %vm936, %v5253
      %5286 = vst.msk [vmem:[%s318 + $0xa8] sm:$0xff] %vm936, %v5254
      %5287 = vst.msk [vmem:[%s318 + $0xb0] sm:$0xff] %vm936, %v5255
      %5288 = vst.msk [vmem:[%s318 + $0xb8] sm:$0xff] %vm936, %v5256
      %5289 = vst.msk [vmem:[%s318 + $0xc0] sm:$0xff] %vm936, %v5257
      %5290 = vst.msk [vmem:[%s318 + $0xc8] sm:$0xff] %vm936, %v5258
      %5291 = vst.msk [vmem:[%s318 + $0xd0] sm:$0xff] %vm936, %v5259
      %5292 = vst.msk [vmem:[%s318 + $0xd8] sm:$0xff] %vm936, %v5260
      %5293 = vst.msk [vmem:[%s318 + $0xe0] sm:$0xff] %vm936, %v5261
      %5294 = vst.msk [vmem:[%s318 + $0xe8] sm:$0xff] %vm936, %v5262
      %5295 = vst.msk [vmem:[%s318 + $0xf0] sm:$0xff] %vm936, %v5263
      %5296 = vst.msk [vmem:[%s318 + $0xf8] sm:$0xff] %vm936, %v5264
      %s5297 = smul.u32 16, %s20
      %p5298 = scmp.lt.s32.totalorder %s19, 1
      %s5299 = scalar_select %p5298, %s19, 1
      %p5300 = scmp.lt.s32.totalorder %s5297, 15
      %s5301 = scalar_select %p5300, %s5297, 15
      %s5302 = smul.addr %s5301, 2
      %s5303 = smul.addr %s5299, 32
      %s5304 = sadd.s32 %s5302, %s5303
      %s5305 = smul.addr %s5304, 8
      %s5306 = scalar_lea.vmem %s4, %s5305
      // Predicated region
      $region37: #{resblock_forward.5} parent=35 // pred_check
        %p5307 = pneg %p149
      $region38: #{resblock_forward.5} parent=35 // pred_check_branch
        %5309 = sbr.rel (%p5307) target = $region40
      $region39: #{resblock_forward.5} parent=35 // pred_region
        %s5310 = smul.u32 16, %s20
      $region40: #{resblock_forward.5} parent=35 // pred_fallthru
        _
    $region36: #{resblock_forward.5} parent=5 // pred_fallthru
      _
    %p5311 = scmp.le.s32.totalorder 2, %s10
    // Predicated region
    $region41: #{resblock_forward.5} parent=5 // pred_check
      %p5312 = pneg %p5311
    $region42: #{resblock_forward.5} parent=5 // pred_check_branch
      %5314 = sbr.rel (%p5312) target = $region44
    $region43: #{resblock_forward.5} parent=5 // pred_region
      %s5315 = ssub.s32 %s10, 2
      // Predicated region
      $region45: #{resblock_forward.5} parent=43 // pred_check
        %p5316 = pneg %p155
      $region46: #{resblock_forward.5} parent=43 // pred_check_branch
        %5318 = sbr.rel (%p5316) target = $region48
      $region47: #{resblock_forward.5} parent=43 // pred_region
        %s5319 = smul.u32 16, %s22
        %p5320 = scmp.lt.s32.totalorder %s21, 1
        %s5321 = scalar_select %p5320, %s21, 1
        %p5322 = scmp.lt.s32.totalorder %s5319, 15
        %s5323 = scalar_select %p5322, %s5319, 15
        %s5324 = smul.addr %s5323, 2
        %s5325 = smul.addr %s5321, 32
        %s5326 = sadd.s32 %s5324, %s5325
        %s5327 = smul.addr %s5326, 8
        %s5328 = scalar_lea.vmem %s4, %s5327
      $region48: #{resblock_forward.5} parent=43 // pred_fallthru
        _
    $region44: #{resblock_forward.5} parent=5 // pred_fallthru
      _
  $region6: #{resblock_forward.5} parent=0 // loop_footer
    %s14 = sadd.s32 1, %s10
  $region7: #{resblock_forward.5} parent=0 // loop_footer_branch
    %9 = sbr.rel target = $region3
  $region8: #{resblock_forward.5} parent=0 // loop_exit
    _

// kernel: resblock_forward.7
$region0: #{resblock_forward.7}
  #allocation0 [shape = 'u32[]', space=smem, size = 0x4, offset = 0x4, fixed_abs, tag = 'smem constant byte address 0x4 - core index']
  #allocation1 [shape = 'u32[144,128]{1,0:T(1,128)}', space=vmem, size = 0x12000, scoped, tag = 'internal scratch']
  #allocation2 [shape = 'bf16[9,9,128]{2,1,0:T(8,128)(2,1)}', space=vmem, size = 0x9000, scoped, tag = 'scratch operand']
  %s0 = inlined_call_operand.vmem [shape: bf16[2,9,9,128], index: 0, kind: input, shape index: {}, may-alias: {0,1}]
  %s1 = inlined_call_operand.vmem [shape: bf16[2,9,9,128], index: 1, kind: input, shape index: {}, may-alias: {0,1}]
  %s2 = inlined_call_operand.vmem [shape: bf16[4,128,64], index: 2, kind: input, shape index: {}]
  %s3 = inlined_call_operand.vmem [shape: f32[1,64], index: 3, kind: input, shape index: {}]
  %s4 = inlined_call_operand.vmem [shape: f32[2,8,8,64], index: 4, kind: output, shape index: {}]
  %s5 = sld [smem:[#allocation0]]
  $region49: #{resblock_forward.7} parent=0
    _
  %s7 = ssub.s32 1, %s5
  %s8 = scalar_select 0, %s7, %s5
  loop: start=0, step=1, limit=4
  $region2: #{resblock_forward.7} parent=0 // loop_pre_header
    _
  $region3: #{resblock_forward.7} parent=0 // loop_header
    %s10 = sphi 0, %s14
    %p11 = scmp.ge.s32.totalorder %s10, 4
    %s17 = sphi 0, %s29
    %s18 = sphi 0, %s25
    %s19 = sphi 0, %s17
    %s20 = sphi 0, %s18
    %s21 = sphi 0, %s19
    %s22 = sphi 0, %s20
    %s34 = sphi 0, %s36
    %s37 = sphi 0, %s34
    %s38 = sphi 0, %s37
    %s54 = sphi 0, %s38
    %s66 = sphi 0, %s68
    %s69 = sphi 0, %s66
    %s70 = sphi 0, %s69
    %s86 = sphi 0, %s70
    %s90 = sphi 0, %s90
    %s92 = sphi 0, %s90
    %s93 = sphi 0, %s92
    %s107 = sphi 0, %s93
    %s111 = sphi 0, %s111
    %s113 = sphi 0, %s111
    %s114 = sphi 0, %s113
    %s128 = sphi 0, %s114
    %s136 = sphi 0, %s138
    %s139 = sphi 0, %s136
    %s140 = sphi 0, %s139
    %s156 = sphi 0, %s140
  $region4: #{resblock_forward.7} parent=0 // loop_header_branch
    %13 = sbr.rel (%p11) target = $region8
  $region5: #{resblock_forward.7} parent=0 // loop_body
    %s15 = ssub.s32 %s10, 1
    %s16 = ssub.s32 %s10, 2
    %s23 = sadd.s32 1, %s18
    %p24 = scmp.ge.s32.totalorder %s23, 1
    %s25 = scalar_select %p24, 0, %s23
    %s26 = sadd.s32 1, %s17
    %s27 = scalar_select %p24, %s26, %s17
    %p28 = scmp.ge.s32.totalorder %s27, 2
    %s29 = scalar_select %p28, 0, %s27
    %s30 = ssub.s32 %s17, %s29
    %s31 = ssub.s32 %s18, %s25
    %s32 = sor.u32 %s30, %s31
    %p33 = scmp.eq.s32.totalorder %s32, 0
    %s35 = sadd.s32 %s34, 1
    %s36 = scalar_select %p33, %s34, %s35
    %p39 = pneg %p33
    %p40 = scmp.eq.s32.totalorder %s10, 1
    %p41 = por %p39, %p40
    %p42 = scmp.ne.s32.totalorder %s34, %s37
    %p43 = scmp.eq.s32.totalorder %s10, 0
    %p44 = por %p42, %p43
    %p45 = scmp.ne.s32.totalorder %s34, %s37
    %p46 = scmp.eq.s32.totalorder %s15, 1
    %p47 = por %p45, %p46
    %p48 = scmp.ne.s32.totalorder %s37, %s38
    %p49 = scmp.eq.s32.totalorder %s15, 0
    %p50 = por %p48, %p49
    %p51 = scmp.ne.s32.totalorder %s37, %s38
    %p52 = scmp.eq.s32.totalorder %s16, 1
    %p53 = por %p51, %p52
    %p55 = scmp.ne.s32.totalorder %s38, %s54
    %p56 = scmp.eq.s32.totalorder %s16, 0
    %p57 = por %p55, %p56
    %s58 = sadd.s32 %s18, 1
    %s59 = smul.u32 %s58, 8
    %s60 = sadd.s32 %s25, 1
    %s61 = smul.u32 %s60, 8
    %s62 = ssub.s32 %s17, %s29
    %s63 = ssub.s32 %s59, %s61
    %s64 = sor.u32 %s62, %s63
    %p65 = scmp.eq.s32.totalorder %s64, 0
    %s67 = sadd.s32 %s66, 1
    %s68 = scalar_select %p65, %s66, %s67
    %p71 = pneg %p65
    %p72 = scmp.eq.s32.totalorder %s10, 1
    %p73 = por %p71, %p72
    %p74 = scmp.ne.s32.totalorder %s66, %s69
    %p75 = scmp.eq.s32.totalorder %s10, 0
    %p76 = por %p74, %p75
    %p77 = scmp.ne.s32.totalorder %s66, %s69
    %p78 = scmp.eq.s32.totalorder %s15, 1
    %p79 = por %p77, %p78
    %p80 = scmp.ne.s32.totalorder %s69, %s70
    %p81 = scmp.eq.s32.totalorder %s15, 0
    %p82 = por %p80, %p81
    %p83 = scmp.ne.s32.totalorder %s69, %s70
    %p84 = scmp.eq.s32.totalorder %s16, 1
    %p85 = por %p83, %p84
    %p87 = scmp.ne.s32.totalorder %s70, %s86
    %p88 = scmp.eq.s32.totalorder %s16, 0
    %p89 = por %p87, %p88
    %s91 = sadd.s32 %s90, 1
    %p94 = scmp.eq.s32.totalorder %s10, 1
    %p95 = scmp.ne.s32.totalorder %s90, %s92
    %p96 = scmp.eq.s32.totalorder %s10, 0
    %p97 = por %p95, %p96
    %p98 = scmp.ne.s32.totalorder %s90, %s92
    %p99 = scmp.eq.s32.totalorder %s15, 1
    %p100 = por %p98, %p99
    %p101 = scmp.ne.s32.totalorder %s92, %s93
    %p102 = scmp.eq.s32.totalorder %s15, 0
    %p103 = por %p101, %p102
    %p104 = scmp.ne.s32.totalorder %s92, %s93
    %p105 = scmp.eq.s32.totalorder %s16, 1
    %p106 = por %p104, %p105
    %p108 = scmp.ne.s32.totalorder %s93, %s107
    %p109 = scmp.eq.s32.totalorder %s16, 0
    %p110 = por %p108, %p109
    %s112 = sadd.s32 %s111, 1
    %p115 = scmp.eq.s32.totalorder %s10, 1
    %p116 = scmp.ne.s32.totalorder %s111, %s113
    %p117 = scmp.eq.s32.totalorder %s10, 0
    %p118 = por %p116, %p117
    %p119 = scmp.ne.s32.totalorder %s111, %s113
    %p120 = scmp.eq.s32.totalorder %s15, 1
    %p121 = por %p119, %p120
    %p122 = scmp.ne.s32.totalorder %s113, %s114
    %p123 = scmp.eq.s32.totalorder %s15, 0
    %p124 = por %p122, %p123
    %p125 = scmp.ne.s32.totalorder %s113, %s114
    %p126 = scmp.eq.s32.totalorder %s16, 1
    %p127 = por %p125, %p126
    %p129 = scmp.ne.s32.totalorder %s114, %s128
    %p130 = scmp.eq.s32.totalorder %s16, 0
    %p131 = por %p129, %p130
    %s132 = ssub.s32 %s17, %s29
    %s133 = ssub.s32 %s18, %s25
    %s134 = sor.u32 %s132, %s133
    %p135 = scmp.eq.s32.totalorder %s134, 0
    %s137 = sadd.s32 %s136, 1
    %s138 = scalar_select %p135, %s136, %s137
    %p141 = pneg %p135
    %p142 = scmp.eq.s32.totalorder %s10, 1
    %p143 = por %p141, %p142
    %p144 = scmp.ne.s32.totalorder %s136, %s139
    %p145 = scmp.eq.s32.totalorder %s10, 0
    %p146 = por %p144, %p145
    %p147 = scmp.ne.s32.totalorder %s136, %s139
    %p148 = scmp.eq.s32.totalorder %s15, 1
    %p149 = por %p147, %p148
    %p150 = scmp.ne.s32.totalorder %s139, %s140
    %p151 = scmp.eq.s32.totalorder %s15, 0
    %p152 = por %p150, %p151
    %p153 = scmp.ne.s32.totalorder %s139, %s140
    %p154 = scmp.eq.s32.totalorder %s16, 1
    %p155 = por %p153, %p154
    %p157 = scmp.ne.s32.totalorder %s140, %s156
    %p158 = scmp.eq.s32.totalorder %s16, 0
    %p159 = por %p157, %p158
    %p160 = scmp.le.s32.totalorder 1, %s10
    %p161 = scmp.lt.s32.totalorder %s10, 3
    %p162 = pnand %p160, %p161
    %p163 = pneg %p162
    // Predicated region
    $region9: #{resblock_forward.7} parent=5 // pred_check
      _
    $region10: #{resblock_forward.7} parent=5 // pred_check_branch
      %165 = sbr.rel (%p162) target = $region12
    $region11: #{resblock_forward.7} parent=5 // pred_region
      %s166 = ssub.s32 %s10, 1
      // Predicated region
      $region13: #{resblock_forward.7} parent=11 // pred_check
        %p167 = pneg %p103
      $region14: #{resblock_forward.7} parent=11 // pred_check_branch
        %169 = sbr.rel (%p167) target = $region16
      $region15: #{resblock_forward.7} parent=11 // pred_region
        _
      $region16: #{resblock_forward.7} parent=11 // pred_fallthru
        _
      // Predicated region
      $region17: #{resblock_forward.7} parent=11 // pred_check
        %p170 = pneg %p124
      $region18: #{resblock_forward.7} parent=11 // pred_check_branch
        %172 = sbr.rel (%p170) target = $region20
      $region19: #{resblock_forward.7} parent=11 // pred_region
        _
      $region20: #{resblock_forward.7} parent=11 // pred_fallthru
        _
    $region12: #{resblock_forward.7} parent=5 // pred_fallthru
      _
    %p173 = scmp.lt.s32.totalorder %s10, 2
    // Predicated region
    $region21: #{resblock_forward.7} parent=5 // pred_check
      %p174 = pneg %p173
    $region22: #{resblock_forward.7} parent=5 // pred_check_branch
      %176 = sbr.rel (%p174) target = $region24
    $region23: #{resblock_forward.7} parent=5 // pred_region
      // Predicated region
      $region25: #{resblock_forward.7} parent=23 // pred_check
        %p177 = pneg %p44
      $region26: #{resblock_forward.7} parent=23 // pred_check_branch
        %179 = sbr.rel (%p177) target = $region28
      $region27: #{resblock_forward.7} parent=23 // pred_region
        %s180 = smul.u32 8, %s18
        %s181 = ssub.s32 9, %s180
        %p182 = scmp.lt.s32.totalorder %s181, 8
        %s183 = scalar_select %p182, %s181, 8
        %s184 = smul.u32 64, %s183
        %s185 = smul.u32 %s184, 2
        %p186 = scmp.lt.s32.totalorder %s17, 1
        %s187 = scalar_select %p186, %s17, 1
        %p188 = scmp.lt.s32.totalorder %s180, 8
        %s189 = scalar_select %p188, %s180, 8
        %s190 = smul.addr %s189, 2
        %s191 = smul.addr %s187, 18
        %s192 = sadd.s32 %s190, %s191
        %s193 = smul.addr %s192, 4
        %s194 = scalar_lea.vmem %s0, %s193
        %s195 = smul.u32 8, %s18
        %s196 = ssub.s32 9, %s195
        %p197 = scmp.lt.s32.totalorder %s196, 8
        %s198 = scalar_select %p197, %s196, 8
        %s199 = smul.u32 64, %s198
        %s200 = smul.u32 %s199, 2
      $region28: #{resblock_forward.7} parent=23 // pred_fallthru
        _
      // Predicated region
      $region29: #{resblock_forward.7} parent=23 // pred_check
        %p201 = pneg %p76
      $region30: #{resblock_forward.7} parent=23 // pred_check_branch
        %203 = sbr.rel (%p201) target = $region32
      $region31: #{resblock_forward.7} parent=23 // pred_region
        %s204 = sadd.s32 %s18, 1
        %s205 = smul.u32 %s204, 8
        %p206 = scmp.lt.s32.totalorder %s17, 1
        %s207 = scalar_select %p206, %s17, 1
        %p208 = scmp.lt.s32.totalorder %s205, 8
        %s209 = scalar_select %p208, %s205, 8
        %s210 = smul.addr %s209, 2
        %s211 = smul.addr %s207, 18
        %s212 = sadd.s32 %s210, %s211
        %s213 = smul.addr %s212, 4
        %s214 = scalar_lea.vmem %s1, %s213
        %s215 = sadd.s32 %s18, 1
        %s216 = smul.u32 %s215, 8
      $region32: #{resblock_forward.7} parent=23 // pred_fallthru
        _
    $region24: #{resblock_forward.7} parent=5 // pred_fallthru
      _
    %p217 = scmp.le.s32.totalorder 1, %s10
    %p218 = scmp.lt.s32.totalorder %s10, 3
    %p219 = pnand %p217, %p218
    %p220 = pneg %p219
    // Predicated region
    $region33: #{resblock_forward.7} parent=5 // pred_check
      _
    $region34: #{resblock_forward.7} parent=5 // pred_check_branch
      %222 = sbr.rel (%p219) target = $region36
    $region35: #{resblock_forward.7} parent=5 // pred_region
      %s223 = ssub.s32 %s10, 1
      %s224 = smul.u32 8, %s20
      %s225 = ssub.s32 9, %s224
      %p226 = scmp.lt.s32.totalorder %s225, 8
      %s227 = scalar_select %p226, %s225, 8
      %s228 = smul.u32 64, %s227
      %s229 = smul.u32 %s228, 2
      %p230 = scmp.lt.s32.totalorder %s19, 1
      %s231 = scalar_select %p230, %s19, 1
      %p232 = scmp.lt.s32.totalorder %s224, 8
      %s233 = scalar_select %p232, %s224, 8
      %s234 = smul.addr %s233, 2
      %s235 = smul.addr %s231, 18
      %s236 = sadd.s32 %s234, %s235
      %s237 = smul.addr %s236, 4
      %s238 = scalar_lea.vmem %s0, %s237
      %p239 = pneg %p50
      %p240 = pneg %p47
      %s241 = sadd.s32 %s20, 1
      %s242 = smul.u32 %s241, 8
      %p243 = scmp.lt.s32.totalorder %s19, 1
      %s244 = scalar_select %p243, %s19, 1
      %p245 = scmp.lt.s32.totalorder %s242, 8
      %s246 = scalar_select %p245, %s242, 8
      %s247 = smul.addr %s246, 2
      %s248 = smul.addr %s244, 18
      %s249 = sadd.s32 %s247, %s248
      %s250 = smul.addr %s249, 4
      %s251 = scalar_lea.vmem %s1, %s250
      %p252 = pneg %p82
      %p253 = pneg %p79
      %p254 = pneg %p103
      %p255 = pneg %p100
      %p256 = pneg %p124
      %p257 = pneg %p121
      %p258 = pneg %p152
      %p259 = pneg %p149
      %s260 = smul.u32 8, %s20
      %p261 = scmp.lt.s32.totalorder %s19, 1
      %s262 = scalar_select %p261, %s19, 1
      %p263 = scmp.lt.s32.totalorder %s260, 7
      %s264 = scalar_select %p263, %s260, 7
      %s265 = smul.addr %s262, 8
      %s266 = sadd.s32 %s264, %s265
      %s267 = smul.addr %s266, 8
      %s268 = scalar_lea.vmem %s4, %s267
      %s269 = smul.u32 8, %s20
      %s270 = ssub.s32 9, %s269
      %p271 = scmp.lt.s32.totalorder %s270, 8
      %s272 = scalar_select %p271, %s270, 8
      %s273 = smul.u32 64, %s272
      %s274 = smul.u32 %s273, 2
      %p275 = scmp.lt.s32.totalorder %s19, 1
      %s276 = scalar_select %p275, %s19, 1
      %p277 = scmp.lt.s32.totalorder %s269, 8
      %s278 = scalar_select %p277, %s269, 8
      %s279 = smul.addr %s278, 2
      %s280 = smul.addr %s276, 18
      %s281 = sadd.s32 %s279, %s280
      %s282 = smul.addr %s281, 4
      %s283 = scalar_lea.vmem %s0, %s282
      %s284 = smul.u32 8, %s20
      %s285 = ssub.s32 9, %s284
      %p286 = scmp.lt.s32.totalorder %s285, 8
      %s287 = scalar_select %p286, %s285, 8
      %s288 = smul.u32 64, %s287
      %s289 = smul.u32 %s288, 2
      %s290 = sadd.s32 %s20, 1
      %s291 = smul.u32 %s290, 8
      %p292 = scmp.lt.s32.totalorder %s19, 1
      %s293 = scalar_select %p292, %s19, 1
      %p294 = scmp.lt.s32.totalorder %s291, 8
      %s295 = scalar_select %p294, %s291, 8
      %s296 = smul.addr %s295, 2
      %s297 = smul.addr %s293, 18
      %s298 = sadd.s32 %s296, %s297
      %s299 = smul.addr %s298, 4
      %s300 = scalar_lea.vmem %s1, %s299
      %s301 = sadd.s32 %s20, 1
      %s302 = smul.u32 %s301, 8
      %s303 = smul.u32 8, %s20
      %p304 = scmp.lt.s32.totalorder %s19, 1
      %s305 = scalar_select %p304, %s19, 1
      %p306 = scmp.lt.s32.totalorder %s303, 7
      %s307 = scalar_select %p306, %s303, 7
      %s308 = smul.addr %s305, 8
      %s309 = sadd.s32 %s307, %s308
      %s310 = smul.addr %s309, 8
      %s311 = scalar_lea.vmem %s4, %s310
      %s312 = smul.u32 8, %s20
      %v314 = vld [vmem:[%s283] sm:$0xf]
      %v315 = vld [vmem:[%s283 + $0x4] sm:$0x1]
      %v316 = vld [vmem:[%s283 + $0x8] sm:$0xf]
      %v317 = vld [vmem:[%s283 + $0xc] sm:$0x1]
      %v318 = vld [vmem:[%s283 + $0x10] sm:$0xf]
      %v319 = vld [vmem:[%s283 + $0x14] sm:$0x1]
      %v320 = vld [vmem:[%s283 + $0x18] sm:$0xf]
      %v321 = vld [vmem:[%s283 + $0x1c] sm:$0x1]
      %v322 = vld [vmem:[%s283 + $0x20] sm:$0xf]
      %v323 = vld [vmem:[%s283 + $0x24] sm:$0x1]
      %v324 = vld [vmem:[%s283 + $0x28] sm:$0xf]
      %v325 = vld [vmem:[%s283 + $0x2c] sm:$0x1]
      %v326 = vld [vmem:[%s283 + $0x30] sm:$0xf]
      %v327 = vld [vmem:[%s283 + $0x34] sm:$0x1]
      %v328 = vld [vmem:[%s283 + $0x38] sm:$0xf]
      %v329 = vld [vmem:[%s283 + $0x3c] sm:$0x1]
      %330 = vst [vmem:[#allocation2] sm:$0xf] %v314
      %vm331 = vcmask 1040384
      %vm332 = vsmask.f32 256
      %vm333 = vmand %vm331, %vm332
      %v334 = vld [vmem:[#allocation2 + $0x4] sm:$0x1]
      %v335 = vsel %vm333, %v315, %v334
      %336 = vst [vmem:[#allocation2 + $0x4] sm:$0x1] %v335
      %337 = vst [vmem:[#allocation2 + $0x8] sm:$0xf] %v316
      %v338 = vld [vmem:[#allocation2 + $0xc] sm:$0x1]
      %v339 = vsel %vm333, %v317, %v338
      %340 = vst [vmem:[#allocation2 + $0xc] sm:$0x1] %v339
      %341 = vst [vmem:[#allocation2 + $0x10] sm:$0xf] %v318
      %v342 = vld [vmem:[#allocation2 + $0x14] sm:$0x1]
      %v343 = vsel %vm333, %v319, %v342
      %344 = vst [vmem:[#allocation2 + $0x14] sm:$0x1] %v343
      %345 = vst [vmem:[#allocation2 + $0x18] sm:$0xf] %v320
      %v346 = vld [vmem:[#allocation2 + $0x1c] sm:$0x1]
      %v347 = vsel %vm333, %v321, %v346
      %348 = vst [vmem:[#allocation2 + $0x1c] sm:$0x1] %v347
      %349 = vst [vmem:[#allocation2 + $0x20] sm:$0xf] %v322
      %v350 = vld [vmem:[#allocation2 + $0x24] sm:$0x1]
      %v351 = vsel %vm333, %v323, %v350
      %352 = vst [vmem:[#allocation2 + $0x24] sm:$0x1] %v351
      %353 = vst [vmem:[#allocation2 + $0x28] sm:$0xf] %v324
      %v354 = vld [vmem:[#allocation2 + $0x2c] sm:$0x1]
      %v355 = vsel %vm333, %v325, %v354
      %356 = vst [vmem:[#allocation2 + $0x2c] sm:$0x1] %v355
      %357 = vst [vmem:[#allocation2 + $0x30] sm:$0xf] %v326
      %v358 = vld [vmem:[#allocation2 + $0x34] sm:$0x1]
      %v359 = vsel %vm333, %v327, %v358
      %360 = vst [vmem:[#allocation2 + $0x34] sm:$0x1] %v359
      %361 = vst [vmem:[#allocation2 + $0x38] sm:$0xf] %v328
      %v362 = vld [vmem:[#allocation2 + $0x3c] sm:$0x1]
      %v363 = vsel %vm333, %v329, %v362
      %364 = vst [vmem:[#allocation2 + $0x3c] sm:$0x1] %v363
      %v365 = vld [vmem:[%s300] sm:$0xf]
      %v366 = vld [vmem:[%s300 + $0x4] sm:$0x1]
      %s367 = scalar_lea.vmem [#allocation2], 64
      %368 = vst [vmem:[%s367] sm:$0xf] %v365
      %v369 = vld [vmem:[%s367 + $0x4] sm:$0x1]
      %v370 = vsel %vm333, %v366, %v369
      %371 = vst [vmem:[%s367 + $0x4] sm:$0x1] %v370
      %v372 = vld [vmem:[#allocation2] sm:$0xf]
      %v373 = vld [vmem:[#allocation2 + $0x8] sm:$0xf]
      %v374 = vld [vmem:[#allocation2 + $0x10] sm:$0xf]
      %v375 = vld [vmem:[#allocation2 + $0x18] sm:$0xf]
      %v376 = vld [vmem:[#allocation2 + $0x20] sm:$0xf]
      %v377 = vld [vmem:[#allocation2 + $0x28] sm:$0xf]
      %v378 = vld [vmem:[#allocation2 + $0x30] sm:$0xf]
      %v379 = vld [vmem:[#allocation2 + $0x38] sm:$0xf]
      %v380 = vld [vmem:[%s2] sm:$0xf]
      %v381 = vld [vmem:[%s2 + $0x4] sm:$0xf]
      %v382 = vld [vmem:[%s2 + $0x8] sm:$0xf]
      %v383 = vld [vmem:[%s2 + $0xc] sm:$0xf]
      %v384 = vld [vmem:[%s2 + $0x10] sm:$0xf]
      %v385 = vld [vmem:[%s2 + $0x14] sm:$0xf]
      %v386 = vld [vmem:[%s2 + $0x18] sm:$0xf]
      %v387 = vld [vmem:[%s2 + $0x1c] sm:$0xf]
      %v388 = vld [vmem:[%s2 + $0x20] sm:$0xf]
      %v389 = vld [vmem:[%s2 + $0x24] sm:$0xf]
      %v390 = vld [vmem:[%s2 + $0x28] sm:$0xf]
      %v391 = vld [vmem:[%s2 + $0x2c] sm:$0xf]
      %v392 = vld [vmem:[%s2 + $0x30] sm:$0xf]
      %v393 = vld [vmem:[%s2 + $0x34] sm:$0xf]
      %v394 = vld [vmem:[%s2 + $0x38] sm:$0xf]
      %v395 = vld [vmem:[%s2 + $0x3c] sm:$0xf]
      %v396 = vld [vmem:[#allocation2 + $0x4] sm:$0x1]
      %v397 = vld [vmem:[#allocation2 + $0xc] sm:$0x1]
      %v398 = vld [vmem:[#allocation2 + $0x14] sm:$0x1]
      %v399 = vld [vmem:[#allocation2 + $0x1c] sm:$0x1]
      %v400 = vld [vmem:[#allocation2 + $0x24] sm:$0x1]
      %v401 = vld [vmem:[#allocation2 + $0x2c] sm:$0x1]
      %v402 = vld [vmem:[#allocation2 + $0x34] sm:$0x1]
      %v403 = vld [vmem:[#allocation2 + $0x3c] sm:$0x1]
      %vm404 = vsmask.f32 3328
      %vm405 = vsmask.f32 7440
      %vm406 = vmor %vm404, %vm405
      %v408 = vshrl.u32 %v372, 16
      %v410 = vrot.slane %v408, 4
      %v411 = vshll.u32 %v372, 16
      %v413 = vrot.slane %v411, 5
      %v414 = vor.u32 %v410, %v413
      %v415 = vrot.slane %v414, 4
      %v417 = vshll.u32 %v396, 16
      %v419 = vrot.slane %v417, 5
      %v420 = vsel %vm406, %v415, %v419
      %v422 = vshrl.u32 %v373, 16
      %v424 = vrot.slane %v422, 4
      %v425 = vshll.u32 %v373, 16
      %v427 = vrot.slane %v425, 5
      %v428 = vor.u32 %v424, %v427
      %v429 = vrot.slane %v428, 4
      %v431 = vshll.u32 %v397, 16
      %v433 = vrot.slane %v431, 5
      %v434 = vsel %vm406, %v429, %v433
      %v436 = vshrl.u32 %v374, 16
      %v438 = vrot.slane %v436, 4
      %v439 = vshll.u32 %v374, 16
      %v441 = vrot.slane %v439, 5
      %v442 = vor.u32 %v438, %v441
      %v443 = vrot.slane %v442, 4
      %v445 = vshll.u32 %v398, 16
      %v447 = vrot.slane %v445, 5
      %v448 = vsel %vm406, %v443, %v447
      %v450 = vshrl.u32 %v375, 16
      %v452 = vrot.slane %v450, 4
      %v453 = vshll.u32 %v375, 16
      %v455 = vrot.slane %v453, 5
      %v456 = vor.u32 %v452, %v455
      %v457 = vrot.slane %v456, 4
      %v459 = vshll.u32 %v399, 16
      %v461 = vrot.slane %v459, 5
      %v462 = vsel %vm406, %v457, %v461
      %v464 = vshrl.u32 %v376, 16
      %v466 = vrot.slane %v464, 4
      %v467 = vshll.u32 %v376, 16
      %v469 = vrot.slane %v467, 5
      %v470 = vor.u32 %v466, %v469
      %v471 = vrot.slane %v470, 4
      %v473 = vshll.u32 %v400, 16
      %v475 = vrot.slane %v473, 5
      %v476 = vsel %vm406, %v471, %v475
      %v478 = vshrl.u32 %v377, 16
      %v480 = vrot.slane %v478, 4
      %v481 = vshll.u32 %v377, 16
      %v483 = vrot.slane %v481, 5
      %v484 = vor.u32 %v480, %v483
      %v485 = vrot.slane %v484, 4
      %v487 = vshll.u32 %v401, 16
      %v489 = vrot.slane %v487, 5
      %v490 = vsel %vm406, %v485, %v489
      %v492 = vshrl.u32 %v378, 16
      %v494 = vrot.slane %v492, 4
      %v495 = vshll.u32 %v378, 16
      %v497 = vrot.slane %v495, 5
      %v498 = vor.u32 %v494, %v497
      %v499 = vrot.slane %v498, 4
      %v501 = vshll.u32 %v402, 16
      %v503 = vrot.slane %v501, 5
      %v504 = vsel %vm406, %v499, %v503
      %v506 = vshrl.u32 %v379, 16
      %v508 = vrot.slane %v506, 4
      %v509 = vshll.u32 %v379, 16
      %v511 = vrot.slane %v509, 5
      %v512 = vor.u32 %v508, %v511
      %v513 = vrot.slane %v512, 4
      %v515 = vshll.u32 %v403, 16
      %v517 = vrot.slane %v515, 5
      %v518 = vsel %vm406, %v513, %v517
      %s519 = scalar_lea.vmem %s2, 64
      %v520 = vld [vmem:[%s519] sm:$0xf]
      %v521 = vld [vmem:[%s519 + $0x4] sm:$0xf]
      %v522 = vld [vmem:[%s519 + $0x8] sm:$0xf]
      %v523 = vld [vmem:[%s519 + $0xc] sm:$0xf]
      %v524 = vld [vmem:[%s519 + $0x10] sm:$0xf]
      %v525 = vld [vmem:[%s519 + $0x14] sm:$0xf]
      %v526 = vld [vmem:[%s519 + $0x18] sm:$0xf]
      %v527 = vld [vmem:[%s519 + $0x1c] sm:$0xf]
      %v528 = vld [vmem:[%s519 + $0x20] sm:$0xf]
      %v529 = vld [vmem:[%s519 + $0x24] sm:$0xf]
      %v530 = vld [vmem:[%s519 + $0x28] sm:$0xf]
      %v531 = vld [vmem:[%s519 + $0x2c] sm:$0xf]
      %v532 = vld [vmem:[%s519 + $0x30] sm:$0xf]
      %v533 = vld [vmem:[%s519 + $0x34] sm:$0xf]
      %v534 = vld [vmem:[%s519 + $0x38] sm:$0xf]
      %v535 = vld [vmem:[%s519 + $0x3c] sm:$0xf]
      %v536 = vunpack.c.l.b16 %v420
      %v537 = vunpack.c.l.b16 %v434
      %v538 = vunpack.c.l.b16 %v448
      %v539 = vunpack.c.l.b16 %v462
      %v540 = vunpack.c.l.b16 %v476
      %v541 = vunpack.c.l.b16 %v490
      %v542 = vunpack.c.l.b16 %v504
      %v543 = vunpack.c.l.b16 %v518
      %v544 = vpack.c.b16 %v537, %v536
      %v545 = vpack.c.b16 %v539, %v538
      %v546 = vpack.c.b16 %v541, %v540
      %v547 = vpack.c.b16 %v543, %v542
      %v568 = vunpack.c.l.b16 %v520
      %v569 = vunpack.c.l.b16 %v521
      %v570 = vunpack.c.l.b16 %v522
      %v571 = vunpack.c.l.b16 %v523
      %v572 = vunpack.c.l.b16 %v524
      %v573 = vunpack.c.l.b16 %v525
      %v574 = vunpack.c.l.b16 %v526
      %v575 = vunpack.c.l.b16 %v527
      %v576 = vunpack.c.l.b16 %v528
      %v577 = vunpack.c.l.b16 %v529
      %v578 = vunpack.c.l.b16 %v530
      %v579 = vunpack.c.l.b16 %v531
      %v580 = vunpack.c.l.b16 %v532
      %v581 = vunpack.c.l.b16 %v533
      %v582 = vunpack.c.l.b16 %v534
      %v583 = vunpack.c.l.b16 %v535
      %v584 = vpack.c.b16 %v569, %v568
      %v585 = vpack.c.b16 %v571, %v570
      %v586 = vpack.c.b16 %v573, %v572
      %v587 = vpack.c.b16 %v575, %v574
      %v588 = vpack.c.b16 %v577, %v576
      %v589 = vpack.c.b16 %v579, %v578
      %v590 = vpack.c.b16 %v581, %v580
      %v591 = vpack.c.b16 %v583, %v582
      %600 = vmatprep.subr.bf16.mxu0 0
      %601 = vmatpush1.bf16.msra.mxu0 %v584
      %602 = vmatprep.subr.bf16.mxu0 0
      %603 = vmatpush1.bf16.msra.mxu0 %v585
      %604 = vmatprep.subr.bf16.mxu0 0
      %605 = vmatpush1.bf16.msra.mxu0 %v586
      %606 = vmatprep.subr.bf16.mxu0 0
      %607 = vmatpush1.bf16.msra.mxu0 %v587
      %608 = vmatprep.subr.bf16.mxu0 0
      %609 = vmatpush1.bf16.msra.mxu0 %v588
      %610 = vmatprep.subr.bf16.mxu0 0
      %611 = vmatpush1.bf16.msra.mxu0 %v589
      %612 = vmatprep.subr.bf16.mxu0 0
      %613 = vmatpush1.bf16.msra.mxu0 %v590
      %614 = vmatprep.subr.bf16.mxu0 0
      %615 = vmatpush1.bf16.msra.mxu0 %v591
      %616 = vmatprep.subr.bf16.mxu0 0
      %617 = vmatpush1.bf16.msra.mxu0 0
      %618 = vmatprep.subr.bf16.mxu0 0
      %619 = vmatpush1.bf16.msra.mxu0 0
      %620 = vmatprep.subr.bf16.mxu0 0
      %621 = vmatpush1.bf16.msra.mxu0 0
      %622 = vmatprep.subr.bf16.mxu0 0
      %623 = vmatpush1.bf16.msra.mxu0 0
      %624 = vmatprep.subr.bf16.mxu0 0
      %625 = vmatpush1.bf16.msra.mxu0 0
      %626 = vmatprep.subr.bf16.mxu0 0
      %627 = vmatpush1.bf16.msra.mxu0 0
      %628 = vmatprep.subr.bf16.mxu0 0
      %629 = vmatpush1.bf16.msra.mxu0 0
      %630 = vmatprep.subr.bf16.mxu0 0
      %631 = vmatpush1.bf16.msra.mxu0 0
      %632 = vmatprep.mubr.bf16.mxu0 0
      %633 = vmatmul.mubr.bf16.gmra.mrb[0].mxu0 %v544
      %v634 = vpop.f32.mrb[0].mxu0
      %v635 = vadd.f32 0.0, %v634
      %v636 = vpop.f32.mrb[0].mxu0
      %v637 = vpop.f32.mrb[0].mxu0
      %v638 = vadd.f32 0.0, %v637
      %v639 = vpop.f32.mrb[0].mxu0
      %640 = vmatprep.mubr.bf16.mxu0 0
      %641 = vmatmul.mubr.bf16.gmra.mrb[0].mxu0 %v545
      %v642 = vpop.f32.mrb[0].mxu0
      %v643 = vadd.f32 0.0, %v642
      %v644 = vpop.f32.mrb[0].mxu0
      %v645 = vpop.f32.mrb[0].mxu0
      %v646 = vadd.f32 0.0, %v645
      %v647 = vpop.f32.mrb[0].mxu0
      %648 = vmatprep.mubr.bf16.mxu0 0
      %649 = vmatmul.mubr.bf16.gmra.mrb[0].mxu0 %v546
      %v650 = vpop.f32.mrb[0].mxu0
      %v651 = vadd.f32 0.0, %v650
      %v652 = vpop.f32.mrb[0].mxu0
      %v653 = vpop.f32.mrb[0].mxu0
      %v654 = vadd.f32 0.0, %v653
      %v655 = vpop.f32.mrb[0].mxu0
      %656 = vmatprep.mubr.bf16.mxu0 0
      %657 = vmatmul.mubr.bf16.gmra.mrb[0].mxu0 %v547
      %v658 = vpop.f32.mrb[0].mxu0
      %v659 = vadd.f32 0.0, %v658
      %v660 = vpop.f32.mrb[0].mxu0
      %v661 = vpop.f32.mrb[0].mxu0
      %v662 = vadd.f32 0.0, %v661
      %v663 = vpop.f32.mrb[0].mxu0
      %664 = vdwg.mxu0
      %v673 = vunpack.c.l.b16 %v372
      %v674 = vunpack.c.l.b16 %v373
      %v675 = vunpack.c.l.b16 %v374
      %v676 = vunpack.c.l.b16 %v375
      %v677 = vunpack.c.l.b16 %v376
      %v678 = vunpack.c.l.b16 %v377
      %v679 = vunpack.c.l.b16 %v378
      %v680 = vunpack.c.l.b16 %v379
      %v681 = vpack.c.b16 %v674, %v673
      %v682 = vpack.c.b16 %v676, %v675
      %v683 = vpack.c.b16 %v678, %v677
      %v684 = vpack.c.b16 %v680, %v679
      %v705 = vunpack.c.l.b16 %v380
      %v706 = vunpack.c.l.b16 %v381
      %v707 = vunpack.c.l.b16 %v382
      %v708 = vunpack.c.l.b16 %v383
      %v709 = vunpack.c.l.b16 %v384
      %v710 = vunpack.c.l.b16 %v385
      %v711 = vunpack.c.l.b16 %v386
      %v712 = vunpack.c.l.b16 %v387
      %v713 = vunpack.c.l.b16 %v388
      %v714 = vunpack.c.l.b16 %v389
      %v715 = vunpack.c.l.b16 %v390
      %v716 = vunpack.c.l.b16 %v391
      %v717 = vunpack.c.l.b16 %v392
      %v718 = vunpack.c.l.b16 %v393
      %v719 = vunpack.c.l.b16 %v394
      %v720 = vunpack.c.l.b16 %v395
      %v721 = vpack.c.b16 %v706, %v705
      %v722 = vpack.c.b16 %v708, %v707
      %v723 = vpack.c.b16 %v710, %v709
      %v724 = vpack.c.b16 %v712, %v711
      %v725 = vpack.c.b16 %v714, %v713
      %v726 = vpack.c.b16 %v716, %v715
      %v727 = vpack.c.b16 %v718, %v717
      %v728 = vpack.c.b16 %v720, %v719
      %737 = vmatprep.subr.bf16.mxu0 0
      %738 = vmatpush1.bf16.msra.mxu0 %v721
      %739 = vmatprep.subr.bf16.mxu0 0
      %740 = vmatpush1.bf16.msra.mxu0 %v722
      %741 = vmatprep.subr.bf16.mxu0 0
      %742 = vmatpush1.bf16.msra.mxu0 %v723
      %743 = vmatprep.subr.bf16.mxu0 0
      %744 = vmatpush1.bf16.msra.mxu0 %v724
      %745 = vmatprep.subr.bf16.mxu0 0
      %746 = vmatpush1.bf16.msra.mxu0 %v725
      %747 = vmatprep.subr.bf16.mxu0 0
      %748 = vmatpush1.bf16.msra.mxu0 %v726
      %749 = vmatprep.subr.bf16.mxu0 0
      %750 = vmatpush1.bf16.msra.mxu0 %v727
      %751 = vmatprep.subr.bf16.mxu0 0
      %752 = vmatpush1.bf16.msra.mxu0 %v728
      %753 = vmatprep.subr.bf16.mxu0 0
      %754 = vmatpush1.bf16.msra.mxu0 0
      %755 = vmatprep.subr.bf16.mxu0 0
      %756 = vmatpush1.bf16.msra.mxu0 0
      %757 = vmatprep.subr.bf16.mxu0 0
      %758 = vmatpush1.bf16.msra.mxu0 0
      %759 = vmatprep.subr.bf16.mxu0 0
      %760 = vmatpush1.bf16.msra.mxu0 0
      %761 = vmatprep.subr.bf16.mxu0 0
      %762 = vmatpush1.bf16.msra.mxu0 0
      %763 = vmatprep.subr.bf16.mxu0 0
      %764 = vmatpush1.bf16.msra.mxu0 0
      %765 = vmatprep.subr.bf16.mxu0 0
      %766 = vmatpush1.bf16.msra.mxu0 0
      %767 = vmatprep.subr.bf16.mxu0 0
      %768 = vmatpush1.bf16.msra.mxu0 0
      %769 = vmatprep.mubr.bf16.mxu0 0
      %770 = vmatmul.mubr.bf16.gmra.mrb[0].mxu0 %v681
      %v771 = vpop.f32.mrb[0].mxu0
      %v772 = vadd.f32 %v635, %v771
      %v773 = vpop.f32.mrb[0].mxu0
      %v774 = vpop.f32.mrb[0].mxu0
      %v775 = vadd.f32 %v638, %v774
      %v776 = vpop.f32.mrb[0].mxu0
      %777 = vmatprep.mubr.bf16.mxu0 0
      %778 = vmatmul.mubr.bf16.gmra.mrb[0].mxu0 %v682
      %v779 = vpop.f32.mrb[0].mxu0
      %v780 = vadd.f32 %v643, %v779
      %v781 = vpop.f32.mrb[0].mxu0
      %v782 = vpop.f32.mrb[0].mxu0
      %v783 = vadd.f32 %v646, %v782
      %v784 = vpop.f32.mrb[0].mxu0
      %785 = vmatprep.mubr.bf16.mxu0 0
      %786 = vmatmul.mubr.bf16.gmra.mrb[0].mxu0 %v683
      %v787 = vpop.f32.mrb[0].mxu0
      %v788 = vadd.f32 %v651, %v787
      %v789 = vpop.f32.mrb[0].mxu0
      %v790 = vpop.f32.mrb[0].mxu0
      %v791 = vadd.f32 %v654, %v790
      %v792 = vpop.f32.mrb[0].mxu0
      %793 = vmatprep.mubr.bf16.mxu0 0
      %794 = vmatmul.mubr.bf16.gmra.mrb[0].mxu0 %v684
      %v795 = vpop.f32.mrb[0].mxu0
      %v796 = vadd.f32 %v659, %v795
      %v797 = vpop.f32.mrb[0].mxu0
      %v798 = vpop.f32.mrb[0].mxu0
      %v799 = vadd.f32 %v662, %v798
      %v800 = vpop.f32.mrb[0].mxu0
      %801 = vdwg.mxu0
      %s802 = scalar_lea.vmem [#allocation2], 8
      %v803 = vld [vmem:[%s802] sm:$0xf]
      %v804 = vld [vmem:[%s802 + $0x8] sm:$0xf]
      %v805 = vld [vmem:[%s802 + $0x10] sm:$0xf]
      %v806 = vld [vmem:[%s802 + $0x18] sm:$0xf]
      %v807 = vld [vmem:[%s802 + $0x20] sm:$0xf]
      %v808 = vld [vmem:[%s802 + $0x28] sm:$0xf]
      %v809 = vld [vmem:[%s802 + $0x30] sm:$0xf]
      %v810 = vld [vmem:[%s802 + $0x38] sm:$0xf]
      %s811 = scalar_lea.vmem %s2, 128
      %v812 = vld [vmem:[%s811] sm:$0xf]
      %v813 = vld [vmem:[%s811 + $0x4] sm:$0xf]
      %v814 = vld [vmem:[%s811 + $0x8] sm:$0xf]
      %v815 = vld [vmem:[%s811 + $0xc] sm:$0xf]
      %v816 = vld [vmem:[%s811 + $0x10] sm:$0xf]
      %v817 = vld [vmem:[%s811 + $0x14] sm:$0xf]
      %v818 = vld [vmem:[%s811 + $0x18] sm:$0xf]
      %v819 = vld [vmem:[%s811 + $0x1c] sm:$0xf]
      %v820 = vld [vmem:[%s811 + $0x20] sm:$0xf]
      %v821 = vld [vmem:[%s811 + $0x24] sm:$0xf]
      %v822 = vld [vmem:[%s811 + $0x28] sm:$0xf]
      %v823 = vld [vmem:[%s811 + $0x2c] sm:$0xf]
      %v824 = vld [vmem:[%s811 + $0x30] sm:$0xf]
      %v825 = vld [vmem:[%s811 + $0x34] sm:$0xf]
      %v826 = vld [vmem:[%s811 + $0x38] sm:$0xf]
      %v827 = vld [vmem:[%s811 + $0x3c] sm:$0xf]
      %v836 = vunpack.c.l.b16 %v803
      %v837 = vunpack.c.l.b16 %v804
      %v838 = vunpack.c.l.b16 %v805
      %v839 = vunpack.c.l.b16 %v806
      %v840 = vunpack.c.l.b16 %v807
      %v841 = vunpack.c.l.b16 %v808
      %v842 = vunpack.c.l.b16 %v809
      %v843 = vunpack.c.l.b16 %v810
      %v844 = vpack.c.b16 %v837, %v836
      %v845 = vpack.c.b16 %v839, %v838
      %v846 = vpack.c.b16 %v841, %v840
      %v847 = vpack.c.b16 %v843, %v842
      %v868 = vunpack.c.l.b16 %v812
      %v869 = vunpack.c.l.b16 %v813
      %v870 = vunpack.c.l.b16 %v814
      %v871 = vunpack.c.l.b16 %v815
      %v872 = vunpack.c.l.b16 %v816
      %v873 = vunpack.c.l.b16 %v817
      %v874 = vunpack.c.l.b16 %v818
      %v875 = vunpack.c.l.b16 %v819
      %v876 = vunpack.c.l.b16 %v820
      %v877 = vunpack.c.l.b16 %v821
      %v878 = vunpack.c.l.b16 %v822
      %v879 = vunpack.c.l.b16 %v823
      %v880 = vunpack.c.l.b16 %v824
      %v881 = vunpack.c.l.b16 %v825
      %v882 = vunpack.c.l.b16 %v826
      %v883 = vunpack.c.l.b16 %v827
      %v884 = vpack.c.b16 %v869, %v868
      %v885 = vpack.c.b16 %v871, %v870
      %v886 = vpack.c.b16 %v873, %v872
      %v887 = vpack.c.b16 %v875, %v874
      %v888 = vpack.c.b16 %v877, %v876
      %v889 = vpack.c.b16 %v879, %v878
      %v890 = vpack.c.b16 %v881, %v880
      %v891 = vpack.c.b16 %v883, %v882
      %900 = vmatprep.subr.bf16.mxu0 0
      %901 = vmatpush1.bf16.msra.mxu0 %v884
      %902 = vmatprep.subr.bf16.mxu0 0
      %903 = vmatpush1.bf16.msra.mxu0 %v885
      %904 = vmatprep.subr.bf16.mxu0 0
      %905 = vmatpush1.bf16.msra.mxu0 %v886
      %906 = vmatprep.subr.bf16.mxu0 0
      %907 = vmatpush1.bf16.msra.mxu0 %v887
      %908 = vmatprep.subr.bf16.mxu0 0
      %909 = vmatpush1.bf16.msra.mxu0 %v888
      %910 = vmatprep.subr.bf16.mxu0 0
      %911 = vmatpush1.bf16.msra.mxu0 %v889
      %912 = vmatprep.subr.bf16.mxu0 0
      %913 = vmatpush1.bf16.msra.mxu0 %v890
      %914 = vmatprep.subr.bf16.mxu0 0
      %915 = vmatpush1.bf16.msra.mxu0 %v891
      %916 = vmatprep.subr.bf16.mxu0 0
      %917 = vmatpush1.bf16.msra.mxu0 0
      %918 = vmatprep.subr.bf16.mxu0 0
      %919 = vmatpush1.bf16.msra.mxu0 0
      %920 = vmatprep.subr.bf16.mxu0 0
      %921 = vmatpush1.bf16.msra.mxu0 0
      %922 = vmatprep.subr.bf16.mxu0 0
      %923 = vmatpush1.bf16.msra.mxu0 0
      %924 = vmatprep.subr.bf16.mxu0 0
      %925 = vmatpush1.bf16.msra.mxu0 0
      %926 = vmatprep.subr.bf16.mxu0 0
      %927 = vmatpush1.bf16.msra.mxu0 0
      %928 = vmatprep.subr.bf16.mxu0 0
      %929 = vmatpush1.bf16.msra.mxu0 0
      %930 = vmatprep.subr.bf16.mxu0 0
      %931 = vmatpush1.bf16.msra.mxu0 0
      %932 = vmatprep.mubr.bf16.mxu0 0
      %933 = vmatmul.mubr.bf16.gmra.mrb[0].mxu0 %v844
      %v934 = vpop.f32.mrb[0].mxu0
      %v935 = vadd.f32 0.0, %v934
      %v936 = vpop.f32.mrb[0].mxu0
      %v937 = vpop.f32.mrb[0].mxu0
      %v938 = vadd.f32 0.0, %v937
      %v939 = vpop.f32.mrb[0].mxu0
      %940 = vmatprep.mubr.bf16.mxu0 0
      %941 = vmatmul.mubr.bf16.gmra.mrb[0].mxu0 %v845
      %v942 = vpop.f32.mrb[0].mxu0
      %v943 = vadd.f32 0.0, %v942
      %v944 = vpop.f32.mrb[0].mxu0
      %v945 = vpop.f32.mrb[0].mxu0
      %v946 = vadd.f32 0.0, %v945
      %v947 = vpop.f32.mrb[0].mxu0
      %948 = vmatprep.mubr.bf16.mxu0 0
      %949 = vmatmul.mubr.bf16.gmra.mrb[0].mxu0 %v846
      %v950 = vpop.f32.mrb[0].mxu0
      %v951 = vadd.f32 0.0, %v950
      %v952 = vpop.f32.mrb[0].mxu0
      %v953 = vpop.f32.mrb[0].mxu0
      %v954 = vadd.f32 0.0, %v953
      %v955 = vpop.f32.mrb[0].mxu0
      %956 = vmatprep.mubr.bf16.mxu0 0
      %957 = vmatmul.mubr.bf16.gmra.mrb[0].mxu0 %v847
      %v958 = vpop.f32.mrb[0].mxu0
      %v959 = vadd.f32 0.0, %v958
      %v960 = vpop.f32.mrb[0].mxu0
      %v961 = vpop.f32.mrb[0].mxu0
      %v962 = vadd.f32 0.0, %v961
      %v963 = vpop.f32.mrb[0].mxu0
      %964 = vdwg.mxu0
      %v965 = vadd.f32 %v772, %v935
      %v966 = vadd.f32 %v775, %v938
      %v967 = vadd.f32 %v780, %v943
      %v968 = vadd.f32 %v783, %v946
      %v969 = vadd.f32 %v788, %v951
      %v970 = vadd.f32 %v791, %v954
      %v971 = vadd.f32 %v796, %v959
      %v972 = vadd.f32 %v799, %v962
      %v973 = vld [vmem:[%s802] sm:$0xf]
      %v974 = vld [vmem:[%s802 + $0x4] sm:$0x1]
      %v975 = vld [vmem:[%s802 + $0x8] sm:$0xf]
      %v976 = vld [vmem:[%s802 + $0xc] sm:$0x1]
      %v977 = vld [vmem:[%s802 + $0x10] sm:$0xf]
      %v978 = vld [vmem:[%s802 + $0x14] sm:$0x1]
      %v979 = vld [vmem:[%s802 + $0x18] sm:$0xf]
      %v980 = vld [vmem:[%s802 + $0x1c] sm:$0x1]
      %v981 = vld [vmem:[%s802 + $0x20] sm:$0xf]
      %v982 = vld [vmem:[%s802 + $0x24] sm:$0x1]
      %v983 = vld [vmem:[%s802 + $0x28] sm:$0xf]
      %v984 = vld [vmem:[%s802 + $0x2c] sm:$0x1]
      %v985 = vld [vmem:[%s802 + $0x30] sm:$0xf]
      %v986 = vld [vmem:[%s802 + $0x34] sm:$0x1]
      %v987 = vld [vmem:[%s802 + $0x38] sm:$0xf]
      %v988 = vld [vmem:[%s802 + $0x3c] sm:$0x1]
      %v990 = vshrl.u32 %v973, 16
      %v992 = vrot.slane %v990, 4
      %v993 = vshll.u32 %v973, 16
      %v995 = vrot.slane %v993, 5
      %v996 = vor.u32 %v992, %v995
      %v997 = vrot.slane %v996, 4
      %v999 = vshll.u32 %v974, 16
      %v1001 = vrot.slane %v999, 5
      %v1002 = vsel %vm406, %v997, %v1001
      %v1004 = vshrl.u32 %v975, 16
      %v1006 = vrot.slane %v1004, 4
      %v1007 = vshll.u32 %v975, 16
      %v1009 = vrot.slane %v1007, 5
      %v1010 = vor.u32 %v1006, %v1009
      %v1011 = vrot.slane %v1010, 4
      %v1013 = vshll.u32 %v976, 16
      %v1015 = vrot.slane %v1013, 5
      %v1016 = vsel %vm406, %v1011, %v1015
      %v1018 = vshrl.u32 %v977, 16
      %v1020 = vrot.slane %v1018, 4
      %v1021 = vshll.u32 %v977, 16
      %v1023 = vrot.slane %v1021, 5
      %v1024 = vor.u32 %v1020, %v1023
      %v1025 = vrot.slane %v1024, 4
      %v1027 = vshll.u32 %v978, 16
      %v1029 = vrot.slane %v1027, 5
      %v1030 = vsel %vm406, %v1025, %v1029
      %v1032 = vshrl.u32 %v979, 16
      %v1034 = vrot.slane %v1032, 4
      %v1035 = vshll.u32 %v979, 16
      %v1037 = vrot.slane %v1035, 5
      %v1038 = vor.u32 %v1034, %v1037
      %v1039 = vrot.slane %v1038, 4
      %v1041 = vshll.u32 %v980, 16
      %v1043 = vrot.slane %v1041, 5
      %v1044 = vsel %vm406, %v1039, %v1043
      %v1046 = vshrl.u32 %v981, 16
      %v1048 = vrot.slane %v1046, 4
      %v1049 = vshll.u32 %v981, 16
      %v1051 = vrot.slane %v1049, 5
      %v1052 = vor.u32 %v1048, %v1051
      %v1053 = vrot.slane %v1052, 4
      %v1055 = vshll.u32 %v982, 16
      %v1057 = vrot.slane %v1055, 5
      %v1058 = vsel %vm406, %v1053, %v1057
      %v1060 = vshrl.u32 %v983, 16
      %v1062 = vrot.slane %v1060, 4
      %v1063 = vshll.u32 %v983, 16
      %v1065 = vrot.slane %v1063, 5
      %v1066 = vor.u32 %v1062, %v1065
      %v1067 = vrot.slane %v1066, 4
      %v1069 = vshll.u32 %v984, 16
      %v1071 = vrot.slane %v1069, 5
      %v1072 = vsel %vm406, %v1067, %v1071
      %v1074 = vshrl.u32 %v985, 16
      %v1076 = vrot.slane %v1074, 4
      %v1077 = vshll.u32 %v985, 16
      %v1079 = vrot.slane %v1077, 5
      %v1080 = vor.u32 %v1076, %v1079
      %v1081 = vrot.slane %v1080, 4
      %v1083 = vshll.u32 %v986, 16
      %v1085 = vrot.slane %v1083, 5
      %v1086 = vsel %vm406, %v1081, %v1085
      %v1088 = vshrl.u32 %v987, 16
      %v1090 = vrot.slane %v1088, 4
      %v1091 = vshll.u32 %v987, 16
      %v1093 = vrot.slane %v1091, 5
      %v1094 = vor.u32 %v1090, %v1093
      %v1095 = vrot.slane %v1094, 4
      %v1097 = vshll.u32 %v988, 16
      %v1099 = vrot.slane %v1097, 5
      %v1100 = vsel %vm406, %v1095, %v1099
      %s1101 = scalar_lea.vmem %s2, 192
      %v1102 = vld [vmem:[%s1101] sm:$0xf]
      %v1103 = vld [vmem:[%s1101 + $0x4] sm:$0xf]
      %v1104 = vld [vmem:[%s1101 + $0x8] sm:$0xf]
      %v1105 = vld [vmem:[%s1101 + $0xc] sm:$0xf]
      %v1106 = vld [vmem:[%s1101 + $0x10] sm:$0xf]
      %v1107 = vld [vmem:[%s1101 + $0x14] sm:$0xf]
      %v1108 = vld [vmem:[%s1101 + $0x18] sm:$0xf]
      %v1109 = vld [vmem:[%s1101 + $0x1c] sm:$0xf]
      %v1110 = vld [vmem:[%s1101 + $0x20] sm:$0xf]
      %v1111 = vld [vmem:[%s1101 + $0x24] sm:$0xf]
      %v1112 = vld [vmem:[%s1101 + $0x28] sm:$0xf]
      %v1113 = vld [vmem:[%s1101 + $0x2c] sm:$0xf]
      %v1114 = vld [vmem:[%s1101 + $0x30] sm:$0xf]
      %v1115 = vld [vmem:[%s1101 + $0x34] sm:$0xf]
      %v1116 = vld [vmem:[%s1101 + $0x38] sm:$0xf]
      %v1117 = vld [vmem:[%s1101 + $0x3c] sm:$0xf]
      %v1118 = vunpack.c.l.b16 %v1002
      %v1119 = vunpack.c.l.b16 %v1016
      %v1120 = vunpack.c.l.b16 %v1030
      %v1121 = vunpack.c.l.b16 %v1044
      %v1122 = vunpack.c.l.b16 %v1058
      %v1123 = vunpack.c.l.b16 %v1072
      %v1124 = vunpack.c.l.b16 %v1086
      %v1125 = vunpack.c.l.b16 %v1100
      %v1126 = vpack.c.b16 %v1119, %v1118
      %v1127 = vpack.c.b16 %v1121, %v1120
      %v1128 = vpack.c.b16 %v1123, %v1122
      %v1129 = vpack.c.b16 %v1125, %v1124
      %v1150 = vunpack.c.l.b16 %v1102
      %v1151 = vunpack.c.l.b16 %v1103
      %v1152 = vunpack.c.l.b16 %v1104
      %v1153 = vunpack.c.l.b16 %v1105
      %v1154 = vunpack.c.l.b16 %v1106
      %v1155 = vunpack.c.l.b16 %v1107
      %v1156 = vunpack.c.l.b16 %v1108
      %v1157 = vunpack.c.l.b16 %v1109
      %v1158 = vunpack.c.l.b16 %v1110
      %v1159 = vunpack.c.l.b16 %v1111
      %v1160 = vunpack.c.l.b16 %v1112
      %v1161 = vunpack.c.l.b16 %v1113
      %v1162 = vunpack.c.l.b16 %v1114
      %v1163 = vunpack.c.l.b16 %v1115
      %v1164 = vunpack.c.l.b16 %v1116
      %v1165 = vunpack.c.l.b16 %v1117
      %v1166 = vpack.c.b16 %v1151, %v1150
      %v1167 = vpack.c.b16 %v1153, %v1152
      %v1168 = vpack.c.b16 %v1155, %v1154
      %v1169 = vpack.c.b16 %v1157, %v1156
      %v1170 = vpack.c.b16 %v1159, %v1158
      %v1171 = vpack.c.b16 %v1161, %v1160
      %v1172 = vpack.c.b16 %v1163, %v1162
      %v1173 = vpack.c.b16 %v1165, %v1164
      %1182 = vmatprep.subr.bf16.mxu0 0
      %1183 = vmatpush1.bf16.msra.mxu0 %v1166
      %1184 = vmatprep.subr.bf16.mxu0 0
      %1185 = vmatpush1.bf16.msra.mxu0 %v1167
      %1186 = vmatprep.subr.bf16.mxu0 0
      %1187 = vmatpush1.bf16.msra.mxu0 %v1168
      %1188 = vmatprep.subr.bf16.mxu0 0
      %1189 = vmatpush1.bf16.msra.mxu0 %v1169
      %1190 = vmatprep.subr.bf16.mxu0 0
      %1191 = vmatpush1.bf16.msra.mxu0 %v1170
      %1192 = vmatprep.subr.bf16.mxu0 0
      %1193 = vmatpush1.bf16.msra.mxu0 %v1171
      %1194 = vmatprep.subr.bf16.mxu0 0
      %1195 = vmatpush1.bf16.msra.mxu0 %v1172
      %1196 = vmatprep.subr.bf16.mxu0 0
      %1197 = vmatpush1.bf16.msra.mxu0 %v1173
      %1198 = vmatprep.subr.bf16.mxu0 0
      %1199 = vmatpush1.bf16.msra.mxu0 0
      %1200 = vmatprep.subr.bf16.mxu0 0
      %1201 = vmatpush1.bf16.msra.mxu0 0
      %1202 = vmatprep.subr.bf16.mxu0 0
      %1203 = vmatpush1.bf16.msra.mxu0 0
      %1204 = vmatprep.subr.bf16.mxu0 0
      %1205 = vmatpush1.bf16.msra.mxu0 0
      %1206 = vmatprep.subr.bf16.mxu0 0
      %1207 = vmatpush1.bf16.msra.mxu0 0
      %1208 = vmatprep.subr.bf16.mxu0 0
      %1209 = vmatpush1.bf16.msra.mxu0 0
      %1210 = vmatprep.subr.bf16.mxu0 0
      %1211 = vmatpush1.bf16.msra.mxu0 0
      %1212 = vmatprep.subr.bf16.mxu0 0
      %1213 = vmatpush1.bf16.msra.mxu0 0
      %1214 = vmatprep.mubr.bf16.mxu0 0
      %1215 = vmatmul.mubr.bf16.gmra.mrb[0].mxu0 %v1126
      %v1216 = vpop.f32.mrb[0].mxu0
      %v1217 = vadd.f32 0.0, %v1216
      %v1218 = vpop.f32.mrb[0].mxu0
      %v1219 = vpop.f32.mrb[0].mxu0
      %v1220 = vadd.f32 0.0, %v1219
      %v1221 = vpop.f32.mrb[0].mxu0
      %1222 = vmatprep.mubr.bf16.mxu0 0
      %1223 = vmatmul.mubr.bf16.gmra.mrb[0].mxu0 %v1127
      %v1224 = vpop.f32.mrb[0].mxu0
      %v1225 = vadd.f32 0.0, %v1224
      %v1226 = vpop.f32.mrb[0].mxu0
      %v1227 = vpop.f32.mrb[0].mxu0
      %v1228 = vadd.f32 0.0, %v1227
      %v1229 = vpop.f32.mrb[0].mxu0
      %1230 = vmatprep.mubr.bf16.mxu0 0
      %1231 = vmatmul.mubr.bf16.gmra.mrb[0].mxu0 %v1128
      %v1232 = vpop.f32.mrb[0].mxu0
      %v1233 = vadd.f32 0.0, %v1232
      %v1234 = vpop.f32.mrb[0].mxu0
      %v1235 = vpop.f32.mrb[0].mxu0
      %v1236 = vadd.f32 0.0, %v1235
      %v1237 = vpop.f32.mrb[0].mxu0
      %1238 = vmatprep.mubr.bf16.mxu0 0
      %1239 = vmatmul.mubr.bf16.gmra.mrb[0].mxu0 %v1129
      %v1240 = vpop.f32.mrb[0].mxu0
      %v1241 = vadd.f32 0.0, %v1240
      %v1242 = vpop.f32.mrb[0].mxu0
      %v1243 = vpop.f32.mrb[0].mxu0
      %v1244 = vadd.f32 0.0, %v1243
      %v1245 = vpop.f32.mrb[0].mxu0
      %1246 = vdwg.mxu0
      %v1247 = vadd.f32 %v965, %v1217
      %v1248 = vadd.f32 %v966, %v1220
      %v1249 = vadd.f32 %v967, %v1225
      %v1250 = vadd.f32 %v968, %v1228
      %v1251 = vadd.f32 %v969, %v1233
      %v1252 = vadd.f32 %v970, %v1236
      %v1253 = vadd.f32 %v971, %v1241
      %v1254 = vadd.f32 %v972, %v1244
      %v1255 = vld [vmem:[%s3] sm:$0x1]
      %v1257 = vlaneseq
      %v1258 = vshrl.u32 %v1257, 7
      %v1259 = vsub.s32 0, %v1258
      %v1260 = vrot.slane %v1255, %v1259
      %v1262 = vadd.f32 %v1247, %v1260
      %v1263 = vadd.f32 %v1248, %v1260
      %v1264 = vadd.f32 %v1249, %v1260
      %v1265 = vadd.f32 %v1250, %v1260
      %v1266 = vadd.f32 %v1251, %v1260
      %v1267 = vadd.f32 %v1252, %v1260
      %v1268 = vadd.f32 %v1253, %v1260
      %v1269 = vadd.f32 %v1254, %v1260
      %vm1270 = vcmp.gt.f32.partialorder %v1262, 0.0
      %vm1271 = vcmp.gt.f32.partialorder %v1263, 0.0
      %vm1272 = vcmp.gt.f32.partialorder %v1264, 0.0
      %vm1273 = vcmp.gt.f32.partialorder %v1265, 0.0
      %vm1274 = vcmp.gt.f32.partialorder %v1266, 0.0
      %vm1275 = vcmp.gt.f32.partialorder %v1267, 0.0
      %vm1276 = vcmp.gt.f32.partialorder %v1268, 0.0
      %vm1277 = vcmp.gt.f32.partialorder %v1269, 0.0
      %v1278 = vmul.f32 %v1262, 0.2
      %v1279 = vmul.f32 %v1263, 0.2
      %v1280 = vmul.f32 %v1264, 0.2
      %v1281 = vmul.f32 %v1265, 0.2
      %v1282 = vmul.f32 %v1266, 0.2
      %v1283 = vmul.f32 %v1267, 0.2
      %v1284 = vmul.f32 %v1268, 0.2
      %v1285 = vmul.f32 %v1269, 0.2
      %v1286 = vsel %vm1270, %v1262, %v1278
      %v1287 = vsel %vm1271, %v1263, %v1279
      %v1288 = vsel %vm1272, %v1264, %v1280
      %v1289 = vsel %vm1273, %v1265, %v1281
      %v1290 = vsel %vm1274, %v1266, %v1282
      %v1291 = vsel %vm1275, %v1267, %v1283
      %v1292 = vsel %vm1276, %v1268, %v1284
      %v1293 = vsel %vm1277, %v1269, %v1285
      %v1294 = vmul.f32 %v1286, 1.4142135
      %v1295 = vmul.f32 %v1287, 1.4142135
      %v1296 = vmul.f32 %v1288, 1.4142135
      %v1297 = vmul.f32 %v1289, 1.4142135
      %v1298 = vmul.f32 %v1290, 1.4142135
      %v1299 = vmul.f32 %v1291, 1.4142135
      %v1300 = vmul.f32 %v1292, 1.4142135
      %v1301 = vmul.f32 %v1293, 1.4142135
      %vm1302 = vcmask 523264
      %1303 = vst.msk [vmem:[%s311] sm:$0xff] %vm1302, %v1294
      %1304 = vst.msk [vmem:[%s311 + $0x8] sm:$0xff] %vm1302, %v1295
      %1305 = vst.msk [vmem:[%s311 + $0x10] sm:$0xff] %vm1302, %v1296
      %1306 = vst.msk [vmem:[%s311 + $0x18] sm:$0xff] %vm1302, %v1297
      %1307 = vst.msk [vmem:[%s311 + $0x20] sm:$0xff] %vm1302, %v1298
      %1308 = vst.msk [vmem:[%s311 + $0x28] sm:$0xff] %vm1302, %v1299
      %1309 = vst.msk [vmem:[%s311 + $0x30] sm:$0xff] %vm1302, %v1300
      %1310 = vst.msk [vmem:[%s311 + $0x38] sm:$0xff] %vm1302, %v1301
      %s1311 = smul.u32 8, %s20
      %p1312 = scmp.lt.s32.totalorder %s19, 1
      %s1313 = scalar_select %p1312, %s19, 1
      %p1314 = scmp.lt.s32.totalorder %s1311, 7
      %s1315 = scalar_select %p1314, %s1311, 7
      %s1316 = smul.addr %s1313, 8
      %s1317 = sadd.s32 %s1315, %s1316
      %s1318 = smul.addr %s1317, 8
      %s1319 = scalar_lea.vmem %s4, %s1318
      // Predicated region
      $region37: #{resblock_forward.7} parent=35 // pred_check
        %p1320 = pneg %p149
      $region38: #{resblock_forward.7} parent=35 // pred_check_branch
        %1322 = sbr.rel (%p1320) target = $region40
      $region39: #{resblock_forward.7} parent=35 // pred_region
        %s1323 = smul.u32 8, %s20
      $region40: #{resblock_forward.7} parent=35 // pred_fallthru
        _
    $region36: #{resblock_forward.7} parent=5 // pred_fallthru
      _
    %p1324 = scmp.le.s32.totalorder 2, %s10
    // Predicated region
    $region41: #{resblock_forward.7} parent=5 // pred_check
      %p1325 = pneg %p1324
    $region42: #{resblock_forward.7} parent=5 // pred_check_branch
      %1327 = sbr.rel (%p1325) target = $region44
    $region43: #{resblock_forward.7} parent=5 // pred_region
      %s1328 = ssub.s32 %s10, 2
      // Predicated region
      $region45: #{resblock_forward.7} parent=43 // pred_check
        %p1329 = pneg %p155
      $region46: #{resblock_forward.7} parent=43 // pred_check_branch
        %1331 = sbr.rel (%p1329) target = $region48
      $region47: #{resblock_forward.7} parent=43 // pred_region
        %s1332 = smul.u32 8, %s22
        %p1333 = scmp.lt.s32.totalorder %s21, 1
        %s1334 = scalar_select %p1333, %s21, 1
        %p1335 = scmp.lt.s32.totalorder %s1332, 7
        %s1336 = scalar_select %p1335, %s1332, 7
        %s1337 = smul.addr %s1334, 8
        %s1338 = sadd.s32 %s1336, %s1337
        %s1339 = smul.addr %s1338, 8
        %s1340 = scalar_lea.vmem %s4, %s1339
      $region48: #{resblock_forward.7} parent=43 // pred_fallthru
        _
    $region44: #{resblock_forward.7} parent=5 // pred_fallthru
      _
  $region6: #{resblock_forward.7} parent=0 // loop_footer
    %s14 = sadd.s32 1, %s10
  $region7: #{resblock_forward.7} parent=0 // loop_footer_branch
    %9 = sbr.rel target = $region3
  $region8: #{resblock_forward.7} parent=0 // loop_exit
    _

// kernel: resblock_forward.8
$region0: #{resblock_forward.8}
  #allocation0 [shape = 'u32[]', space=smem, size = 0x4, offset = 0x4, fixed_abs, tag = 'smem constant byte address 0x4 - core index']
  #allocation1 [shape = 'u32[144,128]{1,0:T(1,128)}', space=vmem, size = 0x12000, scoped, tag = 'internal scratch']
  %s0 = inlined_call_operand.vmem [shape: f32[2,18,18,32], index: 0, kind: input, shape index: {}]
  %s1 = inlined_call_operand.vmem [shape: f32[2,15,15,32], index: 1, kind: output, shape index: {}]
  %s2 = sld [smem:[#allocation0]]
  $region37: #{resblock_forward.8} parent=0
    _
  %s4 = ssub.s32 1, %s2
  %s5 = scalar_select 0, %s4, %s2
  loop: start=0, step=1, limit=4
  $region2: #{resblock_forward.8} parent=0 // loop_pre_header
    _
  $region3: #{resblock_forward.8} parent=0 // loop_header
    %s7 = sphi 0, %s11
    %p8 = scmp.ge.s32.totalorder %s7, 4
    %s17 = sphi 0, %s19
    %s20 = sphi 0, %s17
    %s21 = sphi 0, %s20
    %s37 = sphi 0, %s21
    %s43 = sphi 0, %s45
    %s46 = sphi 0, %s43
    %s47 = sphi 0, %s46
    %s63 = sphi 0, %s47
  $region4: #{resblock_forward.8} parent=0 // loop_header_branch
    %10 = sbr.rel (%p8) target = $region8
  $region5: #{resblock_forward.8} parent=0 // loop_body
    %s12 = ssub.s32 %s7, 1
    %s13 = ssub.s32 %s7, 2
    %s14 = sadd.s32 %s7, 1
    %s15 = ssub.s32 %s7, %s14
    %p16 = scmp.eq.s32.totalorder %s15, 0
    %s18 = sadd.s32 %s17, 1
    %s19 = scalar_select %p16, %s17, %s18
    %p22 = pneg %p16
    %p23 = scmp.eq.s32.totalorder %s7, 1
    %p24 = por %p22, %p23
    %p25 = scmp.ne.s32.totalorder %s17, %s20
    %p26 = scmp.eq.s32.totalorder %s7, 0
    %p27 = por %p25, %p26
    %p28 = scmp.ne.s32.totalorder %s17, %s20
    %p29 = scmp.eq.s32.totalorder %s12, 1
    %p30 = por %p28, %p29
    %p31 = scmp.ne.s32.totalorder %s20, %s21
    %p32 = scmp.eq.s32.totalorder %s12, 0
    %p33 = por %p31, %p32
    %p34 = scmp.ne.s32.totalorder %s20, %s21
    %p35 = scmp.eq.s32.totalorder %s13, 1
    %p36 = por %p34, %p35
    %p38 = scmp.ne.s32.totalorder %s21, %s37
    %p39 = scmp.eq.s32.totalorder %s13, 0
    %p40 = por %p38, %p39
    %s41 = ssub.s32 %s7, %s14
    %p42 = scmp.eq.s32.totalorder %s41, 0
    %s44 = sadd.s32 %s43, 1
    %s45 = scalar_select %p42, %s43, %s44
    %p48 = pneg %p42
    %p49 = scmp.eq.s32.totalorder %s7, 1
    %p50 = por %p48, %p49
    %p51 = scmp.ne.s32.totalorder %s43, %s46
    %p52 = scmp.eq.s32.totalorder %s7, 0
    %p53 = por %p51, %p52
    %p54 = scmp.ne.s32.totalorder %s43, %s46
    %p55 = scmp.eq.s32.totalorder %s12, 1
    %p56 = por %p54, %p55
    %p57 = scmp.ne.s32.totalorder %s46, %s47
    %p58 = scmp.eq.s32.totalorder %s12, 0
    %p59 = por %p57, %p58
    %p60 = scmp.ne.s32.totalorder %s46, %s47
    %p61 = scmp.eq.s32.totalorder %s13, 1
    %p62 = por %p60, %p61
    %p64 = scmp.ne.s32.totalorder %s47, %s63
    %p65 = scmp.eq.s32.totalorder %s13, 0
    %p66 = por %p64, %p65
    %p67 = scmp.le.s32.totalorder 1, %s7
    %p68 = scmp.lt.s32.totalorder %s7, 3
    %p69 = pnand %p67, %p68
    %p70 = pneg %p69
    // Predicated region
    $region9: #{resblock_forward.8} parent=5 // pred_check
      _
    $region10: #{resblock_forward.8} parent=5 // pred_check_branch
      %72 = sbr.rel (%p69) target = $region12
    $region11: #{resblock_forward.8} parent=5 // pred_region
      %s73 = ssub.s32 %s7, 1
    $region12: #{resblock_forward.8} parent=5 // pred_fallthru
      _
    %p74 = scmp.lt.s32.totalorder %s7, 2
    // Predicated region
    $region13: #{resblock_forward.8} parent=5 // pred_check
      %p75 = pneg %p74
    $region14: #{resblock_forward.8} parent=5 // pred_check_branch
      %77 = sbr.rel (%p75) target = $region16
    $region15: #{resblock_forward.8} parent=5 // pred_region
      // Predicated region
      $region17: #{resblock_forward.8} parent=15 // pred_check
        %p78 = pneg %p27
      $region18: #{resblock_forward.8} parent=15 // pred_check_branch
        %80 = sbr.rel (%p78) target = $region20
      $region19: #{resblock_forward.8} parent=15 // pred_region
        %p81 = scmp.lt.s32.totalorder %s7, 1
        %s82 = scalar_select %p81, %s7, 1
        %s83 = smul.addr %s82, 54
        %s84 = smul.addr %s83, 8
        %s85 = scalar_lea.vmem %s0, %s84
      $region20: #{resblock_forward.8} parent=15 // pred_fallthru
        _
    $region16: #{resblock_forward.8} parent=5 // pred_fallthru
      _
    %p86 = scmp.le.s32.totalorder 1, %s7
    %p87 = scmp.lt.s32.totalorder %s7, 3
    %p88 = pnand %p86, %p87
    %p89 = pneg %p88
    // Predicated region
    $region21: #{resblock_forward.8} parent=5 // pred_check
      _
    $region22: #{resblock_forward.8} parent=5 // pred_check_branch
      %91 = sbr.rel (%p88) target = $region24
    $region23: #{resblock_forward.8} parent=5 // pred_region
      %s92 = ssub.s32 %s7, 1
      %p93 = scmp.lt.s32.totalorder %s12, 1
      %s94 = scalar_select %p93, %s12, 1
      %s95 = smul.addr %s94, 54
      %s96 = smul.addr %s95, 8
      %s97 = scalar_lea.vmem %s0, %s96
      %p98 = pneg %p33
      %p99 = pneg %p30
      %p100 = pneg %p59
      %p101 = pneg %p56
      %p102 = scmp.lt.s32.totalorder %s12, 1
      %s103 = scalar_select %p102, %s12, 1
      %s104 = smul.addr %s103, 30
      %s105 = smul.addr %s104, 8
      %s106 = scalar_lea.vmem %s1, %s105
      %p107 = scmp.lt.s32.totalorder %s12, 1
      %s108 = scalar_select %p107, %s12, 1
      %s109 = smul.addr %s108, 54
      %s110 = smul.addr %s109, 8
      %s111 = scalar_lea.vmem %s0, %s110
      %p112 = scmp.lt.s32.totalorder %s12, 1
      %s113 = scalar_select %p112, %s12, 1
      %s114 = smul.addr %s113, 30
      %s115 = smul.addr %s114, 8
      %s116 = scalar_lea.vmem %s1, %s115
      %v117 = vld [vmem:[%s111] sm:$0xff]
      %v118 = vld [vmem:[%s111 + $0x8] sm:$0xff]
      %v119 = vld [vmem:[%s111 + $0x10] sm:$0x3]
      %v120 = vld [vmem:[%s111 + $0x18] sm:$0xff]
      %v121 = vld [vmem:[%s111 + $0x20] sm:$0xff]
      %v122 = vld [vmem:[%s111 + $0x28] sm:$0x3]
      %v123 = vld [vmem:[%s111 + $0x30] sm:$0xff]
      %v124 = vld [vmem:[%s111 + $0x38] sm:$0xff]
      %v125 = vld [vmem:[%s111 + $0x40] sm:$0x3]
      %v126 = vld [vmem:[%s111 + $0x48] sm:$0xff]
      %v127 = vld [vmem:[%s111 + $0x50] sm:$0xff]
      %v128 = vld [vmem:[%s111 + $0x58] sm:$0x3]
      %v129 = vld [vmem:[%s111 + $0x60] sm:$0xff]
      %v130 = vld [vmem:[%s111 + $0x68] sm:$0xff]
      %v131 = vld [vmem:[%s111 + $0x70] sm:$0x3]
      %v132 = vld [vmem:[%s111 + $0x78] sm:$0xff]
      %v133 = vld [vmem:[%s111 + $0x80] sm:$0xff]
      %v134 = vld [vmem:[%s111 + $0x88] sm:$0x3]
      %v135 = vld [vmem:[%s111 + $0x90] sm:$0xff]
      %v136 = vld [vmem:[%s111 + $0x98] sm:$0xff]
      %v137 = vld [vmem:[%s111 + $0xa0] sm:$0x3]
      %v138 = vld [vmem:[%s111 + $0xa8] sm:$0xff]
      %v139 = vld [vmem:[%s111 + $0xb0] sm:$0xff]
      %v140 = vld [vmem:[%s111 + $0xb8] sm:$0x3]
      %v141 = vld [vmem:[%s111 + $0xc0] sm:$0xff]
      %v142 = vld [vmem:[%s111 + $0xc8] sm:$0xff]
      %v143 = vld [vmem:[%s111 + $0xd0] sm:$0x3]
      %v144 = vld [vmem:[%s111 + $0xd8] sm:$0xff]
      %v145 = vld [vmem:[%s111 + $0xe0] sm:$0xff]
      %v146 = vld [vmem:[%s111 + $0xe8] sm:$0x3]
      %v147 = vld [vmem:[%s111 + $0xf0] sm:$0xff]
      %v148 = vld [vmem:[%s111 + $0xf8] sm:$0xff]
      %v149 = vld [vmem:[%s111 + $0x100] sm:$0x3]
      %v150 = vld [vmem:[%s111 + $0x108] sm:$0xff]
      %v151 = vld [vmem:[%s111 + $0x110] sm:$0xff]
      %v152 = vld [vmem:[%s111 + $0x118] sm:$0x3]
      %v153 = vld [vmem:[%s111 + $0x120] sm:$0xff]
      %v154 = vld [vmem:[%s111 + $0x128] sm:$0xff]
      %v155 = vld [vmem:[%s111 + $0x130] sm:$0x3]
      %v156 = vld [vmem:[%s111 + $0x138] sm:$0xff]
      %v157 = vld [vmem:[%s111 + $0x140] sm:$0xff]
      %v158 = vld [vmem:[%s111 + $0x148] sm:$0x3]
      %v159 = vld [vmem:[%s111 + $0x150] sm:$0xff]
      %v160 = vld [vmem:[%s111 + $0x158] sm:$0xff]
      %v161 = vld [vmem:[%s111 + $0x160] sm:$0x3]
      %v162 = vld [vmem:[%s111 + $0x168] sm:$0xff]
      %v163 = vld [vmem:[%s111 + $0x170] sm:$0xff]
      %v164 = vld [vmem:[%s111 + $0x178] sm:$0x3]
      %v165 = vld [vmem:[%s111 + $0x180] sm:$0xff]
      %v166 = vld [vmem:[%s111 + $0x188] sm:$0xff]
      %v167 = vld [vmem:[%s111 + $0x190] sm:$0x3]
      %v168 = vld [vmem:[%s111 + $0x198] sm:$0xff]
      %v169 = vld [vmem:[%s111 + $0x1a0] sm:$0xff]
      %v170 = vld [vmem:[%s111 + $0x1a8] sm:$0x3]
      %v171 = vmul.f32 %v117, 0.125
      %v172 = vmul.f32 %v118, 0.125
      %v173 = vmul.f32 %v120, 0.125
      %v174 = vmul.f32 %v121, 0.125
      %v175 = vmul.f32 %v123, 0.125
      %v176 = vmul.f32 %v124, 0.125
      %v177 = vmul.f32 %v126, 0.125
      %v178 = vmul.f32 %v127, 0.125
      %v179 = vmul.f32 %v129, 0.125
      %v180 = vmul.f32 %v130, 0.125
      %v181 = vmul.f32 %v132, 0.125
      %v182 = vmul.f32 %v133, 0.125
      %v183 = vmul.f32 %v135, 0.125
      %v184 = vmul.f32 %v136, 0.125
      %v185 = vmul.f32 %v138, 0.125
      %v186 = vmul.f32 %v139, 0.125
      %v187 = vmul.f32 %v141, 0.125
      %v188 = vmul.f32 %v142, 0.125
      %v189 = vmul.f32 %v144, 0.125
      %v190 = vmul.f32 %v145, 0.125
      %v191 = vmul.f32 %v147, 0.125
      %v192 = vmul.f32 %v148, 0.125
      %v193 = vmul.f32 %v150, 0.125
      %v194 = vmul.f32 %v151, 0.125
      %v195 = vmul.f32 %v153, 0.125
      %v196 = vmul.f32 %v154, 0.125
      %v197 = vmul.f32 %v156, 0.125
      %v198 = vmul.f32 %v157, 0.125
      %v199 = vmul.f32 %v159, 0.125
      %v200 = vmul.f32 %v160, 0.125
      %v201 = vmul.f32 %v162, 0.125
      %v202 = vmul.f32 %v163, 0.125
      %v203 = vmul.f32 %v165, 0.125
      %v204 = vmul.f32 %v166, 0.125
      %v205 = vmul.f32 %v168, 0.125
      %v206 = vmul.f32 %v169, 0.125
      %v207 = vmul.f32 %v117, 0.375
      %v208 = vmul.f32 %v118, 0.375
      %v209 = vmul.f32 %v120, 0.375
      %v210 = vmul.f32 %v121, 0.375
      %v211 = vmul.f32 %v123, 0.375
      %v212 = vmul.f32 %v124, 0.375
      %v213 = vmul.f32 %v126, 0.375
      %v214 = vmul.f32 %v127, 0.375
      %v215 = vmul.f32 %v129, 0.375
      %v216 = vmul.f32 %v130, 0.375
      %v217 = vmul.f32 %v132, 0.375
      %v218 = vmul.f32 %v133, 0.375
      %v219 = vmul.f32 %v135, 0.375
      %v220 = vmul.f32 %v136, 0.375
      %v221 = vmul.f32 %v138, 0.375
      %v222 = vmul.f32 %v139, 0.375
      %v223 = vmul.f32 %v141, 0.375
      %v224 = vmul.f32 %v142, 0.375
      %v225 = vmul.f32 %v144, 0.375
      %v226 = vmul.f32 %v145, 0.375
      %v227 = vmul.f32 %v147, 0.375
      %v228 = vmul.f32 %v148, 0.375
      %v229 = vmul.f32 %v150, 0.375
      %v230 = vmul.f32 %v151, 0.375
      %v231 = vmul.f32 %v153, 0.375
      %v232 = vmul.f32 %v154, 0.375
      %v233 = vmul.f32 %v156, 0.375
      %v234 = vmul.f32 %v157, 0.375
      %v235 = vmul.f32 %v159, 0.375
      %v236 = vmul.f32 %v160, 0.375
      %v237 = vmul.f32 %v162, 0.375
      %v238 = vmul.f32 %v163, 0.375
      %v239 = vmul.f32 %v165, 0.375
      %v240 = vmul.f32 %v166, 0.375
      %v241 = vmul.f32 %v168, 0.375
      %v242 = vmul.f32 %v169, 0.375
      %vm279 = vcmask 1046528
      %v280 = vrot.slane %v207, 1
      %v281 = vrot.slane %v208, 1
      %v282 = vsel %vm279, %v280, %v281
      %v283 = vrot.slane %v209, 1
      %v284 = vrot.slane %v210, 1
      %v285 = vsel %vm279, %v283, %v284
      %v286 = vrot.slane %v211, 1
      %v287 = vrot.slane %v212, 1
      %v288 = vsel %vm279, %v286, %v287
      %v289 = vrot.slane %v213, 1
      %v290 = vrot.slane %v214, 1
      %v291 = vsel %vm279, %v289, %v290
      %v292 = vrot.slane %v215, 1
      %v293 = vrot.slane %v216, 1
      %v294 = vsel %vm279, %v292, %v293
      %v295 = vrot.slane %v217, 1
      %v296 = vrot.slane %v218, 1
      %v297 = vsel %vm279, %v295, %v296
      %v298 = vrot.slane %v219, 1
      %v299 = vrot.slane %v220, 1
      %v300 = vsel %vm279, %v298, %v299
      %v301 = vrot.slane %v221, 1
      %v302 = vrot.slane %v222, 1
      %v303 = vsel %vm279, %v301, %v302
      %v304 = vrot.slane %v223, 1
      %v305 = vrot.slane %v224, 1
      %v306 = vsel %vm279, %v304, %v305
      %v307 = vrot.slane %v225, 1
      %v308 = vrot.slane %v226, 1
      %v309 = vsel %vm279, %v307, %v308
      %v310 = vrot.slane %v227, 1
      %v311 = vrot.slane %v228, 1
      %v312 = vsel %vm279, %v310, %v311
      %v313 = vrot.slane %v229, 1
      %v314 = vrot.slane %v230, 1
      %v315 = vsel %vm279, %v313, %v314
      %v316 = vrot.slane %v231, 1
      %v317 = vrot.slane %v232, 1
      %v318 = vsel %vm279, %v316, %v317
      %v319 = vrot.slane %v233, 1
      %v320 = vrot.slane %v234, 1
      %v321 = vsel %vm279, %v319, %v320
      %v322 = vrot.slane %v235, 1
      %v323 = vrot.slane %v236, 1
      %v324 = vsel %vm279, %v322, %v323
      %v325 = vrot.slane %v237, 1
      %v326 = vrot.slane %v238, 1
      %v327 = vsel %vm279, %v325, %v326
      %v328 = vrot.slane %v239, 1
      %v329 = vrot.slane %v240, 1
      %v330 = vsel %vm279, %v328, %v329
      %v331 = vrot.slane %v241, 1
      %v332 = vrot.slane %v242, 1
      %v333 = vsel %vm279, %v331, %v332
      %v370 = vadd.f32 %v171, %v282
      %v371 = vadd.f32 %v172, %v281
      %v372 = vadd.f32 %v173, %v285
      %v373 = vadd.f32 %v174, %v284
      %v374 = vadd.f32 %v175, %v288
      %v375 = vadd.f32 %v176, %v287
      %v376 = vadd.f32 %v177, %v291
      %v377 = vadd.f32 %v178, %v290
      %v378 = vadd.f32 %v179, %v294
      %v379 = vadd.f32 %v180, %v293
      %v380 = vadd.f32 %v181, %v297
      %v381 = vadd.f32 %v182, %v296
      %v382 = vadd.f32 %v183, %v300
      %v383 = vadd.f32 %v184, %v299
      %v384 = vadd.f32 %v185, %v303
      %v385 = vadd.f32 %v186, %v302
      %v386 = vadd.f32 %v187, %v306
      %v387 = vadd.f32 %v188, %v305
      %v388 = vadd.f32 %v189, %v309
      %v389 = vadd.f32 %v190, %v308
      %v390 = vadd.f32 %v191, %v312
      %v391 = vadd.f32 %v192, %v311
      %v392 = vadd.f32 %v193, %v315
      %v393 = vadd.f32 %v194, %v314
      %v394 = vadd.f32 %v195, %v318
      %v395 = vadd.f32 %v196, %v317
      %v396 = vadd.f32 %v197, %v321
      %v397 = vadd.f32 %v198, %v320
      %v398 = vadd.f32 %v199, %v324
      %v399 = vadd.f32 %v200, %v323
      %v400 = vadd.f32 %v201, %v327
      %v401 = vadd.f32 %v202, %v326
      %v402 = vadd.f32 %v203, %v330
      %v403 = vadd.f32 %v204, %v329
      %v404 = vadd.f32 %v205, %v333
      %v405 = vadd.f32 %v206, %v332
      %v406 = vmul.f32 %v119, 0.375
      %v407 = vmul.f32 %v122, 0.375
      %v408 = vmul.f32 %v125, 0.375
      %v409 = vmul.f32 %v128, 0.375
      %v410 = vmul.f32 %v131, 0.375
      %v411 = vmul.f32 %v134, 0.375
      %v412 = vmul.f32 %v137, 0.375
      %v413 = vmul.f32 %v140, 0.375
      %v414 = vmul.f32 %v143, 0.375
      %v415 = vmul.f32 %v146, 0.375
      %v416 = vmul.f32 %v149, 0.375
      %v417 = vmul.f32 %v152, 0.375
      %v418 = vmul.f32 %v155, 0.375
      %v419 = vmul.f32 %v158, 0.375
      %v420 = vmul.f32 %v161, 0.375
      %v421 = vmul.f32 %v164, 0.375
      %v422 = vmul.f32 %v167, 0.375
      %v423 = vmul.f32 %v170, 0.375
      %vm442 = vcmask 1045504
      %v443 = vrot.slane %v207, 2
      %v444 = vrot.slane %v208, 2
      %v445 = vsel %vm442, %v443, %v444
      %v446 = vrot.slane %v406, 2
      %v447 = vsel %vm442, %v444, %v446
      %v448 = vrot.slane %v209, 2
      %v449 = vrot.slane %v210, 2
      %v450 = vsel %vm442, %v448, %v449
      %v451 = vrot.slane %v407, 2
      %v452 = vsel %vm442, %v449, %v451
      %v453 = vrot.slane %v211, 2
      %v454 = vrot.slane %v212, 2
      %v455 = vsel %vm442, %v453, %v454
      %v456 = vrot.slane %v408, 2
      %v457 = vsel %vm442, %v454, %v456
      %v458 = vrot.slane %v213, 2
      %v459 = vrot.slane %v214, 2
      %v460 = vsel %vm442, %v458, %v459
      %v461 = vrot.slane %v409, 2
      %v462 = vsel %vm442, %v459, %v461
      %v463 = vrot.slane %v215, 2
      %v464 = vrot.slane %v216, 2
      %v465 = vsel %vm442, %v463, %v464
      %v466 = vrot.slane %v410, 2
      %v467 = vsel %vm442, %v464, %v466
      %v468 = vrot.slane %v217, 2
      %v469 = vrot.slane %v218, 2
      %v470 = vsel %vm442, %v468, %v469
      %v471 = vrot.slane %v411, 2
      %v472 = vsel %vm442, %v469, %v471
      %v473 = vrot.slane %v219, 2
      %v474 = vrot.slane %v220, 2
      %v475 = vsel %vm442, %v473, %v474
      %v476 = vrot.slane %v412, 2
      %v477 = vsel %vm442, %v474, %v476
      %v478 = vrot.slane %v221, 2
      %v479 = vrot.slane %v222, 2
      %v480 = vsel %vm442, %v478, %v479
      %v481 = vrot.slane %v413, 2
      %v482 = vsel %vm442, %v479, %v481
      %v483 = vrot.slane %v223, 2
      %v484 = vrot.slane %v224, 2
      %v485 = vsel %vm442, %v483, %v484
      %v486 = vrot.slane %v414, 2
      %v487 = vsel %vm442, %v484, %v486
      %v488 = vrot.slane %v225, 2
      %v489 = vrot.slane %v226, 2
      %v490 = vsel %vm442, %v488, %v489
      %v491 = vrot.slane %v415, 2
      %v492 = vsel %vm442, %v489, %v491
      %v493 = vrot.slane %v227, 2
      %v494 = vrot.slane %v228, 2
      %v495 = vsel %vm442, %v493, %v494
      %v496 = vrot.slane %v416, 2
      %v497 = vsel %vm442, %v494, %v496
      %v498 = vrot.slane %v229, 2
      %v499 = vrot.slane %v230, 2
      %v500 = vsel %vm442, %v498, %v499
      %v501 = vrot.slane %v417, 2
      %v502 = vsel %vm442, %v499, %v501
      %v503 = vrot.slane %v231, 2
      %v504 = vrot.slane %v232, 2
      %v505 = vsel %vm442, %v503, %v504
      %v506 = vrot.slane %v418, 2
      %v507 = vsel %vm442, %v504, %v506
      %v508 = vrot.slane %v233, 2
      %v509 = vrot.slane %v234, 2
      %v510 = vsel %vm442, %v508, %v509
      %v511 = vrot.slane %v419, 2
      %v512 = vsel %vm442, %v509, %v511
      %v513 = vrot.slane %v235, 2
      %v514 = vrot.slane %v236, 2
      %v515 = vsel %vm442, %v513, %v514
      %v516 = vrot.slane %v420, 2
      %v517 = vsel %vm442, %v514, %v516
      %v518 = vrot.slane %v237, 2
      %v519 = vrot.slane %v238, 2
      %v520 = vsel %vm442, %v518, %v519
      %v521 = vrot.slane %v421, 2
      %v522 = vsel %vm442, %v519, %v521
      %v523 = vrot.slane %v239, 2
      %v524 = vrot.slane %v240, 2
      %v525 = vsel %vm442, %v523, %v524
      %v526 = vrot.slane %v422, 2
      %v527 = vsel %vm442, %v524, %v526
      %v528 = vrot.slane %v241, 2
      %v529 = vrot.slane %v242, 2
      %v530 = vsel %vm442, %v528, %v529
      %v531 = vrot.slane %v423, 2
      %v532 = vsel %vm442, %v529, %v531
      %v569 = vadd.f32 %v370, %v445
      %v570 = vadd.f32 %v371, %v447
      %v571 = vadd.f32 %v372, %v450
      %v572 = vadd.f32 %v373, %v452
      %v573 = vadd.f32 %v374, %v455
      %v574 = vadd.f32 %v375, %v457
      %v575 = vadd.f32 %v376, %v460
      %v576 = vadd.f32 %v377, %v462
      %v577 = vadd.f32 %v378, %v465
      %v578 = vadd.f32 %v379, %v467
      %v579 = vadd.f32 %v380, %v470
      %v580 = vadd.f32 %v381, %v472
      %v581 = vadd.f32 %v382, %v475
      %v582 = vadd.f32 %v383, %v477
      %v583 = vadd.f32 %v384, %v480
      %v584 = vadd.f32 %v385, %v482
      %v585 = vadd.f32 %v386, %v485
      %v586 = vadd.f32 %v387, %v487
      %v587 = vadd.f32 %v388, %v490
      %v588 = vadd.f32 %v389, %v492
      %v589 = vadd.f32 %v390, %v495
      %v590 = vadd.f32 %v391, %v497
      %v591 = vadd.f32 %v392, %v500
      %v592 = vadd.f32 %v393, %v502
      %v593 = vadd.f32 %v394, %v505
      %v594 = vadd.f32 %v395, %v507
      %v595 = vadd.f32 %v396, %v510
      %v596 = vadd.f32 %v397, %v512
      %v597 = vadd.f32 %v398, %v515
      %v598 = vadd.f32 %v399, %v517
      %v599 = vadd.f32 %v400, %v520
      %v600 = vadd.f32 %v401, %v522
      %v601 = vadd.f32 %v402, %v525
      %v602 = vadd.f32 %v403, %v527
      %v603 = vadd.f32 %v404, %v530
      %v604 = vadd.f32 %v405, %v532
      %v605 = vmul.f32 %v119, 0.125
      %v606 = vmul.f32 %v122, 0.125
      %v607 = vmul.f32 %v125, 0.125
      %v608 = vmul.f32 %v128, 0.125
      %v609 = vmul.f32 %v131, 0.125
      %v610 = vmul.f32 %v134, 0.125
      %v611 = vmul.f32 %v137, 0.125
      %v612 = vmul.f32 %v140, 0.125
      %v613 = vmul.f32 %v143, 0.125
      %v614 = vmul.f32 %v146, 0.125
      %v615 = vmul.f32 %v149, 0.125
      %v616 = vmul.f32 %v152, 0.125
      %v617 = vmul.f32 %v155, 0.125
      %v618 = vmul.f32 %v158, 0.125
      %v619 = vmul.f32 %v161, 0.125
      %v620 = vmul.f32 %v164, 0.125
      %v621 = vmul.f32 %v167, 0.125
      %v622 = vmul.f32 %v170, 0.125
      %vm677 = vcmask 1044480
      %v678 = vrot.slane %v171, 3
      %v679 = vrot.slane %v172, 3
      %v680 = vsel %vm677, %v678, %v679
      %v681 = vrot.slane %v605, 3
      %v682 = vsel %vm677, %v679, %v681
      %v683 = vrot.slane %v173, 3
      %v684 = vrot.slane %v174, 3
      %v685 = vsel %vm677, %v683, %v684
      %v686 = vrot.slane %v606, 3
      %v687 = vsel %vm677, %v684, %v686
      %v688 = vrot.slane %v175, 3
      %v689 = vrot.slane %v176, 3
      %v690 = vsel %vm677, %v688, %v689
      %v691 = vrot.slane %v607, 3
      %v692 = vsel %vm677, %v689, %v691
      %v693 = vrot.slane %v177, 3
      %v694 = vrot.slane %v178, 3
      %v695 = vsel %vm677, %v693, %v694
      %v696 = vrot.slane %v608, 3
      %v697 = vsel %vm677, %v694, %v696
      %v698 = vrot.slane %v179, 3
      %v699 = vrot.slane %v180, 3
      %v700 = vsel %vm677, %v698, %v699
      %v701 = vrot.slane %v609, 3
      %v702 = vsel %vm677, %v699, %v701
      %v703 = vrot.slane %v181, 3
      %v704 = vrot.slane %v182, 3
      %v705 = vsel %vm677, %v703, %v704
      %v706 = vrot.slane %v610, 3
      %v707 = vsel %vm677, %v704, %v706
      %v708 = vrot.slane %v183, 3
      %v709 = vrot.slane %v184, 3
      %v710 = vsel %vm677, %v708, %v709
      %v711 = vrot.slane %v611, 3
      %v712 = vsel %vm677, %v709, %v711
      %v713 = vrot.slane %v185, 3
      %v714 = vrot.slane %v186, 3
      %v715 = vsel %vm677, %v713, %v714
      %v716 = vrot.slane %v612, 3
      %v717 = vsel %vm677, %v714, %v716
      %v718 = vrot.slane %v187, 3
      %v719 = vrot.slane %v188, 3
      %v720 = vsel %vm677, %v718, %v719
      %v721 = vrot.slane %v613, 3
      %v722 = vsel %vm677, %v719, %v721
      %v723 = vrot.slane %v189, 3
      %v724 = vrot.slane %v190, 3
      %v725 = vsel %vm677, %v723, %v724
      %v726 = vrot.slane %v614, 3
      %v727 = vsel %vm677, %v724, %v726
      %v728 = vrot.slane %v191, 3
      %v729 = vrot.slane %v192, 3
      %v730 = vsel %vm677, %v728, %v729
      %v731 = vrot.slane %v615, 3
      %v732 = vsel %vm677, %v729, %v731
      %v733 = vrot.slane %v193, 3
      %v734 = vrot.slane %v194, 3
      %v735 = vsel %vm677, %v733, %v734
      %v736 = vrot.slane %v616, 3
      %v737 = vsel %vm677, %v734, %v736
      %v738 = vrot.slane %v195, 3
      %v739 = vrot.slane %v196, 3
      %v740 = vsel %vm677, %v738, %v739
      %v741 = vrot.slane %v617, 3
      %v742 = vsel %vm677, %v739, %v741
      %v743 = vrot.slane %v197, 3
      %v744 = vrot.slane %v198, 3
      %v745 = vsel %vm677, %v743, %v744
      %v746 = vrot.slane %v618, 3
      %v747 = vsel %vm677, %v744, %v746
      %v748 = vrot.slane %v199, 3
      %v749 = vrot.slane %v200, 3
      %v750 = vsel %vm677, %v748, %v749
      %v751 = vrot.slane %v619, 3
      %v752 = vsel %vm677, %v749, %v751
      %v753 = vrot.slane %v201, 3
      %v754 = vrot.slane %v202, 3
      %v755 = vsel %vm677, %v753, %v754
      %v756 = vrot.slane %v620, 3
      %v757 = vsel %vm677, %v754, %v756
      %v758 = vrot.slane %v203, 3
      %v759 = vrot.slane %v204, 3
      %v760 = vsel %vm677, %v758, %v759
      %v761 = vrot.slane %v621, 3
      %v762 = vsel %vm677, %v759, %v761
      %v763 = vrot.slane %v205, 3
      %v764 = vrot.slane %v206, 3
      %v765 = vsel %vm677, %v763, %v764
      %v766 = vrot.slane %v622, 3
      %v767 = vsel %vm677, %v764, %v766
      %v804 = vadd.f32 %v569, %v680
      %v805 = vadd.f32 %v570, %v682
      %v806 = vadd.f32 %v571, %v685
      %v807 = vadd.f32 %v572, %v687
      %v808 = vadd.f32 %v573, %v690
      %v809 = vadd.f32 %v574, %v692
      %v810 = vadd.f32 %v575, %v695
      %v811 = vadd.f32 %v576, %v697
      %v812 = vadd.f32 %v577, %v700
      %v813 = vadd.f32 %v578, %v702
      %v814 = vadd.f32 %v579, %v705
      %v815 = vadd.f32 %v580, %v707
      %v816 = vadd.f32 %v581, %v710
      %v817 = vadd.f32 %v582, %v712
      %v818 = vadd.f32 %v583, %v715
      %v819 = vadd.f32 %v584, %v717
      %v820 = vadd.f32 %v585, %v720
      %v821 = vadd.f32 %v586, %v722
      %v822 = vadd.f32 %v587, %v725
      %v823 = vadd.f32 %v588, %v727
      %v824 = vadd.f32 %v589, %v730
      %v825 = vadd.f32 %v590, %v732
      %v826 = vadd.f32 %v591, %v735
      %v827 = vadd.f32 %v592, %v737
      %v828 = vadd.f32 %v593, %v740
      %v829 = vadd.f32 %v594, %v742
      %v830 = vadd.f32 %v595, %v745
      %v831 = vadd.f32 %v596, %v747
      %v832 = vadd.f32 %v597, %v750
      %v833 = vadd.f32 %v598, %v752
      %v834 = vadd.f32 %v599, %v755
      %v835 = vadd.f32 %v600, %v757
      %v836 = vadd.f32 %v601, %v760
      %v837 = vadd.f32 %v602, %v762
      %v838 = vadd.f32 %v603, %v765
      %v839 = vadd.f32 %v604, %v767
      %v840 = vmul.f32 %v804, 0.125
      %v841 = vmul.f32 %v805, 0.125
      %v842 = vmul.f32 %v806, 0.125
      %v843 = vmul.f32 %v807, 0.125
      %v844 = vmul.f32 %v808, 0.125
      %v845 = vmul.f32 %v809, 0.125
      %v846 = vmul.f32 %v810, 0.125
      %v847 = vmul.f32 %v811, 0.125
      %v848 = vmul.f32 %v812, 0.125
      %v849 = vmul.f32 %v813, 0.125
      %v850 = vmul.f32 %v814, 0.125
      %v851 = vmul.f32 %v815, 0.125
      %v852 = vmul.f32 %v816, 0.125
      %v853 = vmul.f32 %v817, 0.125
      %v854 = vmul.f32 %v818, 0.125
      %v855 = vmul.f32 %v819, 0.125
      %v856 = vmul.f32 %v820, 0.125
      %v857 = vmul.f32 %v821, 0.125
      %v858 = vmul.f32 %v822, 0.125
      %v859 = vmul.f32 %v823, 0.125
      %v860 = vmul.f32 %v824, 0.125
      %v861 = vmul.f32 %v825, 0.125
      %v862 = vmul.f32 %v826, 0.125
      %v863 = vmul.f32 %v827, 0.125
      %v864 = vmul.f32 %v828, 0.125
      %v865 = vmul.f32 %v829, 0.125
      %v866 = vmul.f32 %v830, 0.125
      %v867 = vmul.f32 %v831, 0.125
      %v868 = vmul.f32 %v832, 0.125
      %v869 = vmul.f32 %v833, 0.125
      %v870 = vmul.f32 %v806, 0.375
      %v871 = vmul.f32 %v807, 0.375
      %v872 = vmul.f32 %v808, 0.375
      %v873 = vmul.f32 %v809, 0.375
      %v874 = vmul.f32 %v810, 0.375
      %v875 = vmul.f32 %v811, 0.375
      %v876 = vmul.f32 %v812, 0.375
      %v877 = vmul.f32 %v813, 0.375
      %v878 = vmul.f32 %v814, 0.375
      %v879 = vmul.f32 %v815, 0.375
      %v880 = vmul.f32 %v816, 0.375
      %v881 = vmul.f32 %v817, 0.375
      %v882 = vmul.f32 %v818, 0.375
      %v883 = vmul.f32 %v819, 0.375
      %v884 = vmul.f32 %v820, 0.375
      %v885 = vmul.f32 %v821, 0.375
      %v886 = vmul.f32 %v822, 0.375
      %v887 = vmul.f32 %v823, 0.375
      %v888 = vmul.f32 %v824, 0.375
      %v889 = vmul.f32 %v825, 0.375
      %v890 = vmul.f32 %v826, 0.375
      %v891 = vmul.f32 %v827, 0.375
      %v892 = vmul.f32 %v828, 0.375
      %v893 = vmul.f32 %v829, 0.375
      %v894 = vmul.f32 %v830, 0.375
      %v895 = vmul.f32 %v831, 0.375
      %v896 = vmul.f32 %v832, 0.375
      %v897 = vmul.f32 %v833, 0.375
      %v898 = vmul.f32 %v834, 0.375
      %v899 = vmul.f32 %v835, 0.375
      %v900 = vadd.f32 %v840, %v870
      %v901 = vadd.f32 %v841, %v871
      %v902 = vadd.f32 %v842, %v872
      %v903 = vadd.f32 %v843, %v873
      %v904 = vadd.f32 %v844, %v874
      %v905 = vadd.f32 %v845, %v875
      %v906 = vadd.f32 %v846, %v876
      %v907 = vadd.f32 %v847, %v877
      %v908 = vadd.f32 %v848, %v878
      %v909 = vadd.f32 %v849, %v879
      %v910 = vadd.f32 %v850, %v880
      %v911 = vadd.f32 %v851, %v881
      %v912 = vadd.f32 %v852, %v882
      %v913 = vadd.f32 %v853, %v883
      %v914 = vadd.f32 %v854, %v884
      %v915 = vadd.f32 %v855, %v885
      %v916 = vadd.f32 %v856, %v886
      %v917 = vadd.f32 %v857, %v887
      %v918 = vadd.f32 %v858, %v888
      %v919 = vadd.f32 %v859, %v889
      %v920 = vadd.f32 %v860, %v890
      %v921 = vadd.f32 %v861, %v891
      %v922 = vadd.f32 %v862, %v892
      %v923 = vadd.f32 %v863, %v893
      %v924 = vadd.f32 %v864, %v894
      %v925 = vadd.f32 %v865, %v895
      %v926 = vadd.f32 %v866, %v896
      %v927 = vadd.f32 %v867, %v897
      %v928 = vadd.f32 %v868, %v898
      %v929 = vadd.f32 %v869, %v899
      %v930 = vmul.f32 %v836, 0.375
      %v931 = vmul.f32 %v837, 0.375
      %v932 = vadd.f32 %v900, %v872
      %v933 = vadd.f32 %v901, %v873
      %v934 = vadd.f32 %v902, %v874
      %v935 = vadd.f32 %v903, %v875
      %v936 = vadd.f32 %v904, %v876
      %v937 = vadd.f32 %v905, %v877
      %v938 = vadd.f32 %v906, %v878
      %v939 = vadd.f32 %v907, %v879
      %v940 = vadd.f32 %v908, %v880
      %v941 = vadd.f32 %v909, %v881
      %v942 = vadd.f32 %v910, %v882
      %v943 = vadd.f32 %v911, %v883
      %v944 = vadd.f32 %v912, %v884
      %v945 = vadd.f32 %v913, %v885
      %v946 = vadd.f32 %v914, %v886
      %v947 = vadd.f32 %v915, %v887
      %v948 = vadd.f32 %v916, %v888
      %v949 = vadd.f32 %v917, %v889
      %v950 = vadd.f32 %v918, %v890
      %v951 = vadd.f32 %v919, %v891
      %v952 = vadd.f32 %v920, %v892
      %v953 = vadd.f32 %v921, %v893
      %v954 = vadd.f32 %v922, %v894
      %v955 = vadd.f32 %v923, %v895
      %v956 = vadd.f32 %v924, %v896
      %v957 = vadd.f32 %v925, %v897
      %v958 = vadd.f32 %v926, %v898
      %v959 = vadd.f32 %v927, %v899
      %v960 = vadd.f32 %v928, %v930
      %v961 = vadd.f32 %v929, %v931
      %v962 = vmul.f32 %v834, 0.125
      %v963 = vmul.f32 %v835, 0.125
      %v964 = vmul.f32 %v836, 0.125
      %v965 = vmul.f32 %v837, 0.125
      %v966 = vmul.f32 %v838, 0.125
      %v967 = vmul.f32 %v839, 0.125
      %v968 = vadd.f32 %v932, %v846
      %v969 = vadd.f32 %v933, %v847
      %v970 = vadd.f32 %v934, %v848
      %v971 = vadd.f32 %v935, %v849
      %v972 = vadd.f32 %v936, %v850
      %v973 = vadd.f32 %v937, %v851
      %v974 = vadd.f32 %v938, %v852
      %v975 = vadd.f32 %v939, %v853
      %v976 = vadd.f32 %v940, %v854
      %v977 = vadd.f32 %v941, %v855
      %v978 = vadd.f32 %v942, %v856
      %v979 = vadd.f32 %v943, %v857
      %v980 = vadd.f32 %v944, %v858
      %v981 = vadd.f32 %v945, %v859
      %v982 = vadd.f32 %v946, %v860
      %v983 = vadd.f32 %v947, %v861
      %v984 = vadd.f32 %v948, %v862
      %v985 = vadd.f32 %v949, %v863
      %v986 = vadd.f32 %v950, %v864
      %v987 = vadd.f32 %v951, %v865
      %v988 = vadd.f32 %v952, %v866
      %v989 = vadd.f32 %v953, %v867
      %v990 = vadd.f32 %v954, %v868
      %v991 = vadd.f32 %v955, %v869
      %v992 = vadd.f32 %v956, %v962
      %v993 = vadd.f32 %v957, %v963
      %v994 = vadd.f32 %v958, %v964
      %v995 = vadd.f32 %v959, %v965
      %v996 = vadd.f32 %v960, %v966
      %v997 = vadd.f32 %v961, %v967
      %vm998 = vcmask 261120
      %999 = vst.msk [vmem:[%s116] sm:$0xff] %vm998, %v968
      %vm1000 = vcmask 260096
      %1001 = vst.msk [vmem:[%s116 + $0x8] sm:$0x7f] %vm1000, %v969
      %1002 = vst.msk [vmem:[%s116 + $0x10] sm:$0xff] %vm998, %v970
      %1003 = vst.msk [vmem:[%s116 + $0x18] sm:$0x7f] %vm1000, %v971
      %1004 = vst.msk [vmem:[%s116 + $0x20] sm:$0xff] %vm998, %v972
      %1005 = vst.msk [vmem:[%s116 + $0x28] sm:$0x7f] %vm1000, %v973
      %1006 = vst.msk [vmem:[%s116 + $0x30] sm:$0xff] %vm998, %v974
      %1007 = vst.msk [vmem:[%s116 + $0x38] sm:$0x7f] %vm1000, %v975
      %1008 = vst.msk [vmem:[%s116 + $0x40] sm:$0xff] %vm998, %v976
      %1009 = vst.msk [vmem:[%s116 + $0x48] sm:$0x7f] %vm1000, %v977
      %1010 = vst.msk [vmem:[%s116 + $0x50] sm:$0xff] %vm998, %v978
      %1011 = vst.msk [vmem:[%s116 + $0x58] sm:$0x7f] %vm1000, %v979
      %1012 = vst.msk [vmem:[%s116 + $0x60] sm:$0xff] %vm998, %v980
      %1013 = vst.msk [vmem:[%s116 + $0x68] sm:$0x7f] %vm1000, %v981
      %1014 = vst.msk [vmem:[%s116 + $0x70] sm:$0xff] %vm998, %v982
      %1015 = vst.msk [vmem:[%s116 + $0x78] sm:$0x7f] %vm1000, %v983
      %1016 = vst.msk [vmem:[%s116 + $0x80] sm:$0xff] %vm998, %v984
      %1017 = vst.msk [vmem:[%s116 + $0x88] sm:$0x7f] %vm1000, %v985
      %1018 = vst.msk [vmem:[%s116 + $0x90] sm:$0xff] %vm998, %v986
      %1019 = vst.msk [vmem:[%s116 + $0x98] sm:$0x7f] %vm1000, %v987
      %1020 = vst.msk [vmem:[%s116 + $0xa0] sm:$0xff] %vm998, %v988
      %1021 = vst.msk [vmem:[%s116 + $0xa8] sm:$0x7f] %vm1000, %v989
      %1022 = vst.msk [vmem:[%s116 + $0xb0] sm:$0xff] %vm998, %v990
      %1023 = vst.msk [vmem:[%s116 + $0xb8] sm:$0x7f] %vm1000, %v991
      %1024 = vst.msk [vmem:[%s116 + $0xc0] sm:$0xff] %vm998, %v992
      %1025 = vst.msk [vmem:[%s116 + $0xc8] sm:$0x7f] %vm1000, %v993
      %1026 = vst.msk [vmem:[%s116 + $0xd0] sm:$0xff] %vm998, %v994
      %1027 = vst.msk [vmem:[%s116 + $0xd8] sm:$0x7f] %vm1000, %v995
      %1028 = vst.msk [vmem:[%s116 + $0xe0] sm:$0xff] %vm998, %v996
      %1029 = vst.msk [vmem:[%s116 + $0xe8] sm:$0x7f] %vm1000, %v997
      %p1030 = scmp.lt.s32.totalorder %s12, 1
      %s1031 = scalar_select %p1030, %s12, 1
      %s1032 = smul.addr %s1031, 30
      %s1033 = smul.addr %s1032, 8
      %s1034 = scalar_lea.vmem %s1, %s1033
      // Predicated region
      $region25: #{resblock_forward.8} parent=23 // pred_check
        %p1035 = pneg %p56
      $region26: #{resblock_forward.8} parent=23 // pred_check_branch
        %1037 = sbr.rel (%p1035) target = $region28
      $region27: #{resblock_forward.8} parent=23 // pred_region
        _
      $region28: #{resblock_forward.8} parent=23 // pred_fallthru
        _
    $region24: #{resblock_forward.8} parent=5 // pred_fallthru
      _
    %p1038 = scmp.le.s32.totalorder 2, %s7
    // Predicated region
    $region29: #{resblock_forward.8} parent=5 // pred_check
      %p1039 = pneg %p1038
    $region30: #{resblock_forward.8} parent=5 // pred_check_branch
      %1041 = sbr.rel (%p1039) target = $region32
    $region31: #{resblock_forward.8} parent=5 // pred_region
      %s1042 = ssub.s32 %s7, 2
      // Predicated region
      $region33: #{resblock_forward.8} parent=31 // pred_check
        %p1043 = pneg %p62
      $region34: #{resblock_forward.8} parent=31 // pred_check_branch
        %1045 = sbr.rel (%p1043) target = $region36
      $region35: #{resblock_forward.8} parent=31 // pred_region
        %p1046 = scmp.lt.s32.totalorder %s13, 1
        %s1047 = scalar_select %p1046, %s13, 1
        %s1048 = smul.addr %s1047, 30
        %s1049 = smul.addr %s1048, 8
        %s1050 = scalar_lea.vmem %s1, %s1049
      $region36: #{resblock_forward.8} parent=31 // pred_fallthru
        _
    $region32: #{resblock_forward.8} parent=5 // pred_fallthru
      _
  $region6: #{resblock_forward.8} parent=0 // loop_footer
    %s11 = sadd.s32 1, %s7
  $region7: #{resblock_forward.8} parent=0 // loop_footer_branch
    %6 = sbr.rel target = $region3
  $region8: #{resblock_forward.8} parent=0 // loop_exit
    _

// kernel: resblock_forward.9
$region0: #{resblock_forward.9}
  #allocation0 [shape = 'u32[]', space=smem, size = 0x4, offset = 0x4, fixed_abs, tag = 'smem constant byte address 0x4 - core index']
  #allocation1 [shape = 'u32[144,128]{1,0:T(1,128)}', space=vmem, size = 0x12000, scoped, tag = 'internal scratch']
  %s0 = inlined_call_operand.vmem [shape: bf16[128,32], index: 0, kind: input, shape index: {}]
  %s1 = inlined_call_operand.vmem [shape: bf16[32,64], index: 1, kind: input, shape index: {}]
  %s2 = inlined_call_operand.vmem [shape: f32[1,64], index: 2, kind: input, shape index: {}]
  %s3 = inlined_call_operand.vmem [shape: f32[128,64], index: 3, kind: input, shape index: {}]
  %s4 = inlined_call_operand.hbm [shape: f32[128,64], index: 4, kind: output, shape index: {}]
  %s5 = sld [smem:[#allocation0]]
  $region34: #{resblock_forward.9} parent=0
    _
  %s7 = ssub.s32 1, %s5
  %s8 = scalar_select 0, %s7, %s5
  $region1: #{resblock_forward.9} parent=0
    #allocation2 [shape = 'u8[65536]{0}', space=vmem, size = 0x10000, scoped, tag = 'output window, operand 0, single buffered']
    #allocation3 [shape = 's32[1]{0}', space=sflag, size = 0x4, scoped, tag = 'scoped memory for resblock_forward.9']
    %9 = vsyncpa [#allocation3], 0
    // Predicated region
    $region2: #{resblock_forward.9} parent=1 // pred_check
      _
    $region3: #{resblock_forward.9} parent=1 // pred_check_branch
      %11 = sbr.rel (0) target = $region5
    $region4: #{resblock_forward.9} parent=1 // pred_region
      _
    $region5: #{resblock_forward.9} parent=1 // pred_fallthru
      _
    // Predicated region
    $region6: #{resblock_forward.9} parent=1 // pred_check
      _
    $region7: #{resblock_forward.9} parent=1 // pred_check_branch
      %13 = sbr.rel (0) target = $region9
    $region8: #{resblock_forward.9} parent=1 // pred_region
      _
    $region9: #{resblock_forward.9} parent=1 // pred_fallthru
      _
    // Predicated region
    $region10: #{resblock_forward.9} parent=1 // pred_check
      _
    $region11: #{resblock_forward.9} parent=1 // pred_check_branch
      %15 = sbr.rel (0) target = $region13
    $region12: #{resblock_forward.9} parent=1 // pred_region
      _
    $region13: #{resblock_forward.9} parent=1 // pred_fallthru
      _
    // Predicated region
    $region14: #{resblock_forward.9} parent=1 // pred_check
      _
    $region15: #{resblock_forward.9} parent=1 // pred_check_branch
      %17 = sbr.rel (0) target = $region17
    $region16: #{resblock_forward.9} parent=1 // pred_region
      _
    $region17: #{resblock_forward.9} parent=1 // pred_fallthru
      _
    %p19 = scmp.eq.s32.totalorder 0, 0
    // Predicated region
    $region18: #{resblock_forward.9} parent=1 // pred_check
      %p20 = pneg %p19
    $region19: #{resblock_forward.9} parent=1 // pred_check_branch
      %22 = sbr.rel (%p20) target = $region21
    $region20: #{resblock_forward.9} parent=1 // pred_region
      %vm23 = vcmask 523264
      %24 = vst.msk [vmem:[#allocation2] sm:$0xff] %vm23, 0.0
      %25 = vst.msk [vmem:[#allocation2 + $0x8] sm:$0xff] %vm23, 0.0
      %26 = vst.msk [vmem:[#allocation2 + $0x10] sm:$0xff] %vm23, 0.0
      %27 = vst.msk [vmem:[#allocation2 + $0x18] sm:$0xff] %vm23, 0.0
      %28 = vst.msk [vmem:[#allocation2 + $0x20] sm:$0xff] %vm23, 0.0
      %29 = vst.msk [vmem:[#allocation2 + $0x28] sm:$0xff] %vm23, 0.0
      %30 = vst.msk [vmem:[#allocation2 + $0x30] sm:$0xff] %vm23, 0.0
      %31 = vst.msk [vmem:[#allocation2 + $0x38] sm:$0xff] %vm23, 0.0
      %32 = vst.msk [vmem:[#allocation2 + $0x40] sm:$0xff] %vm23, 0.0
      %33 = vst.msk [vmem:[#allocation2 + $0x48] sm:$0xff] %vm23, 0.0
      %34 = vst.msk [vmem:[#allocation2 + $0x50] sm:$0xff] %vm23, 0.0
      %35 = vst.msk [vmem:[#allocation2 + $0x58] sm:$0xff] %vm23, 0.0
      %36 = vst.msk [vmem:[#allocation2 + $0x60] sm:$0xff] %vm23, 0.0
      %37 = vst.msk [vmem:[#allocation2 + $0x68] sm:$0xff] %vm23, 0.0
      %38 = vst.msk [vmem:[#allocation2 + $0x70] sm:$0xff] %vm23, 0.0
      %39 = vst.msk [vmem:[#allocation2 + $0x78] sm:$0xff] %vm23, 0.0
    $region21: #{resblock_forward.9} parent=1 // pred_fallthru
      _
    %v40 = vld [vmem:[#allocation2] sm:$0xff]
    %v41 = vld [vmem:[#allocation2 + $0x8] sm:$0xff]
    %v42 = vld [vmem:[#allocation2 + $0x10] sm:$0xff]
    %v43 = vld [vmem:[#allocation2 + $0x18] sm:$0xff]
    %v44 = vld [vmem:[#allocation2 + $0x20] sm:$0xff]
    %v45 = vld [vmem:[#allocation2 + $0x28] sm:$0xff]
    %v46 = vld [vmem:[#allocation2 + $0x30] sm:$0xff]
    %v47 = vld [vmem:[#allocation2 + $0x38] sm:$0xff]
    %v48 = vld [vmem:[#allocation2 + $0x40] sm:$0xff]
    %v49 = vld [vmem:[#allocation2 + $0x48] sm:$0xff]
    %v50 = vld [vmem:[#allocation2 + $0x50] sm:$0xff]
    %v51 = vld [vmem:[#allocation2 + $0x58] sm:$0xff]
    %v52 = vld [vmem:[#allocation2 + $0x60] sm:$0xff]
    %v53 = vld [vmem:[#allocation2 + $0x68] sm:$0xff]
    %v54 = vld [vmem:[#allocation2 + $0x70] sm:$0xff]
    %v55 = vld [vmem:[#allocation2 + $0x78] sm:$0xff]
    %v56 = vld [vmem:[%s0] sm:$0xf]
    %v57 = vld [vmem:[%s0 + $0x4] sm:$0xf]
    %v58 = vld [vmem:[%s0 + $0x8] sm:$0xf]
    %v59 = vld [vmem:[%s0 + $0xc] sm:$0xf]
    %v60 = vld [vmem:[%s0 + $0x10] sm:$0xf]
    %v61 = vld [vmem:[%s0 + $0x14] sm:$0xf]
    %v62 = vld [vmem:[%s0 + $0x18] sm:$0xf]
    %v63 = vld [vmem:[%s0 + $0x1c] sm:$0xf]
    %v64 = vld [vmem:[%s0 + $0x20] sm:$0xf]
    %v65 = vld [vmem:[%s0 + $0x24] sm:$0xf]
    %v66 = vld [vmem:[%s0 + $0x28] sm:$0xf]
    %v67 = vld [vmem:[%s0 + $0x2c] sm:$0xf]
    %v68 = vld [vmem:[%s0 + $0x30] sm:$0xf]
    %v69 = vld [vmem:[%s0 + $0x34] sm:$0xf]
    %v70 = vld [vmem:[%s0 + $0x38] sm:$0xf]
    %v71 = vld [vmem:[%s0 + $0x3c] sm:$0xf]
    %v72 = vld [vmem:[%s1] sm:$0xf]
    %v73 = vld [vmem:[%s1 + $0x4] sm:$0xf]
    %v74 = vld [vmem:[%s1 + $0x8] sm:$0xf]
    %v75 = vld [vmem:[%s1 + $0xc] sm:$0xf]
    %v92 = vunpack.c.l.b16 %v56
    %v93 = vunpack.c.l.b16 %v57
    %v94 = vunpack.c.l.b16 %v58
    %v95 = vunpack.c.l.b16 %v59
    %v96 = vunpack.c.l.b16 %v60
    %v97 = vunpack.c.l.b16 %v61
    %v98 = vunpack.c.l.b16 %v62
    %v99 = vunpack.c.l.b16 %v63
    %v100 = vunpack.c.l.b16 %v64
    %v101 = vunpack.c.l.b16 %v65
    %v102 = vunpack.c.l.b16 %v66
    %v103 = vunpack.c.l.b16 %v67
    %v104 = vunpack.c.l.b16 %v68
    %v105 = vunpack.c.l.b16 %v69
    %v106 = vunpack.c.l.b16 %v70
    %v107 = vunpack.c.l.b16 %v71
    %v108 = vpack.c.b16 %v93, %v92
    %v109 = vpack.c.b16 %v95, %v94
    %v110 = vpack.c.b16 %v97, %v96
    %v111 = vpack.c.b16 %v99, %v98
    %v112 = vpack.c.b16 %v101, %v100
    %v113 = vpack.c.b16 %v103, %v102
    %v114 = vpack.c.b16 %v105, %v104
    %v115 = vpack.c.b16 %v107, %v106
    %v120 = vunpack.c.l.b16 %v72
    %v121 = vunpack.c.l.b16 %v73
    %v122 = vunpack.c.l.b16 %v74
    %v123 = vunpack.c.l.b16 %v75
    %v124 = vpack.c.b16 %v121, %v120
    %v125 = vpack.c.b16 %v123, %v122
    %vm128 = vcmask 261120
    %v130 = vsel %vm128, %v108, 0
    %v133 = vsel %vm128, %v109, 0
    %v136 = vsel %vm128, %v110, 0
    %v139 = vsel %vm128, %v111, 0
    %v142 = vsel %vm128, %v112, 0
    %v145 = vsel %vm128, %v113, 0
    %v148 = vsel %vm128, %v114, 0
    %v151 = vsel %vm128, %v115, 0
    %153 = vmatprep.subr.bf16.mxu0 0
    %154 = vmatpush1.bf16.msra.mxu0 %v124
    %155 = vmatprep.subr.bf16.mxu0 0
    %156 = vmatpush1.bf16.msra.mxu0 %v125
    %157 = vmatprep.subr.bf16.mxu0 0
    %158 = vmatpush1.bf16.msra.mxu0 0
    %159 = vmatprep.subr.bf16.mxu0 0
    %160 = vmatpush1.bf16.msra.mxu0 0
    %161 = vmatprep.subr.bf16.mxu0 0
    %162 = vmatpush1.bf16.msra.mxu0 0
    %163 = vmatprep.subr.bf16.mxu0 0
    %164 = vmatpush1.bf16.msra.mxu0 0
    %165 = vmatprep.subr.bf16.mxu0 0
    %166 = vmatpush1.bf16.msra.mxu0 0
    %167 = vmatprep.subr.bf16.mxu0 0
    %168 = vmatpush1.bf16.msra.mxu0 0
    %169 = vmatprep.subr.bf16.mxu0 0
    %170 = vmatpush1.bf16.msra.mxu0 0
    %171 = vmatprep.subr.bf16.mxu0 0
    %172 = vmatpush1.bf16.msra.mxu0 0
    %173 = vmatprep.subr.bf16.mxu0 0
    %174 = vmatpush1.bf16.msra.mxu0 0
    %175 = vmatprep.subr.bf16.mxu0 0
    %176 = vmatpush1.bf16.msra.mxu0 0
    %177 = vmatprep.subr.bf16.mxu0 0
    %178 = vmatpush1.bf16.msra.mxu0 0
    %179 = vmatprep.subr.bf16.mxu0 0
    %180 = vmatpush1.bf16.msra.mxu0 0
    %181 = vmatprep.subr.bf16.mxu0 0
    %182 = vmatpush1.bf16.msra.mxu0 0
    %183 = vmatprep.subr.bf16.mxu0 0
    %184 = vmatpush1.bf16.msra.mxu0 0
    %185 = vmatprep.mubr.bf16.mxu0 0
    %186 = vmatmul.mubr.bf16.gmra.mrb[0].mxu0 %v130
    %v187 = vpop.f32.mrb[0].mxu0
    %v188 = vadd.f32 0.0, %v187
    %v189 = vpop.f32.mrb[0].mxu0
    %v190 = vpop.f32.mrb[0].mxu0
    %v191 = vadd.f32 0.0, %v190
    %v192 = vpop.f32.mrb[0].mxu0
    %193 = vmatprep.mubr.bf16.mxu0 0
    %194 = vmatmul.mubr.bf16.gmra.mrb[0].mxu0 %v133
    %v195 = vpop.f32.mrb[0].mxu0
    %v196 = vadd.f32 0.0, %v195
    %v197 = vpop.f32.mrb[0].mxu0
    %v198 = vpop.f32.mrb[0].mxu0
    %v199 = vadd.f32 0.0, %v198
    %v200 = vpop.f32.mrb[0].mxu0
    %201 = vmatprep.mubr.bf16.mxu0 0
    %202 = vmatmul.mubr.bf16.gmra.mrb[0].mxu0 %v136
    %v203 = vpop.f32.mrb[0].mxu0
    %v204 = vadd.f32 0.0, %v203
    %v205 = vpop.f32.mrb[0].mxu0
    %v206 = vpop.f32.mrb[0].mxu0
    %v207 = vadd.f32 0.0, %v206
    %v208 = vpop.f32.mrb[0].mxu0
    %209 = vmatprep.mubr.bf16.mxu0 0
    %210 = vmatmul.mubr.bf16.gmra.mrb[0].mxu0 %v139
    %v211 = vpop.f32.mrb[0].mxu0
    %v212 = vadd.f32 0.0, %v211
    %v213 = vpop.f32.mrb[0].mxu0
    %v214 = vpop.f32.mrb[0].mxu0
    %v215 = vadd.f32 0.0, %v214
    %v216 = vpop.f32.mrb[0].mxu0
    %217 = vmatprep.mubr.bf16.mxu0 0
    %218 = vmatmul.mubr.bf16.gmra.mrb[0].mxu0 %v142
    %v219 = vpop.f32.mrb[0].mxu0
    %v220 = vadd.f32 0.0, %v219
    %v221 = vpop.f32.mrb[0].mxu0
    %v222 = vpop.f32.mrb[0].mxu0
    %v223 = vadd.f32 0.0, %v222
    %v224 = vpop.f32.mrb[0].mxu0
    %225 = vmatprep.mubr.bf16.mxu0 0
    %226 = vmatmul.mubr.bf16.gmra.mrb[0].mxu0 %v145
    %v227 = vpop.f32.mrb[0].mxu0
    %v228 = vadd.f32 0.0, %v227
    %v229 = vpop.f32.mrb[0].mxu0
    %v230 = vpop.f32.mrb[0].mxu0
    %v231 = vadd.f32 0.0, %v230
    %v232 = vpop.f32.mrb[0].mxu0
    %233 = vmatprep.mubr.bf16.mxu0 0
    %234 = vmatmul.mubr.bf16.gmra.mrb[0].mxu0 %v148
    %v235 = vpop.f32.mrb[0].mxu0
    %v236 = vadd.f32 0.0, %v235
    %v237 = vpop.f32.mrb[0].mxu0
    %v238 = vpop.f32.mrb[0].mxu0
    %v239 = vadd.f32 0.0, %v238
    %v240 = vpop.f32.mrb[0].mxu0
    %241 = vmatprep.mubr.bf16.mxu0 0
    %242 = vmatmul.mubr.bf16.gmra.mrb[0].mxu0 %v151
    %v243 = vpop.f32.mrb[0].mxu0
    %v244 = vadd.f32 0.0, %v243
    %v245 = vpop.f32.mrb[0].mxu0
    %v246 = vpop.f32.mrb[0].mxu0
    %v247 = vadd.f32 0.0, %v246
    %v248 = vpop.f32.mrb[0].mxu0
    %249 = vdwg.mxu0
    %v250 = vadd.f32 %v40, %v188
    %v251 = vadd.f32 %v41, %v191
    %v252 = vadd.f32 %v42, %v196
    %v253 = vadd.f32 %v43, %v199
    %v254 = vadd.f32 %v44, %v204
    %v255 = vadd.f32 %v45, %v207
    %v256 = vadd.f32 %v46, %v212
    %v257 = vadd.f32 %v47, %v215
    %v258 = vadd.f32 %v48, %v220
    %v259 = vadd.f32 %v49, %v223
    %v260 = vadd.f32 %v50, %v228
    %v261 = vadd.f32 %v51, %v231
    %v262 = vadd.f32 %v52, %v236
    %v263 = vadd.f32 %v53, %v239
    %v264 = vadd.f32 %v54, %v244
    %v265 = vadd.f32 %v55, %v247
    %vm266 = vcmask 523264
    %267 = vst.msk [vmem:[#allocation2] sm:$0xff] %vm266, %v250
    %268 = vst.msk [vmem:[#allocation2 + $0x8] sm:$0xff] %vm266, %v251
    %269 = vst.msk [vmem:[#allocation2 + $0x10] sm:$0xff] %vm266, %v252
    %270 = vst.msk [vmem:[#allocation2 + $0x18] sm:$0xff] %vm266, %v253
    %271 = vst.msk [vmem:[#allocation2 + $0x20] sm:$0xff] %vm266, %v254
    %272 = vst.msk [vmem:[#allocation2 + $0x28] sm:$0xff] %vm266, %v255
    %273 = vst.msk [vmem:[#allocation2 + $0x30] sm:$0xff] %vm266, %v256
    %274 = vst.msk [vmem:[#allocation2 + $0x38] sm:$0xff] %vm266, %v257
    %275 = vst.msk [vmem:[#allocation2 + $0x40] sm:$0xff] %vm266, %v258
    %276 = vst.msk [vmem:[#allocation2 + $0x48] sm:$0xff] %vm266, %v259
    %277 = vst.msk [vmem:[#allocation2 + $0x50] sm:$0xff] %vm266, %v260
    %278 = vst.msk [vmem:[#allocation2 + $0x58] sm:$0xff] %vm266, %v261
    %279 = vst.msk [vmem:[#allocation2 + $0x60] sm:$0xff] %vm266, %v262
    %280 = vst.msk [vmem:[#allocation2 + $0x68] sm:$0xff] %vm266, %v263
    %281 = vst.msk [vmem:[#allocation2 + $0x70] sm:$0xff] %vm266, %v264
    %282 = vst.msk [vmem:[#allocation2 + $0x78] sm:$0xff] %vm266, %v265
    // Predicated region
    $region22: #{resblock_forward.9} parent=1 // pred_check
      %p283 = pneg %p19
    $region23: #{resblock_forward.9} parent=1 // pred_check_branch
      %285 = sbr.rel (%p283) target = $region25
    $region24: #{resblock_forward.9} parent=1 // pred_region
      %v286 = vld [vmem:[#allocation2] sm:$0xff]
      %v287 = vld [vmem:[#allocation2 + $0x8] sm:$0xff]
      %v288 = vld [vmem:[#allocation2 + $0x10] sm:$0xff]
      %v289 = vld [vmem:[#allocation2 + $0x18] sm:$0xff]
      %v290 = vld [vmem:[#allocation2 + $0x20] sm:$0xff]
      %v291 = vld [vmem:[#allocation2 + $0x28] sm:$0xff]
      %v292 = vld [vmem:[#allocation2 + $0x30] sm:$0xff]
      %v293 = vld [vmem:[#allocation2 + $0x38] sm:$0xff]
      %v294 = vld [vmem:[#allocation2 + $0x40] sm:$0xff]
      %v295 = vld [vmem:[#allocation2 + $0x48] sm:$0xff]
      %v296 = vld [vmem:[#allocation2 + $0x50] sm:$0xff]
      %v297 = vld [vmem:[#allocation2 + $0x58] sm:$0xff]
      %v298 = vld [vmem:[#allocation2 + $0x60] sm:$0xff]
      %v299 = vld [vmem:[#allocation2 + $0x68] sm:$0xff]
      %v300 = vld [vmem:[#allocation2 + $0x70] sm:$0xff]
      %v301 = vld [vmem:[#allocation2 + $0x78] sm:$0xff]
      %v302 = vld [vmem:[%s2] sm:$0x1]
      %v304 = vlaneseq
      %v305 = vshrl.u32 %v304, 7
      %v306 = vsub.s32 0, %v305
      %v307 = vrot.slane %v302, %v306
      %v309 = vadd.f32 %v286, %v307
      %v310 = vadd.f32 %v287, %v307
      %v311 = vadd.f32 %v288, %v307
      %v312 = vadd.f32 %v289, %v307
      %v313 = vadd.f32 %v290, %v307
      %v314 = vadd.f32 %v291, %v307
      %v315 = vadd.f32 %v292, %v307
      %v316 = vadd.f32 %v293, %v307
      %v317 = vadd.f32 %v294, %v307
      %v318 = vadd.f32 %v295, %v307
      %v319 = vadd.f32 %v296, %v307
      %v320 = vadd.f32 %v297, %v307
      %v321 = vadd.f32 %v298, %v307
      %v322 = vadd.f32 %v299, %v307
      %v323 = vadd.f32 %v300, %v307
      %v324 = vadd.f32 %v301, %v307
      %v325 = vld [vmem:[%s3] sm:$0xff]
      %v326 = vld [vmem:[%s3 + $0x8] sm:$0xff]
      %v327 = vld [vmem:[%s3 + $0x10] sm:$0xff]
      %v328 = vld [vmem:[%s3 + $0x18] sm:$0xff]
      %v329 = vld [vmem:[%s3 + $0x20] sm:$0xff]
      %v330 = vld [vmem:[%s3 + $0x28] sm:$0xff]
      %v331 = vld [vmem:[%s3 + $0x30] sm:$0xff]
      %v332 = vld [vmem:[%s3 + $0x38] sm:$0xff]
      %v333 = vld [vmem:[%s3 + $0x40] sm:$0xff]
      %v334 = vld [vmem:[%s3 + $0x48] sm:$0xff]
      %v335 = vld [vmem:[%s3 + $0x50] sm:$0xff]
      %v336 = vld [vmem:[%s3 + $0x58] sm:$0xff]
      %v337 = vld [vmem:[%s3 + $0x60] sm:$0xff]
      %v338 = vld [vmem:[%s3 + $0x68] sm:$0xff]
      %v339 = vld [vmem:[%s3 + $0x70] sm:$0xff]
      %v340 = vld [vmem:[%s3 + $0x78] sm:$0xff]
      %v341 = vadd.f32 %v309, %v325
      %v342 = vadd.f32 %v310, %v326
      %v343 = vadd.f32 %v311, %v327
      %v344 = vadd.f32 %v312, %v328
      %v345 = vadd.f32 %v313, %v329
      %v346 = vadd.f32 %v314, %v330
      %v347 = vadd.f32 %v315, %v331
      %v348 = vadd.f32 %v316, %v332
      %v349 = vadd.f32 %v317, %v333
      %v350 = vadd.f32 %v318, %v334
      %v351 = vadd.f32 %v319, %v335
      %v352 = vadd.f32 %v320, %v336
      %v353 = vadd.f32 %v321, %v337
      %v354 = vadd.f32 %v322, %v338
      %v355 = vadd.f32 %v323, %v339
      %v356 = vadd.f32 %v324, %v340
      %v357 = vmul.f32 %v341, 0.70710677
      %v358 = vmul.f32 %v342, 0.70710677
      %v359 = vmul.f32 %v343, 0.70710677
      %v360 = vmul.f32 %v344, 0.70710677
      %v361 = vmul.f32 %v345, 0.70710677
      %v362 = vmul.f32 %v346, 0.70710677
      %v363 = vmul.f32 %v347, 0.70710677
      %v364 = vmul.f32 %v348, 0.70710677
      %v365 = vmul.f32 %v349, 0.70710677
      %v366 = vmul.f32 %v350, 0.70710677
      %v367 = vmul.f32 %v351, 0.70710677
      %v368 = vmul.f32 %v352, 0.70710677
      %v369 = vmul.f32 %v353, 0.70710677
      %v370 = vmul.f32 %v354, 0.70710677
      %v371 = vmul.f32 %v355, 0.70710677
      %v372 = vmul.f32 %v356, 0.70710677
      %373 = vst.msk [vmem:[#allocation2] sm:$0xff] %vm266, %v357
      %374 = vst.msk [vmem:[#allocation2 + $0x8] sm:$0xff] %vm266, %v358
      %375 = vst.msk [vmem:[#allocation2 + $0x10] sm:$0xff] %vm266, %v359
      %376 = vst.msk [vmem:[#allocation2 + $0x18] sm:$0xff] %vm266, %v360
      %377 = vst.msk [vmem:[#allocation2 + $0x20] sm:$0xff] %vm266, %v361
      %378 = vst.msk [vmem:[#allocation2 + $0x28] sm:$0xff] %vm266, %v362
      %379 = vst.msk [vmem:[#allocation2 + $0x30] sm:$0xff] %vm266, %v363
      %380 = vst.msk [vmem:[#allocation2 + $0x38] sm:$0xff] %vm266, %v364
      %381 = vst.msk [vmem:[#allocation2 + $0x40] sm:$0xff] %vm266, %v365
      %382 = vst.msk [vmem:[#allocation2 + $0x48] sm:$0xff] %vm266, %v366
      %383 = vst.msk [vmem:[#allocation2 + $0x50] sm:$0xff] %vm266, %v367
      %384 = vst.msk [vmem:[#allocation2 + $0x58] sm:$0xff] %vm266, %v368
      %385 = vst.msk [vmem:[#allocation2 + $0x60] sm:$0xff] %vm266, %v369
      %386 = vst.msk [vmem:[#allocation2 + $0x68] sm:$0xff] %vm266, %v370
      %387 = vst.msk [vmem:[#allocation2 + $0x70] sm:$0xff] %vm266, %v371
      %388 = vst.msk [vmem:[#allocation2 + $0x78] sm:$0xff] %vm266, %v372
    $region25: #{resblock_forward.9} parent=1 // pred_fallthru
      _
    // Predicated region
    $region26: #{resblock_forward.9} parent=1 // pred_check
      _
    $region27: #{resblock_forward.9} parent=1 // pred_check_branch
      %390 = sbr.rel (0) target = $region29
    $region28: #{resblock_forward.9} parent=1 // pred_region
      %s392 = ssub.s32 2048, 2048
      %393 = vsyncadd [#allocation3], %s392
      %s394 = sshll.u32 [#allocation2], 4
      %s395 = int_to_ptr.vmem [resolvable:$true] %s394
      %400 = dma.vmem_to_hbm [thread:$0]  %s395, 2048, %s4, [#allocation3], 128, 128, 8
    $region29: #{resblock_forward.9} parent=1 // pred_fallthru
      _
    // Predicated region
    $region30: #{resblock_forward.9} parent=1 // pred_check
      _
    $region31: #{resblock_forward.9} parent=1 // pred_check_branch
      %402 = sbr.rel (0) target = $region33
    $region32: #{resblock_forward.9} parent=1 // pred_region
      %403 = dma.done [#allocation3], 2048
    $region33: #{resblock_forward.9} parent=1 // pred_fallthru
      _
    %404 = vsyncpa [#allocation3], 1

</llo_original>
